<compile_context>
chip_gen: v6e
topology: v6e:2x2x1
jax: 0.10.0
libtpu: 0.0.40
codegen_flags: <defaults>
</compile_context>

<pallas_src>
import functools

import jax
import jax.numpy as jnp
from jax.experimental import pallas as pl
from jax.experimental.pallas import tpu as pltpu


def _round_up(x, m):
    return ((x + m - 1) // m) * m


def _pad_channels(c):
    # Pad the per-tap contraction width to a power-of-two divisor of 128 so
    # per-tap lane offsets in the im2col buffer (j * ccp) never straddle a
    # vreg lane boundary and bf16 operands stay packing-aligned.
    for p in (16, 32, 64, 128):
        if c <= p:
            return p
    return _round_up(c, 128)


def _num_tensorcores():
    """Best-effort TensorCore count of the local device (v7x has 2 per chip)."""
    try:
        dev = jax.devices()[0]
        n = getattr(dev, "num_cores", None)
        if isinstance(n, int) and n >= 1:
            return n
        kind = str(getattr(dev, "device_kind", "")).lower()
        if "v7" in kind:
            return 2
    except Exception:
        pass
    return 1


def _choose_batch_block(batch, pixels, min_blocks=1, max_rows=2048):
    """Largest divisor of `batch` keeping batch_block*H*W rows <= max_rows
    while leaving at least `min_blocks` blocks on the leading 'parallel' grid
    axis (so every TensorCore gets independent work on v7x)."""
    want_blocks = min(min_blocks, batch)
    best = 1
    for bb in range(1, batch + 1):
        if batch % bb:
            continue
        if bb * pixels > max_rows:
            continue
        if batch // bb < want_blocks:
            continue
        best = bb
    return best


# ----------------------------------------------------------------------------
# Parameter init (deterministic, PyTorch-Conv2d-style uniform fan-in bounds).
# Conv weight laid out as (kh*kw, cin+hid, 4*hid) == torch Conv2d weight
# (4*hid, cin+hid, kh, kw) transposed for the per-tap matmul; channel rows are
# cat(x, h) order and gate columns are (i, f, o, g) to match ConvLSTMCell.
# ----------------------------------------------------------------------------
def init_params(key, n_channels, hidden_dims, kernel_sizes):
    ws, bs = [], []
    for i, hid in enumerate(hidden_dims):
        cin = n_channels if i == 0 else hidden_dims[i - 1]
        kh, kw = kernel_sizes[i]
        key, k1, k2 = jax.random.split(key, 3)
        fan_in = (cin + hid) * kh * kw
        bound = float(1.0 / (fan_in ** 0.5))
        w = jax.random.uniform(k1, (kh * kw, cin + hid, 4 * hid),
                               jnp.float32, -bound, bound)
        b = jax.random.uniform(k2, (4 * hid,), jnp.float32, -bound, bound)
        ws.append(w)
        bs.append(b)
    key, k1, k2 = jax.random.split(key, 3)
    bound = float(1.0 / (hidden_dims[-1] ** 0.5))
    fc_w = jax.random.uniform(k1, (hidden_dims[-1], n_channels),
                              jnp.float32, -bound, bound)
    fc_b = jax.random.uniform(k2, (n_channels,), jnp.float32, -bound, bound)
    return {"w": ws, "b": bs, "fc_w": fc_w, "fc_b": fc_b}


# ----------------------------------------------------------------------------
# Fused forward
# ----------------------------------------------------------------------------
def rnn_convlstm_forward(params, video, *, target_len, hidden_dims,
                         kernel_sizes):
    """video: (B, T, C, H, W) f32  ->  (B, target_len, C, H, W) f32."""
    video = jnp.asarray(video, jnp.float32)
    B, T, C, H, W = video.shape
    nl = len(hidden_dims)
    hids = list(hidden_dims)
    khs = [k[0] for k in kernel_sizes]
    kws = [k[1] for k in kernel_sizes]
    cxs = [C] + hids[:-1]                            # per-layer input channels
    ccs = [cxs[l] + hids[l] for l in range(nl)]      # cat(h, x) channels
    ccps = [_pad_channels(c) for c in ccs]           # padded per-tap K width
    Ks = [khs[l] * kws[l] * ccps[l] for l in range(nl)]   # im2col K per layer
    phs = [k // 2 for k in khs]
    pws = [k // 2 for k in kws]
    # left padding in the W (sublane) dim rounded up to 16 (bf16 packing) so
    # interior stores into the padded image are sublane-aligned.
    wls = [0 if p == 0 else _round_up(p, 16) for p in pws]

    P = H * W
    BBLK = _choose_batch_block(B, P, min_blocks=_num_tensorcores())
    nb = B // BBLK
    M = BBLK * P                                     # MXU M dim
    n_enc = T - 1                                    # encoder warm-up steps
    t_total = n_enc + target_len
    CPAD = max(128, _round_up(C, 128))               # lane-dense fc output
    FPAD = min(ccps[0] - hids[0], _round_up(C, 16))  # streamed frame channels

    # ----- operand preparation (plain JAX, runs once per traced call) -------
    frames = jnp.transpose(video, (0, 1, 3, 4, 2))                  # B,T,H,W,C
    frames = jnp.pad(frames, ((0, 0),) * 4 + ((0, FPAD - C),))
    frames = frames.reshape(nb, BBLK, T, H, W, FPAD).transpose(0, 2, 1, 3, 4, 5)
    frames = frames.reshape(nb * T, M, FPAD).astype(jnp.bfloat16)

    w_ops, b_ops = [], []
    for l in range(nl):
        w = params["w"][l]                            # (kh*kw, cc, 4*hid) [x|h]
        w = jnp.concatenate([w[:, cxs[l]:, :], w[:, :cxs[l], :]], axis=1)  # [h|x]
        w = jnp.pad(w, ((0, 0), (0, ccps[l] - ccs[l]), (0, 0)))
        w_ops.append(w.reshape(Ks[l], 4 * hids[l]).astype(jnp.bfloat16))
        b_ops.append(params["b"][l].reshape(1, 4 * hids[l]).astype(jnp.float32))
    fc_w = jnp.pad(params["fc_w"], ((0, 0), (0, CPAD - C))).astype(jnp.bfloat16)
    fc_b = jnp.pad(params["fc_b"], (0, CPAD - C)).reshape(1, CPAD)
    fc_b = fc_b.astype(jnp.float32)

    # ----- fused kernel ------------------------------------------------------
    def kernel(*refs):
        frames_ref = refs[0]
        w_refs = [refs[1 + 2 * l] for l in range(nl)]
        b_refs = [refs[2 + 2 * l] for l in range(nl)]
        fcw_ref = refs[1 + 2 * nl]
        fcb_ref = refs[2 + 2 * nl]
        out_ref = refs[3 + 2 * nl]
        scr = refs[4 + 2 * nl:]
        comb_refs = [scr[3 * l + 0] for l in range(nl)]  # padded [h|x] image
        im_refs = [scr[3 * l + 1] for l in range(nl)]    # im2col (M, K) bf16
        c_refs = [scr[3 * l + 2] for l in range(nl)]     # cell state (M, hid)

        t = pl.program_id(1)

        # (re)initialize recurrent state at the first step of a batch block
        @pl.when(t == 0)
        def _init():
            for l in range(nl):
                comb_refs[l][...] = jnp.zeros_like(comb_refs[l])
                c_refs[l][...] = jnp.zeros_like(c_refs[l])

        # layer-0 input: source frame while encoding (and at the first decode
        # step).  Afterwards comb0's x channels already hold the fed-back
        # prediction written at the end of the previous step.
        @pl.when(t <= n_enc)
        def _load_frame():
            x0 = frames_ref[...].reshape(BBLK, H, W, FPAD)
            comb_refs[0][:, phs[0]:phs[0] + H, wls[0]:wls[0] + W,
                         hids[0]:hids[0] + FPAD] = x0

        # ---- ConvLSTM layer stack (one cell step per layer) -----------------
        x_img = None
        h_last_bf = None
        for l in range(nl):
            hid, cx, ccp = hids[l], cxs[l], ccps[l]
            kh, kw, ph, pw, wl = khs[l], kws[l], phs[l], pws[l], wls[l]
            comb = comb_refs[l]
            if l > 0:                                # input = prev layer's h
                comb[:, ph:ph + H, wl:wl + W, hid:hid + cx] = x_img

            # im2col: each of the kh*kw shifted windows is read/shifted once
            # into an aligned contiguous buffer (lane offsets j*ccp | 128).
            for dy in range(kh):
                for dx in range(kw):
                    j = dy * kw + dx
                    c0 = wl - pw + dx
                    tap = comb[:, dy:dy + H, c0:c0 + W, :].reshape(M, ccp)
                    im_refs[l][:, j * ccp:(j + 1) * ccp] = tap

            # single bf16 MXU matmul (K = kh*kw*ccp), bias fused into the add
            gates = jnp.dot(im_refs[l][...], w_refs[l][...],
                            preferred_element_type=jnp.float32) + b_refs[l][...]

            ifo = jax.nn.sigmoid(gates[:, :3 * hid])  # one contiguous sigmoid
            g = jnp.tanh(gates[:, 3 * hid:])
            i_g = ifo[:, 0 * hid:1 * hid]
            f_g = ifo[:, 1 * hid:2 * hid]
            o_g = ifo[:, 2 * hid:3 * hid]

            c_next = f_g * c_refs[l][...] + i_g * g
            h_next = o_g * jnp.tanh(c_next)
            c_refs[l][...] = c_next

            h_bf = h_next.astype(jnp.bfloat16)        # cast once
            x_img = h_bf.reshape(BBLK, H, W, hid)
            # h for the NEXT step lives directly in comb (no separate h ref)
            comb[:, ph:ph + H, wl:wl + W, 0:hid] = x_img
            h_last_bf = h_bf

        # ---- decode steps: 1x1-conv head, lane-dense bf16 store, feedback ---
        @pl.when(t >= n_enc)
        def _decode():
            out = jnp.dot(h_last_bf, fcw_ref[...],
                          preferred_element_type=jnp.float32) + fcb_ref[...]
            out_ref[...] = out.astype(out_ref.dtype)   # (M, CPAD) full-width
            # feed prediction back (padded fc columns are exactly zero)
            pred = out[:, :FPAD].astype(jnp.bfloat16).reshape(BBLK, H, W, FPAD)
            comb_refs[0][:, phs[0]:phs[0] + H, wls[0]:wls[0] + W,
                         hids[0]:hids[0] + FPAD] = pred

    # ----- specs -------------------------------------------------------------
    in_specs = [
        pl.BlockSpec((None, M, FPAD),
                     lambda b, t: (b * T + jnp.minimum(t, T - 1), 0, 0)),
    ]
    for l in range(nl):
        in_specs.append(pl.BlockSpec((Ks[l], 4 * hids[l]),
                                     lambda b, t: (0, 0)))   # VMEM-resident
        in_specs.append(pl.BlockSpec((1, 4 * hids[l]), lambda b, t: (0, 0)))
    in_specs.append(pl.BlockSpec((hids[-1], CPAD), lambda b, t: (0, 0)))
    in_specs.append(pl.BlockSpec((1, CPAD), lambda b, t: (0, 0)))

    out_specs = pl.BlockSpec(
        (None, None, M, CPAD),
        lambda b, t: (b, jnp.maximum(t - n_enc, 0), 0, 0))

    scratch_shapes = []
    for l in range(nl):
        scratch_shapes.append(pltpu.VMEM(
            (BBLK, H + 2 * phs[l], wls[l] + W + pws[l], ccps[l]), jnp.bfloat16))
        scratch_shapes.append(pltpu.VMEM((M, Ks[l]), jnp.bfloat16))
        scratch_shapes.append(pltpu.VMEM((M, hids[l]), jnp.float32))

    # ----- explicit VMEM budget (weights + scratch + 2x-buffered blocks) -----
    vmem_bytes = 2 * (2 * M * FPAD) + 2 * (2 * M * CPAD)
    vmem_bytes += 2 * hids[-1] * CPAD + 4 * CPAD
    for l in range(nl):
        vmem_bytes += 2 * Ks[l] * 4 * hids[l] + 4 * 4 * hids[l]
        vmem_bytes += 2 * BBLK * (H + 2 * phs[l]) * (wls[l] + W + pws[l]) * ccps[l]
        vmem_bytes += 2 * M * Ks[l] + 4 * M * hids[l]
    vmem_limit = int(min(max(2 * vmem_bytes + (8 << 20), 32 << 20), 64 << 20))

    operands = [frames]
    for l in range(nl):
        operands += [w_ops[l], b_ops[l]]
    operands += [fc_w, fc_b]

    out = pl.pallas_call(
        kernel,
        grid=(nb, t_total),
        in_specs=in_specs,
        out_specs=out_specs,
        out_shape=jax.ShapeDtypeStruct((nb, target_len, M, CPAD), jnp.bfloat16),
        scratch_shapes=scratch_shapes,
        compiler_params=pltpu.CompilerParams(
            dimension_semantics=("parallel", "arbitrary"),
            vmem_limit_bytes=vmem_limit),
    )(*operands)

    out = out.astype(jnp.float32)[..., :C]                 # drop lane padding
    out = out.reshape(nb, target_len, BBLK, H, W, C)
    out = out.transpose(0, 2, 1, 5, 3, 4).reshape(B, target_len, C, H, W)
    return out


# ----------------------------------------------------------------------------
if __name__ == "__main__":
    key = jax.random.PRNGKey(0)
    B, T, C, H, W = 2, 6, 3, 8, 8                    # small shapes
    hidden_dims = (32, 32)
    kernel_sizes = ((3, 3), (3, 3))
    target_len = 4

    kp, kv = jax.random.split(key)
    params = init_params(kp, C, hidden_dims, kernel_sizes)
    video = jax.random.normal(kv, (B, T, C, H, W), jnp.float32)

    fwd = jax.jit(functools.partial(
        rnn_convlstm_forward,
        target_len=target_len,
        hidden_dims=hidden_dims,
        kernel_sizes=kernel_sizes))

    out = fwd(params, video)
    jax.block_until_ready(out)
    assert out.shape == (B, target_len, C, H, W), out.shape
    assert bool(jnp.all(jnp.isfinite(out)))
    print("KERNEL_OK")
</pallas_src>

<mosaic_0001>
module attributes {stable_mosaic.version = 11 : i64} {
  func.func @kernel(%arg0: i32, %arg1: i32, %arg2: memref<1x128x16xbf16, #tpu.memory_space<vmem>>, %arg3: memref<576x128xbf16, #tpu.memory_space<vmem>>, %arg4: memref<1x128xf32, #tpu.memory_space<vmem>>, %arg5: memref<576x128xbf16, #tpu.memory_space<vmem>>, %arg6: memref<1x128xf32, #tpu.memory_space<vmem>>, %arg7: memref<32x128xbf16, #tpu.memory_space<vmem>>, %arg8: memref<1x128xf32, #tpu.memory_space<vmem>>, %arg9: memref<1x1x128x128xbf16, #tpu.memory_space<vmem>>, %arg10: memref<2x10x25x64xbf16, #tpu.memory_space<vmem>>, %arg11: memref<128x576xbf16, #tpu.memory_space<vmem>>, %arg12: memref<128x32xf32, #tpu.memory_space<vmem>>, %arg13: memref<2x10x25x64xbf16, #tpu.memory_space<vmem>>, %arg14: memref<128x576xbf16, #tpu.memory_space<vmem>>, %arg15: memref<128x32xf32, #tpu.memory_space<vmem>>) attributes {dimension_semantics = [#tpu.dimension_semantics<parallel>, #tpu.dimension_semantics<arbitrary>], iteration_bounds = array<i64: 1, 9>, scalar_prefetch = 0 : i64, scratch_operands = 6 : i64, tpu.core_type = #tpu.core_type<tc>, window_params = [{transform_indices = @transform_0, window_bounds = array<i64: 1, 128, 16>}, {pipeline_mode = #tpu.pipeline_mode<synchronous>, transform_indices = @transform_1, window_bounds = array<i64: 576, 128>}, {pipeline_mode = #tpu.pipeline_mode<synchronous>, transform_indices = @transform_2, window_bounds = array<i64: 1, 128>}, {pipeline_mode = #tpu.pipeline_mode<synchronous>, transform_indices = @transform_3, window_bounds = array<i64: 576, 128>}, {pipeline_mode = #tpu.pipeline_mode<synchronous>, transform_indices = @transform_4, window_bounds = array<i64: 1, 128>}, {pipeline_mode = #tpu.pipeline_mode<synchronous>, transform_indices = @transform_5, window_bounds = array<i64: 32, 128>}, {pipeline_mode = #tpu.pipeline_mode<synchronous>, transform_indices = @transform_6, window_bounds = array<i64: 1, 128>}, {transform_indices = @transform_7, window_bounds = array<i64: 1, 1, 128, 128>}]} {
    %c0_i32 = arith.constant 0 : i32
    %0 = arith.cmpi eq, %arg1, %c0_i32 : i32
    %1 = arith.extui %0 : i1 to i32
    %c0_i32_0 = arith.constant 0 : i32
    %2 = arith.cmpi ne, %1, %c0_i32_0 : i32
    scf.if %2 {
      %cst_132 = arith.constant 0.000000e+00 : bf16
      %118 = vector.broadcast %cst_132 : bf16 to vector<2x10x25x64xbf16>
      %c0_133 = arith.constant 0 : index
      %c0_134 = arith.constant 0 : index
      %c0_135 = arith.constant 0 : index
      %c0_136 = arith.constant 0 : index
      %119 = vector.load %arg10[%c0_133, %c0_134, %c0_135, %c0_136] : memref<2x10x25x64xbf16, #tpu.memory_space<vmem>>, vector<2x10x25x64xbf16>
      tpu.vector_store %arg10[%c0_133, %c0_134, %c0_135, %c0_136], %118 {strides = array<i32>} : memref<2x10x25x64xbf16, #tpu.memory_space<vmem>>, vector<2x10x25x64xbf16>,
      %cst_137 = arith.constant 0.000000e+00 : f32
      %120 = vector.broadcast %cst_137 : f32 to vector<128x32xf32>
      %c0_138 = arith.constant 0 : index
      %c0_139 = arith.constant 0 : index
      %121 = vector.load %arg12[%c0_138, %c0_139] : memref<128x32xf32, #tpu.memory_space<vmem>>, vector<128x32xf32>
      tpu.vector_store %arg12[%c0_138, %c0_139], %120 {strides = array<i32>} : memref<128x32xf32, #tpu.memory_space<vmem>>, vector<128x32xf32>,
      %cst_140 = arith.constant 0.000000e+00 : bf16
      %122 = vector.broadcast %cst_140 : bf16 to vector<2x10x25x64xbf16>
      %c0_141 = arith.constant 0 : index
      %c0_142 = arith.constant 0 : index
      %c0_143 = arith.constant 0 : index
      %c0_144 = arith.constant 0 : index
      %123 = vector.load %arg13[%c0_141, %c0_142, %c0_143, %c0_144] : memref<2x10x25x64xbf16, #tpu.memory_space<vmem>>, vector<2x10x25x64xbf16>
      tpu.vector_store %arg13[%c0_141, %c0_142, %c0_143, %c0_144], %122 {strides = array<i32>} : memref<2x10x25x64xbf16, #tpu.memory_space<vmem>>, vector<2x10x25x64xbf16>,
      %cst_145 = arith.constant 0.000000e+00 : f32
      %124 = vector.broadcast %cst_145 : f32 to vector<128x32xf32>
      %c0_146 = arith.constant 0 : index
      %c0_147 = arith.constant 0 : index
      %125 = vector.load %arg15[%c0_146, %c0_147] : memref<128x32xf32, #tpu.memory_space<vmem>>, vector<128x32xf32>
      tpu.vector_store %arg15[%c0_146, %c0_147], %124 {strides = array<i32>} : memref<128x32xf32, #tpu.memory_space<vmem>>, vector<128x32xf32>,
    } else {
    }
    %c5_i32 = arith.constant 5 : i32
    %3 = arith.cmpi sle, %arg1, %c5_i32 : i32
    %4 = arith.extui %3 : i1 to i32
    %c0_i32_1 = arith.constant 0 : i32
    %5 = arith.cmpi ne, %4, %c0_i32_1 : i32
    scf.if %5 {
      %c0_132 = arith.constant 0 : index
      %c0_133 = arith.constant 0 : index
      %c0_134 = arith.constant 0 : index
      %118 = vector.load %arg2[%c0_132, %c0_133, %c0_134] : memref<1x128x16xbf16, #tpu.memory_space<vmem>>, vector<1x128x16xbf16>
      %119 = vector.shape_cast %118 : vector<1x128x16xbf16> to vector<128x16xbf16>
      %120 = vector.shape_cast %119 : vector<128x16xbf16> to vector<2x8x8x16xbf16>
      %c0_135 = arith.constant 0 : index
      %c1_136 = arith.constant 1 : index
      %c16_137 = arith.constant 16 : index
      %c32_138 = arith.constant 32 : index
      %121 = vector.load %arg10[%c0_135, %c1_136, %c16_137, %c32_138] : memref<2x10x25x64xbf16, #tpu.memory_space<vmem>>, vector<2x8x8x16xbf16>
      tpu.vector_store %arg10[%c0_135, %c1_136, %c16_137, %c32_138], %120 {strides = array<i32>} : memref<2x10x25x64xbf16, #tpu.memory_space<vmem>>, vector<2x8x8x16xbf16>,
    } else {
    }
    %c0 = arith.constant 0 : index
    %c0_2 = arith.constant 0 : index
    %c15 = arith.constant 15 : index
    %c0_3 = arith.constant 0 : index
    %6 = vector.load %arg10[%c0, %c0_2, %c15, %c0_3] : memref<2x10x25x64xbf16, #tpu.memory_space<vmem>>, vector<2x8x8x64xbf16>
    %7 = vector.shape_cast %6 : vector<2x8x8x64xbf16> to vector<128x64xbf16>
    %c0_4 = arith.constant 0 : index
    %c0_5 = arith.constant 0 : index
    %8 = vector.load %arg11[%c0_4, %c0_5] : memref<128x576xbf16, #tpu.memory_space<vmem>>, vector<128x64xbf16>
    tpu.vector_store %arg11[%c0_4, %c0_5], %7 {strides = array<i32>} : memref<128x576xbf16, #tpu.memory_space<vmem>>, vector<128x64xbf16>,
    %c0_6 = arith.constant 0 : index
    %c0_7 = arith.constant 0 : index
    %c16 = arith.constant 16 : index
    %c0_8 = arith.constant 0 : index
    %9 = vector.load %arg10[%c0_6, %c0_7, %c16, %c0_8] : memref<2x10x25x64xbf16, #tpu.memory_space<vmem>>, vector<2x8x8x64xbf16>
    %10 = vector.shape_cast %9 : vector<2x8x8x64xbf16> to vector<128x64xbf16>
    %c0_9 = arith.constant 0 : index
    %c64 = arith.constant 64 : index
    %11 = vector.load %arg11[%c0_9, %c64] : memref<128x576xbf16, #tpu.memory_space<vmem>>, vector<128x64xbf16>
    tpu.vector_store %arg11[%c0_9, %c64], %10 {strides = array<i32>} : memref<128x576xbf16, #tpu.memory_space<vmem>>, vector<128x64xbf16>,
    %c0_10 = arith.constant 0 : index
    %c0_11 = arith.constant 0 : index
    %c17 = arith.constant 17 : index
    %c0_12 = arith.constant 0 : index
    %12 = vector.load %arg10[%c0_10, %c0_11, %c17, %c0_12] : memref<2x10x25x64xbf16, #tpu.memory_space<vmem>>, vector<2x8x8x64xbf16>
    %13 = vector.shape_cast %12 : vector<2x8x8x64xbf16> to vector<128x64xbf16>
    %c0_13 = arith.constant 0 : index
    %c128 = arith.constant 128 : index
    %14 = vector.load %arg11[%c0_13, %c128] : memref<128x576xbf16, #tpu.memory_space<vmem>>, vector<128x64xbf16>
    tpu.vector_store %arg11[%c0_13, %c128], %13 {strides = array<i32>} : memref<128x576xbf16, #tpu.memory_space<vmem>>, vector<128x64xbf16>,
    %c0_14 = arith.constant 0 : index
    %c1 = arith.constant 1 : index
    %c15_15 = arith.constant 15 : index
    %c0_16 = arith.constant 0 : index
    %15 = vector.load %arg10[%c0_14, %c1, %c15_15, %c0_16] : memref<2x10x25x64xbf16, #tpu.memory_space<vmem>>, vector<2x8x8x64xbf16>
    %16 = vector.shape_cast %15 : vector<2x8x8x64xbf16> to vector<128x64xbf16>
    %c0_17 = arith.constant 0 : index
    %c192 = arith.constant 192 : index
    %17 = vector.load %arg11[%c0_17, %c192] : memref<128x576xbf16, #tpu.memory_space<vmem>>, vector<128x64xbf16>
    tpu.vector_store %arg11[%c0_17, %c192], %16 {strides = array<i32>} : memref<128x576xbf16, #tpu.memory_space<vmem>>, vector<128x64xbf16>,
    %c0_18 = arith.constant 0 : index
    %c1_19 = arith.constant 1 : index
    %c16_20 = arith.constant 16 : index
    %c0_21 = arith.constant 0 : index
    %18 = vector.load %arg10[%c0_18, %c1_19, %c16_20, %c0_21] : memref<2x10x25x64xbf16, #tpu.memory_space<vmem>>, vector<2x8x8x64xbf16>
    %19 = vector.shape_cast %18 : vector<2x8x8x64xbf16> to vector<128x64xbf16>
    %c0_22 = arith.constant 0 : index
    %c256 = arith.constant 256 : index
    %20 = vector.load %arg11[%c0_22, %c256] : memref<128x576xbf16, #tpu.memory_space<vmem>>, vector<128x64xbf16>
    tpu.vector_store %arg11[%c0_22, %c256], %19 {strides = array<i32>} : memref<128x576xbf16, #tpu.memory_space<vmem>>, vector<128x64xbf16>,
    %c0_23 = arith.constant 0 : index
    %c1_24 = arith.constant 1 : index
    %c17_25 = arith.constant 17 : index
    %c0_26 = arith.constant 0 : index
    %21 = vector.load %arg10[%c0_23, %c1_24, %c17_25, %c0_26] : memref<2x10x25x64xbf16, #tpu.memory_space<vmem>>, vector<2x8x8x64xbf16>
    %22 = vector.shape_cast %21 : vector<2x8x8x64xbf16> to vector<128x64xbf16>
    %c0_27 = arith.constant 0 : index
    %c320 = arith.constant 320 : index
    %23 = vector.load %arg11[%c0_27, %c320] : memref<128x576xbf16, #tpu.memory_space<vmem>>, vector<128x64xbf16>
    tpu.vector_store %arg11[%c0_27, %c320], %22 {strides = array<i32>} : memref<128x576xbf16, #tpu.memory_space<vmem>>, vector<128x64xbf16>,
    %c0_28 = arith.constant 0 : index
    %c2 = arith.constant 2 : index
    %c15_29 = arith.constant 15 : index
    %c0_30 = arith.constant 0 : index
    %24 = vector.load %arg10[%c0_28, %c2, %c15_29, %c0_30] : memref<2x10x25x64xbf16, #tpu.memory_space<vmem>>, vector<2x8x8x64xbf16>
    %25 = vector.shape_cast %24 : vector<2x8x8x64xbf16> to vector<128x64xbf16>
    %c0_31 = arith.constant 0 : index
    %c384 = arith.constant 384 : index
    %26 = vector.load %arg11[%c0_31, %c384] : memref<128x576xbf16, #tpu.memory_space<vmem>>, vector<128x64xbf16>
    tpu.vector_store %arg11[%c0_31, %c384], %25 {strides = array<i32>} : memref<128x576xbf16, #tpu.memory_space<vmem>>, vector<128x64xbf16>,
    %c0_32 = arith.constant 0 : index
    %c2_33 = arith.constant 2 : index
    %c16_34 = arith.constant 16 : index
    %c0_35 = arith.constant 0 : index
    %27 = vector.load %arg10[%c0_32, %c2_33, %c16_34, %c0_35] : memref<2x10x25x64xbf16, #tpu.memory_space<vmem>>, vector<2x8x8x64xbf16>
    %28 = vector.shape_cast %27 : vector<2x8x8x64xbf16> to vector<128x64xbf16>
    %c0_36 = arith.constant 0 : index
    %c448 = arith.constant 448 : index
    %29 = vector.load %arg11[%c0_36, %c448] : memref<128x576xbf16, #tpu.memory_space<vmem>>, vector<128x64xbf16>
    tpu.vector_store %arg11[%c0_36, %c448], %28 {strides = array<i32>} : memref<128x576xbf16, #tpu.memory_space<vmem>>, vector<128x64xbf16>,
    %c0_37 = arith.constant 0 : index
    %c2_38 = arith.constant 2 : index
    %c17_39 = arith.constant 17 : index
    %c0_40 = arith.constant 0 : index
    %30 = vector.load %arg10[%c0_37, %c2_38, %c17_39, %c0_40] : memref<2x10x25x64xbf16, #tpu.memory_space<vmem>>, vector<2x8x8x64xbf16>
    %31 = vector.shape_cast %30 : vector<2x8x8x64xbf16> to vector<128x64xbf16>
    %c0_41 = arith.constant 0 : index
    %c512 = arith.constant 512 : index
    %32 = vector.load %arg11[%c0_41, %c512] : memref<128x576xbf16, #tpu.memory_space<vmem>>, vector<128x64xbf16>
    tpu.vector_store %arg11[%c0_41, %c512], %31 {strides = array<i32>} : memref<128x576xbf16, #tpu.memory_space<vmem>>, vector<128x64xbf16>,
    %c0_42 = arith.constant 0 : index
    %c0_43 = arith.constant 0 : index
    %33 = vector.load %arg11[%c0_42, %c0_43] : memref<128x576xbf16, #tpu.memory_space<vmem>>, vector<128x576xbf16>
    %c0_44 = arith.constant 0 : index
    %c0_45 = arith.constant 0 : index
    %34 = vector.load %arg3[%c0_44, %c0_45] : memref<576x128xbf16, #tpu.memory_space<vmem>>, vector<576x128xbf16>
    %cst = arith.constant dense<0.000000e+00> : vector<128x128xf32>
    %35 = tpu.matmul %33, %34, %cst {dimension_numbers = #tpu.dot_dimension_numbers<[1], [0], [0], [1], [0, 0, 1, 1], [], []>} : vector<128x576xbf16>, vector<576x128xbf16>, vector<128x128xf32> -> vector<128x128xf32>
    %c0_46 = arith.constant 0 : index
    %c0_47 = arith.constant 0 : index
    %36 = vector.load %arg4[%c0_46, %c0_47] : memref<1x128xf32, #tpu.memory_space<vmem>>, vector<1x128xf32>
    %37 = vector.broadcast %36 : vector<1x128xf32> to vector<128x128xf32>
    %38 = arith.addf %35, %37 : vector<128x128xf32>
    %39 = vector.extract_strided_slice %38 {offsets = [0, 0], sizes = [128, 96], strides = [1, 1]} : vector<128x128xf32> to vector<128x96xf32>
    %40 = arith.negf %39 : vector<128x96xf32>
    %41 = math.exp %40 : vector<128x96xf32>
    %cst_48 = arith.constant 1.000000e+00 : f32
    %42 = vector.broadcast %cst_48 : f32 to vector<128x96xf32>
    %43 = arith.addf %42, %41 : vector<128x96xf32>
    %44 = arith.divf %42, %43 : vector<128x96xf32>
    %45 = vector.extract_strided_slice %38 {offsets = [0, 96], sizes = [128, 32], strides = [1, 1]} : vector<128x128xf32> to vector<128x32xf32>
    %46 = math.tanh %45 : vector<128x32xf32>
    %47 = vector.extract_strided_slice %44 {offsets = [0, 0], sizes = [128, 32], strides = [1, 1]} : vector<128x96xf32> to vector<128x32xf32>
    %48 = vector.extract_strided_slice %44 {offsets = [0, 32], sizes = [128, 32], strides = [1, 1]} : vector<128x96xf32> to vector<128x32xf32>
    %49 = vector.extract_strided_slice %44 {offsets = [0, 64], sizes = [128, 32], strides = [1, 1]} : vector<128x96xf32> to vector<128x32xf32>
    %c0_49 = arith.constant 0 : index
    %c0_50 = arith.constant 0 : index
    %50 = vector.load %arg12[%c0_49, %c0_50] : memref<128x32xf32, #tpu.memory_space<vmem>>, vector<128x32xf32>
    %51 = arith.mulf %48, %50 : vector<128x32xf32>
    %52 = arith.mulf %47, %46 : vector<128x32xf32>
    %53 = arith.addf %51, %52 : vector<128x32xf32>
    %54 = math.tanh %53 : vector<128x32xf32>
    %55 = arith.mulf %49, %54 : vector<128x32xf32>
    %c0_51 = arith.constant 0 : index
    %c0_52 = arith.constant 0 : index
    %56 = vector.load %arg12[%c0_51, %c0_52] : memref<128x32xf32, #tpu.memory_space<vmem>>, vector<128x32xf32>
    tpu.vector_store %arg12[%c0_51, %c0_52], %53 {strides = array<i32>} : memref<128x32xf32, #tpu.memory_space<vmem>>, vector<128x32xf32>,
    %57 = arith.truncf %55 : vector<128x32xf32> to vector<128x32xbf16>
    %58 = vector.shape_cast %57 : vector<128x32xbf16> to vector<2x8x8x32xbf16>
    %c0_53 = arith.constant 0 : index
    %c1_54 = arith.constant 1 : index
    %c16_55 = arith.constant 16 : index
    %c0_56 = arith.constant 0 : index
    %59 = vector.load %arg10[%c0_53, %c1_54, %c16_55, %c0_56] : memref<2x10x25x64xbf16, #tpu.memory_space<vmem>>, vector<2x8x8x32xbf16>
    tpu.vector_store %arg10[%c0_53, %c1_54, %c16_55, %c0_56], %58 {strides = array<i32>} : memref<2x10x25x64xbf16, #tpu.memory_space<vmem>>, vector<2x8x8x32xbf16>,
    %c0_57 = arith.constant 0 : index
    %c1_58 = arith.constant 1 : index
    %c16_59 = arith.constant 16 : index
    %c32 = arith.constant 32 : index
    %60 = vector.load %arg13[%c0_57, %c1_58, %c16_59, %c32] : memref<2x10x25x64xbf16, #tpu.memory_space<vmem>>, vector<2x8x8x32xbf16>
    tpu.vector_store %arg13[%c0_57, %c1_58, %c16_59, %c32], %58 {strides = array<i32>} : memref<2x10x25x64xbf16, #tpu.memory_space<vmem>>, vector<2x8x8x32xbf16>,
    %c0_60 = arith.constant 0 : index
    %c0_61 = arith.constant 0 : index
    %c15_62 = arith.constant 15 : index
    %c0_63 = arith.constant 0 : index
    %61 = vector.load %arg13[%c0_60, %c0_61, %c15_62, %c0_63] : memref<2x10x25x64xbf16, #tpu.memory_space<vmem>>, vector<2x8x8x64xbf16>
    %62 = vector.shape_cast %61 : vector<2x8x8x64xbf16> to vector<128x64xbf16>
    %c0_64 = arith.constant 0 : index
    %c0_65 = arith.constant 0 : index
    %63 = vector.load %arg14[%c0_64, %c0_65] : memref<128x576xbf16, #tpu.memory_space<vmem>>, vector<128x64xbf16>
    tpu.vector_store %arg14[%c0_64, %c0_65], %62 {strides = array<i32>} : memref<128x576xbf16, #tpu.memory_space<vmem>>, vector<128x64xbf16>,
    %c0_66 = arith.constant 0 : index
    %c0_67 = arith.constant 0 : index
    %c16_68 = arith.constant 16 : index
    %c0_69 = arith.constant 0 : index
    %64 = vector.load %arg13[%c0_66, %c0_67, %c16_68, %c0_69] : memref<2x10x25x64xbf16, #tpu.memory_space<vmem>>, vector<2x8x8x64xbf16>
    %65 = vector.shape_cast %64 : vector<2x8x8x64xbf16> to vector<128x64xbf16>
    %c0_70 = arith.constant 0 : index
    %c64_71 = arith.constant 64 : index
    %66 = vector.load %arg14[%c0_70, %c64_71] : memref<128x576xbf16, #tpu.memory_space<vmem>>, vector<128x64xbf16>
    tpu.vector_store %arg14[%c0_70, %c64_71], %65 {strides = array<i32>} : memref<128x576xbf16, #tpu.memory_space<vmem>>, vector<128x64xbf16>,
    %c0_72 = arith.constant 0 : index
    %c0_73 = arith.constant 0 : index
    %c17_74 = arith.constant 17 : index
    %c0_75 = arith.constant 0 : index
    %67 = vector.load %arg13[%c0_72, %c0_73, %c17_74, %c0_75] : memref<2x10x25x64xbf16, #tpu.memory_space<vmem>>, vector<2x8x8x64xbf16>
    %68 = vector.shape_cast %67 : vector<2x8x8x64xbf16> to vector<128x64xbf16>
    %c0_76 = arith.constant 0 : index
    %c128_77 = arith.constant 128 : index
    %69 = vector.load %arg14[%c0_76, %c128_77] : memref<128x576xbf16, #tpu.memory_space<vmem>>, vector<128x64xbf16>
    tpu.vector_store %arg14[%c0_76, %c128_77], %68 {strides = array<i32>} : memref<128x576xbf16, #tpu.memory_space<vmem>>, vector<128x64xbf16>,
    %c0_78 = arith.constant 0 : index
    %c1_79 = arith.constant 1 : index
    %c15_80 = arith.constant 15 : index
    %c0_81 = arith.constant 0 : index
    %70 = vector.load %arg13[%c0_78, %c1_79, %c15_80, %c0_81] : memref<2x10x25x64xbf16, #tpu.memory_space<vmem>>, vector<2x8x8x64xbf16>
    %71 = vector.shape_cast %70 : vector<2x8x8x64xbf16> to vector<128x64xbf16>
    %c0_82 = arith.constant 0 : index
    %c192_83 = arith.constant 192 : index
    %72 = vector.load %arg14[%c0_82, %c192_83] : memref<128x576xbf16, #tpu.memory_space<vmem>>, vector<128x64xbf16>
    tpu.vector_store %arg14[%c0_82, %c192_83], %71 {strides = array<i32>} : memref<128x576xbf16, #tpu.memory_space<vmem>>, vector<128x64xbf16>,
    %c0_84 = arith.constant 0 : index
    %c1_85 = arith.constant 1 : index
    %c16_86 = arith.constant 16 : index
    %c0_87 = arith.constant 0 : index
    %73 = vector.load %arg13[%c0_84, %c1_85, %c16_86, %c0_87] : memref<2x10x25x64xbf16, #tpu.memory_space<vmem>>, vector<2x8x8x64xbf16>
    %74 = vector.shape_cast %73 : vector<2x8x8x64xbf16> to vector<128x64xbf16>
    %c0_88 = arith.constant 0 : index
    %c256_89 = arith.constant 256 : index
    %75 = vector.load %arg14[%c0_88, %c256_89] : memref<128x576xbf16, #tpu.memory_space<vmem>>, vector<128x64xbf16>
    tpu.vector_store %arg14[%c0_88, %c256_89], %74 {strides = array<i32>} : memref<128x576xbf16, #tpu.memory_space<vmem>>, vector<128x64xbf16>,
    %c0_90 = arith.constant 0 : index
    %c1_91 = arith.constant 1 : index
    %c17_92 = arith.constant 17 : index
    %c0_93 = arith.constant 0 : index
    %76 = vector.load %arg13[%c0_90, %c1_91, %c17_92, %c0_93] : memref<2x10x25x64xbf16, #tpu.memory_space<vmem>>, vector<2x8x8x64xbf16>
    %77 = vector.shape_cast %76 : vector<2x8x8x64xbf16> to vector<128x64xbf16>
    %c0_94 = arith.constant 0 : index
    %c320_95 = arith.constant 320 : index
    %78 = vector.load %arg14[%c0_94, %c320_95] : memref<128x576xbf16, #tpu.memory_space<vmem>>, vector<128x64xbf16>
    tpu.vector_store %arg14[%c0_94, %c320_95], %77 {strides = array<i32>} : memref<128x576xbf16, #tpu.memory_space<vmem>>, vector<128x64xbf16>,
    %c0_96 = arith.constant 0 : index
    %c2_97 = arith.constant 2 : index
    %c15_98 = arith.constant 15 : index
    %c0_99 = arith.constant 0 : index
    %79 = vector.load %arg13[%c0_96, %c2_97, %c15_98, %c0_99] : memref<2x10x25x64xbf16, #tpu.memory_space<vmem>>, vector<2x8x8x64xbf16>
    %80 = vector.shape_cast %79 : vector<2x8x8x64xbf16> to vector<128x64xbf16>
    %c0_100 = arith.constant 0 : index
    %c384_101 = arith.constant 384 : index
    %81 = vector.load %arg14[%c0_100, %c384_101] : memref<128x576xbf16, #tpu.memory_space<vmem>>, vector<128x64xbf16>
    tpu.vector_store %arg14[%c0_100, %c384_101], %80 {strides = array<i32>} : memref<128x576xbf16, #tpu.memory_space<vmem>>, vector<128x64xbf16>,
    %c0_102 = arith.constant 0 : index
    %c2_103 = arith.constant 2 : index
    %c16_104 = arith.constant 16 : index
    %c0_105 = arith.constant 0 : index
    %82 = vector.load %arg13[%c0_102, %c2_103, %c16_104, %c0_105] : memref<2x10x25x64xbf16, #tpu.memory_space<vmem>>, vector<2x8x8x64xbf16>
    %83 = vector.shape_cast %82 : vector<2x8x8x64xbf16> to vector<128x64xbf16>
    %c0_106 = arith.constant 0 : index
    %c448_107 = arith.constant 448 : index
    %84 = vector.load %arg14[%c0_106, %c448_107] : memref<128x576xbf16, #tpu.memory_space<vmem>>, vector<128x64xbf16>
    tpu.vector_store %arg14[%c0_106, %c448_107], %83 {strides = array<i32>} : memref<128x576xbf16, #tpu.memory_space<vmem>>, vector<128x64xbf16>,
    %c0_108 = arith.constant 0 : index
    %c2_109 = arith.constant 2 : index
    %c17_110 = arith.constant 17 : index
    %c0_111 = arith.constant 0 : index
    %85 = vector.load %arg13[%c0_108, %c2_109, %c17_110, %c0_111] : memref<2x10x25x64xbf16, #tpu.memory_space<vmem>>, vector<2x8x8x64xbf16>
    %86 = vector.shape_cast %85 : vector<2x8x8x64xbf16> to vector<128x64xbf16>
    %c0_112 = arith.constant 0 : index
    %c512_113 = arith.constant 512 : index
    %87 = vector.load %arg14[%c0_112, %c512_113] : memref<128x576xbf16, #tpu.memory_space<vmem>>, vector<128x64xbf16>
    tpu.vector_store %arg14[%c0_112, %c512_113], %86 {strides = array<i32>} : memref<128x576xbf16, #tpu.memory_space<vmem>>, vector<128x64xbf16>,
    %c0_114 = arith.constant 0 : index
    %c0_115 = arith.constant 0 : index
    %88 = vector.load %arg14[%c0_114, %c0_115] : memref<128x576xbf16, #tpu.memory_space<vmem>>, vector<128x576xbf16>
    %c0_116 = arith.constant 0 : index
    %c0_117 = arith.constant 0 : index
    %89 = vector.load %arg5[%c0_116, %c0_117] : memref<576x128xbf16, #tpu.memory_space<vmem>>, vector<576x128xbf16>
    %cst_118 = arith.constant dense<0.000000e+00> : vector<128x128xf32>
    %90 = tpu.matmul %88, %89, %cst_118 {dimension_numbers = #tpu.dot_dimension_numbers<[1], [0], [0], [1], [0, 0, 1, 1], [], []>} : vector<128x576xbf16>, vector<576x128xbf16>, vector<128x128xf32> -> vector<128x128xf32>
    %c0_119 = arith.constant 0 : index
    %c0_120 = arith.constant 0 : index
    %91 = vector.load %arg6[%c0_119, %c0_120] : memref<1x128xf32, #tpu.memory_space<vmem>>, vector<1x128xf32>
    %92 = vector.broadcast %91 : vector<1x128xf32> to vector<128x128xf32>
    %93 = arith.addf %90, %92 : vector<128x128xf32>
    %94 = vector.extract_strided_slice %93 {offsets = [0, 0], sizes = [128, 96], strides = [1, 1]} : vector<128x128xf32> to vector<128x96xf32>
    %95 = arith.negf %94 : vector<128x96xf32>
    %96 = math.exp %95 : vector<128x96xf32>
    %cst_121 = arith.constant 1.000000e+00 : f32
    %97 = vector.broadcast %cst_121 : f32 to vector<128x96xf32>
    %98 = arith.addf %97, %96 : vector<128x96xf32>
    %99 = arith.divf %97, %98 : vector<128x96xf32>
    %100 = vector.extract_strided_slice %93 {offsets = [0, 96], sizes = [128, 32], strides = [1, 1]} : vector<128x128xf32> to vector<128x32xf32>
    %101 = math.tanh %100 : vector<128x32xf32>
    %102 = vector.extract_strided_slice %99 {offsets = [0, 0], sizes = [128, 32], strides = [1, 1]} : vector<128x96xf32> to vector<128x32xf32>
    %103 = vector.extract_strided_slice %99 {offsets = [0, 32], sizes = [128, 32], strides = [1, 1]} : vector<128x96xf32> to vector<128x32xf32>
    %104 = vector.extract_strided_slice %99 {offsets = [0, 64], sizes = [128, 32], strides = [1, 1]} : vector<128x96xf32> to vector<128x32xf32>
    %c0_122 = arith.constant 0 : index
    %c0_123 = arith.constant 0 : index
    %105 = vector.load %arg15[%c0_122, %c0_123] : memref<128x32xf32, #tpu.memory_space<vmem>>, vector<128x32xf32>
    %106 = arith.mulf %103, %105 : vector<128x32xf32>
    %107 = arith.mulf %102, %101 : vector<128x32xf32>
    %108 = arith.addf %106, %107 : vector<128x32xf32>
    %109 = math.tanh %108 : vector<128x32xf32>
    %110 = arith.mulf %104, %109 : vector<128x32xf32>
    %c0_124 = arith.constant 0 : index
    %c0_125 = arith.constant 0 : index
    %111 = vector.load %arg15[%c0_124, %c0_125] : memref<128x32xf32, #tpu.memory_space<vmem>>, vector<128x32xf32>
    tpu.vector_store %arg15[%c0_124, %c0_125], %108 {strides = array<i32>} : memref<128x32xf32, #tpu.memory_space<vmem>>, vector<128x32xf32>,
    %112 = arith.truncf %110 : vector<128x32xf32> to vector<128x32xbf16>
    %113 = vector.shape_cast %112 : vector<128x32xbf16> to vector<2x8x8x32xbf16>
    %c0_126 = arith.constant 0 : index
    %c1_127 = arith.constant 1 : index
    %c16_128 = arith.constant 16 : index
    %c0_129 = arith.constant 0 : index
    %114 = vector.load %arg13[%c0_126, %c1_127, %c16_128, %c0_129] : memref<2x10x25x64xbf16, #tpu.memory_space<vmem>>, vector<2x8x8x32xbf16>
    tpu.vector_store %arg13[%c0_126, %c1_127, %c16_128, %c0_129], %113 {strides = array<i32>} : memref<2x10x25x64xbf16, #tpu.memory_space<vmem>>, vector<2x8x8x32xbf16>,
    %c5_i32_130 = arith.constant 5 : i32
    %115 = arith.cmpi sge, %arg1, %c5_i32_130 : i32
    %116 = arith.extui %115 : i1 to i32
    %c0_i32_131 = arith.constant 0 : i32
    %117 = arith.cmpi ne, %116, %c0_i32_131 : i32
    scf.if %117 {
      %c0_132 = arith.constant 0 : index
      %c0_133 = arith.constant 0 : index
      %118 = vector.load %arg7[%c0_132, %c0_133] : memref<32x128xbf16, #tpu.memory_space<vmem>>, vector<32x128xbf16>
      %cst_134 = arith.constant dense<0.000000e+00> : vector<128x128xf32>
      %119 = tpu.matmul %112, %118, %cst_134 {dimension_numbers = #tpu.dot_dimension_numbers<[1], [0], [0], [1], [0, 0, 1, 1], [], []>} : vector<128x32xbf16>, vector<32x128xbf16>, vector<128x128xf32> -> vector<128x128xf32>
      %c0_135 = arith.constant 0 : index
      %c0_136 = arith.constant 0 : index
      %120 = vector.load %arg8[%c0_135, %c0_136] : memref<1x128xf32, #tpu.memory_space<vmem>>, vector<1x128xf32>
      %121 = vector.broadcast %120 : vector<1x128xf32> to vector<128x128xf32>
      %122 = arith.addf %119, %121 : vector<128x128xf32>
      %123 = arith.truncf %122 : vector<128x128xf32> to vector<128x128xbf16>
      %c0_137 = arith.constant 0 : index
      %c0_138 = arith.constant 0 : index
      %c0_139 = arith.constant 0 : index
      %c0_140 = arith.constant 0 : index
      %124 = vector.load %arg9[%c0_137, %c0_138, %c0_139, %c0_140] : memref<1x1x128x128xbf16, #tpu.memory_space<vmem>>, vector<1x1x128x128xbf16>
      %125 = vector.shape_cast %124 : vector<1x1x128x128xbf16> to vector<128x128xbf16>
      %126 = vector.shape_cast %123 : vector<128x128xbf16> to vector<1x1x128x128xbf16>
      tpu.vector_store %arg9[%c0_137, %c0_138, %c0_139, %c0_140], %126 {strides = array<i32>} : memref<1x1x128x128xbf16, #tpu.memory_space<vmem>>, vector<1x1x128x128xbf16>,
      %127 = vector.extract_strided_slice %122 {offsets = [0, 0], sizes = [128, 16], strides = [1, 1]} : vector<128x128xf32> to vector<128x16xf32>
      %128 = arith.truncf %127 : vector<128x16xf32> to vector<128x16xbf16>
      %129 = vector.shape_cast %128 : vector<128x16xbf16> to vector<2x8x8x16xbf16>
      %c0_141 = arith.constant 0 : index
      %c1_142 = arith.constant 1 : index
      %c16_143 = arith.constant 16 : index
      %c32_144 = arith.constant 32 : index
      %130 = vector.load %arg10[%c0_141, %c1_142, %c16_143, %c32_144] : memref<2x10x25x64xbf16, #tpu.memory_space<vmem>>, vector<2x8x8x16xbf16>
      tpu.vector_store %arg10[%c0_141, %c1_142, %c16_143, %c32_144], %129 {strides = array<i32>} : memref<2x10x25x64xbf16, #tpu.memory_space<vmem>>, vector<2x8x8x16xbf16>,
    } else {
    }
    return
  }
  func.func @transform_0(%arg0: i32, %arg1: i32) -> (i32, i32, i32) {
    %c6_i32 = arith.constant 6 : i32
    %0 = arith.muli %arg0, %c6_i32 : i32
    %c5_i32 = arith.constant 5 : i32
    %1 = arith.minsi %arg1, %c5_i32 : i32
    %2 = arith.addi %0, %1 : i32
    %c0_i32 = arith.constant 0 : i32
    %c0_i32_0 = arith.constant 0 : i32
    %c0_i32_1 = arith.constant 0 : i32
    return %2, %c0_i32, %c0_i32_0 : i32, i32, i32
  }
  func.func @transform_1(%arg0: i32, %arg1: i32) -> (i32, i32) {
    %c0_i32 = arith.constant 0 : i32
    %c0_i32_0 = arith.constant 0 : i32
    %c0_i32_1 = arith.constant 0 : i32
    return %c0_i32, %c0_i32_0 : i32, i32
  }
  func.func @transform_2(%arg0: i32, %arg1: i32) -> (i32, i32) {
    %c0_i32 = arith.constant 0 : i32
    %c0_i32_0 = arith.constant 0 : i32
    %c0_i32_1 = arith.constant 0 : i32
    return %c0_i32, %c0_i32_0 : i32, i32
  }
  func.func @transform_3(%arg0: i32, %arg1: i32) -> (i32, i32) {
    %c0_i32 = arith.constant 0 : i32
    %c0_i32_0 = arith.constant 0 : i32
    %c0_i32_1 = arith.constant 0 : i32
    return %c0_i32, %c0_i32_0 : i32, i32
  }
  func.func @transform_4(%arg0: i32, %arg1: i32) -> (i32, i32) {
    %c0_i32 = arith.constant 0 : i32
    %c0_i32_0 = arith.constant 0 : i32
    %c0_i32_1 = arith.constant 0 : i32
    return %c0_i32, %c0_i32_0 : i32, i32
  }
  func.func @transform_5(%arg0: i32, %arg1: i32) -> (i32, i32) {
    %c0_i32 = arith.constant 0 : i32
    %c0_i32_0 = arith.constant 0 : i32
    %c0_i32_1 = arith.constant 0 : i32
    return %c0_i32, %c0_i32_0 : i32, i32
  }
  func.func @transform_6(%arg0: i32, %arg1: i32) -> (i32, i32) {
    %c0_i32 = arith.constant 0 : i32
    %c0_i32_0 = arith.constant 0 : i32
    %c0_i32_1 = arith.constant 0 : i32
    return %c0_i32, %c0_i32_0 : i32, i32
  }
  func.func @transform_7(%arg0: i32, %arg1: i32) -> (i32, i32, i32, i32) {
    %c5_i32 = arith.constant 5 : i32
    %0 = arith.subi %arg1, %c5_i32 : i32
    %c0_i32 = arith.constant 0 : i32
    %1 = arith.maxsi %0, %c0_i32 : i32
    %c0_i32_0 = arith.constant 0 : i32
    %c0_i32_1 = arith.constant 0 : i32
    %c0_i32_2 = arith.constant 0 : i32
    return %arg0, %1, %c0_i32_0, %c0_i32_1 : i32, i32, i32, i32
  }
}

</mosaic_0001>

<llo_original>
// kernel: rnn_convlstm_forward.1
$region0: #{rnn_convlstm_forward.1}
  #allocation0 [shape = 'u32[]', space=smem, size = 0x4, offset = 0x4, fixed_abs, tag = 'smem constant byte address 0x4 - core index']
  #allocation1 [shape = 'u32[144,128]{1,0:T(1,128)}', space=vmem, size = 0x12000, scoped, tag = 'internal scratch']
  #allocation2 [shape = 'bf16[2,10,25,64]{3,2,1,0:T(8,128)(2,1)}', space=vmem, size = 0x28000, scoped, tag = 'scratch operand']
  #allocation3 [shape = 'bf16[128,576]{1,0:T(8,128)(2,1)}', space=vmem, size = 0x28000, scoped, tag = 'scratch operand']
  #allocation4 [shape = 'f32[128,32]{1,0:T(8,128)}', space=vmem, size = 0x10000, scoped, tag = 'scratch operand']
  #allocation5 [shape = 'bf16[2,10,25,64]{3,2,1,0:T(8,128)(2,1)}', space=vmem, size = 0x28000, scoped, tag = 'scratch operand']
  #allocation6 [shape = 'bf16[128,576]{1,0:T(8,128)(2,1)}', space=vmem, size = 0x28000, scoped, tag = 'scratch operand']
  #allocation7 [shape = 'f32[128,32]{1,0:T(8,128)}', space=vmem, size = 0x10000, scoped, tag = 'scratch operand']
  %s0 = inlined_call_operand.vmem [shape: bf16[6,128,16], index: 0, kind: input, shape index: {}]
  %s1 = inlined_call_operand.vmem [shape: bf16[576,128], index: 1, kind: input, shape index: {}]
  %s2 = inlined_call_operand.vmem [shape: f32[1,128], index: 2, kind: input, shape index: {}]
  %s3 = inlined_call_operand.vmem [shape: bf16[576,128], index: 3, kind: input, shape index: {}]
  %s4 = inlined_call_operand.vmem [shape: f32[1,128], index: 4, kind: input, shape index: {}]
  %s5 = inlined_call_operand.vmem [shape: bf16[32,128], index: 5, kind: input, shape index: {}]
  %s6 = inlined_call_operand.vmem [shape: f32[1,128], index: 6, kind: input, shape index: {}]
  %s7 = inlined_call_operand.vmem [shape: bf16[1,4,128,128], index: 7, kind: output, shape index: {}]
  %s8 = sld [smem:[#allocation0]]
  $region73: #{rnn_convlstm_forward.1} parent=0
    _
  %s10 = ssub.s32 1, %s8
  %s11 = scalar_select 0, %s10, %s8
  loop: start=0, step=1, limit=11
  $region2: #{rnn_convlstm_forward.1} parent=0 // loop_pre_header
    _
  $region3: #{rnn_convlstm_forward.1} parent=0 // loop_header
    %s13 = sphi 0, %s17
    %p14 = scmp.ge.s32.totalorder %s13, 11
    %s20 = sphi 0, %s32
    %s21 = sphi 0, %s28
    %s22 = sphi 0, %s20
    %s23 = sphi 0, %s21
    %s24 = sphi 0, %s22
    %s25 = sphi 0, %s23
    %s43 = sphi 0, %s45
    %s46 = sphi 0, %s43
    %s47 = sphi 0, %s46
    %s63 = sphi 0, %s47
    %s67 = sphi 0, %s67
    %s69 = sphi 0, %s67
    %s70 = sphi 0, %s69
    %s84 = sphi 0, %s70
    %s88 = sphi 0, %s88
    %s90 = sphi 0, %s88
    %s91 = sphi 0, %s90
    %s105 = sphi 0, %s91
    %s109 = sphi 0, %s109
    %s111 = sphi 0, %s109
    %s112 = sphi 0, %s111
    %s126 = sphi 0, %s112
    %s130 = sphi 0, %s130
    %s132 = sphi 0, %s130
    %s133 = sphi 0, %s132
    %s147 = sphi 0, %s133
    %s151 = sphi 0, %s151
    %s153 = sphi 0, %s151
    %s154 = sphi 0, %s153
    %s168 = sphi 0, %s154
    %s172 = sphi 0, %s172
    %s174 = sphi 0, %s172
    %s175 = sphi 0, %s174
    %s189 = sphi 0, %s175
    %s203 = sphi 0, %s205
    %s206 = sphi 0, %s203
    %s207 = sphi 0, %s206
    %s223 = sphi 0, %s207
  $region4: #{rnn_convlstm_forward.1} parent=0 // loop_header_branch
    %16 = sbr.rel (%p14) target = $region8
  $region5: #{rnn_convlstm_forward.1} parent=0 // loop_body
    %s18 = ssub.s32 %s13, 1
    %s19 = ssub.s32 %s13, 2
    %s26 = sadd.s32 1, %s21
    %p27 = scmp.ge.s32.totalorder %s26, 9
    %s28 = scalar_select %p27, 0, %s26
    %s29 = sadd.s32 1, %s20
    %s30 = scalar_select %p27, %s29, %s20
    %p31 = scmp.ge.s32.totalorder %s30, 1
    %s32 = scalar_select %p31, 0, %s30
    %s33 = smul.u32 %s20, 6
    %p34 = scmp.lt.s32.totalorder %s21, 5
    %s35 = scalar_select %p34, %s21, 5
    %s36 = sadd.s32 %s33, %s35
    %s37 = smul.u32 %s32, 6
    %p38 = scmp.lt.s32.totalorder %s28, 5
    %s39 = scalar_select %p38, %s28, 5
    %s40 = sadd.s32 %s37, %s39
    %s41 = ssub.s32 %s36, %s40
    %p42 = scmp.eq.s32.totalorder %s41, 0
    %s44 = sadd.s32 %s43, 1
    %s45 = scalar_select %p42, %s43, %s44
    %p48 = pneg %p42
    %p49 = scmp.eq.s32.totalorder %s13, 8
    %p50 = por %p48, %p49
    %p51 = scmp.ne.s32.totalorder %s43, %s46
    %p52 = scmp.eq.s32.totalorder %s13, 0
    %p53 = por %p51, %p52
    %p54 = scmp.ne.s32.totalorder %s43, %s46
    %p55 = scmp.eq.s32.totalorder %s18, 8
    %p56 = por %p54, %p55
    %p57 = scmp.ne.s32.totalorder %s46, %s47
    %p58 = scmp.eq.s32.totalorder %s18, 0
    %p59 = por %p57, %p58
    %p60 = scmp.ne.s32.totalorder %s46, %s47
    %p61 = scmp.eq.s32.totalorder %s19, 8
    %p62 = por %p60, %p61
    %p64 = scmp.ne.s32.totalorder %s47, %s63
    %p65 = scmp.eq.s32.totalorder %s19, 0
    %p66 = por %p64, %p65
    %s68 = sadd.s32 %s67, 1
    %p71 = scmp.eq.s32.totalorder %s13, 8
    %p72 = scmp.ne.s32.totalorder %s67, %s69
    %p73 = scmp.eq.s32.totalorder %s13, 0
    %p74 = por %p72, %p73
    %p75 = scmp.ne.s32.totalorder %s67, %s69
    %p76 = scmp.eq.s32.totalorder %s18, 8
    %p77 = por %p75, %p76
    %p78 = scmp.ne.s32.totalorder %s69, %s70
    %p79 = scmp.eq.s32.totalorder %s18, 0
    %p80 = por %p78, %p79
    %p81 = scmp.ne.s32.totalorder %s69, %s70
    %p82 = scmp.eq.s32.totalorder %s19, 8
    %p83 = por %p81, %p82
    %p85 = scmp.ne.s32.totalorder %s70, %s84
    %p86 = scmp.eq.s32.totalorder %s19, 0
    %p87 = por %p85, %p86
    %s89 = sadd.s32 %s88, 1
    %p92 = scmp.eq.s32.totalorder %s13, 8
    %p93 = scmp.ne.s32.totalorder %s88, %s90
    %p94 = scmp.eq.s32.totalorder %s13, 0
    %p95 = por %p93, %p94
    %p96 = scmp.ne.s32.totalorder %s88, %s90
    %p97 = scmp.eq.s32.totalorder %s18, 8
    %p98 = por %p96, %p97
    %p99 = scmp.ne.s32.totalorder %s90, %s91
    %p100 = scmp.eq.s32.totalorder %s18, 0
    %p101 = por %p99, %p100
    %p102 = scmp.ne.s32.totalorder %s90, %s91
    %p103 = scmp.eq.s32.totalorder %s19, 8
    %p104 = por %p102, %p103
    %p106 = scmp.ne.s32.totalorder %s91, %s105
    %p107 = scmp.eq.s32.totalorder %s19, 0
    %p108 = por %p106, %p107
    %s110 = sadd.s32 %s109, 1
    %p113 = scmp.eq.s32.totalorder %s13, 8
    %p114 = scmp.ne.s32.totalorder %s109, %s111
    %p115 = scmp.eq.s32.totalorder %s13, 0
    %p116 = por %p114, %p115
    %p117 = scmp.ne.s32.totalorder %s109, %s111
    %p118 = scmp.eq.s32.totalorder %s18, 8
    %p119 = por %p117, %p118
    %p120 = scmp.ne.s32.totalorder %s111, %s112
    %p121 = scmp.eq.s32.totalorder %s18, 0
    %p122 = por %p120, %p121
    %p123 = scmp.ne.s32.totalorder %s111, %s112
    %p124 = scmp.eq.s32.totalorder %s19, 8
    %p125 = por %p123, %p124
    %p127 = scmp.ne.s32.totalorder %s112, %s126
    %p128 = scmp.eq.s32.totalorder %s19, 0
    %p129 = por %p127, %p128
    %s131 = sadd.s32 %s130, 1
    %p134 = scmp.eq.s32.totalorder %s13, 8
    %p135 = scmp.ne.s32.totalorder %s130, %s132
    %p136 = scmp.eq.s32.totalorder %s13, 0
    %p137 = por %p135, %p136
    %p138 = scmp.ne.s32.totalorder %s130, %s132
    %p139 = scmp.eq.s32.totalorder %s18, 8
    %p140 = por %p138, %p139
    %p141 = scmp.ne.s32.totalorder %s132, %s133
    %p142 = scmp.eq.s32.totalorder %s18, 0
    %p143 = por %p141, %p142
    %p144 = scmp.ne.s32.totalorder %s132, %s133
    %p145 = scmp.eq.s32.totalorder %s19, 8
    %p146 = por %p144, %p145
    %p148 = scmp.ne.s32.totalorder %s133, %s147
    %p149 = scmp.eq.s32.totalorder %s19, 0
    %p150 = por %p148, %p149
    %s152 = sadd.s32 %s151, 1
    %p155 = scmp.eq.s32.totalorder %s13, 8
    %p156 = scmp.ne.s32.totalorder %s151, %s153
    %p157 = scmp.eq.s32.totalorder %s13, 0
    %p158 = por %p156, %p157
    %p159 = scmp.ne.s32.totalorder %s151, %s153
    %p160 = scmp.eq.s32.totalorder %s18, 8
    %p161 = por %p159, %p160
    %p162 = scmp.ne.s32.totalorder %s153, %s154
    %p163 = scmp.eq.s32.totalorder %s18, 0
    %p164 = por %p162, %p163
    %p165 = scmp.ne.s32.totalorder %s153, %s154
    %p166 = scmp.eq.s32.totalorder %s19, 8
    %p167 = por %p165, %p166
    %p169 = scmp.ne.s32.totalorder %s154, %s168
    %p170 = scmp.eq.s32.totalorder %s19, 0
    %p171 = por %p169, %p170
    %s173 = sadd.s32 %s172, 1
    %p176 = scmp.eq.s32.totalorder %s13, 8
    %p177 = scmp.ne.s32.totalorder %s172, %s174
    %p178 = scmp.eq.s32.totalorder %s13, 0
    %p179 = por %p177, %p178
    %p180 = scmp.ne.s32.totalorder %s172, %s174
    %p181 = scmp.eq.s32.totalorder %s18, 8
    %p182 = por %p180, %p181
    %p183 = scmp.ne.s32.totalorder %s174, %s175
    %p184 = scmp.eq.s32.totalorder %s18, 0
    %p185 = por %p183, %p184
    %p186 = scmp.ne.s32.totalorder %s174, %s175
    %p187 = scmp.eq.s32.totalorder %s19, 8
    %p188 = por %p186, %p187
    %p190 = scmp.ne.s32.totalorder %s175, %s189
    %p191 = scmp.eq.s32.totalorder %s19, 0
    %p192 = por %p190, %p191
    %s193 = ssub.s32 %s21, 5
    %p194 = scmp.gt.s32.totalorder %s193, 0
    %s195 = scalar_select %p194, %s193, 0
    %s196 = ssub.s32 %s28, 5
    %p197 = scmp.gt.s32.totalorder %s196, 0
    %s198 = scalar_select %p197, %s196, 0
    %s199 = ssub.s32 %s20, %s32
    %s200 = ssub.s32 %s195, %s198
    %s201 = sor.u32 %s199, %s200
    %p202 = scmp.eq.s32.totalorder %s201, 0
    %s204 = sadd.s32 %s203, 1
    %s205 = scalar_select %p202, %s203, %s204
    %p208 = pneg %p202
    %p209 = scmp.eq.s32.totalorder %s13, 8
    %p210 = por %p208, %p209
    %p211 = scmp.ne.s32.totalorder %s203, %s206
    %p212 = scmp.eq.s32.totalorder %s13, 0
    %p213 = por %p211, %p212
    %p214 = scmp.ne.s32.totalorder %s203, %s206
    %p215 = scmp.eq.s32.totalorder %s18, 8
    %p216 = por %p214, %p215
    %p217 = scmp.ne.s32.totalorder %s206, %s207
    %p218 = scmp.eq.s32.totalorder %s18, 0
    %p219 = por %p217, %p218
    %p220 = scmp.ne.s32.totalorder %s206, %s207
    %p221 = scmp.eq.s32.totalorder %s19, 8
    %p222 = por %p220, %p221
    %p224 = scmp.ne.s32.totalorder %s207, %s223
    %p225 = scmp.eq.s32.totalorder %s19, 0
    %p226 = por %p224, %p225
    %p227 = scmp.le.s32.totalorder 1, %s13
    %p228 = scmp.lt.s32.totalorder %s13, 10
    %p229 = pnand %p227, %p228
    %p230 = pneg %p229
    // Predicated region
    $region9: #{rnn_convlstm_forward.1} parent=5 // pred_check
      _
    $region10: #{rnn_convlstm_forward.1} parent=5 // pred_check_branch
      %232 = sbr.rel (%p229) target = $region12
    $region11: #{rnn_convlstm_forward.1} parent=5 // pred_region
      %s233 = ssub.s32 %s13, 1
      // Predicated region
      $region13: #{rnn_convlstm_forward.1} parent=11 // pred_check
        %p234 = pneg %p80
      $region14: #{rnn_convlstm_forward.1} parent=11 // pred_check_branch
        %236 = sbr.rel (%p234) target = $region16
      $region15: #{rnn_convlstm_forward.1} parent=11 // pred_region
        _
      $region16: #{rnn_convlstm_forward.1} parent=11 // pred_fallthru
        _
      // Predicated region
      $region17: #{rnn_convlstm_forward.1} parent=11 // pred_check
        %p237 = pneg %p101
      $region18: #{rnn_convlstm_forward.1} parent=11 // pred_check_branch
        %239 = sbr.rel (%p237) target = $region20
      $region19: #{rnn_convlstm_forward.1} parent=11 // pred_region
        _
      $region20: #{rnn_convlstm_forward.1} parent=11 // pred_fallthru
        _
      // Predicated region
      $region21: #{rnn_convlstm_forward.1} parent=11 // pred_check
        %p240 = pneg %p122
      $region22: #{rnn_convlstm_forward.1} parent=11 // pred_check_branch
        %242 = sbr.rel (%p240) target = $region24
      $region23: #{rnn_convlstm_forward.1} parent=11 // pred_region
        _
      $region24: #{rnn_convlstm_forward.1} parent=11 // pred_fallthru
        _
      // Predicated region
      $region25: #{rnn_convlstm_forward.1} parent=11 // pred_check
        %p243 = pneg %p143
      $region26: #{rnn_convlstm_forward.1} parent=11 // pred_check_branch
        %245 = sbr.rel (%p243) target = $region28
      $region27: #{rnn_convlstm_forward.1} parent=11 // pred_region
        _
      $region28: #{rnn_convlstm_forward.1} parent=11 // pred_fallthru
        _
      // Predicated region
      $region29: #{rnn_convlstm_forward.1} parent=11 // pred_check
        %p246 = pneg %p164
      $region30: #{rnn_convlstm_forward.1} parent=11 // pred_check_branch
        %248 = sbr.rel (%p246) target = $region32
      $region31: #{rnn_convlstm_forward.1} parent=11 // pred_region
        _
      $region32: #{rnn_convlstm_forward.1} parent=11 // pred_fallthru
        _
      // Predicated region
      $region33: #{rnn_convlstm_forward.1} parent=11 // pred_check
        %p249 = pneg %p185
      $region34: #{rnn_convlstm_forward.1} parent=11 // pred_check_branch
        %251 = sbr.rel (%p249) target = $region36
      $region35: #{rnn_convlstm_forward.1} parent=11 // pred_region
        _
      $region36: #{rnn_convlstm_forward.1} parent=11 // pred_fallthru
        _
    $region12: #{rnn_convlstm_forward.1} parent=5 // pred_fallthru
      _
    %p252 = scmp.lt.s32.totalorder %s13, 9
    // Predicated region
    $region37: #{rnn_convlstm_forward.1} parent=5 // pred_check
      %p253 = pneg %p252
    $region38: #{rnn_convlstm_forward.1} parent=5 // pred_check_branch
      %255 = sbr.rel (%p253) target = $region40
    $region39: #{rnn_convlstm_forward.1} parent=5 // pred_region
      // Predicated region
      $region41: #{rnn_convlstm_forward.1} parent=39 // pred_check
        %p256 = pneg %p53
      $region42: #{rnn_convlstm_forward.1} parent=39 // pred_check_branch
        %258 = sbr.rel (%p256) target = $region44
      $region43: #{rnn_convlstm_forward.1} parent=39 // pred_region
        %s259 = smul.u32 %s20, 6
        %p260 = scmp.lt.s32.totalorder %s21, 5
        %s261 = scalar_select %p260, %s21, 5
        %s262 = sadd.s32 %s259, %s261
        %p263 = scmp.lt.s32.totalorder %s262, 5
        %s264 = scalar_select %p263, %s262, 5
        %s265 = smul.addr %s264, 16
        %s266 = smul.addr %s265, 4
        %s267 = scalar_lea.vmem %s0, %s266
        %s268 = smul.u32 %s20, 6
        %p269 = scmp.lt.s32.totalorder %s21, 5
        %s270 = scalar_select %p269, %s21, 5
        %s271 = sadd.s32 %s268, %s270
      $region44: #{rnn_convlstm_forward.1} parent=39 // pred_fallthru
        _
    $region40: #{rnn_convlstm_forward.1} parent=5 // pred_fallthru
      _
    %p272 = scmp.le.s32.totalorder 1, %s13
    %p273 = scmp.lt.s32.totalorder %s13, 10
    %p274 = pnand %p272, %p273
    %p275 = pneg %p274
    // Predicated region
    $region45: #{rnn_convlstm_forward.1} parent=5 // pred_check
      _
    $region46: #{rnn_convlstm_forward.1} parent=5 // pred_check_branch
      %277 = sbr.rel (%p274) target = $region48
    $region47: #{rnn_convlstm_forward.1} parent=5 // pred_region
      %s278 = ssub.s32 %s13, 1
      %s279 = smul.u32 %s22, 6
      %p280 = scmp.lt.s32.totalorder %s23, 5
      %s281 = scalar_select %p280, %s23, 5
      %s282 = sadd.s32 %s279, %s281
      %p283 = scmp.lt.s32.totalorder %s282, 5
      %s284 = scalar_select %p283, %s282, 5
      %s285 = smul.addr %s284, 16
      %s286 = smul.addr %s285, 4
      %s287 = scalar_lea.vmem %s0, %s286
      %p288 = pneg %p59
      %p289 = pneg %p56
      %p290 = pneg %p80
      %p291 = pneg %p77
      %p292 = pneg %p101
      %p293 = pneg %p98
      %p294 = pneg %p122
      %p295 = pneg %p119
      %p296 = pneg %p143
      %p297 = pneg %p140
      %p298 = pneg %p164
      %p299 = pneg %p161
      %p300 = pneg %p185
      %p301 = pneg %p182
      %p302 = pneg %p219
      %p303 = pneg %p216
      %s304 = ssub.s32 %s23, 5
      %p305 = scmp.gt.s32.totalorder %s304, 0
      %s306 = scalar_select %p305, %s304, 0
      %p307 = scmp.lt.s32.totalorder %s22, 0
      %s308 = scalar_select %p307, %s22, 0
      %p309 = scmp.lt.s32.totalorder %s306, 3
      %s310 = scalar_select %p309, %s306, 3
      %s311 = smul.addr %s310, 16
      %s312 = smul.addr %s308, 64
      %s313 = sadd.s32 %s311, %s312
      %s314 = smul.addr %s313, 4
      %s315 = scalar_lea.vmem %s7, %s314
      %s316 = smul.u32 %s22, 6
      %p317 = scmp.lt.s32.totalorder %s23, 5
      %s318 = scalar_select %p317, %s23, 5
      %s319 = sadd.s32 %s316, %s318
      %p320 = scmp.lt.s32.totalorder %s319, 5
      %s321 = scalar_select %p320, %s319, 5
      %s322 = smul.addr %s321, 16
      %s323 = smul.addr %s322, 4
      %s324 = scalar_lea.vmem %s0, %s323
      %s325 = smul.u32 %s22, 6
      %p326 = scmp.lt.s32.totalorder %s23, 5
      %s327 = scalar_select %p326, %s23, 5
      %s328 = sadd.s32 %s325, %s327
      %s329 = ssub.s32 %s23, 5
      %p330 = scmp.gt.s32.totalorder %s329, 0
      %s331 = scalar_select %p330, %s329, 0
      %p332 = scmp.lt.s32.totalorder %s22, 0
      %s333 = scalar_select %p332, %s22, 0
      %p334 = scmp.lt.s32.totalorder %s331, 3
      %s335 = scalar_select %p334, %s331, 3
      %s336 = smul.addr %s335, 16
      %s337 = smul.addr %s333, 64
      %s338 = sadd.s32 %s336, %s337
      %s339 = smul.addr %s338, 4
      %s340 = scalar_lea.vmem %s7, %s339
      %s341 = ssub.s32 %s23, 5
      %p342 = scmp.gt.s32.totalorder %s341, 0
      %s343 = scalar_select %p342, %s341, 0
      %p345 = scmp.eq.s32.totalorder %s23, 0
      // Predicated region
      $region49: #{rnn_convlstm_forward.1} parent=47 // pred_check
        %p346 = pneg %p345
      $region50: #{rnn_convlstm_forward.1} parent=47 // pred_check_branch
        %348 = sbr.rel (%p346) target = $region52
      $region51: #{rnn_convlstm_forward.1} parent=47 // pred_region
        %vm349 = vcmask 519168
        %350 = vst.msk [vmem:[#allocation2] sm:$0xf] %vm349, 0
        %351 = vst.msk [vmem:[#allocation2 + $0x4] sm:$0xf] %vm349, 0
        %352 = vst.msk [vmem:[#allocation2 + $0x8] sm:$0xf] %vm349, 0
        %vm353 = vcmask 516096
        %vm354 = vsmask.f32 256
        %vm355 = vmand %vm353, %vm354
        %v356 = vld [vmem:[#allocation2 + $0xc] sm:$0x1]
        %v357 = vsel %vm355, 0, %v356
        %358 = vst [vmem:[#allocation2 + $0xc] sm:$0x1] %v357
        %359 = vst.msk [vmem:[#allocation2 + $0x10] sm:$0xf] %vm349, 0
        %360 = vst.msk [vmem:[#allocation2 + $0x14] sm:$0xf] %vm349, 0
        %361 = vst.msk [vmem:[#allocation2 + $0x18] sm:$0xf] %vm349, 0
        %v362 = vld [vmem:[#allocation2 + $0x1c] sm:$0x1]
        %v363 = vsel %vm355, 0, %v362
        %364 = vst [vmem:[#allocation2 + $0x1c] sm:$0x1] %v363
        %365 = vst.msk [vmem:[#allocation2 + $0x20] sm:$0xf] %vm349, 0
        %366 = vst.msk [vmem:[#allocation2 + $0x24] sm:$0xf] %vm349, 0
        %367 = vst.msk [vmem:[#allocation2 + $0x28] sm:$0xf] %vm349, 0
        %v368 = vld [vmem:[#allocation2 + $0x2c] sm:$0x1]
        %v369 = vsel %vm355, 0, %v368
        %370 = vst [vmem:[#allocation2 + $0x2c] sm:$0x1] %v369
        %371 = vst.msk [vmem:[#allocation2 + $0x30] sm:$0xf] %vm349, 0
        %372 = vst.msk [vmem:[#allocation2 + $0x34] sm:$0xf] %vm349, 0
        %373 = vst.msk [vmem:[#allocation2 + $0x38] sm:$0xf] %vm349, 0
        %v374 = vld [vmem:[#allocation2 + $0x3c] sm:$0x1]
        %v375 = vsel %vm355, 0, %v374
        %376 = vst [vmem:[#allocation2 + $0x3c] sm:$0x1] %v375
        %377 = vst.msk [vmem:[#allocation2 + $0x40] sm:$0xf] %vm349, 0
        %378 = vst.msk [vmem:[#allocation2 + $0x44] sm:$0xf] %vm349, 0
        %379 = vst.msk [vmem:[#allocation2 + $0x48] sm:$0xf] %vm349, 0
        %v380 = vld [vmem:[#allocation2 + $0x4c] sm:$0x1]
        %v381 = vsel %vm355, 0, %v380
        %382 = vst [vmem:[#allocation2 + $0x4c] sm:$0x1] %v381
        %383 = vst.msk [vmem:[#allocation2 + $0x50] sm:$0xf] %vm349, 0
        %384 = vst.msk [vmem:[#allocation2 + $0x54] sm:$0xf] %vm349, 0
        %385 = vst.msk [vmem:[#allocation2 + $0x58] sm:$0xf] %vm349, 0
        %v386 = vld [vmem:[#allocation2 + $0x5c] sm:$0x1]
        %v387 = vsel %vm355, 0, %v386
        %388 = vst [vmem:[#allocation2 + $0x5c] sm:$0x1] %v387
        %389 = vst.msk [vmem:[#allocation2 + $0x60] sm:$0xf] %vm349, 0
        %390 = vst.msk [vmem:[#allocation2 + $0x64] sm:$0xf] %vm349, 0
        %391 = vst.msk [vmem:[#allocation2 + $0x68] sm:$0xf] %vm349, 0
        %v392 = vld [vmem:[#allocation2 + $0x6c] sm:$0x1]
        %v393 = vsel %vm355, 0, %v392
        %394 = vst [vmem:[#allocation2 + $0x6c] sm:$0x1] %v393
        %395 = vst.msk [vmem:[#allocation2 + $0x70] sm:$0xf] %vm349, 0
        %396 = vst.msk [vmem:[#allocation2 + $0x74] sm:$0xf] %vm349, 0
        %397 = vst.msk [vmem:[#allocation2 + $0x78] sm:$0xf] %vm349, 0
        %v398 = vld [vmem:[#allocation2 + $0x7c] sm:$0x1]
        %v399 = vsel %vm355, 0, %v398
        %400 = vst [vmem:[#allocation2 + $0x7c] sm:$0x1] %v399
        %401 = vst.msk [vmem:[#allocation2 + $0x80] sm:$0xf] %vm349, 0
        %402 = vst.msk [vmem:[#allocation2 + $0x84] sm:$0xf] %vm349, 0
        %403 = vst.msk [vmem:[#allocation2 + $0x88] sm:$0xf] %vm349, 0
        %v404 = vld [vmem:[#allocation2 + $0x8c] sm:$0x1]
        %v405 = vsel %vm355, 0, %v404
        %406 = vst [vmem:[#allocation2 + $0x8c] sm:$0x1] %v405
        %407 = vst.msk [vmem:[#allocation2 + $0x90] sm:$0xf] %vm349, 0
        %408 = vst.msk [vmem:[#allocation2 + $0x94] sm:$0xf] %vm349, 0
        %409 = vst.msk [vmem:[#allocation2 + $0x98] sm:$0xf] %vm349, 0
        %v410 = vld [vmem:[#allocation2 + $0x9c] sm:$0x1]
        %v411 = vsel %vm355, 0, %v410
        %412 = vst [vmem:[#allocation2 + $0x9c] sm:$0x1] %v411
        %413 = vst.msk [vmem:[#allocation2 + $0xa0] sm:$0xf] %vm349, 0
        %414 = vst.msk [vmem:[#allocation2 + $0xa4] sm:$0xf] %vm349, 0
        %415 = vst.msk [vmem:[#allocation2 + $0xa8] sm:$0xf] %vm349, 0
        %v416 = vld [vmem:[#allocation2 + $0xac] sm:$0x1]
        %v417 = vsel %vm355, 0, %v416
        %418 = vst [vmem:[#allocation2 + $0xac] sm:$0x1] %v417
        %419 = vst.msk [vmem:[#allocation2 + $0xb0] sm:$0xf] %vm349, 0
        %420 = vst.msk [vmem:[#allocation2 + $0xb4] sm:$0xf] %vm349, 0
        %421 = vst.msk [vmem:[#allocation2 + $0xb8] sm:$0xf] %vm349, 0
        %v422 = vld [vmem:[#allocation2 + $0xbc] sm:$0x1]
        %v423 = vsel %vm355, 0, %v422
        %424 = vst [vmem:[#allocation2 + $0xbc] sm:$0x1] %v423
        %425 = vst.msk [vmem:[#allocation2 + $0xc0] sm:$0xf] %vm349, 0
        %426 = vst.msk [vmem:[#allocation2 + $0xc4] sm:$0xf] %vm349, 0
        %427 = vst.msk [vmem:[#allocation2 + $0xc8] sm:$0xf] %vm349, 0
        %v428 = vld [vmem:[#allocation2 + $0xcc] sm:$0x1]
        %v429 = vsel %vm355, 0, %v428
        %430 = vst [vmem:[#allocation2 + $0xcc] sm:$0x1] %v429
        %431 = vst.msk [vmem:[#allocation2 + $0xd0] sm:$0xf] %vm349, 0
        %432 = vst.msk [vmem:[#allocation2 + $0xd4] sm:$0xf] %vm349, 0
        %433 = vst.msk [vmem:[#allocation2 + $0xd8] sm:$0xf] %vm349, 0
        %v434 = vld [vmem:[#allocation2 + $0xdc] sm:$0x1]
        %v435 = vsel %vm355, 0, %v434
        %436 = vst [vmem:[#allocation2 + $0xdc] sm:$0x1] %v435
        %437 = vst.msk [vmem:[#allocation2 + $0xe0] sm:$0xf] %vm349, 0
        %438 = vst.msk [vmem:[#allocation2 + $0xe4] sm:$0xf] %vm349, 0
        %439 = vst.msk [vmem:[#allocation2 + $0xe8] sm:$0xf] %vm349, 0
        %v440 = vld [vmem:[#allocation2 + $0xec] sm:$0x1]
        %v441 = vsel %vm355, 0, %v440
        %442 = vst [vmem:[#allocation2 + $0xec] sm:$0x1] %v441
        %443 = vst.msk [vmem:[#allocation2 + $0xf0] sm:$0xf] %vm349, 0
        %444 = vst.msk [vmem:[#allocation2 + $0xf4] sm:$0xf] %vm349, 0
        %445 = vst.msk [vmem:[#allocation2 + $0xf8] sm:$0xf] %vm349, 0
        %v446 = vld [vmem:[#allocation2 + $0xfc] sm:$0x1]
        %v447 = vsel %vm355, 0, %v446
        %448 = vst [vmem:[#allocation2 + $0xfc] sm:$0x1] %v447
        %449 = vst.msk [vmem:[#allocation2 + $0x100] sm:$0xf] %vm349, 0
        %450 = vst.msk [vmem:[#allocation2 + $0x104] sm:$0xf] %vm349, 0
        %451 = vst.msk [vmem:[#allocation2 + $0x108] sm:$0xf] %vm349, 0
        %v452 = vld [vmem:[#allocation2 + $0x10c] sm:$0x1]
        %v453 = vsel %vm355, 0, %v452
        %454 = vst [vmem:[#allocation2 + $0x10c] sm:$0x1] %v453
        %455 = vst.msk [vmem:[#allocation2 + $0x110] sm:$0xf] %vm349, 0
        %456 = vst.msk [vmem:[#allocation2 + $0x114] sm:$0xf] %vm349, 0
        %457 = vst.msk [vmem:[#allocation2 + $0x118] sm:$0xf] %vm349, 0
        %v458 = vld [vmem:[#allocation2 + $0x11c] sm:$0x1]
        %v459 = vsel %vm355, 0, %v458
        %460 = vst [vmem:[#allocation2 + $0x11c] sm:$0x1] %v459
        %461 = vst.msk [vmem:[#allocation2 + $0x120] sm:$0xf] %vm349, 0
        %462 = vst.msk [vmem:[#allocation2 + $0x124] sm:$0xf] %vm349, 0
        %463 = vst.msk [vmem:[#allocation2 + $0x128] sm:$0xf] %vm349, 0
        %v464 = vld [vmem:[#allocation2 + $0x12c] sm:$0x1]
        %v465 = vsel %vm355, 0, %v464
        %466 = vst [vmem:[#allocation2 + $0x12c] sm:$0x1] %v465
        %467 = vst.msk [vmem:[#allocation2 + $0x130] sm:$0xf] %vm349, 0
        %468 = vst.msk [vmem:[#allocation2 + $0x134] sm:$0xf] %vm349, 0
        %469 = vst.msk [vmem:[#allocation2 + $0x138] sm:$0xf] %vm349, 0
        %v470 = vld [vmem:[#allocation2 + $0x13c] sm:$0x1]
        %v471 = vsel %vm355, 0, %v470
        %472 = vst [vmem:[#allocation2 + $0x13c] sm:$0x1] %v471
        %vm473 = vcmask 261120
        %474 = vst.msk [vmem:[#allocation4] sm:$0xff] %vm473, 0.0
        %475 = vst.msk [vmem:[#allocation4 + $0x8] sm:$0xff] %vm473, 0.0
        %476 = vst.msk [vmem:[#allocation4 + $0x10] sm:$0xff] %vm473, 0.0
        %477 = vst.msk [vmem:[#allocation4 + $0x18] sm:$0xff] %vm473, 0.0
        %478 = vst.msk [vmem:[#allocation4 + $0x20] sm:$0xff] %vm473, 0.0
        %479 = vst.msk [vmem:[#allocation4 + $0x28] sm:$0xff] %vm473, 0.0
        %480 = vst.msk [vmem:[#allocation4 + $0x30] sm:$0xff] %vm473, 0.0
        %481 = vst.msk [vmem:[#allocation4 + $0x38] sm:$0xff] %vm473, 0.0
        %482 = vst.msk [vmem:[#allocation4 + $0x40] sm:$0xff] %vm473, 0.0
        %483 = vst.msk [vmem:[#allocation4 + $0x48] sm:$0xff] %vm473, 0.0
        %484 = vst.msk [vmem:[#allocation4 + $0x50] sm:$0xff] %vm473, 0.0
        %485 = vst.msk [vmem:[#allocation4 + $0x58] sm:$0xff] %vm473, 0.0
        %486 = vst.msk [vmem:[#allocation4 + $0x60] sm:$0xff] %vm473, 0.0
        %487 = vst.msk [vmem:[#allocation4 + $0x68] sm:$0xff] %vm473, 0.0
        %488 = vst.msk [vmem:[#allocation4 + $0x70] sm:$0xff] %vm473, 0.0
        %489 = vst.msk [vmem:[#allocation4 + $0x78] sm:$0xff] %vm473, 0.0
        %490 = vst.msk [vmem:[#allocation5] sm:$0xf] %vm349, 0
        %491 = vst.msk [vmem:[#allocation5 + $0x4] sm:$0xf] %vm349, 0
        %492 = vst.msk [vmem:[#allocation5 + $0x8] sm:$0xf] %vm349, 0
        %v493 = vld [vmem:[#allocation5 + $0xc] sm:$0x1]
        %v494 = vsel %vm355, 0, %v493
        %495 = vst [vmem:[#allocation5 + $0xc] sm:$0x1] %v494
        %496 = vst.msk [vmem:[#allocation5 + $0x10] sm:$0xf] %vm349, 0
        %497 = vst.msk [vmem:[#allocation5 + $0x14] sm:$0xf] %vm349, 0
        %498 = vst.msk [vmem:[#allocation5 + $0x18] sm:$0xf] %vm349, 0
        %v499 = vld [vmem:[#allocation5 + $0x1c] sm:$0x1]
        %v500 = vsel %vm355, 0, %v499
        %501 = vst [vmem:[#allocation5 + $0x1c] sm:$0x1] %v500
        %502 = vst.msk [vmem:[#allocation5 + $0x20] sm:$0xf] %vm349, 0
        %503 = vst.msk [vmem:[#allocation5 + $0x24] sm:$0xf] %vm349, 0
        %504 = vst.msk [vmem:[#allocation5 + $0x28] sm:$0xf] %vm349, 0
        %v505 = vld [vmem:[#allocation5 + $0x2c] sm:$0x1]
        %v506 = vsel %vm355, 0, %v505
        %507 = vst [vmem:[#allocation5 + $0x2c] sm:$0x1] %v506
        %508 = vst.msk [vmem:[#allocation5 + $0x30] sm:$0xf] %vm349, 0
        %509 = vst.msk [vmem:[#allocation5 + $0x34] sm:$0xf] %vm349, 0
        %510 = vst.msk [vmem:[#allocation5 + $0x38] sm:$0xf] %vm349, 0
        %v511 = vld [vmem:[#allocation5 + $0x3c] sm:$0x1]
        %v512 = vsel %vm355, 0, %v511
        %513 = vst [vmem:[#allocation5 + $0x3c] sm:$0x1] %v512
        %514 = vst.msk [vmem:[#allocation5 + $0x40] sm:$0xf] %vm349, 0
        %515 = vst.msk [vmem:[#allocation5 + $0x44] sm:$0xf] %vm349, 0
        %516 = vst.msk [vmem:[#allocation5 + $0x48] sm:$0xf] %vm349, 0
        %v517 = vld [vmem:[#allocation5 + $0x4c] sm:$0x1]
        %v518 = vsel %vm355, 0, %v517
        %519 = vst [vmem:[#allocation5 + $0x4c] sm:$0x1] %v518
        %520 = vst.msk [vmem:[#allocation5 + $0x50] sm:$0xf] %vm349, 0
        %521 = vst.msk [vmem:[#allocation5 + $0x54] sm:$0xf] %vm349, 0
        %522 = vst.msk [vmem:[#allocation5 + $0x58] sm:$0xf] %vm349, 0
        %v523 = vld [vmem:[#allocation5 + $0x5c] sm:$0x1]
        %v524 = vsel %vm355, 0, %v523
        %525 = vst [vmem:[#allocation5 + $0x5c] sm:$0x1] %v524
        %526 = vst.msk [vmem:[#allocation5 + $0x60] sm:$0xf] %vm349, 0
        %527 = vst.msk [vmem:[#allocation5 + $0x64] sm:$0xf] %vm349, 0
        %528 = vst.msk [vmem:[#allocation5 + $0x68] sm:$0xf] %vm349, 0
        %v529 = vld [vmem:[#allocation5 + $0x6c] sm:$0x1]
        %v530 = vsel %vm355, 0, %v529
        %531 = vst [vmem:[#allocation5 + $0x6c] sm:$0x1] %v530
        %532 = vst.msk [vmem:[#allocation5 + $0x70] sm:$0xf] %vm349, 0
        %533 = vst.msk [vmem:[#allocation5 + $0x74] sm:$0xf] %vm349, 0
        %534 = vst.msk [vmem:[#allocation5 + $0x78] sm:$0xf] %vm349, 0
        %v535 = vld [vmem:[#allocation5 + $0x7c] sm:$0x1]
        %v536 = vsel %vm355, 0, %v535
        %537 = vst [vmem:[#allocation5 + $0x7c] sm:$0x1] %v536
        %538 = vst.msk [vmem:[#allocation5 + $0x80] sm:$0xf] %vm349, 0
        %539 = vst.msk [vmem:[#allocation5 + $0x84] sm:$0xf] %vm349, 0
        %540 = vst.msk [vmem:[#allocation5 + $0x88] sm:$0xf] %vm349, 0
        %v541 = vld [vmem:[#allocation5 + $0x8c] sm:$0x1]
        %v542 = vsel %vm355, 0, %v541
        %543 = vst [vmem:[#allocation5 + $0x8c] sm:$0x1] %v542
        %544 = vst.msk [vmem:[#allocation5 + $0x90] sm:$0xf] %vm349, 0
        %545 = vst.msk [vmem:[#allocation5 + $0x94] sm:$0xf] %vm349, 0
        %546 = vst.msk [vmem:[#allocation5 + $0x98] sm:$0xf] %vm349, 0
        %v547 = vld [vmem:[#allocation5 + $0x9c] sm:$0x1]
        %v548 = vsel %vm355, 0, %v547
        %549 = vst [vmem:[#allocation5 + $0x9c] sm:$0x1] %v548
        %550 = vst.msk [vmem:[#allocation5 + $0xa0] sm:$0xf] %vm349, 0
        %551 = vst.msk [vmem:[#allocation5 + $0xa4] sm:$0xf] %vm349, 0
        %552 = vst.msk [vmem:[#allocation5 + $0xa8] sm:$0xf] %vm349, 0
        %v553 = vld [vmem:[#allocation5 + $0xac] sm:$0x1]
        %v554 = vsel %vm355, 0, %v553
        %555 = vst [vmem:[#allocation5 + $0xac] sm:$0x1] %v554
        %556 = vst.msk [vmem:[#allocation5 + $0xb0] sm:$0xf] %vm349, 0
        %557 = vst.msk [vmem:[#allocation5 + $0xb4] sm:$0xf] %vm349, 0
        %558 = vst.msk [vmem:[#allocation5 + $0xb8] sm:$0xf] %vm349, 0
        %v559 = vld [vmem:[#allocation5 + $0xbc] sm:$0x1]
        %v560 = vsel %vm355, 0, %v559
        %561 = vst [vmem:[#allocation5 + $0xbc] sm:$0x1] %v560
        %562 = vst.msk [vmem:[#allocation5 + $0xc0] sm:$0xf] %vm349, 0
        %563 = vst.msk [vmem:[#allocation5 + $0xc4] sm:$0xf] %vm349, 0
        %564 = vst.msk [vmem:[#allocation5 + $0xc8] sm:$0xf] %vm349, 0
        %v565 = vld [vmem:[#allocation5 + $0xcc] sm:$0x1]
        %v566 = vsel %vm355, 0, %v565
        %567 = vst [vmem:[#allocation5 + $0xcc] sm:$0x1] %v566
        %568 = vst.msk [vmem:[#allocation5 + $0xd0] sm:$0xf] %vm349, 0
        %569 = vst.msk [vmem:[#allocation5 + $0xd4] sm:$0xf] %vm349, 0
        %570 = vst.msk [vmem:[#allocation5 + $0xd8] sm:$0xf] %vm349, 0
        %v571 = vld [vmem:[#allocation5 + $0xdc] sm:$0x1]
        %v572 = vsel %vm355, 0, %v571
        %573 = vst [vmem:[#allocation5 + $0xdc] sm:$0x1] %v572
        %574 = vst.msk [vmem:[#allocation5 + $0xe0] sm:$0xf] %vm349, 0
        %575 = vst.msk [vmem:[#allocation5 + $0xe4] sm:$0xf] %vm349, 0
        %576 = vst.msk [vmem:[#allocation5 + $0xe8] sm:$0xf] %vm349, 0
        %v577 = vld [vmem:[#allocation5 + $0xec] sm:$0x1]
        %v578 = vsel %vm355, 0, %v577
        %579 = vst [vmem:[#allocation5 + $0xec] sm:$0x1] %v578
        %580 = vst.msk [vmem:[#allocation5 + $0xf0] sm:$0xf] %vm349, 0
        %581 = vst.msk [vmem:[#allocation5 + $0xf4] sm:$0xf] %vm349, 0
        %582 = vst.msk [vmem:[#allocation5 + $0xf8] sm:$0xf] %vm349, 0
        %v583 = vld [vmem:[#allocation5 + $0xfc] sm:$0x1]
        %v584 = vsel %vm355, 0, %v583
        %585 = vst [vmem:[#allocation5 + $0xfc] sm:$0x1] %v584
        %586 = vst.msk [vmem:[#allocation5 + $0x100] sm:$0xf] %vm349, 0
        %587 = vst.msk [vmem:[#allocation5 + $0x104] sm:$0xf] %vm349, 0
        %588 = vst.msk [vmem:[#allocation5 + $0x108] sm:$0xf] %vm349, 0
        %v589 = vld [vmem:[#allocation5 + $0x10c] sm:$0x1]
        %v590 = vsel %vm355, 0, %v589
        %591 = vst [vmem:[#allocation5 + $0x10c] sm:$0x1] %v590
        %592 = vst.msk [vmem:[#allocation5 + $0x110] sm:$0xf] %vm349, 0
        %593 = vst.msk [vmem:[#allocation5 + $0x114] sm:$0xf] %vm349, 0
        %594 = vst.msk [vmem:[#allocation5 + $0x118] sm:$0xf] %vm349, 0
        %v595 = vld [vmem:[#allocation5 + $0x11c] sm:$0x1]
        %v596 = vsel %vm355, 0, %v595
        %597 = vst [vmem:[#allocation5 + $0x11c] sm:$0x1] %v596
        %598 = vst.msk [vmem:[#allocation5 + $0x120] sm:$0xf] %vm349, 0
        %599 = vst.msk [vmem:[#allocation5 + $0x124] sm:$0xf] %vm349, 0
        %600 = vst.msk [vmem:[#allocation5 + $0x128] sm:$0xf] %vm349, 0
        %v601 = vld [vmem:[#allocation5 + $0x12c] sm:$0x1]
        %v602 = vsel %vm355, 0, %v601
        %603 = vst [vmem:[#allocation5 + $0x12c] sm:$0x1] %v602
        %604 = vst.msk [vmem:[#allocation5 + $0x130] sm:$0xf] %vm349, 0
        %605 = vst.msk [vmem:[#allocation5 + $0x134] sm:$0xf] %vm349, 0
        %606 = vst.msk [vmem:[#allocation5 + $0x138] sm:$0xf] %vm349, 0
        %v607 = vld [vmem:[#allocation5 + $0x13c] sm:$0x1]
        %v608 = vsel %vm355, 0, %v607
        %609 = vst [vmem:[#allocation5 + $0x13c] sm:$0x1] %v608
        %610 = vst.msk [vmem:[#allocation7] sm:$0xff] %vm473, 0.0
        %611 = vst.msk [vmem:[#allocation7 + $0x8] sm:$0xff] %vm473, 0.0
        %612 = vst.msk [vmem:[#allocation7 + $0x10] sm:$0xff] %vm473, 0.0
        %613 = vst.msk [vmem:[#allocation7 + $0x18] sm:$0xff] %vm473, 0.0
        %614 = vst.msk [vmem:[#allocation7 + $0x20] sm:$0xff] %vm473, 0.0
        %615 = vst.msk [vmem:[#allocation7 + $0x28] sm:$0xff] %vm473, 0.0
        %616 = vst.msk [vmem:[#allocation7 + $0x30] sm:$0xff] %vm473, 0.0
        %617 = vst.msk [vmem:[#allocation7 + $0x38] sm:$0xff] %vm473, 0.0
        %618 = vst.msk [vmem:[#allocation7 + $0x40] sm:$0xff] %vm473, 0.0
        %619 = vst.msk [vmem:[#allocation7 + $0x48] sm:$0xff] %vm473, 0.0
        %620 = vst.msk [vmem:[#allocation7 + $0x50] sm:$0xff] %vm473, 0.0
        %621 = vst.msk [vmem:[#allocation7 + $0x58] sm:$0xff] %vm473, 0.0
        %622 = vst.msk [vmem:[#allocation7 + $0x60] sm:$0xff] %vm473, 0.0
        %623 = vst.msk [vmem:[#allocation7 + $0x68] sm:$0xff] %vm473, 0.0
        %624 = vst.msk [vmem:[#allocation7 + $0x70] sm:$0xff] %vm473, 0.0
        %625 = vst.msk [vmem:[#allocation7 + $0x78] sm:$0xff] %vm473, 0.0
      $region52: #{rnn_convlstm_forward.1} parent=47 // pred_fallthru
        _
      %p626 = scmp.le.s32.totalorder %s23, 5
      // Predicated region
      $region53: #{rnn_convlstm_forward.1} parent=47 // pred_check
        %p627 = pneg %p626
      $region54: #{rnn_convlstm_forward.1} parent=47 // pred_check_branch
        %629 = sbr.rel (%p627) target = $region56
      $region55: #{rnn_convlstm_forward.1} parent=47 // pred_region
        %v630 = vld [vmem:[%s324] sm:$0xf]
        %v631 = vld [vmem:[%s324 + $0x4] sm:$0xf]
        %v632 = vld [vmem:[%s324 + $0x8] sm:$0xf]
        %v633 = vld [vmem:[%s324 + $0xc] sm:$0xf]
        %v634 = vld [vmem:[%s324 + $0x10] sm:$0xf]
        %v635 = vld [vmem:[%s324 + $0x14] sm:$0xf]
        %v636 = vld [vmem:[%s324 + $0x18] sm:$0xf]
        %v637 = vld [vmem:[%s324 + $0x1c] sm:$0xf]
        %v638 = vld [vmem:[%s324 + $0x20] sm:$0xf]
        %v639 = vld [vmem:[%s324 + $0x24] sm:$0xf]
        %v640 = vld [vmem:[%s324 + $0x28] sm:$0xf]
        %v641 = vld [vmem:[%s324 + $0x2c] sm:$0xf]
        %v642 = vld [vmem:[%s324 + $0x30] sm:$0xf]
        %v643 = vld [vmem:[%s324 + $0x34] sm:$0xf]
        %v644 = vld [vmem:[%s324 + $0x38] sm:$0xf]
        %v645 = vld [vmem:[%s324 + $0x3c] sm:$0xf]
        %662 = vrot.lane.b32.xlu0 %v630, 32
        %v663 = vpop.permute.xlu0 %662
        %664 = vrot.lane.b32.xlu0 %v631, 32
        %v665 = vpop.permute.xlu0 %664
        %666 = vrot.lane.b32.xlu0 %v632, 32
        %v667 = vpop.permute.xlu0 %666
        %668 = vrot.lane.b32.xlu0 %v633, 32
        %v669 = vpop.permute.xlu0 %668
        %670 = vrot.lane.b32.xlu0 %v634, 32
        %v671 = vpop.permute.xlu0 %670
        %672 = vrot.lane.b32.xlu0 %v635, 32
        %v673 = vpop.permute.xlu0 %672
        %674 = vrot.lane.b32.xlu0 %v636, 32
        %v675 = vpop.permute.xlu0 %674
        %676 = vrot.lane.b32.xlu0 %v637, 32
        %v677 = vpop.permute.xlu0 %676
        %678 = vrot.lane.b32.xlu0 %v638, 32
        %v679 = vpop.permute.xlu0 %678
        %680 = vrot.lane.b32.xlu0 %v639, 32
        %v681 = vpop.permute.xlu0 %680
        %682 = vrot.lane.b32.xlu0 %v640, 32
        %v683 = vpop.permute.xlu0 %682
        %684 = vrot.lane.b32.xlu0 %v641, 32
        %v685 = vpop.permute.xlu0 %684
        %686 = vrot.lane.b32.xlu0 %v642, 32
        %v687 = vpop.permute.xlu0 %686
        %688 = vrot.lane.b32.xlu0 %v643, 32
        %v689 = vpop.permute.xlu0 %688
        %690 = vrot.lane.b32.xlu0 %v644, 32
        %v691 = vpop.permute.xlu0 %690
        %692 = vrot.lane.b32.xlu0 %v645, 32
        %v693 = vpop.permute.xlu0 %692
        %s710 = scalar_lea.vmem [#allocation2], 16
        %vm711 = vcmask 388352
        %712 = vst.msk [vmem:[%s710 + $0x8] sm:$0xf] %vm711, %v663
        %713 = vst.msk [vmem:[%s710 + $0x18] sm:$0xf] %vm711, %v665
        %714 = vst.msk [vmem:[%s710 + $0x28] sm:$0xf] %vm711, %v667
        %715 = vst.msk [vmem:[%s710 + $0x38] sm:$0xf] %vm711, %v669
        %716 = vst.msk [vmem:[%s710 + $0x48] sm:$0xf] %vm711, %v671
        %717 = vst.msk [vmem:[%s710 + $0x58] sm:$0xf] %vm711, %v673
        %718 = vst.msk [vmem:[%s710 + $0x68] sm:$0xf] %vm711, %v675
        %719 = vst.msk [vmem:[%s710 + $0x78] sm:$0xf] %vm711, %v677
        %720 = vst.msk [vmem:[%s710 + $0xa8] sm:$0xf] %vm711, %v679
        %721 = vst.msk [vmem:[%s710 + $0xb8] sm:$0xf] %vm711, %v681
        %722 = vst.msk [vmem:[%s710 + $0xc8] sm:$0xf] %vm711, %v683
        %723 = vst.msk [vmem:[%s710 + $0xd8] sm:$0xf] %vm711, %v685
        %724 = vst.msk [vmem:[%s710 + $0xe8] sm:$0xf] %vm711, %v687
        %725 = vst.msk [vmem:[%s710 + $0xf8] sm:$0xf] %vm711, %v689
        %726 = vst.msk [vmem:[%s710 + $0x108] sm:$0xf] %vm711, %v691
        %727 = vst.msk [vmem:[%s710 + $0x118] sm:$0xf] %vm711, %v693
      $region56: #{rnn_convlstm_forward.1} parent=47 // pred_fallthru
        _
      %v728 = vld [vmem:[#allocation2 + $0x4] sm:$0x8]
      %v729 = vld [vmem:[#allocation2 + $0x8] sm:$0xf]
      %v730 = vld [vmem:[#allocation2 + $0x14] sm:$0x8]
      %v731 = vld [vmem:[#allocation2 + $0x18] sm:$0xf]
      %v732 = vld [vmem:[#allocation2 + $0x24] sm:$0x8]
      %v733 = vld [vmem:[#allocation2 + $0x28] sm:$0xf]
      %v734 = vld [vmem:[#allocation2 + $0x34] sm:$0x8]
      %v735 = vld [vmem:[#allocation2 + $0x38] sm:$0xf]
      %v736 = vld [vmem:[#allocation2 + $0x44] sm:$0x8]
      %v737 = vld [vmem:[#allocation2 + $0x48] sm:$0xf]
      %v738 = vld [vmem:[#allocation2 + $0x54] sm:$0x8]
      %v739 = vld [vmem:[#allocation2 + $0x58] sm:$0xf]
      %v740 = vld [vmem:[#allocation2 + $0x64] sm:$0x8]
      %v741 = vld [vmem:[#allocation2 + $0x68] sm:$0xf]
      %v742 = vld [vmem:[#allocation2 + $0x74] sm:$0x8]
      %v743 = vld [vmem:[#allocation2 + $0x78] sm:$0xf]
      %v744 = vld [vmem:[#allocation2 + $0xa4] sm:$0x8]
      %v745 = vld [vmem:[#allocation2 + $0xa8] sm:$0xf]
      %v746 = vld [vmem:[#allocation2 + $0xb4] sm:$0x8]
      %v747 = vld [vmem:[#allocation2 + $0xb8] sm:$0xf]
      %v748 = vld [vmem:[#allocation2 + $0xc4] sm:$0x8]
      %v749 = vld [vmem:[#allocation2 + $0xc8] sm:$0xf]
      %v750 = vld [vmem:[#allocation2 + $0xd4] sm:$0x8]
      %v751 = vld [vmem:[#allocation2 + $0xd8] sm:$0xf]
      %v752 = vld [vmem:[#allocation2 + $0xe4] sm:$0x8]
      %v753 = vld [vmem:[#allocation2 + $0xe8] sm:$0xf]
      %v754 = vld [vmem:[#allocation2 + $0xf4] sm:$0x8]
      %v755 = vld [vmem:[#allocation2 + $0xf8] sm:$0xf]
      %v756 = vld [vmem:[#allocation2 + $0x104] sm:$0x8]
      %v757 = vld [vmem:[#allocation2 + $0x108] sm:$0xf]
      %v758 = vld [vmem:[#allocation2 + $0x114] sm:$0x8]
      %v759 = vld [vmem:[#allocation2 + $0x118] sm:$0xf]
      %vm760 = vsmask.f32 256
      %vm761 = vsmask.f32 4368
      %vm762 = vmor %vm760, %vm761
      %v764 = vshrl.u32 %v728, 16
      %v766 = vrot.slane %v764, 7
      %v767 = vrot.slane %v766, 4
      %v769 = vshrl.u32 %v729, 16
      %v771 = vrot.slane %v769, 7
      %v772 = vshll.u32 %v729, 16
      %v774 = vor.u32 %v771, %v772
      %v775 = vsel %vm762, %v767, %v774
      %v777 = vshrl.u32 %v730, 16
      %v779 = vrot.slane %v777, 7
      %v780 = vrot.slane %v779, 4
      %v782 = vshrl.u32 %v731, 16
      %v784 = vrot.slane %v782, 7
      %v785 = vshll.u32 %v731, 16
      %v787 = vor.u32 %v784, %v785
      %v788 = vsel %vm762, %v780, %v787
      %v790 = vshrl.u32 %v732, 16
      %v792 = vrot.slane %v790, 7
      %v793 = vrot.slane %v792, 4
      %v795 = vshrl.u32 %v733, 16
      %v797 = vrot.slane %v795, 7
      %v798 = vshll.u32 %v733, 16
      %v800 = vor.u32 %v797, %v798
      %v801 = vsel %vm762, %v793, %v800
      %v803 = vshrl.u32 %v734, 16
      %v805 = vrot.slane %v803, 7
      %v806 = vrot.slane %v805, 4
      %v808 = vshrl.u32 %v735, 16
      %v810 = vrot.slane %v808, 7
      %v811 = vshll.u32 %v735, 16
      %v813 = vor.u32 %v810, %v811
      %v814 = vsel %vm762, %v806, %v813
      %v816 = vshrl.u32 %v736, 16
      %v818 = vrot.slane %v816, 7
      %v819 = vrot.slane %v818, 4
      %v821 = vshrl.u32 %v737, 16
      %v823 = vrot.slane %v821, 7
      %v824 = vshll.u32 %v737, 16
      %v826 = vor.u32 %v823, %v824
      %v827 = vsel %vm762, %v819, %v826
      %v829 = vshrl.u32 %v738, 16
      %v831 = vrot.slane %v829, 7
      %v832 = vrot.slane %v831, 4
      %v834 = vshrl.u32 %v739, 16
      %v836 = vrot.slane %v834, 7
      %v837 = vshll.u32 %v739, 16
      %v839 = vor.u32 %v836, %v837
      %v840 = vsel %vm762, %v832, %v839
      %v842 = vshrl.u32 %v740, 16
      %v844 = vrot.slane %v842, 7
      %v845 = vrot.slane %v844, 4
      %v847 = vshrl.u32 %v741, 16
      %v849 = vrot.slane %v847, 7
      %v850 = vshll.u32 %v741, 16
      %v852 = vor.u32 %v849, %v850
      %v853 = vsel %vm762, %v845, %v852
      %v855 = vshrl.u32 %v742, 16
      %v857 = vrot.slane %v855, 7
      %v858 = vrot.slane %v857, 4
      %v860 = vshrl.u32 %v743, 16
      %v862 = vrot.slane %v860, 7
      %v863 = vshll.u32 %v743, 16
      %v865 = vor.u32 %v862, %v863
      %v866 = vsel %vm762, %v858, %v865
      %v868 = vshrl.u32 %v744, 16
      %v870 = vrot.slane %v868, 7
      %v871 = vrot.slane %v870, 4
      %v873 = vshrl.u32 %v745, 16
      %v875 = vrot.slane %v873, 7
      %v876 = vshll.u32 %v745, 16
      %v878 = vor.u32 %v875, %v876
      %v879 = vsel %vm762, %v871, %v878
      %v881 = vshrl.u32 %v746, 16
      %v883 = vrot.slane %v881, 7
      %v884 = vrot.slane %v883, 4
      %v886 = vshrl.u32 %v747, 16
      %v888 = vrot.slane %v886, 7
      %v889 = vshll.u32 %v747, 16
      %v891 = vor.u32 %v888, %v889
      %v892 = vsel %vm762, %v884, %v891
      %v894 = vshrl.u32 %v748, 16
      %v896 = vrot.slane %v894, 7
      %v897 = vrot.slane %v896, 4
      %v899 = vshrl.u32 %v749, 16
      %v901 = vrot.slane %v899, 7
      %v902 = vshll.u32 %v749, 16
      %v904 = vor.u32 %v901, %v902
      %v905 = vsel %vm762, %v897, %v904
      %v907 = vshrl.u32 %v750, 16
      %v909 = vrot.slane %v907, 7
      %v910 = vrot.slane %v909, 4
      %v912 = vshrl.u32 %v751, 16
      %v914 = vrot.slane %v912, 7
      %v915 = vshll.u32 %v751, 16
      %v917 = vor.u32 %v914, %v915
      %v918 = vsel %vm762, %v910, %v917
      %v920 = vshrl.u32 %v752, 16
      %v922 = vrot.slane %v920, 7
      %v923 = vrot.slane %v922, 4
      %v925 = vshrl.u32 %v753, 16
      %v927 = vrot.slane %v925, 7
      %v928 = vshll.u32 %v753, 16
      %v930 = vor.u32 %v927, %v928
      %v931 = vsel %vm762, %v923, %v930
      %v933 = vshrl.u32 %v754, 16
      %v935 = vrot.slane %v933, 7
      %v936 = vrot.slane %v935, 4
      %v938 = vshrl.u32 %v755, 16
      %v940 = vrot.slane %v938, 7
      %v941 = vshll.u32 %v755, 16
      %v943 = vor.u32 %v940, %v941
      %v944 = vsel %vm762, %v936, %v943
      %v946 = vshrl.u32 %v756, 16
      %v948 = vrot.slane %v946, 7
      %v949 = vrot.slane %v948, 4
      %v951 = vshrl.u32 %v757, 16
      %v953 = vrot.slane %v951, 7
      %v954 = vshll.u32 %v757, 16
      %v956 = vor.u32 %v953, %v954
      %v957 = vsel %vm762, %v949, %v956
      %v959 = vshrl.u32 %v758, 16
      %v961 = vrot.slane %v959, 7
      %v962 = vrot.slane %v961, 4
      %v964 = vshrl.u32 %v759, 16
      %v966 = vrot.slane %v964, 7
      %v967 = vshll.u32 %v759, 16
      %v969 = vor.u32 %v966, %v967
      %v970 = vsel %vm762, %v962, %v969
      %vm987 = vcmask 519168
      %988 = vst.msk [vmem:[#allocation3] sm:$0xf] %vm987, %v775
      %989 = vst.msk [vmem:[#allocation3 + $0x14] sm:$0xf] %vm987, %v788
      %990 = vst.msk [vmem:[#allocation3 + $0x28] sm:$0xf] %vm987, %v801
      %991 = vst.msk [vmem:[#allocation3 + $0x3c] sm:$0xf] %vm987, %v814
      %992 = vst.msk [vmem:[#allocation3 + $0x50] sm:$0xf] %vm987, %v827
      %993 = vst.msk [vmem:[#allocation3 + $0x64] sm:$0xf] %vm987, %v840
      %994 = vst.msk [vmem:[#allocation3 + $0x78] sm:$0xf] %vm987, %v853
      %995 = vst.msk [vmem:[#allocation3 + $0x8c] sm:$0xf] %vm987, %v866
      %996 = vst.msk [vmem:[#allocation3 + $0xa0] sm:$0xf] %vm987, %v879
      %997 = vst.msk [vmem:[#allocation3 + $0xb4] sm:$0xf] %vm987, %v892
      %998 = vst.msk [vmem:[#allocation3 + $0xc8] sm:$0xf] %vm987, %v905
      %999 = vst.msk [vmem:[#allocation3 + $0xdc] sm:$0xf] %vm987, %v918
      %1000 = vst.msk [vmem:[#allocation3 + $0xf0] sm:$0xf] %vm987, %v931
      %1001 = vst.msk [vmem:[#allocation3 + $0x104] sm:$0xf] %vm987, %v944
      %1002 = vst.msk [vmem:[#allocation3 + $0x118] sm:$0xf] %vm987, %v957
      %1003 = vst.msk [vmem:[#allocation3 + $0x12c] sm:$0xf] %vm987, %v970
      %v1004 = vld [vmem:[#allocation2 + $0x8] sm:$0xf]
      %v1005 = vld [vmem:[#allocation2 + $0x18] sm:$0xf]
      %v1006 = vld [vmem:[#allocation2 + $0x28] sm:$0xf]
      %v1007 = vld [vmem:[#allocation2 + $0x38] sm:$0xf]
      %v1008 = vld [vmem:[#allocation2 + $0x48] sm:$0xf]
      %v1009 = vld [vmem:[#allocation2 + $0x58] sm:$0xf]
      %v1010 = vld [vmem:[#allocation2 + $0x68] sm:$0xf]
      %v1011 = vld [vmem:[#allocation2 + $0x78] sm:$0xf]
      %v1012 = vld [vmem:[#allocation2 + $0xa8] sm:$0xf]
      %v1013 = vld [vmem:[#allocation2 + $0xb8] sm:$0xf]
      %v1014 = vld [vmem:[#allocation2 + $0xc8] sm:$0xf]
      %v1015 = vld [vmem:[#allocation2 + $0xd8] sm:$0xf]
      %v1016 = vld [vmem:[#allocation2 + $0xe8] sm:$0xf]
      %v1017 = vld [vmem:[#allocation2 + $0xf8] sm:$0xf]
      %v1018 = vld [vmem:[#allocation2 + $0x108] sm:$0xf]
      %v1019 = vld [vmem:[#allocation2 + $0x118] sm:$0xf]
      %1036 = vrot.lane.b32.xlu0 %v1004, 64
      %v1037 = vpop.permute.xlu0 %1036
      %1038 = vrot.lane.b32.xlu0 %v1005, 64
      %v1039 = vpop.permute.xlu0 %1038
      %1040 = vrot.lane.b32.xlu0 %v1006, 64
      %v1041 = vpop.permute.xlu0 %1040
      %1042 = vrot.lane.b32.xlu0 %v1007, 64
      %v1043 = vpop.permute.xlu0 %1042
      %1044 = vrot.lane.b32.xlu0 %v1008, 64
      %v1045 = vpop.permute.xlu0 %1044
      %1046 = vrot.lane.b32.xlu0 %v1009, 64
      %v1047 = vpop.permute.xlu0 %1046
      %1048 = vrot.lane.b32.xlu0 %v1010, 64
      %v1049 = vpop.permute.xlu0 %1048
      %1050 = vrot.lane.b32.xlu0 %v1011, 64
      %v1051 = vpop.permute.xlu0 %1050
      %1052 = vrot.lane.b32.xlu0 %v1012, 64
      %v1053 = vpop.permute.xlu0 %1052
      %1054 = vrot.lane.b32.xlu0 %v1013, 64
      %v1055 = vpop.permute.xlu0 %1054
      %1056 = vrot.lane.b32.xlu0 %v1014, 64
      %v1057 = vpop.permute.xlu0 %1056
      %1058 = vrot.lane.b32.xlu0 %v1015, 64
      %v1059 = vpop.permute.xlu0 %1058
      %1060 = vrot.lane.b32.xlu0 %v1016, 64
      %v1061 = vpop.permute.xlu0 %1060
      %1062 = vrot.lane.b32.xlu0 %v1017, 64
      %v1063 = vpop.permute.xlu0 %1062
      %1064 = vrot.lane.b32.xlu0 %v1018, 64
      %v1065 = vpop.permute.xlu0 %1064
      %1066 = vrot.lane.b32.xlu0 %v1019, 64
      %v1067 = vpop.permute.xlu0 %1066
      %vm1084 = vcmask 1043968
      %1085 = vst.msk [vmem:[#allocation3] sm:$0xf] %vm1084, %v1037
      %1086 = vst.msk [vmem:[#allocation3 + $0x14] sm:$0xf] %vm1084, %v1039
      %1087 = vst.msk [vmem:[#allocation3 + $0x28] sm:$0xf] %vm1084, %v1041
      %1088 = vst.msk [vmem:[#allocation3 + $0x3c] sm:$0xf] %vm1084, %v1043
      %1089 = vst.msk [vmem:[#allocation3 + $0x50] sm:$0xf] %vm1084, %v1045
      %1090 = vst.msk [vmem:[#allocation3 + $0x64] sm:$0xf] %vm1084, %v1047
      %1091 = vst.msk [vmem:[#allocation3 + $0x78] sm:$0xf] %vm1084, %v1049
      %1092 = vst.msk [vmem:[#allocation3 + $0x8c] sm:$0xf] %vm1084, %v1051
      %1093 = vst.msk [vmem:[#allocation3 + $0xa0] sm:$0xf] %vm1084, %v1053
      %1094 = vst.msk [vmem:[#allocation3 + $0xb4] sm:$0xf] %vm1084, %v1055
      %1095 = vst.msk [vmem:[#allocation3 + $0xc8] sm:$0xf] %vm1084, %v1057
      %1096 = vst.msk [vmem:[#allocation3 + $0xdc] sm:$0xf] %vm1084, %v1059
      %1097 = vst.msk [vmem:[#allocation3 + $0xf0] sm:$0xf] %vm1084, %v1061
      %1098 = vst.msk [vmem:[#allocation3 + $0x104] sm:$0xf] %vm1084, %v1063
      %1099 = vst.msk [vmem:[#allocation3 + $0x118] sm:$0xf] %vm1084, %v1065
      %1100 = vst.msk [vmem:[#allocation3 + $0x12c] sm:$0xf] %vm1084, %v1067
      %v1101 = vld [vmem:[#allocation2 + $0x8] sm:$0xf]
      %v1102 = vld [vmem:[#allocation2 + $0xc] sm:$0x1]
      %v1103 = vld [vmem:[#allocation2 + $0x18] sm:$0xf]
      %v1104 = vld [vmem:[#allocation2 + $0x1c] sm:$0x1]
      %v1105 = vld [vmem:[#allocation2 + $0x28] sm:$0xf]
      %v1106 = vld [vmem:[#allocation2 + $0x2c] sm:$0x1]
      %v1107 = vld [vmem:[#allocation2 + $0x38] sm:$0xf]
      %v1108 = vld [vmem:[#allocation2 + $0x3c] sm:$0x1]
      %v1109 = vld [vmem:[#allocation2 + $0x48] sm:$0xf]
      %v1110 = vld [vmem:[#allocation2 + $0x4c] sm:$0x1]
      %v1111 = vld [vmem:[#allocation2 + $0x58] sm:$0xf]
      %v1112 = vld [vmem:[#allocation2 + $0x5c] sm:$0x1]
      %v1113 = vld [vmem:[#allocation2 + $0x68] sm:$0xf]
      %v1114 = vld [vmem:[#allocation2 + $0x6c] sm:$0x1]
      %v1115 = vld [vmem:[#allocation2 + $0x78] sm:$0xf]
      %v1116 = vld [vmem:[#allocation2 + $0x7c] sm:$0x1]
      %v1117 = vld [vmem:[#allocation2 + $0xa8] sm:$0xf]
      %v1118 = vld [vmem:[#allocation2 + $0xac] sm:$0x1]
      %v1119 = vld [vmem:[#allocation2 + $0xb8] sm:$0xf]
      %v1120 = vld [vmem:[#allocation2 + $0xbc] sm:$0x1]
      %v1121 = vld [vmem:[#allocation2 + $0xc8] sm:$0xf]
      %v1122 = vld [vmem:[#allocation2 + $0xcc] sm:$0x1]
      %v1123 = vld [vmem:[#allocation2 + $0xd8] sm:$0xf]
      %v1124 = vld [vmem:[#allocation2 + $0xdc] sm:$0x1]
      %v1125 = vld [vmem:[#allocation2 + $0xe8] sm:$0xf]
      %v1126 = vld [vmem:[#allocation2 + $0xec] sm:$0x1]
      %v1127 = vld [vmem:[#allocation2 + $0xf8] sm:$0xf]
      %v1128 = vld [vmem:[#allocation2 + $0xfc] sm:$0x1]
      %v1129 = vld [vmem:[#allocation2 + $0x108] sm:$0xf]
      %v1130 = vld [vmem:[#allocation2 + $0x10c] sm:$0x1]
      %v1131 = vld [vmem:[#allocation2 + $0x118] sm:$0xf]
      %v1132 = vld [vmem:[#allocation2 + $0x11c] sm:$0x1]
      %vm1133 = vsmask.f32 3328
      %vm1134 = vsmask.f32 7440
      %vm1135 = vmor %vm1133, %vm1134
      %v1137 = vshrl.u32 %v1101, 16
      %v1139 = vrot.slane %v1137, 4
      %v1140 = vshll.u32 %v1101, 16
      %v1142 = vrot.slane %v1140, 5
      %v1143 = vor.u32 %v1139, %v1142
      %v1144 = vrot.slane %v1143, 4
      %v1146 = vshll.u32 %v1102, 16
      %v1148 = vrot.slane %v1146, 5
      %v1149 = vsel %vm1135, %v1144, %v1148
      %v1151 = vshrl.u32 %v1103, 16
      %v1153 = vrot.slane %v1151, 4
      %v1154 = vshll.u32 %v1103, 16
      %v1156 = vrot.slane %v1154, 5
      %v1157 = vor.u32 %v1153, %v1156
      %v1158 = vrot.slane %v1157, 4
      %v1160 = vshll.u32 %v1104, 16
      %v1162 = vrot.slane %v1160, 5
      %v1163 = vsel %vm1135, %v1158, %v1162
      %v1165 = vshrl.u32 %v1105, 16
      %v1167 = vrot.slane %v1165, 4
      %v1168 = vshll.u32 %v1105, 16
      %v1170 = vrot.slane %v1168, 5
      %v1171 = vor.u32 %v1167, %v1170
      %v1172 = vrot.slane %v1171, 4
      %v1174 = vshll.u32 %v1106, 16
      %v1176 = vrot.slane %v1174, 5
      %v1177 = vsel %vm1135, %v1172, %v1176
      %v1179 = vshrl.u32 %v1107, 16
      %v1181 = vrot.slane %v1179, 4
      %v1182 = vshll.u32 %v1107, 16
      %v1184 = vrot.slane %v1182, 5
      %v1185 = vor.u32 %v1181, %v1184
      %v1186 = vrot.slane %v1185, 4
      %v1188 = vshll.u32 %v1108, 16
      %v1190 = vrot.slane %v1188, 5
      %v1191 = vsel %vm1135, %v1186, %v1190
      %v1193 = vshrl.u32 %v1109, 16
      %v1195 = vrot.slane %v1193, 4
      %v1196 = vshll.u32 %v1109, 16
      %v1198 = vrot.slane %v1196, 5
      %v1199 = vor.u32 %v1195, %v1198
      %v1200 = vrot.slane %v1199, 4
      %v1202 = vshll.u32 %v1110, 16
      %v1204 = vrot.slane %v1202, 5
      %v1205 = vsel %vm1135, %v1200, %v1204
      %v1207 = vshrl.u32 %v1111, 16
      %v1209 = vrot.slane %v1207, 4
      %v1210 = vshll.u32 %v1111, 16
      %v1212 = vrot.slane %v1210, 5
      %v1213 = vor.u32 %v1209, %v1212
      %v1214 = vrot.slane %v1213, 4
      %v1216 = vshll.u32 %v1112, 16
      %v1218 = vrot.slane %v1216, 5
      %v1219 = vsel %vm1135, %v1214, %v1218
      %v1221 = vshrl.u32 %v1113, 16
      %v1223 = vrot.slane %v1221, 4
      %v1224 = vshll.u32 %v1113, 16
      %v1226 = vrot.slane %v1224, 5
      %v1227 = vor.u32 %v1223, %v1226
      %v1228 = vrot.slane %v1227, 4
      %v1230 = vshll.u32 %v1114, 16
      %v1232 = vrot.slane %v1230, 5
      %v1233 = vsel %vm1135, %v1228, %v1232
      %v1235 = vshrl.u32 %v1115, 16
      %v1237 = vrot.slane %v1235, 4
      %v1238 = vshll.u32 %v1115, 16
      %v1240 = vrot.slane %v1238, 5
      %v1241 = vor.u32 %v1237, %v1240
      %v1242 = vrot.slane %v1241, 4
      %v1244 = vshll.u32 %v1116, 16
      %v1246 = vrot.slane %v1244, 5
      %v1247 = vsel %vm1135, %v1242, %v1246
      %v1249 = vshrl.u32 %v1117, 16
      %v1251 = vrot.slane %v1249, 4
      %v1252 = vshll.u32 %v1117, 16
      %v1254 = vrot.slane %v1252, 5
      %v1255 = vor.u32 %v1251, %v1254
      %v1256 = vrot.slane %v1255, 4
      %v1258 = vshll.u32 %v1118, 16
      %v1260 = vrot.slane %v1258, 5
      %v1261 = vsel %vm1135, %v1256, %v1260
      %v1263 = vshrl.u32 %v1119, 16
      %v1265 = vrot.slane %v1263, 4
      %v1266 = vshll.u32 %v1119, 16
      %v1268 = vrot.slane %v1266, 5
      %v1269 = vor.u32 %v1265, %v1268
      %v1270 = vrot.slane %v1269, 4
      %v1272 = vshll.u32 %v1120, 16
      %v1274 = vrot.slane %v1272, 5
      %v1275 = vsel %vm1135, %v1270, %v1274
      %v1277 = vshrl.u32 %v1121, 16
      %v1279 = vrot.slane %v1277, 4
      %v1280 = vshll.u32 %v1121, 16
      %v1282 = vrot.slane %v1280, 5
      %v1283 = vor.u32 %v1279, %v1282
      %v1284 = vrot.slane %v1283, 4
      %v1286 = vshll.u32 %v1122, 16
      %v1288 = vrot.slane %v1286, 5
      %v1289 = vsel %vm1135, %v1284, %v1288
      %v1291 = vshrl.u32 %v1123, 16
      %v1293 = vrot.slane %v1291, 4
      %v1294 = vshll.u32 %v1123, 16
      %v1296 = vrot.slane %v1294, 5
      %v1297 = vor.u32 %v1293, %v1296
      %v1298 = vrot.slane %v1297, 4
      %v1300 = vshll.u32 %v1124, 16
      %v1302 = vrot.slane %v1300, 5
      %v1303 = vsel %vm1135, %v1298, %v1302
      %v1305 = vshrl.u32 %v1125, 16
      %v1307 = vrot.slane %v1305, 4
      %v1308 = vshll.u32 %v1125, 16
      %v1310 = vrot.slane %v1308, 5
      %v1311 = vor.u32 %v1307, %v1310
      %v1312 = vrot.slane %v1311, 4
      %v1314 = vshll.u32 %v1126, 16
      %v1316 = vrot.slane %v1314, 5
      %v1317 = vsel %vm1135, %v1312, %v1316
      %v1319 = vshrl.u32 %v1127, 16
      %v1321 = vrot.slane %v1319, 4
      %v1322 = vshll.u32 %v1127, 16
      %v1324 = vrot.slane %v1322, 5
      %v1325 = vor.u32 %v1321, %v1324
      %v1326 = vrot.slane %v1325, 4
      %v1328 = vshll.u32 %v1128, 16
      %v1330 = vrot.slane %v1328, 5
      %v1331 = vsel %vm1135, %v1326, %v1330
      %v1333 = vshrl.u32 %v1129, 16
      %v1335 = vrot.slane %v1333, 4
      %v1336 = vshll.u32 %v1129, 16
      %v1338 = vrot.slane %v1336, 5
      %v1339 = vor.u32 %v1335, %v1338
      %v1340 = vrot.slane %v1339, 4
      %v1342 = vshll.u32 %v1130, 16
      %v1344 = vrot.slane %v1342, 5
      %v1345 = vsel %vm1135, %v1340, %v1344
      %v1347 = vshrl.u32 %v1131, 16
      %v1349 = vrot.slane %v1347, 4
      %v1350 = vshll.u32 %v1131, 16
      %v1352 = vrot.slane %v1350, 5
      %v1353 = vor.u32 %v1349, %v1352
      %v1354 = vrot.slane %v1353, 4
      %v1356 = vshll.u32 %v1132, 16
      %v1358 = vrot.slane %v1356, 5
      %v1359 = vsel %vm1135, %v1354, %v1358
      %1376 = vst.msk [vmem:[#allocation3 + $0x4] sm:$0xf] %vm987, %v1149
      %1377 = vst.msk [vmem:[#allocation3 + $0x18] sm:$0xf] %vm987, %v1163
      %1378 = vst.msk [vmem:[#allocation3 + $0x2c] sm:$0xf] %vm987, %v1177
      %1379 = vst.msk [vmem:[#allocation3 + $0x40] sm:$0xf] %vm987, %v1191
      %1380 = vst.msk [vmem:[#allocation3 + $0x54] sm:$0xf] %vm987, %v1205
      %1381 = vst.msk [vmem:[#allocation3 + $0x68] sm:$0xf] %vm987, %v1219
      %1382 = vst.msk [vmem:[#allocation3 + $0x7c] sm:$0xf] %vm987, %v1233
      %1383 = vst.msk [vmem:[#allocation3 + $0x90] sm:$0xf] %vm987, %v1247
      %1384 = vst.msk [vmem:[#allocation3 + $0xa4] sm:$0xf] %vm987, %v1261
      %1385 = vst.msk [vmem:[#allocation3 + $0xb8] sm:$0xf] %vm987, %v1275
      %1386 = vst.msk [vmem:[#allocation3 + $0xcc] sm:$0xf] %vm987, %v1289
      %1387 = vst.msk [vmem:[#allocation3 + $0xe0] sm:$0xf] %vm987, %v1303
      %1388 = vst.msk [vmem:[#allocation3 + $0xf4] sm:$0xf] %vm987, %v1317
      %1389 = vst.msk [vmem:[#allocation3 + $0x108] sm:$0xf] %vm987, %v1331
      %1390 = vst.msk [vmem:[#allocation3 + $0x11c] sm:$0xf] %vm987, %v1345
      %1391 = vst.msk [vmem:[#allocation3 + $0x130] sm:$0xf] %vm987, %v1359
      %s1392 = scalar_lea.vmem [#allocation2], 16
      %v1393 = vld [vmem:[%s1392 + $0x4] sm:$0x8]
      %v1394 = vld [vmem:[%s1392 + $0x8] sm:$0xf]
      %v1395 = vld [vmem:[%s1392 + $0x14] sm:$0x8]
      %v1396 = vld [vmem:[%s1392 + $0x18] sm:$0xf]
      %v1397 = vld [vmem:[%s1392 + $0x24] sm:$0x8]
      %v1398 = vld [vmem:[%s1392 + $0x28] sm:$0xf]
      %v1399 = vld [vmem:[%s1392 + $0x34] sm:$0x8]
      %v1400 = vld [vmem:[%s1392 + $0x38] sm:$0xf]
      %v1401 = vld [vmem:[%s1392 + $0x44] sm:$0x8]
      %v1402 = vld [vmem:[%s1392 + $0x48] sm:$0xf]
      %v1403 = vld [vmem:[%s1392 + $0x54] sm:$0x8]
      %v1404 = vld [vmem:[%s1392 + $0x58] sm:$0xf]
      %v1405 = vld [vmem:[%s1392 + $0x64] sm:$0x8]
      %v1406 = vld [vmem:[%s1392 + $0x68] sm:$0xf]
      %v1407 = vld [vmem:[%s1392 + $0x74] sm:$0x8]
      %v1408 = vld [vmem:[%s1392 + $0x78] sm:$0xf]
      %v1409 = vld [vmem:[%s1392 + $0xa4] sm:$0x8]
      %v1410 = vld [vmem:[%s1392 + $0xa8] sm:$0xf]
      %v1411 = vld [vmem:[%s1392 + $0xb4] sm:$0x8]
      %v1412 = vld [vmem:[%s1392 + $0xb8] sm:$0xf]
      %v1413 = vld [vmem:[%s1392 + $0xc4] sm:$0x8]
      %v1414 = vld [vmem:[%s1392 + $0xc8] sm:$0xf]
      %v1415 = vld [vmem:[%s1392 + $0xd4] sm:$0x8]
      %v1416 = vld [vmem:[%s1392 + $0xd8] sm:$0xf]
      %v1417 = vld [vmem:[%s1392 + $0xe4] sm:$0x8]
      %v1418 = vld [vmem:[%s1392 + $0xe8] sm:$0xf]
      %v1419 = vld [vmem:[%s1392 + $0xf4] sm:$0x8]
      %v1420 = vld [vmem:[%s1392 + $0xf8] sm:$0xf]
      %v1421 = vld [vmem:[%s1392 + $0x104] sm:$0x8]
      %v1422 = vld [vmem:[%s1392 + $0x108] sm:$0xf]
      %v1423 = vld [vmem:[%s1392 + $0x114] sm:$0x8]
      %v1424 = vld [vmem:[%s1392 + $0x118] sm:$0xf]
      %v1426 = vshrl.u32 %v1393, 16
      %v1428 = vrot.slane %v1426, 7
      %v1429 = vrot.slane %v1428, 4
      %v1431 = vshrl.u32 %v1394, 16
      %v1433 = vrot.slane %v1431, 7
      %v1434 = vshll.u32 %v1394, 16
      %v1436 = vor.u32 %v1433, %v1434
      %v1437 = vsel %vm762, %v1429, %v1436
      %v1439 = vshrl.u32 %v1395, 16
      %v1441 = vrot.slane %v1439, 7
      %v1442 = vrot.slane %v1441, 4
      %v1444 = vshrl.u32 %v1396, 16
      %v1446 = vrot.slane %v1444, 7
      %v1447 = vshll.u32 %v1396, 16
      %v1449 = vor.u32 %v1446, %v1447
      %v1450 = vsel %vm762, %v1442, %v1449
      %v1452 = vshrl.u32 %v1397, 16
      %v1454 = vrot.slane %v1452, 7
      %v1455 = vrot.slane %v1454, 4
      %v1457 = vshrl.u32 %v1398, 16
      %v1459 = vrot.slane %v1457, 7
      %v1460 = vshll.u32 %v1398, 16
      %v1462 = vor.u32 %v1459, %v1460
      %v1463 = vsel %vm762, %v1455, %v1462
      %v1465 = vshrl.u32 %v1399, 16
      %v1467 = vrot.slane %v1465, 7
      %v1468 = vrot.slane %v1467, 4
      %v1470 = vshrl.u32 %v1400, 16
      %v1472 = vrot.slane %v1470, 7
      %v1473 = vshll.u32 %v1400, 16
      %v1475 = vor.u32 %v1472, %v1473
      %v1476 = vsel %vm762, %v1468, %v1475
      %v1478 = vshrl.u32 %v1401, 16
      %v1480 = vrot.slane %v1478, 7
      %v1481 = vrot.slane %v1480, 4
      %v1483 = vshrl.u32 %v1402, 16
      %v1485 = vrot.slane %v1483, 7
      %v1486 = vshll.u32 %v1402, 16
      %v1488 = vor.u32 %v1485, %v1486
      %v1489 = vsel %vm762, %v1481, %v1488
      %v1491 = vshrl.u32 %v1403, 16
      %v1493 = vrot.slane %v1491, 7
      %v1494 = vrot.slane %v1493, 4
      %v1496 = vshrl.u32 %v1404, 16
      %v1498 = vrot.slane %v1496, 7
      %v1499 = vshll.u32 %v1404, 16
      %v1501 = vor.u32 %v1498, %v1499
      %v1502 = vsel %vm762, %v1494, %v1501
      %v1504 = vshrl.u32 %v1405, 16
      %v1506 = vrot.slane %v1504, 7
      %v1507 = vrot.slane %v1506, 4
      %v1509 = vshrl.u32 %v1406, 16
      %v1511 = vrot.slane %v1509, 7
      %v1512 = vshll.u32 %v1406, 16
      %v1514 = vor.u32 %v1511, %v1512
      %v1515 = vsel %vm762, %v1507, %v1514
      %v1517 = vshrl.u32 %v1407, 16
      %v1519 = vrot.slane %v1517, 7
      %v1520 = vrot.slane %v1519, 4
      %v1522 = vshrl.u32 %v1408, 16
      %v1524 = vrot.slane %v1522, 7
      %v1525 = vshll.u32 %v1408, 16
      %v1527 = vor.u32 %v1524, %v1525
      %v1528 = vsel %vm762, %v1520, %v1527
      %v1530 = vshrl.u32 %v1409, 16
      %v1532 = vrot.slane %v1530, 7
      %v1533 = vrot.slane %v1532, 4
      %v1535 = vshrl.u32 %v1410, 16
      %v1537 = vrot.slane %v1535, 7
      %v1538 = vshll.u32 %v1410, 16
      %v1540 = vor.u32 %v1537, %v1538
      %v1541 = vsel %vm762, %v1533, %v1540
      %v1543 = vshrl.u32 %v1411, 16
      %v1545 = vrot.slane %v1543, 7
      %v1546 = vrot.slane %v1545, 4
      %v1548 = vshrl.u32 %v1412, 16
      %v1550 = vrot.slane %v1548, 7
      %v1551 = vshll.u32 %v1412, 16
      %v1553 = vor.u32 %v1550, %v1551
      %v1554 = vsel %vm762, %v1546, %v1553
      %v1556 = vshrl.u32 %v1413, 16
      %v1558 = vrot.slane %v1556, 7
      %v1559 = vrot.slane %v1558, 4
      %v1561 = vshrl.u32 %v1414, 16
      %v1563 = vrot.slane %v1561, 7
      %v1564 = vshll.u32 %v1414, 16
      %v1566 = vor.u32 %v1563, %v1564
      %v1567 = vsel %vm762, %v1559, %v1566
      %v1569 = vshrl.u32 %v1415, 16
      %v1571 = vrot.slane %v1569, 7
      %v1572 = vrot.slane %v1571, 4
      %v1574 = vshrl.u32 %v1416, 16
      %v1576 = vrot.slane %v1574, 7
      %v1577 = vshll.u32 %v1416, 16
      %v1579 = vor.u32 %v1576, %v1577
      %v1580 = vsel %vm762, %v1572, %v1579
      %v1582 = vshrl.u32 %v1417, 16
      %v1584 = vrot.slane %v1582, 7
      %v1585 = vrot.slane %v1584, 4
      %v1587 = vshrl.u32 %v1418, 16
      %v1589 = vrot.slane %v1587, 7
      %v1590 = vshll.u32 %v1418, 16
      %v1592 = vor.u32 %v1589, %v1590
      %v1593 = vsel %vm762, %v1585, %v1592
      %v1595 = vshrl.u32 %v1419, 16
      %v1597 = vrot.slane %v1595, 7
      %v1598 = vrot.slane %v1597, 4
      %v1600 = vshrl.u32 %v1420, 16
      %v1602 = vrot.slane %v1600, 7
      %v1603 = vshll.u32 %v1420, 16
      %v1605 = vor.u32 %v1602, %v1603
      %v1606 = vsel %vm762, %v1598, %v1605
      %v1608 = vshrl.u32 %v1421, 16
      %v1610 = vrot.slane %v1608, 7
      %v1611 = vrot.slane %v1610, 4
      %v1613 = vshrl.u32 %v1422, 16
      %v1615 = vrot.slane %v1613, 7
      %v1616 = vshll.u32 %v1422, 16
      %v1618 = vor.u32 %v1615, %v1616
      %v1619 = vsel %vm762, %v1611, %v1618
      %v1621 = vshrl.u32 %v1423, 16
      %v1623 = vrot.slane %v1621, 7
      %v1624 = vrot.slane %v1623, 4
      %v1626 = vshrl.u32 %v1424, 16
      %v1628 = vrot.slane %v1626, 7
      %v1629 = vshll.u32 %v1424, 16
      %v1631 = vor.u32 %v1628, %v1629
      %v1632 = vsel %vm762, %v1624, %v1631
      %1633 = vrot.lane.b32.xlu0 %v1437, 64
      %v1634 = vpop.permute.xlu0 %1633
      %1635 = vrot.lane.b32.xlu0 %v1450, 64
      %v1636 = vpop.permute.xlu0 %1635
      %1637 = vrot.lane.b32.xlu0 %v1463, 64
      %v1638 = vpop.permute.xlu0 %1637
      %1639 = vrot.lane.b32.xlu0 %v1476, 64
      %v1640 = vpop.permute.xlu0 %1639
      %1641 = vrot.lane.b32.xlu0 %v1489, 64
      %v1642 = vpop.permute.xlu0 %1641
      %1643 = vrot.lane.b32.xlu0 %v1502, 64
      %v1644 = vpop.permute.xlu0 %1643
      %1645 = vrot.lane.b32.xlu0 %v1515, 64
      %v1646 = vpop.permute.xlu0 %1645
      %1647 = vrot.lane.b32.xlu0 %v1528, 64
      %v1648 = vpop.permute.xlu0 %1647
      %1649 = vrot.lane.b32.xlu0 %v1541, 64
      %v1650 = vpop.permute.xlu0 %1649
      %1651 = vrot.lane.b32.xlu0 %v1554, 64
      %v1652 = vpop.permute.xlu0 %1651
      %1653 = vrot.lane.b32.xlu0 %v1567, 64
      %v1654 = vpop.permute.xlu0 %1653
      %1655 = vrot.lane.b32.xlu0 %v1580, 64
      %v1656 = vpop.permute.xlu0 %1655
      %1657 = vrot.lane.b32.xlu0 %v1593, 64
      %v1658 = vpop.permute.xlu0 %1657
      %1659 = vrot.lane.b32.xlu0 %v1606, 64
      %v1660 = vpop.permute.xlu0 %1659
      %1661 = vrot.lane.b32.xlu0 %v1619, 64
      %v1662 = vpop.permute.xlu0 %1661
      %1663 = vrot.lane.b32.xlu0 %v1632, 64
      %v1664 = vpop.permute.xlu0 %1663
      %1681 = vst.msk [vmem:[#allocation3 + $0x4] sm:$0xf] %vm1084, %v1634
      %1682 = vst.msk [vmem:[#allocation3 + $0x18] sm:$0xf] %vm1084, %v1636
      %1683 = vst.msk [vmem:[#allocation3 + $0x2c] sm:$0xf] %vm1084, %v1638
      %1684 = vst.msk [vmem:[#allocation3 + $0x40] sm:$0xf] %vm1084, %v1640
      %1685 = vst.msk [vmem:[#allocation3 + $0x54] sm:$0xf] %vm1084, %v1642
      %1686 = vst.msk [vmem:[#allocation3 + $0x68] sm:$0xf] %vm1084, %v1644
      %1687 = vst.msk [vmem:[#allocation3 + $0x7c] sm:$0xf] %vm1084, %v1646
      %1688 = vst.msk [vmem:[#allocation3 + $0x90] sm:$0xf] %vm1084, %v1648
      %1689 = vst.msk [vmem:[#allocation3 + $0xa4] sm:$0xf] %vm1084, %v1650
      %1690 = vst.msk [vmem:[#allocation3 + $0xb8] sm:$0xf] %vm1084, %v1652
      %1691 = vst.msk [vmem:[#allocation3 + $0xcc] sm:$0xf] %vm1084, %v1654
      %1692 = vst.msk [vmem:[#allocation3 + $0xe0] sm:$0xf] %vm1084, %v1656
      %1693 = vst.msk [vmem:[#allocation3 + $0xf4] sm:$0xf] %vm1084, %v1658
      %1694 = vst.msk [vmem:[#allocation3 + $0x108] sm:$0xf] %vm1084, %v1660
      %1695 = vst.msk [vmem:[#allocation3 + $0x11c] sm:$0xf] %vm1084, %v1662
      %1696 = vst.msk [vmem:[#allocation3 + $0x130] sm:$0xf] %vm1084, %v1664
      %v1697 = vld [vmem:[%s1392 + $0x8] sm:$0xf]
      %v1698 = vld [vmem:[%s1392 + $0x18] sm:$0xf]
      %v1699 = vld [vmem:[%s1392 + $0x28] sm:$0xf]
      %v1700 = vld [vmem:[%s1392 + $0x38] sm:$0xf]
      %v1701 = vld [vmem:[%s1392 + $0x48] sm:$0xf]
      %v1702 = vld [vmem:[%s1392 + $0x58] sm:$0xf]
      %v1703 = vld [vmem:[%s1392 + $0x68] sm:$0xf]
      %v1704 = vld [vmem:[%s1392 + $0x78] sm:$0xf]
      %v1705 = vld [vmem:[%s1392 + $0xa8] sm:$0xf]
      %v1706 = vld [vmem:[%s1392 + $0xb8] sm:$0xf]
      %v1707 = vld [vmem:[%s1392 + $0xc8] sm:$0xf]
      %v1708 = vld [vmem:[%s1392 + $0xd8] sm:$0xf]
      %v1709 = vld [vmem:[%s1392 + $0xe8] sm:$0xf]
      %v1710 = vld [vmem:[%s1392 + $0xf8] sm:$0xf]
      %v1711 = vld [vmem:[%s1392 + $0x108] sm:$0xf]
      %v1712 = vld [vmem:[%s1392 + $0x118] sm:$0xf]
      %1713 = vst.msk [vmem:[#allocation3 + $0x8] sm:$0xf] %vm987, %v1697
      %1714 = vst.msk [vmem:[#allocation3 + $0x1c] sm:$0xf] %vm987, %v1698
      %1715 = vst.msk [vmem:[#allocation3 + $0x30] sm:$0xf] %vm987, %v1699
      %1716 = vst.msk [vmem:[#allocation3 + $0x44] sm:$0xf] %vm987, %v1700
      %1717 = vst.msk [vmem:[#allocation3 + $0x58] sm:$0xf] %vm987, %v1701
      %1718 = vst.msk [vmem:[#allocation3 + $0x6c] sm:$0xf] %vm987, %v1702
      %1719 = vst.msk [vmem:[#allocation3 + $0x80] sm:$0xf] %vm987, %v1703
      %1720 = vst.msk [vmem:[#allocation3 + $0x94] sm:$0xf] %vm987, %v1704
      %1721 = vst.msk [vmem:[#allocation3 + $0xa8] sm:$0xf] %vm987, %v1705
      %1722 = vst.msk [vmem:[#allocation3 + $0xbc] sm:$0xf] %vm987, %v1706
      %1723 = vst.msk [vmem:[#allocation3 + $0xd0] sm:$0xf] %vm987, %v1707
      %1724 = vst.msk [vmem:[#allocation3 + $0xe4] sm:$0xf] %vm987, %v1708
      %1725 = vst.msk [vmem:[#allocation3 + $0xf8] sm:$0xf] %vm987, %v1709
      %1726 = vst.msk [vmem:[#allocation3 + $0x10c] sm:$0xf] %vm987, %v1710
      %1727 = vst.msk [vmem:[#allocation3 + $0x120] sm:$0xf] %vm987, %v1711
      %1728 = vst.msk [vmem:[#allocation3 + $0x134] sm:$0xf] %vm987, %v1712
      %v1729 = vld [vmem:[%s1392 + $0x8] sm:$0xf]
      %v1730 = vld [vmem:[%s1392 + $0xc] sm:$0x1]
      %v1731 = vld [vmem:[%s1392 + $0x18] sm:$0xf]
      %v1732 = vld [vmem:[%s1392 + $0x1c] sm:$0x1]
      %v1733 = vld [vmem:[%s1392 + $0x28] sm:$0xf]
      %v1734 = vld [vmem:[%s1392 + $0x2c] sm:$0x1]
      %v1735 = vld [vmem:[%s1392 + $0x38] sm:$0xf]
      %v1736 = vld [vmem:[%s1392 + $0x3c] sm:$0x1]
      %v1737 = vld [vmem:[%s1392 + $0x48] sm:$0xf]
      %v1738 = vld [vmem:[%s1392 + $0x4c] sm:$0x1]
      %v1739 = vld [vmem:[%s1392 + $0x58] sm:$0xf]
      %v1740 = vld [vmem:[%s1392 + $0x5c] sm:$0x1]
      %v1741 = vld [vmem:[%s1392 + $0x68] sm:$0xf]
      %v1742 = vld [vmem:[%s1392 + $0x6c] sm:$0x1]
      %v1743 = vld [vmem:[%s1392 + $0x78] sm:$0xf]
      %v1744 = vld [vmem:[%s1392 + $0x7c] sm:$0x1]
      %v1745 = vld [vmem:[%s1392 + $0xa8] sm:$0xf]
      %v1746 = vld [vmem:[%s1392 + $0xac] sm:$0x1]
      %v1747 = vld [vmem:[%s1392 + $0xb8] sm:$0xf]
      %v1748 = vld [vmem:[%s1392 + $0xbc] sm:$0x1]
      %v1749 = vld [vmem:[%s1392 + $0xc8] sm:$0xf]
      %v1750 = vld [vmem:[%s1392 + $0xcc] sm:$0x1]
      %v1751 = vld [vmem:[%s1392 + $0xd8] sm:$0xf]
      %v1752 = vld [vmem:[%s1392 + $0xdc] sm:$0x1]
      %v1753 = vld [vmem:[%s1392 + $0xe8] sm:$0xf]
      %v1754 = vld [vmem:[%s1392 + $0xec] sm:$0x1]
      %v1755 = vld [vmem:[%s1392 + $0xf8] sm:$0xf]
      %v1756 = vld [vmem:[%s1392 + $0xfc] sm:$0x1]
      %v1757 = vld [vmem:[%s1392 + $0x108] sm:$0xf]
      %v1758 = vld [vmem:[%s1392 + $0x10c] sm:$0x1]
      %v1759 = vld [vmem:[%s1392 + $0x118] sm:$0xf]
      %v1760 = vld [vmem:[%s1392 + $0x11c] sm:$0x1]
      %v1762 = vshrl.u32 %v1729, 16
      %v1764 = vrot.slane %v1762, 4
      %v1765 = vshll.u32 %v1729, 16
      %v1767 = vrot.slane %v1765, 5
      %v1768 = vor.u32 %v1764, %v1767
      %v1769 = vrot.slane %v1768, 4
      %v1771 = vshll.u32 %v1730, 16
      %v1773 = vrot.slane %v1771, 5
      %v1774 = vsel %vm1135, %v1769, %v1773
      %v1776 = vshrl.u32 %v1731, 16
      %v1778 = vrot.slane %v1776, 4
      %v1779 = vshll.u32 %v1731, 16
      %v1781 = vrot.slane %v1779, 5
      %v1782 = vor.u32 %v1778, %v1781
      %v1783 = vrot.slane %v1782, 4
      %v1785 = vshll.u32 %v1732, 16
      %v1787 = vrot.slane %v1785, 5
      %v1788 = vsel %vm1135, %v1783, %v1787
      %v1790 = vshrl.u32 %v1733, 16
      %v1792 = vrot.slane %v1790, 4
      %v1793 = vshll.u32 %v1733, 16
      %v1795 = vrot.slane %v1793, 5
      %v1796 = vor.u32 %v1792, %v1795
      %v1797 = vrot.slane %v1796, 4
      %v1799 = vshll.u32 %v1734, 16
      %v1801 = vrot.slane %v1799, 5
      %v1802 = vsel %vm1135, %v1797, %v1801
      %v1804 = vshrl.u32 %v1735, 16
      %v1806 = vrot.slane %v1804, 4
      %v1807 = vshll.u32 %v1735, 16
      %v1809 = vrot.slane %v1807, 5
      %v1810 = vor.u32 %v1806, %v1809
      %v1811 = vrot.slane %v1810, 4
      %v1813 = vshll.u32 %v1736, 16
      %v1815 = vrot.slane %v1813, 5
      %v1816 = vsel %vm1135, %v1811, %v1815
      %v1818 = vshrl.u32 %v1737, 16
      %v1820 = vrot.slane %v1818, 4
      %v1821 = vshll.u32 %v1737, 16
      %v1823 = vrot.slane %v1821, 5
      %v1824 = vor.u32 %v1820, %v1823
      %v1825 = vrot.slane %v1824, 4
      %v1827 = vshll.u32 %v1738, 16
      %v1829 = vrot.slane %v1827, 5
      %v1830 = vsel %vm1135, %v1825, %v1829
      %v1832 = vshrl.u32 %v1739, 16
      %v1834 = vrot.slane %v1832, 4
      %v1835 = vshll.u32 %v1739, 16
      %v1837 = vrot.slane %v1835, 5
      %v1838 = vor.u32 %v1834, %v1837
      %v1839 = vrot.slane %v1838, 4
      %v1841 = vshll.u32 %v1740, 16
      %v1843 = vrot.slane %v1841, 5
      %v1844 = vsel %vm1135, %v1839, %v1843
      %v1846 = vshrl.u32 %v1741, 16
      %v1848 = vrot.slane %v1846, 4
      %v1849 = vshll.u32 %v1741, 16
      %v1851 = vrot.slane %v1849, 5
      %v1852 = vor.u32 %v1848, %v1851
      %v1853 = vrot.slane %v1852, 4
      %v1855 = vshll.u32 %v1742, 16
      %v1857 = vrot.slane %v1855, 5
      %v1858 = vsel %vm1135, %v1853, %v1857
      %v1860 = vshrl.u32 %v1743, 16
      %v1862 = vrot.slane %v1860, 4
      %v1863 = vshll.u32 %v1743, 16
      %v1865 = vrot.slane %v1863, 5
      %v1866 = vor.u32 %v1862, %v1865
      %v1867 = vrot.slane %v1866, 4
      %v1869 = vshll.u32 %v1744, 16
      %v1871 = vrot.slane %v1869, 5
      %v1872 = vsel %vm1135, %v1867, %v1871
      %v1874 = vshrl.u32 %v1745, 16
      %v1876 = vrot.slane %v1874, 4
      %v1877 = vshll.u32 %v1745, 16
      %v1879 = vrot.slane %v1877, 5
      %v1880 = vor.u32 %v1876, %v1879
      %v1881 = vrot.slane %v1880, 4
      %v1883 = vshll.u32 %v1746, 16
      %v1885 = vrot.slane %v1883, 5
      %v1886 = vsel %vm1135, %v1881, %v1885
      %v1888 = vshrl.u32 %v1747, 16
      %v1890 = vrot.slane %v1888, 4
      %v1891 = vshll.u32 %v1747, 16
      %v1893 = vrot.slane %v1891, 5
      %v1894 = vor.u32 %v1890, %v1893
      %v1895 = vrot.slane %v1894, 4
      %v1897 = vshll.u32 %v1748, 16
      %v1899 = vrot.slane %v1897, 5
      %v1900 = vsel %vm1135, %v1895, %v1899
      %v1902 = vshrl.u32 %v1749, 16
      %v1904 = vrot.slane %v1902, 4
      %v1905 = vshll.u32 %v1749, 16
      %v1907 = vrot.slane %v1905, 5
      %v1908 = vor.u32 %v1904, %v1907
      %v1909 = vrot.slane %v1908, 4
      %v1911 = vshll.u32 %v1750, 16
      %v1913 = vrot.slane %v1911, 5
      %v1914 = vsel %vm1135, %v1909, %v1913
      %v1916 = vshrl.u32 %v1751, 16
      %v1918 = vrot.slane %v1916, 4
      %v1919 = vshll.u32 %v1751, 16
      %v1921 = vrot.slane %v1919, 5
      %v1922 = vor.u32 %v1918, %v1921
      %v1923 = vrot.slane %v1922, 4
      %v1925 = vshll.u32 %v1752, 16
      %v1927 = vrot.slane %v1925, 5
      %v1928 = vsel %vm1135, %v1923, %v1927
      %v1930 = vshrl.u32 %v1753, 16
      %v1932 = vrot.slane %v1930, 4
      %v1933 = vshll.u32 %v1753, 16
      %v1935 = vrot.slane %v1933, 5
      %v1936 = vor.u32 %v1932, %v1935
      %v1937 = vrot.slane %v1936, 4
      %v1939 = vshll.u32 %v1754, 16
      %v1941 = vrot.slane %v1939, 5
      %v1942 = vsel %vm1135, %v1937, %v1941
      %v1944 = vshrl.u32 %v1755, 16
      %v1946 = vrot.slane %v1944, 4
      %v1947 = vshll.u32 %v1755, 16
      %v1949 = vrot.slane %v1947, 5
      %v1950 = vor.u32 %v1946, %v1949
      %v1951 = vrot.slane %v1950, 4
      %v1953 = vshll.u32 %v1756, 16
      %v1955 = vrot.slane %v1953, 5
      %v1956 = vsel %vm1135, %v1951, %v1955
      %v1958 = vshrl.u32 %v1757, 16
      %v1960 = vrot.slane %v1958, 4
      %v1961 = vshll.u32 %v1757, 16
      %v1963 = vrot.slane %v1961, 5
      %v1964 = vor.u32 %v1960, %v1963
      %v1965 = vrot.slane %v1964, 4
      %v1967 = vshll.u32 %v1758, 16
      %v1969 = vrot.slane %v1967, 5
      %v1970 = vsel %vm1135, %v1965, %v1969
      %v1972 = vshrl.u32 %v1759, 16
      %v1974 = vrot.slane %v1972, 4
      %v1975 = vshll.u32 %v1759, 16
      %v1977 = vrot.slane %v1975, 5
      %v1978 = vor.u32 %v1974, %v1977
      %v1979 = vrot.slane %v1978, 4
      %v1981 = vshll.u32 %v1760, 16
      %v1983 = vrot.slane %v1981, 5
      %v1984 = vsel %vm1135, %v1979, %v1983
      %1985 = vrot.lane.b32.xlu0 %v1774, 64
      %v1986 = vpop.permute.xlu0 %1985
      %1987 = vrot.lane.b32.xlu0 %v1788, 64
      %v1988 = vpop.permute.xlu0 %1987
      %1989 = vrot.lane.b32.xlu0 %v1802, 64
      %v1990 = vpop.permute.xlu0 %1989
      %1991 = vrot.lane.b32.xlu0 %v1816, 64
      %v1992 = vpop.permute.xlu0 %1991
      %1993 = vrot.lane.b32.xlu0 %v1830, 64
      %v1994 = vpop.permute.xlu0 %1993
      %1995 = vrot.lane.b32.xlu0 %v1844, 64
      %v1996 = vpop.permute.xlu0 %1995
      %1997 = vrot.lane.b32.xlu0 %v1858, 64
      %v1998 = vpop.permute.xlu0 %1997
      %1999 = vrot.lane.b32.xlu0 %v1872, 64
      %v2000 = vpop.permute.xlu0 %1999
      %2001 = vrot.lane.b32.xlu0 %v1886, 64
      %v2002 = vpop.permute.xlu0 %2001
      %2003 = vrot.lane.b32.xlu0 %v1900, 64
      %v2004 = vpop.permute.xlu0 %2003
      %2005 = vrot.lane.b32.xlu0 %v1914, 64
      %v2006 = vpop.permute.xlu0 %2005
      %2007 = vrot.lane.b32.xlu0 %v1928, 64
      %v2008 = vpop.permute.xlu0 %2007
      %2009 = vrot.lane.b32.xlu0 %v1942, 64
      %v2010 = vpop.permute.xlu0 %2009
      %2011 = vrot.lane.b32.xlu0 %v1956, 64
      %v2012 = vpop.permute.xlu0 %2011
      %2013 = vrot.lane.b32.xlu0 %v1970, 64
      %v2014 = vpop.permute.xlu0 %2013
      %2015 = vrot.lane.b32.xlu0 %v1984, 64
      %v2016 = vpop.permute.xlu0 %2015
      %2033 = vst.msk [vmem:[#allocation3 + $0x8] sm:$0xf] %vm1084, %v1986
      %2034 = vst.msk [vmem:[#allocation3 + $0x1c] sm:$0xf] %vm1084, %v1988
      %2035 = vst.msk [vmem:[#allocation3 + $0x30] sm:$0xf] %vm1084, %v1990
      %2036 = vst.msk [vmem:[#allocation3 + $0x44] sm:$0xf] %vm1084, %v1992
      %2037 = vst.msk [vmem:[#allocation3 + $0x58] sm:$0xf] %vm1084, %v1994
      %2038 = vst.msk [vmem:[#allocation3 + $0x6c] sm:$0xf] %vm1084, %v1996
      %2039 = vst.msk [vmem:[#allocation3 + $0x80] sm:$0xf] %vm1084, %v1998
      %2040 = vst.msk [vmem:[#allocation3 + $0x94] sm:$0xf] %vm1084, %v2000
      %2041 = vst.msk [vmem:[#allocation3 + $0xa8] sm:$0xf] %vm1084, %v2002
      %2042 = vst.msk [vmem:[#allocation3 + $0xbc] sm:$0xf] %vm1084, %v2004
      %2043 = vst.msk [vmem:[#allocation3 + $0xd0] sm:$0xf] %vm1084, %v2006
      %2044 = vst.msk [vmem:[#allocation3 + $0xe4] sm:$0xf] %vm1084, %v2008
      %2045 = vst.msk [vmem:[#allocation3 + $0xf8] sm:$0xf] %vm1084, %v2010
      %2046 = vst.msk [vmem:[#allocation3 + $0x10c] sm:$0xf] %vm1084, %v2012
      %2047 = vst.msk [vmem:[#allocation3 + $0x120] sm:$0xf] %vm1084, %v2014
      %2048 = vst.msk [vmem:[#allocation3 + $0x134] sm:$0xf] %vm1084, %v2016
      %s2049 = scalar_lea.vmem [#allocation2], 32
      %v2050 = vld [vmem:[%s2049 + $0x4] sm:$0x8]
      %v2051 = vld [vmem:[%s2049 + $0x8] sm:$0xf]
      %v2052 = vld [vmem:[%s2049 + $0x14] sm:$0x8]
      %v2053 = vld [vmem:[%s2049 + $0x18] sm:$0xf]
      %v2054 = vld [vmem:[%s2049 + $0x24] sm:$0x8]
      %v2055 = vld [vmem:[%s2049 + $0x28] sm:$0xf]
      %v2056 = vld [vmem:[%s2049 + $0x34] sm:$0x8]
      %v2057 = vld [vmem:[%s2049 + $0x38] sm:$0xf]
      %v2058 = vld [vmem:[%s2049 + $0x44] sm:$0x8]
      %v2059 = vld [vmem:[%s2049 + $0x48] sm:$0xf]
      %v2060 = vld [vmem:[%s2049 + $0x54] sm:$0x8]
      %v2061 = vld [vmem:[%s2049 + $0x58] sm:$0xf]
      %v2062 = vld [vmem:[%s2049 + $0x64] sm:$0x8]
      %v2063 = vld [vmem:[%s2049 + $0x68] sm:$0xf]
      %v2064 = vld [vmem:[%s2049 + $0x74] sm:$0x8]
      %v2065 = vld [vmem:[%s2049 + $0x78] sm:$0xf]
      %v2066 = vld [vmem:[%s2049 + $0xa4] sm:$0x8]
      %v2067 = vld [vmem:[%s2049 + $0xa8] sm:$0xf]
      %v2068 = vld [vmem:[%s2049 + $0xb4] sm:$0x8]
      %v2069 = vld [vmem:[%s2049 + $0xb8] sm:$0xf]
      %v2070 = vld [vmem:[%s2049 + $0xc4] sm:$0x8]
      %v2071 = vld [vmem:[%s2049 + $0xc8] sm:$0xf]
      %v2072 = vld [vmem:[%s2049 + $0xd4] sm:$0x8]
      %v2073 = vld [vmem:[%s2049 + $0xd8] sm:$0xf]
      %v2074 = vld [vmem:[%s2049 + $0xe4] sm:$0x8]
      %v2075 = vld [vmem:[%s2049 + $0xe8] sm:$0xf]
      %v2076 = vld [vmem:[%s2049 + $0xf4] sm:$0x8]
      %v2077 = vld [vmem:[%s2049 + $0xf8] sm:$0xf]
      %v2078 = vld [vmem:[%s2049 + $0x104] sm:$0x8]
      %v2079 = vld [vmem:[%s2049 + $0x108] sm:$0xf]
      %v2080 = vld [vmem:[%s2049 + $0x114] sm:$0x8]
      %v2081 = vld [vmem:[%s2049 + $0x118] sm:$0xf]
      %v2083 = vshrl.u32 %v2050, 16
      %v2085 = vrot.slane %v2083, 7
      %v2086 = vrot.slane %v2085, 4
      %v2088 = vshrl.u32 %v2051, 16
      %v2090 = vrot.slane %v2088, 7
      %v2091 = vshll.u32 %v2051, 16
      %v2093 = vor.u32 %v2090, %v2091
      %v2094 = vsel %vm762, %v2086, %v2093
      %v2096 = vshrl.u32 %v2052, 16
      %v2098 = vrot.slane %v2096, 7
      %v2099 = vrot.slane %v2098, 4
      %v2101 = vshrl.u32 %v2053, 16
      %v2103 = vrot.slane %v2101, 7
      %v2104 = vshll.u32 %v2053, 16
      %v2106 = vor.u32 %v2103, %v2104
      %v2107 = vsel %vm762, %v2099, %v2106
      %v2109 = vshrl.u32 %v2054, 16
      %v2111 = vrot.slane %v2109, 7
      %v2112 = vrot.slane %v2111, 4
      %v2114 = vshrl.u32 %v2055, 16
      %v2116 = vrot.slane %v2114, 7
      %v2117 = vshll.u32 %v2055, 16
      %v2119 = vor.u32 %v2116, %v2117
      %v2120 = vsel %vm762, %v2112, %v2119
      %v2122 = vshrl.u32 %v2056, 16
      %v2124 = vrot.slane %v2122, 7
      %v2125 = vrot.slane %v2124, 4
      %v2127 = vshrl.u32 %v2057, 16
      %v2129 = vrot.slane %v2127, 7
      %v2130 = vshll.u32 %v2057, 16
      %v2132 = vor.u32 %v2129, %v2130
      %v2133 = vsel %vm762, %v2125, %v2132
      %v2135 = vshrl.u32 %v2058, 16
      %v2137 = vrot.slane %v2135, 7
      %v2138 = vrot.slane %v2137, 4
      %v2140 = vshrl.u32 %v2059, 16
      %v2142 = vrot.slane %v2140, 7
      %v2143 = vshll.u32 %v2059, 16
      %v2145 = vor.u32 %v2142, %v2143
      %v2146 = vsel %vm762, %v2138, %v2145
      %v2148 = vshrl.u32 %v2060, 16
      %v2150 = vrot.slane %v2148, 7
      %v2151 = vrot.slane %v2150, 4
      %v2153 = vshrl.u32 %v2061, 16
      %v2155 = vrot.slane %v2153, 7
      %v2156 = vshll.u32 %v2061, 16
      %v2158 = vor.u32 %v2155, %v2156
      %v2159 = vsel %vm762, %v2151, %v2158
      %v2161 = vshrl.u32 %v2062, 16
      %v2163 = vrot.slane %v2161, 7
      %v2164 = vrot.slane %v2163, 4
      %v2166 = vshrl.u32 %v2063, 16
      %v2168 = vrot.slane %v2166, 7
      %v2169 = vshll.u32 %v2063, 16
      %v2171 = vor.u32 %v2168, %v2169
      %v2172 = vsel %vm762, %v2164, %v2171
      %v2174 = vshrl.u32 %v2064, 16
      %v2176 = vrot.slane %v2174, 7
      %v2177 = vrot.slane %v2176, 4
      %v2179 = vshrl.u32 %v2065, 16
      %v2181 = vrot.slane %v2179, 7
      %v2182 = vshll.u32 %v2065, 16
      %v2184 = vor.u32 %v2181, %v2182
      %v2185 = vsel %vm762, %v2177, %v2184
      %v2187 = vshrl.u32 %v2066, 16
      %v2189 = vrot.slane %v2187, 7
      %v2190 = vrot.slane %v2189, 4
      %v2192 = vshrl.u32 %v2067, 16
      %v2194 = vrot.slane %v2192, 7
      %v2195 = vshll.u32 %v2067, 16
      %v2197 = vor.u32 %v2194, %v2195
      %v2198 = vsel %vm762, %v2190, %v2197
      %v2200 = vshrl.u32 %v2068, 16
      %v2202 = vrot.slane %v2200, 7
      %v2203 = vrot.slane %v2202, 4
      %v2205 = vshrl.u32 %v2069, 16
      %v2207 = vrot.slane %v2205, 7
      %v2208 = vshll.u32 %v2069, 16
      %v2210 = vor.u32 %v2207, %v2208
      %v2211 = vsel %vm762, %v2203, %v2210
      %v2213 = vshrl.u32 %v2070, 16
      %v2215 = vrot.slane %v2213, 7
      %v2216 = vrot.slane %v2215, 4
      %v2218 = vshrl.u32 %v2071, 16
      %v2220 = vrot.slane %v2218, 7
      %v2221 = vshll.u32 %v2071, 16
      %v2223 = vor.u32 %v2220, %v2221
      %v2224 = vsel %vm762, %v2216, %v2223
      %v2226 = vshrl.u32 %v2072, 16
      %v2228 = vrot.slane %v2226, 7
      %v2229 = vrot.slane %v2228, 4
      %v2231 = vshrl.u32 %v2073, 16
      %v2233 = vrot.slane %v2231, 7
      %v2234 = vshll.u32 %v2073, 16
      %v2236 = vor.u32 %v2233, %v2234
      %v2237 = vsel %vm762, %v2229, %v2236
      %v2239 = vshrl.u32 %v2074, 16
      %v2241 = vrot.slane %v2239, 7
      %v2242 = vrot.slane %v2241, 4
      %v2244 = vshrl.u32 %v2075, 16
      %v2246 = vrot.slane %v2244, 7
      %v2247 = vshll.u32 %v2075, 16
      %v2249 = vor.u32 %v2246, %v2247
      %v2250 = vsel %vm762, %v2242, %v2249
      %v2252 = vshrl.u32 %v2076, 16
      %v2254 = vrot.slane %v2252, 7
      %v2255 = vrot.slane %v2254, 4
      %v2257 = vshrl.u32 %v2077, 16
      %v2259 = vrot.slane %v2257, 7
      %v2260 = vshll.u32 %v2077, 16
      %v2262 = vor.u32 %v2259, %v2260
      %v2263 = vsel %vm762, %v2255, %v2262
      %v2265 = vshrl.u32 %v2078, 16
      %v2267 = vrot.slane %v2265, 7
      %v2268 = vrot.slane %v2267, 4
      %v2270 = vshrl.u32 %v2079, 16
      %v2272 = vrot.slane %v2270, 7
      %v2273 = vshll.u32 %v2079, 16
      %v2275 = vor.u32 %v2272, %v2273
      %v2276 = vsel %vm762, %v2268, %v2275
      %v2278 = vshrl.u32 %v2080, 16
      %v2280 = vrot.slane %v2278, 7
      %v2281 = vrot.slane %v2280, 4
      %v2283 = vshrl.u32 %v2081, 16
      %v2285 = vrot.slane %v2283, 7
      %v2286 = vshll.u32 %v2081, 16
      %v2288 = vor.u32 %v2285, %v2286
      %v2289 = vsel %vm762, %v2281, %v2288
      %2306 = vst.msk [vmem:[#allocation3 + $0xc] sm:$0xf] %vm987, %v2094
      %2307 = vst.msk [vmem:[#allocation3 + $0x20] sm:$0xf] %vm987, %v2107
      %2308 = vst.msk [vmem:[#allocation3 + $0x34] sm:$0xf] %vm987, %v2120
      %2309 = vst.msk [vmem:[#allocation3 + $0x48] sm:$0xf] %vm987, %v2133
      %2310 = vst.msk [vmem:[#allocation3 + $0x5c] sm:$0xf] %vm987, %v2146
      %2311 = vst.msk [vmem:[#allocation3 + $0x70] sm:$0xf] %vm987, %v2159
      %2312 = vst.msk [vmem:[#allocation3 + $0x84] sm:$0xf] %vm987, %v2172
      %2313 = vst.msk [vmem:[#allocation3 + $0x98] sm:$0xf] %vm987, %v2185
      %2314 = vst.msk [vmem:[#allocation3 + $0xac] sm:$0xf] %vm987, %v2198
      %2315 = vst.msk [vmem:[#allocation3 + $0xc0] sm:$0xf] %vm987, %v2211
      %2316 = vst.msk [vmem:[#allocation3 + $0xd4] sm:$0xf] %vm987, %v2224
      %2317 = vst.msk [vmem:[#allocation3 + $0xe8] sm:$0xf] %vm987, %v2237
      %2318 = vst.msk [vmem:[#allocation3 + $0xfc] sm:$0xf] %vm987, %v2250
      %2319 = vst.msk [vmem:[#allocation3 + $0x110] sm:$0xf] %vm987, %v2263
      %2320 = vst.msk [vmem:[#allocation3 + $0x124] sm:$0xf] %vm987, %v2276
      %2321 = vst.msk [vmem:[#allocation3 + $0x138] sm:$0xf] %vm987, %v2289
      %v2322 = vld [vmem:[%s2049 + $0x8] sm:$0xf]
      %v2323 = vld [vmem:[%s2049 + $0x18] sm:$0xf]
      %v2324 = vld [vmem:[%s2049 + $0x28] sm:$0xf]
      %v2325 = vld [vmem:[%s2049 + $0x38] sm:$0xf]
      %v2326 = vld [vmem:[%s2049 + $0x48] sm:$0xf]
      %v2327 = vld [vmem:[%s2049 + $0x58] sm:$0xf]
      %v2328 = vld [vmem:[%s2049 + $0x68] sm:$0xf]
      %v2329 = vld [vmem:[%s2049 + $0x78] sm:$0xf]
      %v2330 = vld [vmem:[%s2049 + $0xa8] sm:$0xf]
      %v2331 = vld [vmem:[%s2049 + $0xb8] sm:$0xf]
      %v2332 = vld [vmem:[%s2049 + $0xc8] sm:$0xf]
      %v2333 = vld [vmem:[%s2049 + $0xd8] sm:$0xf]
      %v2334 = vld [vmem:[%s2049 + $0xe8] sm:$0xf]
      %v2335 = vld [vmem:[%s2049 + $0xf8] sm:$0xf]
      %v2336 = vld [vmem:[%s2049 + $0x108] sm:$0xf]
      %v2337 = vld [vmem:[%s2049 + $0x118] sm:$0xf]
      %2354 = vrot.lane.b32.xlu0 %v2322, 64
      %v2355 = vpop.permute.xlu0 %2354
      %2356 = vrot.lane.b32.xlu0 %v2323, 64
      %v2357 = vpop.permute.xlu0 %2356
      %2358 = vrot.lane.b32.xlu0 %v2324, 64
      %v2359 = vpop.permute.xlu0 %2358
      %2360 = vrot.lane.b32.xlu0 %v2325, 64
      %v2361 = vpop.permute.xlu0 %2360
      %2362 = vrot.lane.b32.xlu0 %v2326, 64
      %v2363 = vpop.permute.xlu0 %2362
      %2364 = vrot.lane.b32.xlu0 %v2327, 64
      %v2365 = vpop.permute.xlu0 %2364
      %2366 = vrot.lane.b32.xlu0 %v2328, 64
      %v2367 = vpop.permute.xlu0 %2366
      %2368 = vrot.lane.b32.xlu0 %v2329, 64
      %v2369 = vpop.permute.xlu0 %2368
      %2370 = vrot.lane.b32.xlu0 %v2330, 64
      %v2371 = vpop.permute.xlu0 %2370
      %2372 = vrot.lane.b32.xlu0 %v2331, 64
      %v2373 = vpop.permute.xlu0 %2372
      %2374 = vrot.lane.b32.xlu0 %v2332, 64
      %v2375 = vpop.permute.xlu0 %2374
      %2376 = vrot.lane.b32.xlu0 %v2333, 64
      %v2377 = vpop.permute.xlu0 %2376
      %2378 = vrot.lane.b32.xlu0 %v2334, 64
      %v2379 = vpop.permute.xlu0 %2378
      %2380 = vrot.lane.b32.xlu0 %v2335, 64
      %v2381 = vpop.permute.xlu0 %2380
      %2382 = vrot.lane.b32.xlu0 %v2336, 64
      %v2383 = vpop.permute.xlu0 %2382
      %2384 = vrot.lane.b32.xlu0 %v2337, 64
      %v2385 = vpop.permute.xlu0 %2384
      %2402 = vst.msk [vmem:[#allocation3 + $0xc] sm:$0xf] %vm1084, %v2355
      %2403 = vst.msk [vmem:[#allocation3 + $0x20] sm:$0xf] %vm1084, %v2357
      %2404 = vst.msk [vmem:[#allocation3 + $0x34] sm:$0xf] %vm1084, %v2359
      %2405 = vst.msk [vmem:[#allocation3 + $0x48] sm:$0xf] %vm1084, %v2361
      %2406 = vst.msk [vmem:[#allocation3 + $0x5c] sm:$0xf] %vm1084, %v2363
      %2407 = vst.msk [vmem:[#allocation3 + $0x70] sm:$0xf] %vm1084, %v2365
      %2408 = vst.msk [vmem:[#allocation3 + $0x84] sm:$0xf] %vm1084, %v2367
      %2409 = vst.msk [vmem:[#allocation3 + $0x98] sm:$0xf] %vm1084, %v2369
      %2410 = vst.msk [vmem:[#allocation3 + $0xac] sm:$0xf] %vm1084, %v2371
      %2411 = vst.msk [vmem:[#allocation3 + $0xc0] sm:$0xf] %vm1084, %v2373
      %2412 = vst.msk [vmem:[#allocation3 + $0xd4] sm:$0xf] %vm1084, %v2375
      %2413 = vst.msk [vmem:[#allocation3 + $0xe8] sm:$0xf] %vm1084, %v2377
      %2414 = vst.msk [vmem:[#allocation3 + $0xfc] sm:$0xf] %vm1084, %v2379
      %2415 = vst.msk [vmem:[#allocation3 + $0x110] sm:$0xf] %vm1084, %v2381
      %2416 = vst.msk [vmem:[#allocation3 + $0x124] sm:$0xf] %vm1084, %v2383
      %2417 = vst.msk [vmem:[#allocation3 + $0x138] sm:$0xf] %vm1084, %v2385
      %v2418 = vld [vmem:[%s2049 + $0x8] sm:$0xf]
      %v2419 = vld [vmem:[%s2049 + $0xc] sm:$0x1]
      %v2420 = vld [vmem:[%s2049 + $0x18] sm:$0xf]
      %v2421 = vld [vmem:[%s2049 + $0x1c] sm:$0x1]
      %v2422 = vld [vmem:[%s2049 + $0x28] sm:$0xf]
      %v2423 = vld [vmem:[%s2049 + $0x2c] sm:$0x1]
      %v2424 = vld [vmem:[%s2049 + $0x38] sm:$0xf]
      %v2425 = vld [vmem:[%s2049 + $0x3c] sm:$0x1]
      %v2426 = vld [vmem:[%s2049 + $0x48] sm:$0xf]
      %v2427 = vld [vmem:[%s2049 + $0x4c] sm:$0x1]
      %v2428 = vld [vmem:[%s2049 + $0x58] sm:$0xf]
      %v2429 = vld [vmem:[%s2049 + $0x5c] sm:$0x1]
      %v2430 = vld [vmem:[%s2049 + $0x68] sm:$0xf]
      %v2431 = vld [vmem:[%s2049 + $0x6c] sm:$0x1]
      %v2432 = vld [vmem:[%s2049 + $0x78] sm:$0xf]
      %v2433 = vld [vmem:[%s2049 + $0x7c] sm:$0x1]
      %v2434 = vld [vmem:[%s2049 + $0xa8] sm:$0xf]
      %v2435 = vld [vmem:[%s2049 + $0xac] sm:$0x1]
      %v2436 = vld [vmem:[%s2049 + $0xb8] sm:$0xf]
      %v2437 = vld [vmem:[%s2049 + $0xbc] sm:$0x1]
      %v2438 = vld [vmem:[%s2049 + $0xc8] sm:$0xf]
      %v2439 = vld [vmem:[%s2049 + $0xcc] sm:$0x1]
      %v2440 = vld [vmem:[%s2049 + $0xd8] sm:$0xf]
      %v2441 = vld [vmem:[%s2049 + $0xdc] sm:$0x1]
      %v2442 = vld [vmem:[%s2049 + $0xe8] sm:$0xf]
      %v2443 = vld [vmem:[%s2049 + $0xec] sm:$0x1]
      %v2444 = vld [vmem:[%s2049 + $0xf8] sm:$0xf]
      %v2445 = vld [vmem:[%s2049 + $0xfc] sm:$0x1]
      %v2446 = vld [vmem:[%s2049 + $0x108] sm:$0xf]
      %v2447 = vld [vmem:[%s2049 + $0x10c] sm:$0x1]
      %v2448 = vld [vmem:[%s2049 + $0x118] sm:$0xf]
      %v2449 = vld [vmem:[%s2049 + $0x11c] sm:$0x1]
      %v2451 = vshrl.u32 %v2418, 16
      %v2453 = vrot.slane %v2451, 4
      %v2454 = vshll.u32 %v2418, 16
      %v2456 = vrot.slane %v2454, 5
      %v2457 = vor.u32 %v2453, %v2456
      %v2458 = vrot.slane %v2457, 4
      %v2460 = vshll.u32 %v2419, 16
      %v2462 = vrot.slane %v2460, 5
      %v2463 = vsel %vm1135, %v2458, %v2462
      %v2465 = vshrl.u32 %v2420, 16
      %v2467 = vrot.slane %v2465, 4
      %v2468 = vshll.u32 %v2420, 16
      %v2470 = vrot.slane %v2468, 5
      %v2471 = vor.u32 %v2467, %v2470
      %v2472 = vrot.slane %v2471, 4
      %v2474 = vshll.u32 %v2421, 16
      %v2476 = vrot.slane %v2474, 5
      %v2477 = vsel %vm1135, %v2472, %v2476
      %v2479 = vshrl.u32 %v2422, 16
      %v2481 = vrot.slane %v2479, 4
      %v2482 = vshll.u32 %v2422, 16
      %v2484 = vrot.slane %v2482, 5
      %v2485 = vor.u32 %v2481, %v2484
      %v2486 = vrot.slane %v2485, 4
      %v2488 = vshll.u32 %v2423, 16
      %v2490 = vrot.slane %v2488, 5
      %v2491 = vsel %vm1135, %v2486, %v2490
      %v2493 = vshrl.u32 %v2424, 16
      %v2495 = vrot.slane %v2493, 4
      %v2496 = vshll.u32 %v2424, 16
      %v2498 = vrot.slane %v2496, 5
      %v2499 = vor.u32 %v2495, %v2498
      %v2500 = vrot.slane %v2499, 4
      %v2502 = vshll.u32 %v2425, 16
      %v2504 = vrot.slane %v2502, 5
      %v2505 = vsel %vm1135, %v2500, %v2504
      %v2507 = vshrl.u32 %v2426, 16
      %v2509 = vrot.slane %v2507, 4
      %v2510 = vshll.u32 %v2426, 16
      %v2512 = vrot.slane %v2510, 5
      %v2513 = vor.u32 %v2509, %v2512
      %v2514 = vrot.slane %v2513, 4
      %v2516 = vshll.u32 %v2427, 16
      %v2518 = vrot.slane %v2516, 5
      %v2519 = vsel %vm1135, %v2514, %v2518
      %v2521 = vshrl.u32 %v2428, 16
      %v2523 = vrot.slane %v2521, 4
      %v2524 = vshll.u32 %v2428, 16
      %v2526 = vrot.slane %v2524, 5
      %v2527 = vor.u32 %v2523, %v2526
      %v2528 = vrot.slane %v2527, 4
      %v2530 = vshll.u32 %v2429, 16
      %v2532 = vrot.slane %v2530, 5
      %v2533 = vsel %vm1135, %v2528, %v2532
      %v2535 = vshrl.u32 %v2430, 16
      %v2537 = vrot.slane %v2535, 4
      %v2538 = vshll.u32 %v2430, 16
      %v2540 = vrot.slane %v2538, 5
      %v2541 = vor.u32 %v2537, %v2540
      %v2542 = vrot.slane %v2541, 4
      %v2544 = vshll.u32 %v2431, 16
      %v2546 = vrot.slane %v2544, 5
      %v2547 = vsel %vm1135, %v2542, %v2546
      %v2549 = vshrl.u32 %v2432, 16
      %v2551 = vrot.slane %v2549, 4
      %v2552 = vshll.u32 %v2432, 16
      %v2554 = vrot.slane %v2552, 5
      %v2555 = vor.u32 %v2551, %v2554
      %v2556 = vrot.slane %v2555, 4
      %v2558 = vshll.u32 %v2433, 16
      %v2560 = vrot.slane %v2558, 5
      %v2561 = vsel %vm1135, %v2556, %v2560
      %v2563 = vshrl.u32 %v2434, 16
      %v2565 = vrot.slane %v2563, 4
      %v2566 = vshll.u32 %v2434, 16
      %v2568 = vrot.slane %v2566, 5
      %v2569 = vor.u32 %v2565, %v2568
      %v2570 = vrot.slane %v2569, 4
      %v2572 = vshll.u32 %v2435, 16
      %v2574 = vrot.slane %v2572, 5
      %v2575 = vsel %vm1135, %v2570, %v2574
      %v2577 = vshrl.u32 %v2436, 16
      %v2579 = vrot.slane %v2577, 4
      %v2580 = vshll.u32 %v2436, 16
      %v2582 = vrot.slane %v2580, 5
      %v2583 = vor.u32 %v2579, %v2582
      %v2584 = vrot.slane %v2583, 4
      %v2586 = vshll.u32 %v2437, 16
      %v2588 = vrot.slane %v2586, 5
      %v2589 = vsel %vm1135, %v2584, %v2588
      %v2591 = vshrl.u32 %v2438, 16
      %v2593 = vrot.slane %v2591, 4
      %v2594 = vshll.u32 %v2438, 16
      %v2596 = vrot.slane %v2594, 5
      %v2597 = vor.u32 %v2593, %v2596
      %v2598 = vrot.slane %v2597, 4
      %v2600 = vshll.u32 %v2439, 16
      %v2602 = vrot.slane %v2600, 5
      %v2603 = vsel %vm1135, %v2598, %v2602
      %v2605 = vshrl.u32 %v2440, 16
      %v2607 = vrot.slane %v2605, 4
      %v2608 = vshll.u32 %v2440, 16
      %v2610 = vrot.slane %v2608, 5
      %v2611 = vor.u32 %v2607, %v2610
      %v2612 = vrot.slane %v2611, 4
      %v2614 = vshll.u32 %v2441, 16
      %v2616 = vrot.slane %v2614, 5
      %v2617 = vsel %vm1135, %v2612, %v2616
      %v2619 = vshrl.u32 %v2442, 16
      %v2621 = vrot.slane %v2619, 4
      %v2622 = vshll.u32 %v2442, 16
      %v2624 = vrot.slane %v2622, 5
      %v2625 = vor.u32 %v2621, %v2624
      %v2626 = vrot.slane %v2625, 4
      %v2628 = vshll.u32 %v2443, 16
      %v2630 = vrot.slane %v2628, 5
      %v2631 = vsel %vm1135, %v2626, %v2630
      %v2633 = vshrl.u32 %v2444, 16
      %v2635 = vrot.slane %v2633, 4
      %v2636 = vshll.u32 %v2444, 16
      %v2638 = vrot.slane %v2636, 5
      %v2639 = vor.u32 %v2635, %v2638
      %v2640 = vrot.slane %v2639, 4
      %v2642 = vshll.u32 %v2445, 16
      %v2644 = vrot.slane %v2642, 5
      %v2645 = vsel %vm1135, %v2640, %v2644
      %v2647 = vshrl.u32 %v2446, 16
      %v2649 = vrot.slane %v2647, 4
      %v2650 = vshll.u32 %v2446, 16
      %v2652 = vrot.slane %v2650, 5
      %v2653 = vor.u32 %v2649, %v2652
      %v2654 = vrot.slane %v2653, 4
      %v2656 = vshll.u32 %v2447, 16
      %v2658 = vrot.slane %v2656, 5
      %v2659 = vsel %vm1135, %v2654, %v2658
      %v2661 = vshrl.u32 %v2448, 16
      %v2663 = vrot.slane %v2661, 4
      %v2664 = vshll.u32 %v2448, 16
      %v2666 = vrot.slane %v2664, 5
      %v2667 = vor.u32 %v2663, %v2666
      %v2668 = vrot.slane %v2667, 4
      %v2670 = vshll.u32 %v2449, 16
      %v2672 = vrot.slane %v2670, 5
      %v2673 = vsel %vm1135, %v2668, %v2672
      %2690 = vst.msk [vmem:[#allocation3 + $0x10] sm:$0xf] %vm987, %v2463
      %2691 = vst.msk [vmem:[#allocation3 + $0x24] sm:$0xf] %vm987, %v2477
      %2692 = vst.msk [vmem:[#allocation3 + $0x38] sm:$0xf] %vm987, %v2491
      %2693 = vst.msk [vmem:[#allocation3 + $0x4c] sm:$0xf] %vm987, %v2505
      %2694 = vst.msk [vmem:[#allocation3 + $0x60] sm:$0xf] %vm987, %v2519
      %2695 = vst.msk [vmem:[#allocation3 + $0x74] sm:$0xf] %vm987, %v2533
      %2696 = vst.msk [vmem:[#allocation3 + $0x88] sm:$0xf] %vm987, %v2547
      %2697 = vst.msk [vmem:[#allocation3 + $0x9c] sm:$0xf] %vm987, %v2561
      %2698 = vst.msk [vmem:[#allocation3 + $0xb0] sm:$0xf] %vm987, %v2575
      %2699 = vst.msk [vmem:[#allocation3 + $0xc4] sm:$0xf] %vm987, %v2589
      %2700 = vst.msk [vmem:[#allocation3 + $0xd8] sm:$0xf] %vm987, %v2603
      %2701 = vst.msk [vmem:[#allocation3 + $0xec] sm:$0xf] %vm987, %v2617
      %2702 = vst.msk [vmem:[#allocation3 + $0x100] sm:$0xf] %vm987, %v2631
      %2703 = vst.msk [vmem:[#allocation3 + $0x114] sm:$0xf] %vm987, %v2645
      %2704 = vst.msk [vmem:[#allocation3 + $0x128] sm:$0xf] %vm987, %v2659
      %2705 = vst.msk [vmem:[#allocation3 + $0x13c] sm:$0xf] %vm987, %v2673
      %v2706 = vld [vmem:[#allocation3] sm:$0xff]
      %v2707 = vld [vmem:[#allocation3 + $0x8] sm:$0xff]
      %v2708 = vld [vmem:[#allocation3 + $0x10] sm:$0xf]
      %v2709 = vld [vmem:[#allocation3 + $0x14] sm:$0xff]
      %v2710 = vld [vmem:[#allocation3 + $0x1c] sm:$0xff]
      %v2711 = vld [vmem:[#allocation3 + $0x24] sm:$0xf]
      %v2712 = vld [vmem:[#allocation3 + $0x28] sm:$0xff]
      %v2713 = vld [vmem:[#allocation3 + $0x30] sm:$0xff]
      %v2714 = vld [vmem:[#allocation3 + $0x38] sm:$0xf]
      %v2715 = vld [vmem:[#allocation3 + $0x3c] sm:$0xff]
      %v2716 = vld [vmem:[#allocation3 + $0x44] sm:$0xff]
      %v2717 = vld [vmem:[#allocation3 + $0x4c] sm:$0xf]
      %v2718 = vld [vmem:[#allocation3 + $0x50] sm:$0xff]
      %v2719 = vld [vmem:[#allocation3 + $0x58] sm:$0xff]
      %v2720 = vld [vmem:[#allocation3 + $0x60] sm:$0xf]
      %v2721 = vld [vmem:[#allocation3 + $0x64] sm:$0xff]
      %v2722 = vld [vmem:[#allocation3 + $0x6c] sm:$0xff]
      %v2723 = vld [vmem:[#allocation3 + $0x74] sm:$0xf]
      %v2724 = vld [vmem:[#allocation3 + $0x78] sm:$0xff]
      %v2725 = vld [vmem:[#allocation3 + $0x80] sm:$0xff]
      %v2726 = vld [vmem:[#allocation3 + $0x88] sm:$0xf]
      %v2727 = vld [vmem:[#allocation3 + $0x8c] sm:$0xff]
      %v2728 = vld [vmem:[#allocation3 + $0x94] sm:$0xff]
      %v2729 = vld [vmem:[#allocation3 + $0x9c] sm:$0xf]
      %v2730 = vld [vmem:[#allocation3 + $0xa0] sm:$0xff]
      %v2731 = vld [vmem:[#allocation3 + $0xa8] sm:$0xff]
      %v2732 = vld [vmem:[#allocation3 + $0xb0] sm:$0xf]
      %v2733 = vld [vmem:[#allocation3 + $0xb4] sm:$0xff]
      %v2734 = vld [vmem:[#allocation3 + $0xbc] sm:$0xff]
      %v2735 = vld [vmem:[#allocation3 + $0xc4] sm:$0xf]
      %v2736 = vld [vmem:[#allocation3 + $0xc8] sm:$0xff]
      %v2737 = vld [vmem:[#allocation3 + $0xd0] sm:$0xff]
      %v2738 = vld [vmem:[#allocation3 + $0xd8] sm:$0xf]
      %v2739 = vld [vmem:[#allocation3 + $0xdc] sm:$0xff]
      %v2740 = vld [vmem:[#allocation3 + $0xe4] sm:$0xff]
      %v2741 = vld [vmem:[#allocation3 + $0xec] sm:$0xf]
      %v2742 = vld [vmem:[#allocation3 + $0xf0] sm:$0xff]
      %v2743 = vld [vmem:[#allocation3 + $0xf8] sm:$0xff]
      %v2744 = vld [vmem:[#allocation3 + $0x100] sm:$0xf]
      %v2745 = vld [vmem:[#allocation3 + $0x104] sm:$0xff]
      %v2746 = vld [vmem:[#allocation3 + $0x10c] sm:$0xff]
      %v2747 = vld [vmem:[#allocation3 + $0x114] sm:$0xf]
      %v2748 = vld [vmem:[#allocation3 + $0x118] sm:$0xff]
      %v2749 = vld [vmem:[#allocation3 + $0x120] sm:$0xff]
      %v2750 = vld [vmem:[#allocation3 + $0x128] sm:$0xf]
      %v2751 = vld [vmem:[#allocation3 + $0x12c] sm:$0xff]
      %v2752 = vld [vmem:[#allocation3 + $0x134] sm:$0xff]
      %v2753 = vld [vmem:[#allocation3 + $0x13c] sm:$0xf]
      %v2754 = vld [vmem:[%s1] sm:$0xf]
      %v2755 = vld [vmem:[%s1 + $0x4] sm:$0xf]
      %v2756 = vld [vmem:[%s1 + $0x8] sm:$0xf]
      %v2757 = vld [vmem:[%s1 + $0xc] sm:$0xf]
      %v2758 = vld [vmem:[%s1 + $0x10] sm:$0xf]
      %v2759 = vld [vmem:[%s1 + $0x14] sm:$0xf]
      %v2760 = vld [vmem:[%s1 + $0x18] sm:$0xf]
      %v2761 = vld [vmem:[%s1 + $0x1c] sm:$0xf]
      %v2762 = vld [vmem:[%s1 + $0x20] sm:$0xf]
      %v2763 = vld [vmem:[%s1 + $0x24] sm:$0xf]
      %v2764 = vld [vmem:[%s1 + $0x28] sm:$0xf]
      %v2765 = vld [vmem:[%s1 + $0x2c] sm:$0xf]
      %v2766 = vld [vmem:[%s1 + $0x30] sm:$0xf]
      %v2767 = vld [vmem:[%s1 + $0x34] sm:$0xf]
      %v2768 = vld [vmem:[%s1 + $0x38] sm:$0xf]
      %v2769 = vld [vmem:[%s1 + $0x3c] sm:$0xf]
      %v2770 = vld [vmem:[%s1 + $0x40] sm:$0xf]
      %v2771 = vld [vmem:[%s1 + $0x44] sm:$0xf]
      %v2772 = vld [vmem:[%s1 + $0x48] sm:$0xf]
      %v2773 = vld [vmem:[%s1 + $0x4c] sm:$0xf]
      %v2774 = vld [vmem:[%s1 + $0x50] sm:$0xf]
      %v2775 = vld [vmem:[%s1 + $0x54] sm:$0xf]
      %v2776 = vld [vmem:[%s1 + $0x58] sm:$0xf]
      %v2777 = vld [vmem:[%s1 + $0x5c] sm:$0xf]
      %v2778 = vld [vmem:[%s1 + $0x60] sm:$0xf]
      %v2779 = vld [vmem:[%s1 + $0x64] sm:$0xf]
      %v2780 = vld [vmem:[%s1 + $0x68] sm:$0xf]
      %v2781 = vld [vmem:[%s1 + $0x6c] sm:$0xf]
      %v2782 = vld [vmem:[%s1 + $0x70] sm:$0xf]
      %v2783 = vld [vmem:[%s1 + $0x74] sm:$0xf]
      %v2784 = vld [vmem:[%s1 + $0x78] sm:$0xf]
      %v2785 = vld [vmem:[%s1 + $0x7c] sm:$0xf]
      %v2786 = vld [vmem:[%s1 + $0x80] sm:$0xf]
      %v2787 = vld [vmem:[%s1 + $0x84] sm:$0xf]
      %v2788 = vld [vmem:[%s1 + $0x88] sm:$0xf]
      %v2789 = vld [vmem:[%s1 + $0x8c] sm:$0xf]
      %v2790 = vld [vmem:[%s1 + $0x90] sm:$0xf]
      %v2791 = vld [vmem:[%s1 + $0x94] sm:$0xf]
      %v2792 = vld [vmem:[%s1 + $0x98] sm:$0xf]
      %v2793 = vld [vmem:[%s1 + $0x9c] sm:$0xf]
      %v2794 = vld [vmem:[%s1 + $0xa0] sm:$0xf]
      %v2795 = vld [vmem:[%s1 + $0xa4] sm:$0xf]
      %v2796 = vld [vmem:[%s1 + $0xa8] sm:$0xf]
      %v2797 = vld [vmem:[%s1 + $0xac] sm:$0xf]
      %v2798 = vld [vmem:[%s1 + $0xb0] sm:$0xf]
      %v2799 = vld [vmem:[%s1 + $0xb4] sm:$0xf]
      %v2800 = vld [vmem:[%s1 + $0xb8] sm:$0xf]
      %v2801 = vld [vmem:[%s1 + $0xbc] sm:$0xf]
      %v2802 = vld [vmem:[%s1 + $0xc0] sm:$0xf]
      %v2803 = vld [vmem:[%s1 + $0xc4] sm:$0xf]
      %v2804 = vld [vmem:[%s1 + $0xc8] sm:$0xf]
      %v2805 = vld [vmem:[%s1 + $0xcc] sm:$0xf]
      %v2806 = vld [vmem:[%s1 + $0xd0] sm:$0xf]
      %v2807 = vld [vmem:[%s1 + $0xd4] sm:$0xf]
      %v2808 = vld [vmem:[%s1 + $0xd8] sm:$0xf]
      %v2809 = vld [vmem:[%s1 + $0xdc] sm:$0xf]
      %v2810 = vld [vmem:[%s1 + $0xe0] sm:$0xf]
      %v2811 = vld [vmem:[%s1 + $0xe4] sm:$0xf]
      %v2812 = vld [vmem:[%s1 + $0xe8] sm:$0xf]
      %v2813 = vld [vmem:[%s1 + $0xec] sm:$0xf]
      %v2814 = vld [vmem:[%s1 + $0xf0] sm:$0xf]
      %v2815 = vld [vmem:[%s1 + $0xf4] sm:$0xf]
      %v2816 = vld [vmem:[%s1 + $0xf8] sm:$0xf]
      %v2817 = vld [vmem:[%s1 + $0xfc] sm:$0xf]
      %v2818 = vld [vmem:[%s1 + $0x100] sm:$0xf]
      %v2819 = vld [vmem:[%s1 + $0x104] sm:$0xf]
      %v2820 = vld [vmem:[%s1 + $0x108] sm:$0xf]
      %v2821 = vld [vmem:[%s1 + $0x10c] sm:$0xf]
      %v2822 = vld [vmem:[%s1 + $0x110] sm:$0xf]
      %v2823 = vld [vmem:[%s1 + $0x114] sm:$0xf]
      %v2824 = vld [vmem:[%s1 + $0x118] sm:$0xf]
      %v2825 = vld [vmem:[%s1 + $0x11c] sm:$0xf]
      %v2826 = vld [vmem:[%s2] sm:$0x1]
      %v2828 = vlaneseq
      %v2829 = vshrl.u32 %v2828, 7
      %v2830 = vsub.s32 0, %v2829
      %v2831 = vrot.slane %v2826, %v2830
      %v2881 = vunpack.c.l.b16 %v2706
      %v2882 = vunpack.c.h.b16 %v2706
      %v2883 = vunpack.c.l.b16 %v2707
      %v2884 = vunpack.c.h.b16 %v2707
      %v2885 = vunpack.c.l.b16 %v2708
      %v2886 = vunpack.c.l.b16 %v2709
      %v2887 = vunpack.c.h.b16 %v2709
      %v2888 = vunpack.c.l.b16 %v2710
      %v2889 = vunpack.c.h.b16 %v2710
      %v2890 = vunpack.c.l.b16 %v2711
      %v2891 = vunpack.c.l.b16 %v2712
      %v2892 = vunpack.c.h.b16 %v2712
      %v2893 = vunpack.c.l.b16 %v2713
      %v2894 = vunpack.c.h.b16 %v2713
      %v2895 = vunpack.c.l.b16 %v2714
      %v2896 = vunpack.c.l.b16 %v2715
      %v2897 = vunpack.c.h.b16 %v2715
      %v2898 = vunpack.c.l.b16 %v2716
      %v2899 = vunpack.c.h.b16 %v2716
      %v2900 = vunpack.c.l.b16 %v2717
      %v2901 = vunpack.c.l.b16 %v2718
      %v2902 = vunpack.c.h.b16 %v2718
      %v2903 = vunpack.c.l.b16 %v2719
      %v2904 = vunpack.c.h.b16 %v2719
      %v2905 = vunpack.c.l.b16 %v2720
      %v2906 = vunpack.c.l.b16 %v2721
      %v2907 = vunpack.c.h.b16 %v2721
      %v2908 = vunpack.c.l.b16 %v2722
      %v2909 = vunpack.c.h.b16 %v2722
      %v2910 = vunpack.c.l.b16 %v2723
      %v2911 = vunpack.c.l.b16 %v2724
      %v2912 = vunpack.c.h.b16 %v2724
      %v2913 = vunpack.c.l.b16 %v2725
      %v2914 = vunpack.c.h.b16 %v2725
      %v2915 = vunpack.c.l.b16 %v2726
      %v2916 = vunpack.c.l.b16 %v2727
      %v2917 = vunpack.c.h.b16 %v2727
      %v2918 = vunpack.c.l.b16 %v2728
      %v2919 = vunpack.c.h.b16 %v2728
      %v2920 = vunpack.c.l.b16 %v2729
      %v2921 = vunpack.c.l.b16 %v2730
      %v2922 = vunpack.c.h.b16 %v2730
      %v2923 = vunpack.c.l.b16 %v2731
      %v2924 = vunpack.c.h.b16 %v2731
      %v2925 = vunpack.c.l.b16 %v2732
      %v2926 = vunpack.c.l.b16 %v2733
      %v2927 = vunpack.c.h.b16 %v2733
      %v2928 = vunpack.c.l.b16 %v2734
      %v2929 = vunpack.c.h.b16 %v2734
      %v2930 = vunpack.c.l.b16 %v2735
      %v2931 = vunpack.c.l.b16 %v2736
      %v2932 = vunpack.c.h.b16 %v2736
      %v2933 = vunpack.c.l.b16 %v2737
      %v2934 = vunpack.c.h.b16 %v2737
      %v2935 = vunpack.c.l.b16 %v2738
      %v2936 = vunpack.c.l.b16 %v2739
      %v2937 = vunpack.c.h.b16 %v2739
      %v2938 = vunpack.c.l.b16 %v2740
      %v2939 = vunpack.c.h.b16 %v2740
      %v2940 = vunpack.c.l.b16 %v2741
      %v2941 = vunpack.c.l.b16 %v2742
      %v2942 = vunpack.c.h.b16 %v2742
      %v2943 = vunpack.c.l.b16 %v2743
      %v2944 = vunpack.c.h.b16 %v2743
      %v2945 = vunpack.c.l.b16 %v2744
      %v2946 = vunpack.c.l.b16 %v2745
      %v2947 = vunpack.c.h.b16 %v2745
      %v2948 = vunpack.c.l.b16 %v2746
      %v2949 = vunpack.c.h.b16 %v2746
      %v2950 = vunpack.c.l.b16 %v2747
      %v2951 = vunpack.c.l.b16 %v2748
      %v2952 = vunpack.c.h.b16 %v2748
      %v2953 = vunpack.c.l.b16 %v2749
      %v2954 = vunpack.c.h.b16 %v2749
      %v2955 = vunpack.c.l.b16 %v2750
      %v2956 = vunpack.c.l.b16 %v2751
      %v2957 = vunpack.c.h.b16 %v2751
      %v2958 = vunpack.c.l.b16 %v2752
      %v2959 = vunpack.c.h.b16 %v2752
      %v2960 = vunpack.c.l.b16 %v2753
      %v2961 = vpack.c.b16 %v2886, %v2881
      %v2962 = vpack.c.b16 %v2887, %v2882
      %v2963 = vpack.c.b16 %v2888, %v2883
      %v2964 = vpack.c.b16 %v2889, %v2884
      %v2965 = vpack.c.b16 %v2890, %v2885
      %v2966 = vpack.c.b16 %v2896, %v2891
      %v2967 = vpack.c.b16 %v2897, %v2892
      %v2968 = vpack.c.b16 %v2898, %v2893
      %v2969 = vpack.c.b16 %v2899, %v2894
      %v2970 = vpack.c.b16 %v2900, %v2895
      %v2971 = vpack.c.b16 %v2906, %v2901
      %v2972 = vpack.c.b16 %v2907, %v2902
      %v2973 = vpack.c.b16 %v2908, %v2903
      %v2974 = vpack.c.b16 %v2909, %v2904
      %v2975 = vpack.c.b16 %v2910, %v2905
      %v2976 = vpack.c.b16 %v2916, %v2911
      %v2977 = vpack.c.b16 %v2917, %v2912
      %v2978 = vpack.c.b16 %v2918, %v2913
      %v2979 = vpack.c.b16 %v2919, %v2914
      %v2980 = vpack.c.b16 %v2920, %v2915
      %v2981 = vpack.c.b16 %v2926, %v2921
      %v2982 = vpack.c.b16 %v2927, %v2922
      %v2983 = vpack.c.b16 %v2928, %v2923
      %v2984 = vpack.c.b16 %v2929, %v2924
      %v2985 = vpack.c.b16 %v2930, %v2925
      %v2986 = vpack.c.b16 %v2936, %v2931
      %v2987 = vpack.c.b16 %v2937, %v2932
      %v2988 = vpack.c.b16 %v2938, %v2933
      %v2989 = vpack.c.b16 %v2939, %v2934
      %v2990 = vpack.c.b16 %v2940, %v2935
      %v2991 = vpack.c.b16 %v2946, %v2941
      %v2992 = vpack.c.b16 %v2947, %v2942
      %v2993 = vpack.c.b16 %v2948, %v2943
      %v2994 = vpack.c.b16 %v2949, %v2944
      %v2995 = vpack.c.b16 %v2950, %v2945
      %v2996 = vpack.c.b16 %v2956, %v2951
      %v2997 = vpack.c.b16 %v2957, %v2952
      %v2998 = vpack.c.b16 %v2958, %v2953
      %v2999 = vpack.c.b16 %v2959, %v2954
      %v3000 = vpack.c.b16 %v2960, %v2955
      %v3105 = vunpack.c.l.b16 %v2754
      %v3106 = vunpack.c.l.b16 %v2755
      %v3107 = vunpack.c.l.b16 %v2756
      %v3108 = vunpack.c.l.b16 %v2757
      %v3109 = vunpack.c.l.b16 %v2758
      %v3110 = vunpack.c.l.b16 %v2759
      %v3111 = vunpack.c.l.b16 %v2760
      %v3112 = vunpack.c.l.b16 %v2761
      %v3113 = vunpack.c.l.b16 %v2762
      %v3114 = vunpack.c.l.b16 %v2763
      %v3115 = vunpack.c.l.b16 %v2764
      %v3116 = vunpack.c.l.b16 %v2765
      %v3117 = vunpack.c.l.b16 %v2766
      %v3118 = vunpack.c.l.b16 %v2767
      %v3119 = vunpack.c.l.b16 %v2768
      %v3120 = vunpack.c.l.b16 %v2769
      %v3121 = vunpack.c.l.b16 %v2770
      %v3122 = vunpack.c.l.b16 %v2771
      %v3123 = vunpack.c.l.b16 %v2772
      %v3124 = vunpack.c.l.b16 %v2773
      %v3125 = vunpack.c.l.b16 %v2774
      %v3126 = vunpack.c.l.b16 %v2775
      %v3127 = vunpack.c.l.b16 %v2776
      %v3128 = vunpack.c.l.b16 %v2777
      %v3129 = vunpack.c.l.b16 %v2778
      %v3130 = vunpack.c.l.b16 %v2779
      %v3131 = vunpack.c.l.b16 %v2780
      %v3132 = vunpack.c.l.b16 %v2781
      %v3133 = vunpack.c.l.b16 %v2782
      %v3134 = vunpack.c.l.b16 %v2783
      %v3135 = vunpack.c.l.b16 %v2784
      %v3136 = vunpack.c.l.b16 %v2785
      %v3137 = vunpack.c.l.b16 %v2786
      %v3138 = vunpack.c.l.b16 %v2787
      %v3139 = vunpack.c.l.b16 %v2788
      %v3140 = vunpack.c.l.b16 %v2789
      %v3141 = vunpack.c.l.b16 %v2790
      %v3142 = vunpack.c.l.b16 %v2791
      %v3143 = vunpack.c.l.b16 %v2792
      %v3144 = vunpack.c.l.b16 %v2793
      %v3145 = vunpack.c.l.b16 %v2794
      %v3146 = vunpack.c.l.b16 %v2795
      %v3147 = vunpack.c.l.b16 %v2796
      %v3148 = vunpack.c.l.b16 %v2797
      %v3149 = vunpack.c.l.b16 %v2798
      %v3150 = vunpack.c.l.b16 %v2799
      %v3151 = vunpack.c.l.b16 %v2800
      %v3152 = vunpack.c.l.b16 %v2801
      %v3153 = vunpack.c.l.b16 %v2802
      %v3154 = vunpack.c.l.b16 %v2803
      %v3155 = vunpack.c.l.b16 %v2804
      %v3156 = vunpack.c.l.b16 %v2805
      %v3157 = vunpack.c.l.b16 %v2806
      %v3158 = vunpack.c.l.b16 %v2807
      %v3159 = vunpack.c.l.b16 %v2808
      %v3160 = vunpack.c.l.b16 %v2809
      %v3161 = vunpack.c.l.b16 %v2810
      %v3162 = vunpack.c.l.b16 %v2811
      %v3163 = vunpack.c.l.b16 %v2812
      %v3164 = vunpack.c.l.b16 %v2813
      %v3165 = vunpack.c.l.b16 %v2814
      %v3166 = vunpack.c.l.b16 %v2815
      %v3167 = vunpack.c.l.b16 %v2816
      %v3168 = vunpack.c.l.b16 %v2817
      %v3169 = vunpack.c.l.b16 %v2818
      %v3170 = vunpack.c.l.b16 %v2819
      %v3171 = vunpack.c.l.b16 %v2820
      %v3172 = vunpack.c.l.b16 %v2821
      %v3173 = vunpack.c.l.b16 %v2822
      %v3174 = vunpack.c.l.b16 %v2823
      %v3175 = vunpack.c.l.b16 %v2824
      %v3176 = vunpack.c.l.b16 %v2825
      %v3177 = vpack.c.b16 %v3106, %v3105
      %v3178 = vpack.c.b16 %v3108, %v3107
      %v3179 = vpack.c.b16 %v3110, %v3109
      %v3180 = vpack.c.b16 %v3112, %v3111
      %v3181 = vpack.c.b16 %v3114, %v3113
      %v3182 = vpack.c.b16 %v3116, %v3115
      %v3183 = vpack.c.b16 %v3118, %v3117
      %v3184 = vpack.c.b16 %v3120, %v3119
      %v3185 = vpack.c.b16 %v3122, %v3121
      %v3186 = vpack.c.b16 %v3124, %v3123
      %v3187 = vpack.c.b16 %v3126, %v3125
      %v3188 = vpack.c.b16 %v3128, %v3127
      %v3189 = vpack.c.b16 %v3130, %v3129
      %v3190 = vpack.c.b16 %v3132, %v3131
      %v3191 = vpack.c.b16 %v3134, %v3133
      %v3192 = vpack.c.b16 %v3136, %v3135
      %v3193 = vpack.c.b16 %v3138, %v3137
      %v3194 = vpack.c.b16 %v3140, %v3139
      %v3195 = vpack.c.b16 %v3142, %v3141
      %v3196 = vpack.c.b16 %v3144, %v3143
      %v3197 = vpack.c.b16 %v3146, %v3145
      %v3198 = vpack.c.b16 %v3148, %v3147
      %v3199 = vpack.c.b16 %v3150, %v3149
      %v3200 = vpack.c.b16 %v3152, %v3151
      %v3201 = vpack.c.b16 %v3154, %v3153
      %v3202 = vpack.c.b16 %v3156, %v3155
      %v3203 = vpack.c.b16 %v3158, %v3157
      %v3204 = vpack.c.b16 %v3160, %v3159
      %v3205 = vpack.c.b16 %v3162, %v3161
      %v3206 = vpack.c.b16 %v3164, %v3163
      %v3207 = vpack.c.b16 %v3166, %v3165
      %v3208 = vpack.c.b16 %v3168, %v3167
      %v3209 = vpack.c.b16 %v3170, %v3169
      %v3210 = vpack.c.b16 %v3172, %v3171
      %v3211 = vpack.c.b16 %v3174, %v3173
      %v3212 = vpack.c.b16 %v3176, %v3175
      %vm3249 = vcmask 523264
      %v3251 = vsel %vm3249, %v2965, 0
      %v3254 = vsel %vm3249, %v2970, 0
      %v3257 = vsel %vm3249, %v2975, 0
      %v3260 = vsel %vm3249, %v2980, 0
      %v3263 = vsel %vm3249, %v2985, 0
      %v3266 = vsel %vm3249, %v2990, 0
      %v3269 = vsel %vm3249, %v2995, 0
      %v3272 = vsel %vm3249, %v3000, 0
      %3274 = vmatprep.subr.bf16.mxu0 0
      %3275 = vmatpush1.bf16.msra.mxu0 %v3184
      %3276 = vmatprep.subr.bf16.mxu0 0
      %3277 = vmatpush1.bf16.msra.mxu0 %v3183
      %3278 = vmatprep.subr.bf16.mxu0 0
      %3279 = vmatpush1.bf16.msra.mxu0 %v3182
      %3280 = vmatprep.subr.bf16.mxu0 0
      %3281 = vmatpush1.bf16.msra.mxu0 %v3181
      %3282 = vmatprep.subr.bf16.mxu0 0
      %3283 = vmatpush1.bf16.msra.mxu0 %v3180
      %3284 = vmatprep.subr.bf16.mxu0 0
      %3285 = vmatpush1.bf16.msra.mxu0 %v3179
      %3286 = vmatprep.subr.bf16.mxu0 0
      %3287 = vmatpush1.bf16.msra.mxu0 %v3178
      %3288 = vmatprep.subr.bf16.mxu0 0
      %3289 = vmatpush1.bf16.msra.mxu0 %v3177
      %3290 = vmatprep.subr.bf16.mxu0 0
      %3291 = vmatpush2.bf16.msra.mxu0 %v3192
      %3292 = vmatprep.subr.bf16.mxu0 0
      %3293 = vmatpush2.bf16.msra.mxu0 %v3191
      %3294 = vmatprep.subr.bf16.mxu0 0
      %3295 = vmatpush2.bf16.msra.mxu0 %v3190
      %3296 = vmatprep.subr.bf16.mxu0 0
      %3297 = vmatpush2.bf16.msra.mxu0 %v3189
      %3298 = vmatprep.subr.bf16.mxu0 0
      %3299 = vmatpush2.bf16.msra.mxu0 %v3188
      %3300 = vmatprep.subr.bf16.mxu0 0
      %3301 = vmatpush2.bf16.msra.mxu0 %v3187
      %3302 = vmatprep.subr.bf16.mxu0 0
      %3303 = vmatpush2.bf16.msra.mxu0 %v3186
      %3304 = vmatprep.subr.bf16.mxu0 0
      %3305 = vmatpush2.bf16.msra.mxu0 %v3185
      %3306 = vmatprep.mubr.bf16.mxu0 %v2962
      %3307 = vmatmul.mubr.bf16.gmra.mxu0 %v2961
      %v3308 = vpop.f32.mrf.mxu0
      %v3309 = vadd.f32 %v2831, %v3308
      %v3310 = vpop.f32.mrf.mxu0
      %v3311 = vpop.f32.mrf.mxu0
      %v3312 = vadd.f32 %v2831, %v3311
      %v3313 = vpop.f32.mrf.mxu0
      %3314 = vmatprep.mubr.bf16.mxu0 %v2967
      %3315 = vmatmul.mubr.bf16.gmra.mxu0 %v2966
      %v3316 = vpop.f32.mrf.mxu0
      %v3317 = vadd.f32 %v2831, %v3316
      %v3318 = vpop.f32.mrf.mxu0
      %v3319 = vpop.f32.mrf.mxu0
      %v3320 = vadd.f32 %v2831, %v3319
      %v3321 = vpop.f32.mrf.mxu0
      %3322 = vmatprep.mubr.bf16.mxu0 %v2972
      %3323 = vmatmul.mubr.bf16.gmra.mxu0 %v2971
      %v3324 = vpop.f32.mrf.mxu0
      %v3325 = vadd.f32 %v2831, %v3324
      %v3326 = vpop.f32.mrf.mxu0
      %v3327 = vpop.f32.mrf.mxu0
      %v3328 = vadd.f32 %v2831, %v3327
      %v3329 = vpop.f32.mrf.mxu0
      %3330 = vmatprep.mubr.bf16.mxu0 %v2977
      %3331 = vmatmul.mubr.bf16.gmra.mxu0 %v2976
      %v3332 = vpop.f32.mrf.mxu0
      %v3333 = vadd.f32 %v2831, %v3332
      %v3334 = vpop.f32.mrf.mxu0
      %v3335 = vpop.f32.mrf.mxu0
      %v3336 = vadd.f32 %v2831, %v3335
      %v3337 = vpop.f32.mrf.mxu0
      %3338 = vmatprep.mubr.bf16.mxu0 %v2982
      %3339 = vmatmul.mubr.bf16.gmra.mxu0 %v2981
      %v3340 = vpop.f32.mrf.mxu0
      %v3341 = vadd.f32 %v2831, %v3340
      %v3342 = vpop.f32.mrf.mxu0
      %v3343 = vpop.f32.mrf.mxu0
      %v3344 = vadd.f32 %v2831, %v3343
      %v3345 = vpop.f32.mrf.mxu0
      %3346 = vmatprep.mubr.bf16.mxu0 %v2987
      %3347 = vmatmul.mubr.bf16.gmra.mxu0 %v2986
      %v3348 = vpop.f32.mrf.mxu0
      %v3349 = vadd.f32 %v2831, %v3348
      %v3350 = vpop.f32.mrf.mxu0
      %v3351 = vpop.f32.mrf.mxu0
      %v3352 = vadd.f32 %v2831, %v3351
      %v3353 = vpop.f32.mrf.mxu0
      %3354 = vmatprep.mubr.bf16.mxu0 %v2992
      %3355 = vmatmul.mubr.bf16.gmra.mxu0 %v2991
      %v3356 = vpop.f32.mrf.mxu0
      %v3357 = vadd.f32 %v2831, %v3356
      %v3358 = vpop.f32.mrf.mxu0
      %v3359 = vpop.f32.mrf.mxu0
      %v3360 = vadd.f32 %v2831, %v3359
      %v3361 = vpop.f32.mrf.mxu0
      %3362 = vmatprep.mubr.bf16.mxu0 %v2997
      %3363 = vmatmul.mubr.bf16.gmra.mxu0 %v2996
      %v3364 = vpop.f32.mrf.mxu0
      %v3365 = vadd.f32 %v2831, %v3364
      %v3366 = vpop.f32.mrf.mxu0
      %v3367 = vpop.f32.mrf.mxu0
      %v3368 = vadd.f32 %v2831, %v3367
      %v3369 = vpop.f32.mrf.mxu0
      %3370 = vdwg.mxu0
      %3371 = vmatprep.subr.bf16.mxu0 0
      %3372 = vmatpush1.bf16.msra.mxu0 %v3200
      %3373 = vmatprep.subr.bf16.mxu0 0
      %3374 = vmatpush1.bf16.msra.mxu0 %v3199
      %3375 = vmatprep.subr.bf16.mxu0 0
      %3376 = vmatpush1.bf16.msra.mxu0 %v3198
      %3377 = vmatprep.subr.bf16.mxu0 0
      %3378 = vmatpush1.bf16.msra.mxu0 %v3197
      %3379 = vmatprep.subr.bf16.mxu0 0
      %3380 = vmatpush1.bf16.msra.mxu0 %v3196
      %3381 = vmatprep.subr.bf16.mxu0 0
      %3382 = vmatpush1.bf16.msra.mxu0 %v3195
      %3383 = vmatprep.subr.bf16.mxu0 0
      %3384 = vmatpush1.bf16.msra.mxu0 %v3194
      %3385 = vmatprep.subr.bf16.mxu0 0
      %3386 = vmatpush1.bf16.msra.mxu0 %v3193
      %3387 = vmatprep.subr.bf16.mxu0 0
      %3388 = vmatpush2.bf16.msra.mxu0 %v3208
      %3389 = vmatprep.subr.bf16.mxu0 0
      %3390 = vmatpush2.bf16.msra.mxu0 %v3207
      %3391 = vmatprep.subr.bf16.mxu0 0
      %3392 = vmatpush2.bf16.msra.mxu0 %v3206
      %3393 = vmatprep.subr.bf16.mxu0 0
      %3394 = vmatpush2.bf16.msra.mxu0 %v3205
      %3395 = vmatprep.subr.bf16.mxu0 0
      %3396 = vmatpush2.bf16.msra.mxu0 %v3204
      %3397 = vmatprep.subr.bf16.mxu0 0
      %3398 = vmatpush2.bf16.msra.mxu0 %v3203
      %3399 = vmatprep.subr.bf16.mxu0 0
      %3400 = vmatpush2.bf16.msra.mxu0 %v3202
      %3401 = vmatprep.subr.bf16.mxu0 0
      %3402 = vmatpush2.bf16.msra.mxu0 %v3201
      %3403 = vmatprep.mubr.bf16.mxu0 %v2964
      %3404 = vmatmul.mubr.bf16.gmra.mxu0 %v2963
      %v3405 = vpop.f32.mrf.mxu0
      %v3406 = vadd.f32 %v3309, %v3405
      %v3407 = vpop.f32.mrf.mxu0
      %v3408 = vpop.f32.mrf.mxu0
      %v3409 = vadd.f32 %v3312, %v3408
      %v3410 = vpop.f32.mrf.mxu0
      %3411 = vmatprep.mubr.bf16.mxu0 %v2969
      %3412 = vmatmul.mubr.bf16.gmra.mxu0 %v2968
      %v3413 = vpop.f32.mrf.mxu0
      %v3414 = vadd.f32 %v3317, %v3413
      %v3415 = vpop.f32.mrf.mxu0
      %v3416 = vpop.f32.mrf.mxu0
      %v3417 = vadd.f32 %v3320, %v3416
      %v3418 = vpop.f32.mrf.mxu0
      %3419 = vmatprep.mubr.bf16.mxu0 %v2974
      %3420 = vmatmul.mubr.bf16.gmra.mxu0 %v2973
      %v3421 = vpop.f32.mrf.mxu0
      %v3422 = vadd.f32 %v3325, %v3421
      %v3423 = vpop.f32.mrf.mxu0
      %v3424 = vpop.f32.mrf.mxu0
      %v3425 = vadd.f32 %v3328, %v3424
      %v3426 = vpop.f32.mrf.mxu0
      %3427 = vmatprep.mubr.bf16.mxu0 %v2979
      %3428 = vmatmul.mubr.bf16.gmra.mxu0 %v2978
      %v3429 = vpop.f32.mrf.mxu0
      %v3430 = vadd.f32 %v3333, %v3429
      %v3431 = vpop.f32.mrf.mxu0
      %v3432 = vpop.f32.mrf.mxu0
      %v3433 = vadd.f32 %v3336, %v3432
      %v3434 = vpop.f32.mrf.mxu0
      %3435 = vmatprep.mubr.bf16.mxu0 %v2984
      %3436 = vmatmul.mubr.bf16.gmra.mxu0 %v2983
      %v3437 = vpop.f32.mrf.mxu0
      %v3438 = vadd.f32 %v3341, %v3437
      %v3439 = vpop.f32.mrf.mxu0
      %v3440 = vpop.f32.mrf.mxu0
      %v3441 = vadd.f32 %v3344, %v3440
      %v3442 = vpop.f32.mrf.mxu0
      %3443 = vmatprep.mubr.bf16.mxu0 %v2989
      %3444 = vmatmul.mubr.bf16.gmra.mxu0 %v2988
      %v3445 = vpop.f32.mrf.mxu0
      %v3446 = vadd.f32 %v3349, %v3445
      %v3447 = vpop.f32.mrf.mxu0
      %v3448 = vpop.f32.mrf.mxu0
      %v3449 = vadd.f32 %v3352, %v3448
      %v3450 = vpop.f32.mrf.mxu0
      %3451 = vmatprep.mubr.bf16.mxu0 %v2994
      %3452 = vmatmul.mubr.bf16.gmra.mxu0 %v2993
      %v3453 = vpop.f32.mrf.mxu0
      %v3454 = vadd.f32 %v3357, %v3453
      %v3455 = vpop.f32.mrf.mxu0
      %v3456 = vpop.f32.mrf.mxu0
      %v3457 = vadd.f32 %v3360, %v3456
      %v3458 = vpop.f32.mrf.mxu0
      %3459 = vmatprep.mubr.bf16.mxu0 %v2999
      %3460 = vmatmul.mubr.bf16.gmra.mxu0 %v2998
      %v3461 = vpop.f32.mrf.mxu0
      %v3462 = vadd.f32 %v3365, %v3461
      %v3463 = vpop.f32.mrf.mxu0
      %v3464 = vpop.f32.mrf.mxu0
      %v3465 = vadd.f32 %v3368, %v3464
      %v3466 = vpop.f32.mrf.mxu0
      %3467 = vdwg.mxu0
      %3468 = vmatprep.subr.bf16.mxu0 0
      %3469 = vmatpush1.bf16.msra.mxu0 0
      %3470 = vmatprep.subr.bf16.mxu0 0
      %3471 = vmatpush1.bf16.msra.mxu0 0
      %3472 = vmatprep.subr.bf16.mxu0 0
      %3473 = vmatpush1.bf16.msra.mxu0 0
      %3474 = vmatprep.subr.bf16.mxu0 0
      %3475 = vmatpush1.bf16.msra.mxu0 0
      %3476 = vmatprep.subr.bf16.mxu0 0
      %3477 = vmatpush1.bf16.msra.mxu0 %v3212
      %3478 = vmatprep.subr.bf16.mxu0 0
      %3479 = vmatpush1.bf16.msra.mxu0 %v3211
      %3480 = vmatprep.subr.bf16.mxu0 0
      %3481 = vmatpush1.bf16.msra.mxu0 %v3210
      %3482 = vmatprep.subr.bf16.mxu0 0
      %3483 = vmatpush1.bf16.msra.mxu0 %v3209
      %3484 = vmatprep.subr.bf16.mxu0 0
      %3485 = vmatpush2.bf16.msra.mxu0 0
      %3486 = vmatprep.subr.bf16.mxu0 0
      %3487 = vmatpush2.bf16.msra.mxu0 0
      %3488 = vmatprep.subr.bf16.mxu0 0
      %3489 = vmatpush2.bf16.msra.mxu0 0
      %3490 = vmatprep.subr.bf16.mxu0 0
      %3491 = vmatpush2.bf16.msra.mxu0 0
      %3492 = vmatprep.subr.bf16.mxu0 0
      %3493 = vmatpush2.bf16.msra.mxu0 0
      %3494 = vmatprep.subr.bf16.mxu0 0
      %3495 = vmatpush2.bf16.msra.mxu0 0
      %3496 = vmatprep.subr.bf16.mxu0 0
      %3497 = vmatpush2.bf16.msra.mxu0 0
      %3498 = vmatprep.subr.bf16.mxu0 0
      %3499 = vmatpush2.bf16.msra.mxu0 0
      %3500 = vmatprep.mubr.bf16.mxu0 0
      %3501 = vmatmul.mubr.bf16.gmra.mxu0 %v3251
      %v3502 = vpop.f32.mrf.mxu0
      %v3503 = vadd.f32 %v3406, %v3502
      %v3504 = vpop.f32.mrf.mxu0
      %v3505 = vpop.f32.mrf.mxu0
      %v3506 = vadd.f32 %v3409, %v3505
      %v3507 = vpop.f32.mrf.mxu0
      %3508 = vmatprep.mubr.bf16.mxu0 0
      %3509 = vmatmul.mubr.bf16.gmra.mxu0 %v3254
      %v3510 = vpop.f32.mrf.mxu0
      %v3511 = vadd.f32 %v3414, %v3510
      %v3512 = vpop.f32.mrf.mxu0
      %v3513 = vpop.f32.mrf.mxu0
      %v3514 = vadd.f32 %v3417, %v3513
      %v3515 = vpop.f32.mrf.mxu0
      %3516 = vmatprep.mubr.bf16.mxu0 0
      %3517 = vmatmul.mubr.bf16.gmra.mxu0 %v3257
      %v3518 = vpop.f32.mrf.mxu0
      %v3519 = vadd.f32 %v3422, %v3518
      %v3520 = vpop.f32.mrf.mxu0
      %v3521 = vpop.f32.mrf.mxu0
      %v3522 = vadd.f32 %v3425, %v3521
      %v3523 = vpop.f32.mrf.mxu0
      %3524 = vmatprep.mubr.bf16.mxu0 0
      %3525 = vmatmul.mubr.bf16.gmra.mxu0 %v3260
      %v3526 = vpop.f32.mrf.mxu0
      %v3527 = vadd.f32 %v3430, %v3526
      %v3528 = vpop.f32.mrf.mxu0
      %v3529 = vpop.f32.mrf.mxu0
      %v3530 = vadd.f32 %v3433, %v3529
      %v3531 = vpop.f32.mrf.mxu0
      %3532 = vmatprep.mubr.bf16.mxu0 0
      %3533 = vmatmul.mubr.bf16.gmra.mxu0 %v3263
      %v3534 = vpop.f32.mrf.mxu0
      %v3535 = vadd.f32 %v3438, %v3534
      %v3536 = vpop.f32.mrf.mxu0
      %v3537 = vpop.f32.mrf.mxu0
      %v3538 = vadd.f32 %v3441, %v3537
      %v3539 = vpop.f32.mrf.mxu0
      %3540 = vmatprep.mubr.bf16.mxu0 0
      %3541 = vmatmul.mubr.bf16.gmra.mxu0 %v3266
      %v3542 = vpop.f32.mrf.mxu0
      %v3543 = vadd.f32 %v3446, %v3542
      %v3544 = vpop.f32.mrf.mxu0
      %v3545 = vpop.f32.mrf.mxu0
      %v3546 = vadd.f32 %v3449, %v3545
      %v3547 = vpop.f32.mrf.mxu0
      %3548 = vmatprep.mubr.bf16.mxu0 0
      %3549 = vmatmul.mubr.bf16.gmra.mxu0 %v3269
      %v3550 = vpop.f32.mrf.mxu0
      %v3551 = vadd.f32 %v3454, %v3550
      %v3552 = vpop.f32.mrf.mxu0
      %v3553 = vpop.f32.mrf.mxu0
      %v3554 = vadd.f32 %v3457, %v3553
      %v3555 = vpop.f32.mrf.mxu0
      %3556 = vmatprep.mubr.bf16.mxu0 0
      %3557 = vmatmul.mubr.bf16.gmra.mxu0 %v3272
      %v3558 = vpop.f32.mrf.mxu0
      %v3559 = vadd.f32 %v3462, %v3558
      %v3560 = vpop.f32.mrf.mxu0
      %v3561 = vpop.f32.mrf.mxu0
      %v3562 = vadd.f32 %v3465, %v3561
      %v3563 = vpop.f32.mrf.mxu0
      %3564 = vdwg.mxu0
      %v3565 = vxor.u32 %v3503, 2147483648
      %v3566 = vxor.u32 %v3506, 2147483648
      %v3567 = vxor.u32 %v3511, 2147483648
      %v3568 = vxor.u32 %v3514, 2147483648
      %v3569 = vxor.u32 %v3519, 2147483648
      %v3570 = vxor.u32 %v3522, 2147483648
      %v3571 = vxor.u32 %v3527, 2147483648
      %v3572 = vxor.u32 %v3530, 2147483648
      %v3573 = vxor.u32 %v3535, 2147483648
      %v3574 = vxor.u32 %v3538, 2147483648
      %v3575 = vxor.u32 %v3543, 2147483648
      %v3576 = vxor.u32 %v3546, 2147483648
      %v3577 = vxor.u32 %v3551, 2147483648
      %v3578 = vxor.u32 %v3554, 2147483648
      %v3579 = vxor.u32 %v3559, 2147483648
      %v3580 = vxor.u32 %v3562, 2147483648
      %v3581 = vmul.f32 %v3565, 1.442695
      %v3582 = vpow.pop %v3581
      %v3583 = vmul.f32 %v3566, 1.442695
      %v3584 = vpow.pop %v3583
      %v3585 = vmul.f32 %v3567, 1.442695
      %v3586 = vpow.pop %v3585
      %v3587 = vmul.f32 %v3568, 1.442695
      %v3588 = vpow.pop %v3587
      %v3589 = vmul.f32 %v3569, 1.442695
      %v3590 = vpow.pop %v3589
      %v3591 = vmul.f32 %v3570, 1.442695
      %v3592 = vpow.pop %v3591
      %v3593 = vmul.f32 %v3571, 1.442695
      %v3594 = vpow.pop %v3593
      %v3595 = vmul.f32 %v3572, 1.442695
      %v3596 = vpow.pop %v3595
      %v3597 = vmul.f32 %v3573, 1.442695
      %v3598 = vpow.pop %v3597
      %v3599 = vmul.f32 %v3574, 1.442695
      %v3600 = vpow.pop %v3599
      %v3601 = vmul.f32 %v3575, 1.442695
      %v3602 = vpow.pop %v3601
      %v3603 = vmul.f32 %v3576, 1.442695
      %v3604 = vpow.pop %v3603
      %v3605 = vmul.f32 %v3577, 1.442695
      %v3606 = vpow.pop %v3605
      %v3607 = vmul.f32 %v3578, 1.442695
      %v3608 = vpow.pop %v3607
      %v3609 = vmul.f32 %v3579, 1.442695
      %v3610 = vpow.pop %v3609
      %v3611 = vmul.f32 %v3580, 1.442695
      %v3612 = vpow.pop %v3611
      %v3613 = vadd.f32 %v3582, 1.0
      %v3614 = vadd.f32 %v3584, 1.0
      %v3615 = vadd.f32 %v3586, 1.0
      %v3616 = vadd.f32 %v3588, 1.0
      %v3617 = vadd.f32 %v3590, 1.0
      %v3618 = vadd.f32 %v3592, 1.0
      %v3619 = vadd.f32 %v3594, 1.0
      %v3620 = vadd.f32 %v3596, 1.0
      %v3621 = vadd.f32 %v3598, 1.0
      %v3622 = vadd.f32 %v3600, 1.0
      %v3623 = vadd.f32 %v3602, 1.0
      %v3624 = vadd.f32 %v3604, 1.0
      %v3625 = vadd.f32 %v3606, 1.0
      %v3626 = vadd.f32 %v3608, 1.0
      %v3627 = vadd.f32 %v3610, 1.0
      %v3628 = vadd.f32 %v3612, 1.0
      %v3629 = vrcp.pop %v3613
      %v3630 = vmul.f32 1.0, %v3629
      %v3631 = vrcp.pop %v3614
      %v3632 = vmul.f32 1.0, %v3631
      %v3633 = vrcp.pop %v3615
      %v3634 = vmul.f32 1.0, %v3633
      %v3635 = vrcp.pop %v3616
      %v3636 = vmul.f32 1.0, %v3635
      %v3637 = vrcp.pop %v3617
      %v3638 = vmul.f32 1.0, %v3637
      %v3639 = vrcp.pop %v3618
      %v3640 = vmul.f32 1.0, %v3639
      %v3641 = vrcp.pop %v3619
      %v3642 = vmul.f32 1.0, %v3641
      %v3643 = vrcp.pop %v3620
      %v3644 = vmul.f32 1.0, %v3643
      %v3645 = vrcp.pop %v3621
      %v3646 = vmul.f32 1.0, %v3645
      %v3647 = vrcp.pop %v3622
      %v3648 = vmul.f32 1.0, %v3647
      %v3649 = vrcp.pop %v3623
      %v3650 = vmul.f32 1.0, %v3649
      %v3651 = vrcp.pop %v3624
      %v3652 = vmul.f32 1.0, %v3651
      %v3653 = vrcp.pop %v3625
      %v3654 = vmul.f32 1.0, %v3653
      %v3655 = vrcp.pop %v3626
      %v3656 = vmul.f32 1.0, %v3655
      %v3657 = vrcp.pop %v3627
      %v3658 = vmul.f32 1.0, %v3657
      %v3659 = vrcp.pop %v3628
      %v3660 = vmul.f32 1.0, %v3659
      %v3661 = vtanh.pop %v3503
      %v3662 = vtanh.pop %v3506
      %v3663 = vtanh.pop %v3511
      %v3664 = vtanh.pop %v3514
      %v3665 = vtanh.pop %v3519
      %v3666 = vtanh.pop %v3522
      %v3667 = vtanh.pop %v3527
      %v3668 = vtanh.pop %v3530
      %v3669 = vtanh.pop %v3535
      %v3670 = vtanh.pop %v3538
      %v3671 = vtanh.pop %v3543
      %v3672 = vtanh.pop %v3546
      %v3673 = vtanh.pop %v3551
      %v3674 = vtanh.pop %v3554
      %v3675 = vtanh.pop %v3559
      %v3676 = vtanh.pop %v3562
      %v3677 = vld [vmem:[#allocation4] sm:$0xff]
      %v3678 = vld [vmem:[#allocation4 + $0x8] sm:$0xff]
      %v3679 = vld [vmem:[#allocation4 + $0x10] sm:$0xff]
      %v3680 = vld [vmem:[#allocation4 + $0x18] sm:$0xff]
      %v3681 = vld [vmem:[#allocation4 + $0x20] sm:$0xff]
      %v3682 = vld [vmem:[#allocation4 + $0x28] sm:$0xff]
      %v3683 = vld [vmem:[#allocation4 + $0x30] sm:$0xff]
      %v3684 = vld [vmem:[#allocation4 + $0x38] sm:$0xff]
      %v3685 = vld [vmem:[#allocation4 + $0x40] sm:$0xff]
      %v3686 = vld [vmem:[#allocation4 + $0x48] sm:$0xff]
      %v3687 = vld [vmem:[#allocation4 + $0x50] sm:$0xff]
      %v3688 = vld [vmem:[#allocation4 + $0x58] sm:$0xff]
      %v3689 = vld [vmem:[#allocation4 + $0x60] sm:$0xff]
      %v3690 = vld [vmem:[#allocation4 + $0x68] sm:$0xff]
      %v3691 = vld [vmem:[#allocation4 + $0x70] sm:$0xff]
      %v3692 = vld [vmem:[#allocation4 + $0x78] sm:$0xff]
      %3709 = vrot.lane.b32.xlu0 %v3677, 32
      %v3710 = vpop.permute.xlu0 %3709
      %3711 = vrot.lane.b32.xlu0 %v3678, 32
      %v3712 = vpop.permute.xlu0 %3711
      %3713 = vrot.lane.b32.xlu0 %v3679, 32
      %v3714 = vpop.permute.xlu0 %3713
      %3715 = vrot.lane.b32.xlu0 %v3680, 32
      %v3716 = vpop.permute.xlu0 %3715
      %3717 = vrot.lane.b32.xlu0 %v3681, 32
      %v3718 = vpop.permute.xlu0 %3717
      %3719 = vrot.lane.b32.xlu0 %v3682, 32
      %v3720 = vpop.permute.xlu0 %3719
      %3721 = vrot.lane.b32.xlu0 %v3683, 32
      %v3722 = vpop.permute.xlu0 %3721
      %3723 = vrot.lane.b32.xlu0 %v3684, 32
      %v3724 = vpop.permute.xlu0 %3723
      %3725 = vrot.lane.b32.xlu0 %v3685, 32
      %v3726 = vpop.permute.xlu0 %3725
      %3727 = vrot.lane.b32.xlu0 %v3686, 32
      %v3728 = vpop.permute.xlu0 %3727
      %3729 = vrot.lane.b32.xlu0 %v3687, 32
      %v3730 = vpop.permute.xlu0 %3729
      %3731 = vrot.lane.b32.xlu0 %v3688, 32
      %v3732 = vpop.permute.xlu0 %3731
      %3733 = vrot.lane.b32.xlu0 %v3689, 32
      %v3734 = vpop.permute.xlu0 %3733
      %3735 = vrot.lane.b32.xlu0 %v3690, 32
      %v3736 = vpop.permute.xlu0 %3735
      %3737 = vrot.lane.b32.xlu0 %v3691, 32
      %v3738 = vpop.permute.xlu0 %3737
      %3739 = vrot.lane.b32.xlu0 %v3692, 32
      %v3740 = vpop.permute.xlu0 %3739
      %v3757 = vmul.f32 %v3630, %v3710
      %v3758 = vmul.f32 %v3632, %v3712
      %v3759 = vmul.f32 %v3634, %v3714
      %v3760 = vmul.f32 %v3636, %v3716
      %v3761 = vmul.f32 %v3638, %v3718
      %v3762 = vmul.f32 %v3640, %v3720
      %v3763 = vmul.f32 %v3642, %v3722
      %v3764 = vmul.f32 %v3644, %v3724
      %v3765 = vmul.f32 %v3646, %v3726
      %v3766 = vmul.f32 %v3648, %v3728
      %v3767 = vmul.f32 %v3650, %v3730
      %v3768 = vmul.f32 %v3652, %v3732
      %v3769 = vmul.f32 %v3654, %v3734
      %v3770 = vmul.f32 %v3656, %v3736
      %v3771 = vmul.f32 %v3658, %v3738
      %v3772 = vmul.f32 %v3660, %v3740
      %3789 = vrot.lane.b32.xlu0 %v3661, 32
      %v3790 = vpop.permute.xlu0 %3789
      %3791 = vrot.lane.b32.xlu0 %v3662, 32
      %v3792 = vpop.permute.xlu0 %3791
      %3793 = vrot.lane.b32.xlu0 %v3663, 32
      %v3794 = vpop.permute.xlu0 %3793
      %3795 = vrot.lane.b32.xlu0 %v3664, 32
      %v3796 = vpop.permute.xlu0 %3795
      %3797 = vrot.lane.b32.xlu0 %v3665, 32
      %v3798 = vpop.permute.xlu0 %3797
      %3799 = vrot.lane.b32.xlu0 %v3666, 32
      %v3800 = vpop.permute.xlu0 %3799
      %3801 = vrot.lane.b32.xlu0 %v3667, 32
      %v3802 = vpop.permute.xlu0 %3801
      %3803 = vrot.lane.b32.xlu0 %v3668, 32
      %v3804 = vpop.permute.xlu0 %3803
      %3805 = vrot.lane.b32.xlu0 %v3669, 32
      %v3806 = vpop.permute.xlu0 %3805
      %3807 = vrot.lane.b32.xlu0 %v3670, 32
      %v3808 = vpop.permute.xlu0 %3807
      %3809 = vrot.lane.b32.xlu0 %v3671, 32
      %v3810 = vpop.permute.xlu0 %3809
      %3811 = vrot.lane.b32.xlu0 %v3672, 32
      %v3812 = vpop.permute.xlu0 %3811
      %3813 = vrot.lane.b32.xlu0 %v3673, 32
      %v3814 = vpop.permute.xlu0 %3813
      %3815 = vrot.lane.b32.xlu0 %v3674, 32
      %v3816 = vpop.permute.xlu0 %3815
      %3817 = vrot.lane.b32.xlu0 %v3675, 32
      %v3818 = vpop.permute.xlu0 %3817
      %3819 = vrot.lane.b32.xlu0 %v3676, 32
      %v3820 = vpop.permute.xlu0 %3819
      %v3837 = vmul.f32 %v3630, %v3790
      %v3838 = vmul.f32 %v3632, %v3792
      %v3839 = vmul.f32 %v3634, %v3794
      %v3840 = vmul.f32 %v3636, %v3796
      %v3841 = vmul.f32 %v3638, %v3798
      %v3842 = vmul.f32 %v3640, %v3800
      %v3843 = vmul.f32 %v3642, %v3802
      %v3844 = vmul.f32 %v3644, %v3804
      %v3845 = vmul.f32 %v3646, %v3806
      %v3846 = vmul.f32 %v3648, %v3808
      %v3847 = vmul.f32 %v3650, %v3810
      %v3848 = vmul.f32 %v3652, %v3812
      %v3849 = vmul.f32 %v3654, %v3814
      %v3850 = vmul.f32 %v3656, %v3816
      %v3851 = vmul.f32 %v3658, %v3818
      %v3852 = vmul.f32 %v3660, %v3820
      %3869 = vrot.lane.b32.xlu0 %v3837, 32
      %v3870 = vpop.permute.xlu0 %3869
      %3871 = vrot.lane.b32.xlu0 %v3838, 32
      %v3872 = vpop.permute.xlu0 %3871
      %3873 = vrot.lane.b32.xlu0 %v3839, 32
      %v3874 = vpop.permute.xlu0 %3873
      %3875 = vrot.lane.b32.xlu0 %v3840, 32
      %v3876 = vpop.permute.xlu0 %3875
      %3877 = vrot.lane.b32.xlu0 %v3841, 32
      %v3878 = vpop.permute.xlu0 %3877
      %3879 = vrot.lane.b32.xlu0 %v3842, 32
      %v3880 = vpop.permute.xlu0 %3879
      %3881 = vrot.lane.b32.xlu0 %v3843, 32
      %v3882 = vpop.permute.xlu0 %3881
      %3883 = vrot.lane.b32.xlu0 %v3844, 32
      %v3884 = vpop.permute.xlu0 %3883
      %3885 = vrot.lane.b32.xlu0 %v3845, 32
      %v3886 = vpop.permute.xlu0 %3885
      %3887 = vrot.lane.b32.xlu0 %v3846, 32
      %v3888 = vpop.permute.xlu0 %3887
      %3889 = vrot.lane.b32.xlu0 %v3847, 32
      %v3890 = vpop.permute.xlu0 %3889
      %3891 = vrot.lane.b32.xlu0 %v3848, 32
      %v3892 = vpop.permute.xlu0 %3891
      %3893 = vrot.lane.b32.xlu0 %v3849, 32
      %v3894 = vpop.permute.xlu0 %3893
      %3895 = vrot.lane.b32.xlu0 %v3850, 32
      %v3896 = vpop.permute.xlu0 %3895
      %3897 = vrot.lane.b32.xlu0 %v3851, 32
      %v3898 = vpop.permute.xlu0 %3897
      %3899 = vrot.lane.b32.xlu0 %v3852, 32
      %v3900 = vpop.permute.xlu0 %3899
      %v3917 = vadd.f32 %v3757, %v3870
      %v3918 = vadd.f32 %v3758, %v3872
      %v3919 = vadd.f32 %v3759, %v3874
      %v3920 = vadd.f32 %v3760, %v3876
      %v3921 = vadd.f32 %v3761, %v3878
      %v3922 = vadd.f32 %v3762, %v3880
      %v3923 = vadd.f32 %v3763, %v3882
      %v3924 = vadd.f32 %v3764, %v3884
      %v3925 = vadd.f32 %v3765, %v3886
      %v3926 = vadd.f32 %v3766, %v3888
      %v3927 = vadd.f32 %v3767, %v3890
      %v3928 = vadd.f32 %v3768, %v3892
      %v3929 = vadd.f32 %v3769, %v3894
      %v3930 = vadd.f32 %v3770, %v3896
      %v3931 = vadd.f32 %v3771, %v3898
      %v3932 = vadd.f32 %v3772, %v3900
      %v3933 = vtanh.pop %v3917
      %v3934 = vtanh.pop %v3918
      %v3935 = vtanh.pop %v3919
      %v3936 = vtanh.pop %v3920
      %v3937 = vtanh.pop %v3921
      %v3938 = vtanh.pop %v3922
      %v3939 = vtanh.pop %v3923
      %v3940 = vtanh.pop %v3924
      %v3941 = vtanh.pop %v3925
      %v3942 = vtanh.pop %v3926
      %v3943 = vtanh.pop %v3927
      %v3944 = vtanh.pop %v3928
      %v3945 = vtanh.pop %v3929
      %v3946 = vtanh.pop %v3930
      %v3947 = vtanh.pop %v3931
      %v3948 = vtanh.pop %v3932
      %3965 = vrot.lane.b32.xlu0 %v3933, 32
      %v3966 = vpop.permute.xlu0 %3965
      %3967 = vrot.lane.b32.xlu0 %v3934, 32
      %v3968 = vpop.permute.xlu0 %3967
      %3969 = vrot.lane.b32.xlu0 %v3935, 32
      %v3970 = vpop.permute.xlu0 %3969
      %3971 = vrot.lane.b32.xlu0 %v3936, 32
      %v3972 = vpop.permute.xlu0 %3971
      %3973 = vrot.lane.b32.xlu0 %v3937, 32
      %v3974 = vpop.permute.xlu0 %3973
      %3975 = vrot.lane.b32.xlu0 %v3938, 32
      %v3976 = vpop.permute.xlu0 %3975
      %3977 = vrot.lane.b32.xlu0 %v3939, 32
      %v3978 = vpop.permute.xlu0 %3977
      %3979 = vrot.lane.b32.xlu0 %v3940, 32
      %v3980 = vpop.permute.xlu0 %3979
      %3981 = vrot.lane.b32.xlu0 %v3941, 32
      %v3982 = vpop.permute.xlu0 %3981
      %3983 = vrot.lane.b32.xlu0 %v3942, 32
      %v3984 = vpop.permute.xlu0 %3983
      %3985 = vrot.lane.b32.xlu0 %v3943, 32
      %v3986 = vpop.permute.xlu0 %3985
      %3987 = vrot.lane.b32.xlu0 %v3944, 32
      %v3988 = vpop.permute.xlu0 %3987
      %3989 = vrot.lane.b32.xlu0 %v3945, 32
      %v3990 = vpop.permute.xlu0 %3989
      %3991 = vrot.lane.b32.xlu0 %v3946, 32
      %v3992 = vpop.permute.xlu0 %3991
      %3993 = vrot.lane.b32.xlu0 %v3947, 32
      %v3994 = vpop.permute.xlu0 %3993
      %3995 = vrot.lane.b32.xlu0 %v3948, 32
      %v3996 = vpop.permute.xlu0 %3995
      %v4013 = vmul.f32 %v3630, %v3966
      %v4014 = vmul.f32 %v3632, %v3968
      %v4015 = vmul.f32 %v3634, %v3970
      %v4016 = vmul.f32 %v3636, %v3972
      %v4017 = vmul.f32 %v3638, %v3974
      %v4018 = vmul.f32 %v3640, %v3976
      %v4019 = vmul.f32 %v3642, %v3978
      %v4020 = vmul.f32 %v3644, %v3980
      %v4021 = vmul.f32 %v3646, %v3982
      %v4022 = vmul.f32 %v3648, %v3984
      %v4023 = vmul.f32 %v3650, %v3986
      %v4024 = vmul.f32 %v3652, %v3988
      %v4025 = vmul.f32 %v3654, %v3990
      %v4026 = vmul.f32 %v3656, %v3992
      %v4027 = vmul.f32 %v3658, %v3994
      %v4028 = vmul.f32 %v3660, %v3996
      %4045 = vrot.lane.b32.xlu0 %v3917, 96
      %v4046 = vpop.permute.xlu0 %4045
      %4047 = vrot.lane.b32.xlu0 %v3918, 96
      %v4048 = vpop.permute.xlu0 %4047
      %4049 = vrot.lane.b32.xlu0 %v3919, 96
      %v4050 = vpop.permute.xlu0 %4049
      %4051 = vrot.lane.b32.xlu0 %v3920, 96
      %v4052 = vpop.permute.xlu0 %4051
      %4053 = vrot.lane.b32.xlu0 %v3921, 96
      %v4054 = vpop.permute.xlu0 %4053
      %4055 = vrot.lane.b32.xlu0 %v3922, 96
      %v4056 = vpop.permute.xlu0 %4055
      %4057 = vrot.lane.b32.xlu0 %v3923, 96
      %v4058 = vpop.permute.xlu0 %4057
      %4059 = vrot.lane.b32.xlu0 %v3924, 96
      %v4060 = vpop.permute.xlu0 %4059
      %4061 = vrot.lane.b32.xlu0 %v3925, 96
      %v4062 = vpop.permute.xlu0 %4061
      %4063 = vrot.lane.b32.xlu0 %v3926, 96
      %v4064 = vpop.permute.xlu0 %4063
      %4065 = vrot.lane.b32.xlu0 %v3927, 96
      %v4066 = vpop.permute.xlu0 %4065
      %4067 = vrot.lane.b32.xlu0 %v3928, 96
      %v4068 = vpop.permute.xlu0 %4067
      %4069 = vrot.lane.b32.xlu0 %v3929, 96
      %v4070 = vpop.permute.xlu0 %4069
      %4071 = vrot.lane.b32.xlu0 %v3930, 96
      %v4072 = vpop.permute.xlu0 %4071
      %4073 = vrot.lane.b32.xlu0 %v3931, 96
      %v4074 = vpop.permute.xlu0 %4073
      %4075 = vrot.lane.b32.xlu0 %v3932, 96
      %v4076 = vpop.permute.xlu0 %4075
      %vm4093 = vcmask 261120
      %4094 = vst.msk [vmem:[#allocation4] sm:$0xff] %vm4093, %v4046
      %4095 = vst.msk [vmem:[#allocation4 + $0x8] sm:$0xff] %vm4093, %v4048
      %4096 = vst.msk [vmem:[#allocation4 + $0x10] sm:$0xff] %vm4093, %v4050
      %4097 = vst.msk [vmem:[#allocation4 + $0x18] sm:$0xff] %vm4093, %v4052
      %4098 = vst.msk [vmem:[#allocation4 + $0x20] sm:$0xff] %vm4093, %v4054
      %4099 = vst.msk [vmem:[#allocation4 + $0x28] sm:$0xff] %vm4093, %v4056
      %4100 = vst.msk [vmem:[#allocation4 + $0x30] sm:$0xff] %vm4093, %v4058
      %4101 = vst.msk [vmem:[#allocation4 + $0x38] sm:$0xff] %vm4093, %v4060
      %4102 = vst.msk [vmem:[#allocation4 + $0x40] sm:$0xff] %vm4093, %v4062
      %4103 = vst.msk [vmem:[#allocation4 + $0x48] sm:$0xff] %vm4093, %v4064
      %4104 = vst.msk [vmem:[#allocation4 + $0x50] sm:$0xff] %vm4093, %v4066
      %4105 = vst.msk [vmem:[#allocation4 + $0x58] sm:$0xff] %vm4093, %v4068
      %4106 = vst.msk [vmem:[#allocation4 + $0x60] sm:$0xff] %vm4093, %v4070
      %4107 = vst.msk [vmem:[#allocation4 + $0x68] sm:$0xff] %vm4093, %v4072
      %4108 = vst.msk [vmem:[#allocation4 + $0x70] sm:$0xff] %vm4093, %v4074
      %4109 = vst.msk [vmem:[#allocation4 + $0x78] sm:$0xff] %vm4093, %v4076
      %v4110 = vpack.c.bf16 %v4014, %v4013
      %v4111 = vpack.c.bf16 %v4016, %v4015
      %v4112 = vpack.c.bf16 %v4018, %v4017
      %v4113 = vpack.c.bf16 %v4020, %v4019
      %v4114 = vpack.c.bf16 %v4022, %v4021
      %v4115 = vpack.c.bf16 %v4024, %v4023
      %v4116 = vpack.c.bf16 %v4026, %v4025
      %v4117 = vpack.c.bf16 %v4028, %v4027
      %v4126 = vunpack.c.l.b16 %v4110
      %v4127 = vunpack.c.h.b16 %v4110
      %v4128 = vunpack.c.l.b16 %v4111
      %v4129 = vunpack.c.h.b16 %v4111
      %v4130 = vunpack.c.l.b16 %v4112
      %v4131 = vunpack.c.h.b16 %v4112
      %v4132 = vunpack.c.l.b16 %v4113
      %v4133 = vunpack.c.h.b16 %v4113
      %v4134 = vunpack.c.l.b16 %v4114
      %v4135 = vunpack.c.h.b16 %v4114
      %v4136 = vunpack.c.l.b16 %v4115
      %v4137 = vunpack.c.h.b16 %v4115
      %v4138 = vunpack.c.l.b16 %v4116
      %v4139 = vunpack.c.h.b16 %v4116
      %v4140 = vunpack.c.l.b16 %v4117
      %v4141 = vunpack.c.h.b16 %v4117
      %v4142 = vpack.c.b16 %v4126, %v4126
      %v4143 = vpack.c.b16 %v4127, %v4127
      %v4144 = vpack.c.b16 %v4128, %v4128
      %v4145 = vpack.c.b16 %v4129, %v4129
      %v4146 = vpack.c.b16 %v4130, %v4130
      %v4147 = vpack.c.b16 %v4131, %v4131
      %v4148 = vpack.c.b16 %v4132, %v4132
      %v4149 = vpack.c.b16 %v4133, %v4133
      %v4150 = vpack.c.b16 %v4134, %v4134
      %v4151 = vpack.c.b16 %v4135, %v4135
      %v4152 = vpack.c.b16 %v4136, %v4136
      %v4153 = vpack.c.b16 %v4137, %v4137
      %v4154 = vpack.c.b16 %v4138, %v4138
      %v4155 = vpack.c.b16 %v4139, %v4139
      %v4156 = vpack.c.b16 %v4140, %v4140
      %v4157 = vpack.c.b16 %v4141, %v4141
      %4158 = vrot.lane.b32.xlu0 %v4142, 64
      %v4159 = vpop.permute.xlu0 %4158
      %4160 = vrot.lane.b32.xlu0 %v4143, 64
      %v4161 = vpop.permute.xlu0 %4160
      %4162 = vrot.lane.b32.xlu0 %v4144, 64
      %v4163 = vpop.permute.xlu0 %4162
      %4164 = vrot.lane.b32.xlu0 %v4145, 64
      %v4165 = vpop.permute.xlu0 %4164
      %4166 = vrot.lane.b32.xlu0 %v4146, 64
      %v4167 = vpop.permute.xlu0 %4166
      %4168 = vrot.lane.b32.xlu0 %v4147, 64
      %v4169 = vpop.permute.xlu0 %4168
      %4170 = vrot.lane.b32.xlu0 %v4148, 64
      %v4171 = vpop.permute.xlu0 %4170
      %4172 = vrot.lane.b32.xlu0 %v4149, 64
      %v4173 = vpop.permute.xlu0 %4172
      %4174 = vrot.lane.b32.xlu0 %v4150, 64
      %v4175 = vpop.permute.xlu0 %4174
      %4176 = vrot.lane.b32.xlu0 %v4151, 64
      %v4177 = vpop.permute.xlu0 %4176
      %4178 = vrot.lane.b32.xlu0 %v4152, 64
      %v4179 = vpop.permute.xlu0 %4178
      %4180 = vrot.lane.b32.xlu0 %v4153, 64
      %v4181 = vpop.permute.xlu0 %4180
      %4182 = vrot.lane.b32.xlu0 %v4154, 64
      %v4183 = vpop.permute.xlu0 %4182
      %4184 = vrot.lane.b32.xlu0 %v4155, 64
      %v4185 = vpop.permute.xlu0 %4184
      %4186 = vrot.lane.b32.xlu0 %v4156, 64
      %v4187 = vpop.permute.xlu0 %4186
      %4188 = vrot.lane.b32.xlu0 %v4157, 64
      %v4189 = vpop.permute.xlu0 %4188
      %vm4206 = vcmask 257024
      %4207 = vst.msk [vmem:[%s1392 + $0x8] sm:$0xf] %vm4206, %v4159
      %4208 = vst.msk [vmem:[%s1392 + $0x18] sm:$0xf] %vm4206, %v4161
      %4209 = vst.msk [vmem:[%s1392 + $0x28] sm:$0xf] %vm4206, %v4163
      %4210 = vst.msk [vmem:[%s1392 + $0x38] sm:$0xf] %vm4206, %v4165
      %4211 = vst.msk [vmem:[%s1392 + $0x48] sm:$0xf] %vm4206, %v4167
      %4212 = vst.msk [vmem:[%s1392 + $0x58] sm:$0xf] %vm4206, %v4169
      %4213 = vst.msk [vmem:[%s1392 + $0x68] sm:$0xf] %vm4206, %v4171
      %4214 = vst.msk [vmem:[%s1392 + $0x78] sm:$0xf] %vm4206, %v4173
      %4215 = vst.msk [vmem:[%s1392 + $0xa8] sm:$0xf] %vm4206, %v4175
      %4216 = vst.msk [vmem:[%s1392 + $0xb8] sm:$0xf] %vm4206, %v4177
      %4217 = vst.msk [vmem:[%s1392 + $0xc8] sm:$0xf] %vm4206, %v4179
      %4218 = vst.msk [vmem:[%s1392 + $0xd8] sm:$0xf] %vm4206, %v4181
      %4219 = vst.msk [vmem:[%s1392 + $0xe8] sm:$0xf] %vm4206, %v4183
      %4220 = vst.msk [vmem:[%s1392 + $0xf8] sm:$0xf] %vm4206, %v4185
      %4221 = vst.msk [vmem:[%s1392 + $0x108] sm:$0xf] %vm4206, %v4187
      %4222 = vst.msk [vmem:[%s1392 + $0x118] sm:$0xf] %vm4206, %v4189
      %4223 = vrot.lane.b32.xlu0 %v4142, 96
      %v4224 = vpop.permute.xlu0 %4223
      %4225 = vrot.lane.b32.xlu0 %v4143, 96
      %v4226 = vpop.permute.xlu0 %4225
      %4227 = vrot.lane.b32.xlu0 %v4144, 96
      %v4228 = vpop.permute.xlu0 %4227
      %4229 = vrot.lane.b32.xlu0 %v4145, 96
      %v4230 = vpop.permute.xlu0 %4229
      %4231 = vrot.lane.b32.xlu0 %v4146, 96
      %v4232 = vpop.permute.xlu0 %4231
      %4233 = vrot.lane.b32.xlu0 %v4147, 96
      %v4234 = vpop.permute.xlu0 %4233
      %4235 = vrot.lane.b32.xlu0 %v4148, 96
      %v4236 = vpop.permute.xlu0 %4235
      %4237 = vrot.lane.b32.xlu0 %v4149, 96
      %v4238 = vpop.permute.xlu0 %4237
      %4239 = vrot.lane.b32.xlu0 %v4150, 96
      %v4240 = vpop.permute.xlu0 %4239
      %4241 = vrot.lane.b32.xlu0 %v4151, 96
      %v4242 = vpop.permute.xlu0 %4241
      %4243 = vrot.lane.b32.xlu0 %v4152, 96
      %v4244 = vpop.permute.xlu0 %4243
      %4245 = vrot.lane.b32.xlu0 %v4153, 96
      %v4246 = vpop.permute.xlu0 %4245
      %4247 = vrot.lane.b32.xlu0 %v4154, 96
      %v4248 = vpop.permute.xlu0 %4247
      %4249 = vrot.lane.b32.xlu0 %v4155, 96
      %v4250 = vpop.permute.xlu0 %4249
      %4251 = vrot.lane.b32.xlu0 %v4156, 96
      %v4252 = vpop.permute.xlu0 %4251
      %4253 = vrot.lane.b32.xlu0 %v4157, 96
      %v4254 = vpop.permute.xlu0 %4253
      %s4271 = scalar_lea.vmem [#allocation5], 16
      %vm4272 = vcmask 519424
      %4273 = vst.msk [vmem:[%s4271 + $0x8] sm:$0xf] %vm4272, %v4224
      %4274 = vst.msk [vmem:[%s4271 + $0x18] sm:$0xf] %vm4272, %v4226
      %4275 = vst.msk [vmem:[%s4271 + $0x28] sm:$0xf] %vm4272, %v4228
      %4276 = vst.msk [vmem:[%s4271 + $0x38] sm:$0xf] %vm4272, %v4230
      %4277 = vst.msk [vmem:[%s4271 + $0x48] sm:$0xf] %vm4272, %v4232
      %4278 = vst.msk [vmem:[%s4271 + $0x58] sm:$0xf] %vm4272, %v4234
      %4279 = vst.msk [vmem:[%s4271 + $0x68] sm:$0xf] %vm4272, %v4236
      %4280 = vst.msk [vmem:[%s4271 + $0x78] sm:$0xf] %vm4272, %v4238
      %4281 = vst.msk [vmem:[%s4271 + $0xa8] sm:$0xf] %vm4272, %v4240
      %4282 = vst.msk [vmem:[%s4271 + $0xb8] sm:$0xf] %vm4272, %v4242
      %4283 = vst.msk [vmem:[%s4271 + $0xc8] sm:$0xf] %vm4272, %v4244
      %4284 = vst.msk [vmem:[%s4271 + $0xd8] sm:$0xf] %vm4272, %v4246
      %4285 = vst.msk [vmem:[%s4271 + $0xe8] sm:$0xf] %vm4272, %v4248
      %4286 = vst.msk [vmem:[%s4271 + $0xf8] sm:$0xf] %vm4272, %v4250
      %4287 = vst.msk [vmem:[%s4271 + $0x108] sm:$0xf] %vm4272, %v4252
      %4288 = vst.msk [vmem:[%s4271 + $0x118] sm:$0xf] %vm4272, %v4254
      %v4289 = vld [vmem:[#allocation5 + $0x4] sm:$0x8]
      %v4290 = vld [vmem:[#allocation5 + $0x8] sm:$0xf]
      %v4291 = vld [vmem:[#allocation5 + $0x14] sm:$0x8]
      %v4292 = vld [vmem:[#allocation5 + $0x18] sm:$0xf]
      %v4293 = vld [vmem:[#allocation5 + $0x24] sm:$0x8]
      %v4294 = vld [vmem:[#allocation5 + $0x28] sm:$0xf]
      %v4295 = vld [vmem:[#allocation5 + $0x34] sm:$0x8]
      %v4296 = vld [vmem:[#allocation5 + $0x38] sm:$0xf]
      %v4297 = vld [vmem:[#allocation5 + $0x44] sm:$0x8]
      %v4298 = vld [vmem:[#allocation5 + $0x48] sm:$0xf]
      %v4299 = vld [vmem:[#allocation5 + $0x54] sm:$0x8]
      %v4300 = vld [vmem:[#allocation5 + $0x58] sm:$0xf]
      %v4301 = vld [vmem:[#allocation5 + $0x64] sm:$0x8]
      %v4302 = vld [vmem:[#allocation5 + $0x68] sm:$0xf]
      %v4303 = vld [vmem:[#allocation5 + $0x74] sm:$0x8]
      %v4304 = vld [vmem:[#allocation5 + $0x78] sm:$0xf]
      %v4305 = vld [vmem:[#allocation5 + $0xa4] sm:$0x8]
      %v4306 = vld [vmem:[#allocation5 + $0xa8] sm:$0xf]
      %v4307 = vld [vmem:[#allocation5 + $0xb4] sm:$0x8]
      %v4308 = vld [vmem:[#allocation5 + $0xb8] sm:$0xf]
      %v4309 = vld [vmem:[#allocation5 + $0xc4] sm:$0x8]
      %v4310 = vld [vmem:[#allocation5 + $0xc8] sm:$0xf]
      %v4311 = vld [vmem:[#allocation5 + $0xd4] sm:$0x8]
      %v4312 = vld [vmem:[#allocation5 + $0xd8] sm:$0xf]
      %v4313 = vld [vmem:[#allocation5 + $0xe4] sm:$0x8]
      %v4314 = vld [vmem:[#allocation5 + $0xe8] sm:$0xf]
      %v4315 = vld [vmem:[#allocation5 + $0xf4] sm:$0x8]
      %v4316 = vld [vmem:[#allocation5 + $0xf8] sm:$0xf]
      %v4317 = vld [vmem:[#allocation5 + $0x104] sm:$0x8]
      %v4318 = vld [vmem:[#allocation5 + $0x108] sm:$0xf]
      %v4319 = vld [vmem:[#allocation5 + $0x114] sm:$0x8]
      %v4320 = vld [vmem:[#allocation5 + $0x118] sm:$0xf]
      %v4322 = vshrl.u32 %v4289, 16
      %v4324 = vrot.slane %v4322, 7
      %v4325 = vrot.slane %v4324, 4
      %v4327 = vshrl.u32 %v4290, 16
      %v4329 = vrot.slane %v4327, 7
      %v4330 = vshll.u32 %v4290, 16
      %v4332 = vor.u32 %v4329, %v4330
      %v4333 = vsel %vm762, %v4325, %v4332
      %v4335 = vshrl.u32 %v4291, 16
      %v4337 = vrot.slane %v4335, 7
      %v4338 = vrot.slane %v4337, 4
      %v4340 = vshrl.u32 %v4292, 16
      %v4342 = vrot.slane %v4340, 7
      %v4343 = vshll.u32 %v4292, 16
      %v4345 = vor.u32 %v4342, %v4343
      %v4346 = vsel %vm762, %v4338, %v4345
      %v4348 = vshrl.u32 %v4293, 16
      %v4350 = vrot.slane %v4348, 7
      %v4351 = vrot.slane %v4350, 4
      %v4353 = vshrl.u32 %v4294, 16
      %v4355 = vrot.slane %v4353, 7
      %v4356 = vshll.u32 %v4294, 16
      %v4358 = vor.u32 %v4355, %v4356
      %v4359 = vsel %vm762, %v4351, %v4358
      %v4361 = vshrl.u32 %v4295, 16
      %v4363 = vrot.slane %v4361, 7
      %v4364 = vrot.slane %v4363, 4
      %v4366 = vshrl.u32 %v4296, 16
      %v4368 = vrot.slane %v4366, 7
      %v4369 = vshll.u32 %v4296, 16
      %v4371 = vor.u32 %v4368, %v4369
      %v4372 = vsel %vm762, %v4364, %v4371
      %v4374 = vshrl.u32 %v4297, 16
      %v4376 = vrot.slane %v4374, 7
      %v4377 = vrot.slane %v4376, 4
      %v4379 = vshrl.u32 %v4298, 16
      %v4381 = vrot.slane %v4379, 7
      %v4382 = vshll.u32 %v4298, 16
      %v4384 = vor.u32 %v4381, %v4382
      %v4385 = vsel %vm762, %v4377, %v4384
      %v4387 = vshrl.u32 %v4299, 16
      %v4389 = vrot.slane %v4387, 7
      %v4390 = vrot.slane %v4389, 4
      %v4392 = vshrl.u32 %v4300, 16
      %v4394 = vrot.slane %v4392, 7
      %v4395 = vshll.u32 %v4300, 16
      %v4397 = vor.u32 %v4394, %v4395
      %v4398 = vsel %vm762, %v4390, %v4397
      %v4400 = vshrl.u32 %v4301, 16
      %v4402 = vrot.slane %v4400, 7
      %v4403 = vrot.slane %v4402, 4
      %v4405 = vshrl.u32 %v4302, 16
      %v4407 = vrot.slane %v4405, 7
      %v4408 = vshll.u32 %v4302, 16
      %v4410 = vor.u32 %v4407, %v4408
      %v4411 = vsel %vm762, %v4403, %v4410
      %v4413 = vshrl.u32 %v4303, 16
      %v4415 = vrot.slane %v4413, 7
      %v4416 = vrot.slane %v4415, 4
      %v4418 = vshrl.u32 %v4304, 16
      %v4420 = vrot.slane %v4418, 7
      %v4421 = vshll.u32 %v4304, 16
      %v4423 = vor.u32 %v4420, %v4421
      %v4424 = vsel %vm762, %v4416, %v4423
      %v4426 = vshrl.u32 %v4305, 16
      %v4428 = vrot.slane %v4426, 7
      %v4429 = vrot.slane %v4428, 4
      %v4431 = vshrl.u32 %v4306, 16
      %v4433 = vrot.slane %v4431, 7
      %v4434 = vshll.u32 %v4306, 16
      %v4436 = vor.u32 %v4433, %v4434
      %v4437 = vsel %vm762, %v4429, %v4436
      %v4439 = vshrl.u32 %v4307, 16
      %v4441 = vrot.slane %v4439, 7
      %v4442 = vrot.slane %v4441, 4
      %v4444 = vshrl.u32 %v4308, 16
      %v4446 = vrot.slane %v4444, 7
      %v4447 = vshll.u32 %v4308, 16
      %v4449 = vor.u32 %v4446, %v4447
      %v4450 = vsel %vm762, %v4442, %v4449
      %v4452 = vshrl.u32 %v4309, 16
      %v4454 = vrot.slane %v4452, 7
      %v4455 = vrot.slane %v4454, 4
      %v4457 = vshrl.u32 %v4310, 16
      %v4459 = vrot.slane %v4457, 7
      %v4460 = vshll.u32 %v4310, 16
      %v4462 = vor.u32 %v4459, %v4460
      %v4463 = vsel %vm762, %v4455, %v4462
      %v4465 = vshrl.u32 %v4311, 16
      %v4467 = vrot.slane %v4465, 7
      %v4468 = vrot.slane %v4467, 4
      %v4470 = vshrl.u32 %v4312, 16
      %v4472 = vrot.slane %v4470, 7
      %v4473 = vshll.u32 %v4312, 16
      %v4475 = vor.u32 %v4472, %v4473
      %v4476 = vsel %vm762, %v4468, %v4475
      %v4478 = vshrl.u32 %v4313, 16
      %v4480 = vrot.slane %v4478, 7
      %v4481 = vrot.slane %v4480, 4
      %v4483 = vshrl.u32 %v4314, 16
      %v4485 = vrot.slane %v4483, 7
      %v4486 = vshll.u32 %v4314, 16
      %v4488 = vor.u32 %v4485, %v4486
      %v4489 = vsel %vm762, %v4481, %v4488
      %v4491 = vshrl.u32 %v4315, 16
      %v4493 = vrot.slane %v4491, 7
      %v4494 = vrot.slane %v4493, 4
      %v4496 = vshrl.u32 %v4316, 16
      %v4498 = vrot.slane %v4496, 7
      %v4499 = vshll.u32 %v4316, 16
      %v4501 = vor.u32 %v4498, %v4499
      %v4502 = vsel %vm762, %v4494, %v4501
      %v4504 = vshrl.u32 %v4317, 16
      %v4506 = vrot.slane %v4504, 7
      %v4507 = vrot.slane %v4506, 4
      %v4509 = vshrl.u32 %v4318, 16
      %v4511 = vrot.slane %v4509, 7
      %v4512 = vshll.u32 %v4318, 16
      %v4514 = vor.u32 %v4511, %v4512
      %v4515 = vsel %vm762, %v4507, %v4514
      %v4517 = vshrl.u32 %v4319, 16
      %v4519 = vrot.slane %v4517, 7
      %v4520 = vrot.slane %v4519, 4
      %v4522 = vshrl.u32 %v4320, 16
      %v4524 = vrot.slane %v4522, 7
      %v4525 = vshll.u32 %v4320, 16
      %v4527 = vor.u32 %v4524, %v4525
      %v4528 = vsel %vm762, %v4520, %v4527
      %4545 = vst.msk [vmem:[#allocation6] sm:$0xf] %vm987, %v4333
      %4546 = vst.msk [vmem:[#allocation6 + $0x14] sm:$0xf] %vm987, %v4346
      %4547 = vst.msk [vmem:[#allocation6 + $0x28] sm:$0xf] %vm987, %v4359
      %4548 = vst.msk [vmem:[#allocation6 + $0x3c] sm:$0xf] %vm987, %v4372
      %4549 = vst.msk [vmem:[#allocation6 + $0x50] sm:$0xf] %vm987, %v4385
      %4550 = vst.msk [vmem:[#allocation6 + $0x64] sm:$0xf] %vm987, %v4398
      %4551 = vst.msk [vmem:[#allocation6 + $0x78] sm:$0xf] %vm987, %v4411
      %4552 = vst.msk [vmem:[#allocation6 + $0x8c] sm:$0xf] %vm987, %v4424
      %4553 = vst.msk [vmem:[#allocation6 + $0xa0] sm:$0xf] %vm987, %v4437
      %4554 = vst.msk [vmem:[#allocation6 + $0xb4] sm:$0xf] %vm987, %v4450
      %4555 = vst.msk [vmem:[#allocation6 + $0xc8] sm:$0xf] %vm987, %v4463
      %4556 = vst.msk [vmem:[#allocation6 + $0xdc] sm:$0xf] %vm987, %v4476
      %4557 = vst.msk [vmem:[#allocation6 + $0xf0] sm:$0xf] %vm987, %v4489
      %4558 = vst.msk [vmem:[#allocation6 + $0x104] sm:$0xf] %vm987, %v4502
      %4559 = vst.msk [vmem:[#allocation6 + $0x118] sm:$0xf] %vm987, %v4515
      %4560 = vst.msk [vmem:[#allocation6 + $0x12c] sm:$0xf] %vm987, %v4528
      %v4561 = vld [vmem:[#allocation5 + $0x8] sm:$0xf]
      %v4562 = vld [vmem:[#allocation5 + $0x18] sm:$0xf]
      %v4563 = vld [vmem:[#allocation5 + $0x28] sm:$0xf]
      %v4564 = vld [vmem:[#allocation5 + $0x38] sm:$0xf]
      %v4565 = vld [vmem:[#allocation5 + $0x48] sm:$0xf]
      %v4566 = vld [vmem:[#allocation5 + $0x58] sm:$0xf]
      %v4567 = vld [vmem:[#allocation5 + $0x68] sm:$0xf]
      %v4568 = vld [vmem:[#allocation5 + $0x78] sm:$0xf]
      %v4569 = vld [vmem:[#allocation5 + $0xa8] sm:$0xf]
      %v4570 = vld [vmem:[#allocation5 + $0xb8] sm:$0xf]
      %v4571 = vld [vmem:[#allocation5 + $0xc8] sm:$0xf]
      %v4572 = vld [vmem:[#allocation5 + $0xd8] sm:$0xf]
      %v4573 = vld [vmem:[#allocation5 + $0xe8] sm:$0xf]
      %v4574 = vld [vmem:[#allocation5 + $0xf8] sm:$0xf]
      %v4575 = vld [vmem:[#allocation5 + $0x108] sm:$0xf]
      %v4576 = vld [vmem:[#allocation5 + $0x118] sm:$0xf]
      %4593 = vrot.lane.b32.xlu0 %v4561, 64
      %v4594 = vpop.permute.xlu0 %4593
      %4595 = vrot.lane.b32.xlu0 %v4562, 64
      %v4596 = vpop.permute.xlu0 %4595
      %4597 = vrot.lane.b32.xlu0 %v4563, 64
      %v4598 = vpop.permute.xlu0 %4597
      %4599 = vrot.lane.b32.xlu0 %v4564, 64
      %v4600 = vpop.permute.xlu0 %4599
      %4601 = vrot.lane.b32.xlu0 %v4565, 64
      %v4602 = vpop.permute.xlu0 %4601
      %4603 = vrot.lane.b32.xlu0 %v4566, 64
      %v4604 = vpop.permute.xlu0 %4603
      %4605 = vrot.lane.b32.xlu0 %v4567, 64
      %v4606 = vpop.permute.xlu0 %4605
      %4607 = vrot.lane.b32.xlu0 %v4568, 64
      %v4608 = vpop.permute.xlu0 %4607
      %4609 = vrot.lane.b32.xlu0 %v4569, 64
      %v4610 = vpop.permute.xlu0 %4609
      %4611 = vrot.lane.b32.xlu0 %v4570, 64
      %v4612 = vpop.permute.xlu0 %4611
      %4613 = vrot.lane.b32.xlu0 %v4571, 64
      %v4614 = vpop.permute.xlu0 %4613
      %4615 = vrot.lane.b32.xlu0 %v4572, 64
      %v4616 = vpop.permute.xlu0 %4615
      %4617 = vrot.lane.b32.xlu0 %v4573, 64
      %v4618 = vpop.permute.xlu0 %4617
      %4619 = vrot.lane.b32.xlu0 %v4574, 64
      %v4620 = vpop.permute.xlu0 %4619
      %4621 = vrot.lane.b32.xlu0 %v4575, 64
      %v4622 = vpop.permute.xlu0 %4621
      %4623 = vrot.lane.b32.xlu0 %v4576, 64
      %v4624 = vpop.permute.xlu0 %4623
      %4641 = vst.msk [vmem:[#allocation6] sm:$0xf] %vm1084, %v4594
      %4642 = vst.msk [vmem:[#allocation6 + $0x14] sm:$0xf] %vm1084, %v4596
      %4643 = vst.msk [vmem:[#allocation6 + $0x28] sm:$0xf] %vm1084, %v4598
      %4644 = vst.msk [vmem:[#allocation6 + $0x3c] sm:$0xf] %vm1084, %v4600
      %4645 = vst.msk [vmem:[#allocation6 + $0x50] sm:$0xf] %vm1084, %v4602
      %4646 = vst.msk [vmem:[#allocation6 + $0x64] sm:$0xf] %vm1084, %v4604
      %4647 = vst.msk [vmem:[#allocation6 + $0x78] sm:$0xf] %vm1084, %v4606
      %4648 = vst.msk [vmem:[#allocation6 + $0x8c] sm:$0xf] %vm1084, %v4608
      %4649 = vst.msk [vmem:[#allocation6 + $0xa0] sm:$0xf] %vm1084, %v4610
      %4650 = vst.msk [vmem:[#allocation6 + $0xb4] sm:$0xf] %vm1084, %v4612
      %4651 = vst.msk [vmem:[#allocation6 + $0xc8] sm:$0xf] %vm1084, %v4614
      %4652 = vst.msk [vmem:[#allocation6 + $0xdc] sm:$0xf] %vm1084, %v4616
      %4653 = vst.msk [vmem:[#allocation6 + $0xf0] sm:$0xf] %vm1084, %v4618
      %4654 = vst.msk [vmem:[#allocation6 + $0x104] sm:$0xf] %vm1084, %v4620
      %4655 = vst.msk [vmem:[#allocation6 + $0x118] sm:$0xf] %vm1084, %v4622
      %4656 = vst.msk [vmem:[#allocation6 + $0x12c] sm:$0xf] %vm1084, %v4624
      %v4657 = vld [vmem:[#allocation5 + $0x8] sm:$0xf]
      %v4658 = vld [vmem:[#allocation5 + $0xc] sm:$0x1]
      %v4659 = vld [vmem:[#allocation5 + $0x18] sm:$0xf]
      %v4660 = vld [vmem:[#allocation5 + $0x1c] sm:$0x1]
      %v4661 = vld [vmem:[#allocation5 + $0x28] sm:$0xf]
      %v4662 = vld [vmem:[#allocation5 + $0x2c] sm:$0x1]
      %v4663 = vld [vmem:[#allocation5 + $0x38] sm:$0xf]
      %v4664 = vld [vmem:[#allocation5 + $0x3c] sm:$0x1]
      %v4665 = vld [vmem:[#allocation5 + $0x48] sm:$0xf]
      %v4666 = vld [vmem:[#allocation5 + $0x4c] sm:$0x1]
      %v4667 = vld [vmem:[#allocation5 + $0x58] sm:$0xf]
      %v4668 = vld [vmem:[#allocation5 + $0x5c] sm:$0x1]
      %v4669 = vld [vmem:[#allocation5 + $0x68] sm:$0xf]
      %v4670 = vld [vmem:[#allocation5 + $0x6c] sm:$0x1]
      %v4671 = vld [vmem:[#allocation5 + $0x78] sm:$0xf]
      %v4672 = vld [vmem:[#allocation5 + $0x7c] sm:$0x1]
      %v4673 = vld [vmem:[#allocation5 + $0xa8] sm:$0xf]
      %v4674 = vld [vmem:[#allocation5 + $0xac] sm:$0x1]
      %v4675 = vld [vmem:[#allocation5 + $0xb8] sm:$0xf]
      %v4676 = vld [vmem:[#allocation5 + $0xbc] sm:$0x1]
      %v4677 = vld [vmem:[#allocation5 + $0xc8] sm:$0xf]
      %v4678 = vld [vmem:[#allocation5 + $0xcc] sm:$0x1]
      %v4679 = vld [vmem:[#allocation5 + $0xd8] sm:$0xf]
      %v4680 = vld [vmem:[#allocation5 + $0xdc] sm:$0x1]
      %v4681 = vld [vmem:[#allocation5 + $0xe8] sm:$0xf]
      %v4682 = vld [vmem:[#allocation5 + $0xec] sm:$0x1]
      %v4683 = vld [vmem:[#allocation5 + $0xf8] sm:$0xf]
      %v4684 = vld [vmem:[#allocation5 + $0xfc] sm:$0x1]
      %v4685 = vld [vmem:[#allocation5 + $0x108] sm:$0xf]
      %v4686 = vld [vmem:[#allocation5 + $0x10c] sm:$0x1]
      %v4687 = vld [vmem:[#allocation5 + $0x118] sm:$0xf]
      %v4688 = vld [vmem:[#allocation5 + $0x11c] sm:$0x1]
      %v4690 = vshrl.u32 %v4657, 16
      %v4692 = vrot.slane %v4690, 4
      %v4693 = vshll.u32 %v4657, 16
      %v4695 = vrot.slane %v4693, 5
      %v4696 = vor.u32 %v4692, %v4695
      %v4697 = vrot.slane %v4696, 4
      %v4699 = vshll.u32 %v4658, 16
      %v4701 = vrot.slane %v4699, 5
      %v4702 = vsel %vm1135, %v4697, %v4701
      %v4704 = vshrl.u32 %v4659, 16
      %v4706 = vrot.slane %v4704, 4
      %v4707 = vshll.u32 %v4659, 16
      %v4709 = vrot.slane %v4707, 5
      %v4710 = vor.u32 %v4706, %v4709
      %v4711 = vrot.slane %v4710, 4
      %v4713 = vshll.u32 %v4660, 16
      %v4715 = vrot.slane %v4713, 5
      %v4716 = vsel %vm1135, %v4711, %v4715
      %v4718 = vshrl.u32 %v4661, 16
      %v4720 = vrot.slane %v4718, 4
      %v4721 = vshll.u32 %v4661, 16
      %v4723 = vrot.slane %v4721, 5
      %v4724 = vor.u32 %v4720, %v4723
      %v4725 = vrot.slane %v4724, 4
      %v4727 = vshll.u32 %v4662, 16
      %v4729 = vrot.slane %v4727, 5
      %v4730 = vsel %vm1135, %v4725, %v4729
      %v4732 = vshrl.u32 %v4663, 16
      %v4734 = vrot.slane %v4732, 4
      %v4735 = vshll.u32 %v4663, 16
      %v4737 = vrot.slane %v4735, 5
      %v4738 = vor.u32 %v4734, %v4737
      %v4739 = vrot.slane %v4738, 4
      %v4741 = vshll.u32 %v4664, 16
      %v4743 = vrot.slane %v4741, 5
      %v4744 = vsel %vm1135, %v4739, %v4743
      %v4746 = vshrl.u32 %v4665, 16
      %v4748 = vrot.slane %v4746, 4
      %v4749 = vshll.u32 %v4665, 16
      %v4751 = vrot.slane %v4749, 5
      %v4752 = vor.u32 %v4748, %v4751
      %v4753 = vrot.slane %v4752, 4
      %v4755 = vshll.u32 %v4666, 16
      %v4757 = vrot.slane %v4755, 5
      %v4758 = vsel %vm1135, %v4753, %v4757
      %v4760 = vshrl.u32 %v4667, 16
      %v4762 = vrot.slane %v4760, 4
      %v4763 = vshll.u32 %v4667, 16
      %v4765 = vrot.slane %v4763, 5
      %v4766 = vor.u32 %v4762, %v4765
      %v4767 = vrot.slane %v4766, 4
      %v4769 = vshll.u32 %v4668, 16
      %v4771 = vrot.slane %v4769, 5
      %v4772 = vsel %vm1135, %v4767, %v4771
      %v4774 = vshrl.u32 %v4669, 16
      %v4776 = vrot.slane %v4774, 4
      %v4777 = vshll.u32 %v4669, 16
      %v4779 = vrot.slane %v4777, 5
      %v4780 = vor.u32 %v4776, %v4779
      %v4781 = vrot.slane %v4780, 4
      %v4783 = vshll.u32 %v4670, 16
      %v4785 = vrot.slane %v4783, 5
      %v4786 = vsel %vm1135, %v4781, %v4785
      %v4788 = vshrl.u32 %v4671, 16
      %v4790 = vrot.slane %v4788, 4
      %v4791 = vshll.u32 %v4671, 16
      %v4793 = vrot.slane %v4791, 5
      %v4794 = vor.u32 %v4790, %v4793
      %v4795 = vrot.slane %v4794, 4
      %v4797 = vshll.u32 %v4672, 16
      %v4799 = vrot.slane %v4797, 5
      %v4800 = vsel %vm1135, %v4795, %v4799
      %v4802 = vshrl.u32 %v4673, 16
      %v4804 = vrot.slane %v4802, 4
      %v4805 = vshll.u32 %v4673, 16
      %v4807 = vrot.slane %v4805, 5
      %v4808 = vor.u32 %v4804, %v4807
      %v4809 = vrot.slane %v4808, 4
      %v4811 = vshll.u32 %v4674, 16
      %v4813 = vrot.slane %v4811, 5
      %v4814 = vsel %vm1135, %v4809, %v4813
      %v4816 = vshrl.u32 %v4675, 16
      %v4818 = vrot.slane %v4816, 4
      %v4819 = vshll.u32 %v4675, 16
      %v4821 = vrot.slane %v4819, 5
      %v4822 = vor.u32 %v4818, %v4821
      %v4823 = vrot.slane %v4822, 4
      %v4825 = vshll.u32 %v4676, 16
      %v4827 = vrot.slane %v4825, 5
      %v4828 = vsel %vm1135, %v4823, %v4827
      %v4830 = vshrl.u32 %v4677, 16
      %v4832 = vrot.slane %v4830, 4
      %v4833 = vshll.u32 %v4677, 16
      %v4835 = vrot.slane %v4833, 5
      %v4836 = vor.u32 %v4832, %v4835
      %v4837 = vrot.slane %v4836, 4
      %v4839 = vshll.u32 %v4678, 16
      %v4841 = vrot.slane %v4839, 5
      %v4842 = vsel %vm1135, %v4837, %v4841
      %v4844 = vshrl.u32 %v4679, 16
      %v4846 = vrot.slane %v4844, 4
      %v4847 = vshll.u32 %v4679, 16
      %v4849 = vrot.slane %v4847, 5
      %v4850 = vor.u32 %v4846, %v4849
      %v4851 = vrot.slane %v4850, 4
      %v4853 = vshll.u32 %v4680, 16
      %v4855 = vrot.slane %v4853, 5
      %v4856 = vsel %vm1135, %v4851, %v4855
      %v4858 = vshrl.u32 %v4681, 16
      %v4860 = vrot.slane %v4858, 4
      %v4861 = vshll.u32 %v4681, 16
      %v4863 = vrot.slane %v4861, 5
      %v4864 = vor.u32 %v4860, %v4863
      %v4865 = vrot.slane %v4864, 4
      %v4867 = vshll.u32 %v4682, 16
      %v4869 = vrot.slane %v4867, 5
      %v4870 = vsel %vm1135, %v4865, %v4869
      %v4872 = vshrl.u32 %v4683, 16
      %v4874 = vrot.slane %v4872, 4
      %v4875 = vshll.u32 %v4683, 16
      %v4877 = vrot.slane %v4875, 5
      %v4878 = vor.u32 %v4874, %v4877
      %v4879 = vrot.slane %v4878, 4
      %v4881 = vshll.u32 %v4684, 16
      %v4883 = vrot.slane %v4881, 5
      %v4884 = vsel %vm1135, %v4879, %v4883
      %v4886 = vshrl.u32 %v4685, 16
      %v4888 = vrot.slane %v4886, 4
      %v4889 = vshll.u32 %v4685, 16
      %v4891 = vrot.slane %v4889, 5
      %v4892 = vor.u32 %v4888, %v4891
      %v4893 = vrot.slane %v4892, 4
      %v4895 = vshll.u32 %v4686, 16
      %v4897 = vrot.slane %v4895, 5
      %v4898 = vsel %vm1135, %v4893, %v4897
      %v4900 = vshrl.u32 %v4687, 16
      %v4902 = vrot.slane %v4900, 4
      %v4903 = vshll.u32 %v4687, 16
      %v4905 = vrot.slane %v4903, 5
      %v4906 = vor.u32 %v4902, %v4905
      %v4907 = vrot.slane %v4906, 4
      %v4909 = vshll.u32 %v4688, 16
      %v4911 = vrot.slane %v4909, 5
      %v4912 = vsel %vm1135, %v4907, %v4911
      %4929 = vst.msk [vmem:[#allocation6 + $0x4] sm:$0xf] %vm987, %v4702
      %4930 = vst.msk [vmem:[#allocation6 + $0x18] sm:$0xf] %vm987, %v4716
      %4931 = vst.msk [vmem:[#allocation6 + $0x2c] sm:$0xf] %vm987, %v4730
      %4932 = vst.msk [vmem:[#allocation6 + $0x40] sm:$0xf] %vm987, %v4744
      %4933 = vst.msk [vmem:[#allocation6 + $0x54] sm:$0xf] %vm987, %v4758
      %4934 = vst.msk [vmem:[#allocation6 + $0x68] sm:$0xf] %vm987, %v4772
      %4935 = vst.msk [vmem:[#allocation6 + $0x7c] sm:$0xf] %vm987, %v4786
      %4936 = vst.msk [vmem:[#allocation6 + $0x90] sm:$0xf] %vm987, %v4800
      %4937 = vst.msk [vmem:[#allocation6 + $0xa4] sm:$0xf] %vm987, %v4814
      %4938 = vst.msk [vmem:[#allocation6 + $0xb8] sm:$0xf] %vm987, %v4828
      %4939 = vst.msk [vmem:[#allocation6 + $0xcc] sm:$0xf] %vm987, %v4842
      %4940 = vst.msk [vmem:[#allocation6 + $0xe0] sm:$0xf] %vm987, %v4856
      %4941 = vst.msk [vmem:[#allocation6 + $0xf4] sm:$0xf] %vm987, %v4870
      %4942 = vst.msk [vmem:[#allocation6 + $0x108] sm:$0xf] %vm987, %v4884
      %4943 = vst.msk [vmem:[#allocation6 + $0x11c] sm:$0xf] %vm987, %v4898
      %4944 = vst.msk [vmem:[#allocation6 + $0x130] sm:$0xf] %vm987, %v4912
      %v4945 = vld [vmem:[%s4271 + $0x4] sm:$0x8]
      %v4946 = vld [vmem:[%s4271 + $0x8] sm:$0xf]
      %v4947 = vld [vmem:[%s4271 + $0x14] sm:$0x8]
      %v4948 = vld [vmem:[%s4271 + $0x18] sm:$0xf]
      %v4949 = vld [vmem:[%s4271 + $0x24] sm:$0x8]
      %v4950 = vld [vmem:[%s4271 + $0x28] sm:$0xf]
      %v4951 = vld [vmem:[%s4271 + $0x34] sm:$0x8]
      %v4952 = vld [vmem:[%s4271 + $0x38] sm:$0xf]
      %v4953 = vld [vmem:[%s4271 + $0x44] sm:$0x8]
      %v4954 = vld [vmem:[%s4271 + $0x48] sm:$0xf]
      %v4955 = vld [vmem:[%s4271 + $0x54] sm:$0x8]
      %v4956 = vld [vmem:[%s4271 + $0x58] sm:$0xf]
      %v4957 = vld [vmem:[%s4271 + $0x64] sm:$0x8]
      %v4958 = vld [vmem:[%s4271 + $0x68] sm:$0xf]
      %v4959 = vld [vmem:[%s4271 + $0x74] sm:$0x8]
      %v4960 = vld [vmem:[%s4271 + $0x78] sm:$0xf]
      %v4961 = vld [vmem:[%s4271 + $0xa4] sm:$0x8]
      %v4962 = vld [vmem:[%s4271 + $0xa8] sm:$0xf]
      %v4963 = vld [vmem:[%s4271 + $0xb4] sm:$0x8]
      %v4964 = vld [vmem:[%s4271 + $0xb8] sm:$0xf]
      %v4965 = vld [vmem:[%s4271 + $0xc4] sm:$0x8]
      %v4966 = vld [vmem:[%s4271 + $0xc8] sm:$0xf]
      %v4967 = vld [vmem:[%s4271 + $0xd4] sm:$0x8]
      %v4968 = vld [vmem:[%s4271 + $0xd8] sm:$0xf]
      %v4969 = vld [vmem:[%s4271 + $0xe4] sm:$0x8]
      %v4970 = vld [vmem:[%s4271 + $0xe8] sm:$0xf]
      %v4971 = vld [vmem:[%s4271 + $0xf4] sm:$0x8]
      %v4972 = vld [vmem:[%s4271 + $0xf8] sm:$0xf]
      %v4973 = vld [vmem:[%s4271 + $0x104] sm:$0x8]
      %v4974 = vld [vmem:[%s4271 + $0x108] sm:$0xf]
      %v4975 = vld [vmem:[%s4271 + $0x114] sm:$0x8]
      %v4976 = vld [vmem:[%s4271 + $0x118] sm:$0xf]
      %v4978 = vshrl.u32 %v4945, 16
      %v4980 = vrot.slane %v4978, 7
      %v4981 = vrot.slane %v4980, 4
      %v4983 = vshrl.u32 %v4946, 16
      %v4985 = vrot.slane %v4983, 7
      %v4986 = vshll.u32 %v4946, 16
      %v4988 = vor.u32 %v4985, %v4986
      %v4989 = vsel %vm762, %v4981, %v4988
      %v4991 = vshrl.u32 %v4947, 16
      %v4993 = vrot.slane %v4991, 7
      %v4994 = vrot.slane %v4993, 4
      %v4996 = vshrl.u32 %v4948, 16
      %v4998 = vrot.slane %v4996, 7
      %v4999 = vshll.u32 %v4948, 16
      %v5001 = vor.u32 %v4998, %v4999
      %v5002 = vsel %vm762, %v4994, %v5001
      %v5004 = vshrl.u32 %v4949, 16
      %v5006 = vrot.slane %v5004, 7
      %v5007 = vrot.slane %v5006, 4
      %v5009 = vshrl.u32 %v4950, 16
      %v5011 = vrot.slane %v5009, 7
      %v5012 = vshll.u32 %v4950, 16
      %v5014 = vor.u32 %v5011, %v5012
      %v5015 = vsel %vm762, %v5007, %v5014
      %v5017 = vshrl.u32 %v4951, 16
      %v5019 = vrot.slane %v5017, 7
      %v5020 = vrot.slane %v5019, 4
      %v5022 = vshrl.u32 %v4952, 16
      %v5024 = vrot.slane %v5022, 7
      %v5025 = vshll.u32 %v4952, 16
      %v5027 = vor.u32 %v5024, %v5025
      %v5028 = vsel %vm762, %v5020, %v5027
      %v5030 = vshrl.u32 %v4953, 16
      %v5032 = vrot.slane %v5030, 7
      %v5033 = vrot.slane %v5032, 4
      %v5035 = vshrl.u32 %v4954, 16
      %v5037 = vrot.slane %v5035, 7
      %v5038 = vshll.u32 %v4954, 16
      %v5040 = vor.u32 %v5037, %v5038
      %v5041 = vsel %vm762, %v5033, %v5040
      %v5043 = vshrl.u32 %v4955, 16
      %v5045 = vrot.slane %v5043, 7
      %v5046 = vrot.slane %v5045, 4
      %v5048 = vshrl.u32 %v4956, 16
      %v5050 = vrot.slane %v5048, 7
      %v5051 = vshll.u32 %v4956, 16
      %v5053 = vor.u32 %v5050, %v5051
      %v5054 = vsel %vm762, %v5046, %v5053
      %v5056 = vshrl.u32 %v4957, 16
      %v5058 = vrot.slane %v5056, 7
      %v5059 = vrot.slane %v5058, 4
      %v5061 = vshrl.u32 %v4958, 16
      %v5063 = vrot.slane %v5061, 7
      %v5064 = vshll.u32 %v4958, 16
      %v5066 = vor.u32 %v5063, %v5064
      %v5067 = vsel %vm762, %v5059, %v5066
      %v5069 = vshrl.u32 %v4959, 16
      %v5071 = vrot.slane %v5069, 7
      %v5072 = vrot.slane %v5071, 4
      %v5074 = vshrl.u32 %v4960, 16
      %v5076 = vrot.slane %v5074, 7
      %v5077 = vshll.u32 %v4960, 16
      %v5079 = vor.u32 %v5076, %v5077
      %v5080 = vsel %vm762, %v5072, %v5079
      %v5082 = vshrl.u32 %v4961, 16
      %v5084 = vrot.slane %v5082, 7
      %v5085 = vrot.slane %v5084, 4
      %v5087 = vshrl.u32 %v4962, 16
      %v5089 = vrot.slane %v5087, 7
      %v5090 = vshll.u32 %v4962, 16
      %v5092 = vor.u32 %v5089, %v5090
      %v5093 = vsel %vm762, %v5085, %v5092
      %v5095 = vshrl.u32 %v4963, 16
      %v5097 = vrot.slane %v5095, 7
      %v5098 = vrot.slane %v5097, 4
      %v5100 = vshrl.u32 %v4964, 16
      %v5102 = vrot.slane %v5100, 7
      %v5103 = vshll.u32 %v4964, 16
      %v5105 = vor.u32 %v5102, %v5103
      %v5106 = vsel %vm762, %v5098, %v5105
      %v5108 = vshrl.u32 %v4965, 16
      %v5110 = vrot.slane %v5108, 7
      %v5111 = vrot.slane %v5110, 4
      %v5113 = vshrl.u32 %v4966, 16
      %v5115 = vrot.slane %v5113, 7
      %v5116 = vshll.u32 %v4966, 16
      %v5118 = vor.u32 %v5115, %v5116
      %v5119 = vsel %vm762, %v5111, %v5118
      %v5121 = vshrl.u32 %v4967, 16
      %v5123 = vrot.slane %v5121, 7
      %v5124 = vrot.slane %v5123, 4
      %v5126 = vshrl.u32 %v4968, 16
      %v5128 = vrot.slane %v5126, 7
      %v5129 = vshll.u32 %v4968, 16
      %v5131 = vor.u32 %v5128, %v5129
      %v5132 = vsel %vm762, %v5124, %v5131
      %v5134 = vshrl.u32 %v4969, 16
      %v5136 = vrot.slane %v5134, 7
      %v5137 = vrot.slane %v5136, 4
      %v5139 = vshrl.u32 %v4970, 16
      %v5141 = vrot.slane %v5139, 7
      %v5142 = vshll.u32 %v4970, 16
      %v5144 = vor.u32 %v5141, %v5142
      %v5145 = vsel %vm762, %v5137, %v5144
      %v5147 = vshrl.u32 %v4971, 16
      %v5149 = vrot.slane %v5147, 7
      %v5150 = vrot.slane %v5149, 4
      %v5152 = vshrl.u32 %v4972, 16
      %v5154 = vrot.slane %v5152, 7
      %v5155 = vshll.u32 %v4972, 16
      %v5157 = vor.u32 %v5154, %v5155
      %v5158 = vsel %vm762, %v5150, %v5157
      %v5160 = vshrl.u32 %v4973, 16
      %v5162 = vrot.slane %v5160, 7
      %v5163 = vrot.slane %v5162, 4
      %v5165 = vshrl.u32 %v4974, 16
      %v5167 = vrot.slane %v5165, 7
      %v5168 = vshll.u32 %v4974, 16
      %v5170 = vor.u32 %v5167, %v5168
      %v5171 = vsel %vm762, %v5163, %v5170
      %v5173 = vshrl.u32 %v4975, 16
      %v5175 = vrot.slane %v5173, 7
      %v5176 = vrot.slane %v5175, 4
      %v5178 = vshrl.u32 %v4976, 16
      %v5180 = vrot.slane %v5178, 7
      %v5181 = vshll.u32 %v4976, 16
      %v5183 = vor.u32 %v5180, %v5181
      %v5184 = vsel %vm762, %v5176, %v5183
      %5185 = vrot.lane.b32.xlu0 %v4989, 64
      %v5186 = vpop.permute.xlu0 %5185
      %5187 = vrot.lane.b32.xlu0 %v5002, 64
      %v5188 = vpop.permute.xlu0 %5187
      %5189 = vrot.lane.b32.xlu0 %v5015, 64
      %v5190 = vpop.permute.xlu0 %5189
      %5191 = vrot.lane.b32.xlu0 %v5028, 64
      %v5192 = vpop.permute.xlu0 %5191
      %5193 = vrot.lane.b32.xlu0 %v5041, 64
      %v5194 = vpop.permute.xlu0 %5193
      %5195 = vrot.lane.b32.xlu0 %v5054, 64
      %v5196 = vpop.permute.xlu0 %5195
      %5197 = vrot.lane.b32.xlu0 %v5067, 64
      %v5198 = vpop.permute.xlu0 %5197
      %5199 = vrot.lane.b32.xlu0 %v5080, 64
      %v5200 = vpop.permute.xlu0 %5199
      %5201 = vrot.lane.b32.xlu0 %v5093, 64
      %v5202 = vpop.permute.xlu0 %5201
      %5203 = vrot.lane.b32.xlu0 %v5106, 64
      %v5204 = vpop.permute.xlu0 %5203
      %5205 = vrot.lane.b32.xlu0 %v5119, 64
      %v5206 = vpop.permute.xlu0 %5205
      %5207 = vrot.lane.b32.xlu0 %v5132, 64
      %v5208 = vpop.permute.xlu0 %5207
      %5209 = vrot.lane.b32.xlu0 %v5145, 64
      %v5210 = vpop.permute.xlu0 %5209
      %5211 = vrot.lane.b32.xlu0 %v5158, 64
      %v5212 = vpop.permute.xlu0 %5211
      %5213 = vrot.lane.b32.xlu0 %v5171, 64
      %v5214 = vpop.permute.xlu0 %5213
      %5215 = vrot.lane.b32.xlu0 %v5184, 64
      %v5216 = vpop.permute.xlu0 %5215
      %5233 = vst.msk [vmem:[#allocation6 + $0x4] sm:$0xf] %vm1084, %v5186
      %5234 = vst.msk [vmem:[#allocation6 + $0x18] sm:$0xf] %vm1084, %v5188
      %5235 = vst.msk [vmem:[#allocation6 + $0x2c] sm:$0xf] %vm1084, %v5190
      %5236 = vst.msk [vmem:[#allocation6 + $0x40] sm:$0xf] %vm1084, %v5192
      %5237 = vst.msk [vmem:[#allocation6 + $0x54] sm:$0xf] %vm1084, %v5194
      %5238 = vst.msk [vmem:[#allocation6 + $0x68] sm:$0xf] %vm1084, %v5196
      %5239 = vst.msk [vmem:[#allocation6 + $0x7c] sm:$0xf] %vm1084, %v5198
      %5240 = vst.msk [vmem:[#allocation6 + $0x90] sm:$0xf] %vm1084, %v5200
      %5241 = vst.msk [vmem:[#allocation6 + $0xa4] sm:$0xf] %vm1084, %v5202
      %5242 = vst.msk [vmem:[#allocation6 + $0xb8] sm:$0xf] %vm1084, %v5204
      %5243 = vst.msk [vmem:[#allocation6 + $0xcc] sm:$0xf] %vm1084, %v5206
      %5244 = vst.msk [vmem:[#allocation6 + $0xe0] sm:$0xf] %vm1084, %v5208
      %5245 = vst.msk [vmem:[#allocation6 + $0xf4] sm:$0xf] %vm1084, %v5210
      %5246 = vst.msk [vmem:[#allocation6 + $0x108] sm:$0xf] %vm1084, %v5212
      %5247 = vst.msk [vmem:[#allocation6 + $0x11c] sm:$0xf] %vm1084, %v5214
      %5248 = vst.msk [vmem:[#allocation6 + $0x130] sm:$0xf] %vm1084, %v5216
      %v5249 = vld [vmem:[%s4271 + $0x8] sm:$0xf]
      %v5250 = vld [vmem:[%s4271 + $0x18] sm:$0xf]
      %v5251 = vld [vmem:[%s4271 + $0x28] sm:$0xf]
      %v5252 = vld [vmem:[%s4271 + $0x38] sm:$0xf]
      %v5253 = vld [vmem:[%s4271 + $0x48] sm:$0xf]
      %v5254 = vld [vmem:[%s4271 + $0x58] sm:$0xf]
      %v5255 = vld [vmem:[%s4271 + $0x68] sm:$0xf]
      %v5256 = vld [vmem:[%s4271 + $0x78] sm:$0xf]
      %v5257 = vld [vmem:[%s4271 + $0xa8] sm:$0xf]
      %v5258 = vld [vmem:[%s4271 + $0xb8] sm:$0xf]
      %v5259 = vld [vmem:[%s4271 + $0xc8] sm:$0xf]
      %v5260 = vld [vmem:[%s4271 + $0xd8] sm:$0xf]
      %v5261 = vld [vmem:[%s4271 + $0xe8] sm:$0xf]
      %v5262 = vld [vmem:[%s4271 + $0xf8] sm:$0xf]
      %v5263 = vld [vmem:[%s4271 + $0x108] sm:$0xf]
      %v5264 = vld [vmem:[%s4271 + $0x118] sm:$0xf]
      %5265 = vst.msk [vmem:[#allocation6 + $0x8] sm:$0xf] %vm987, %v5249
      %5266 = vst.msk [vmem:[#allocation6 + $0x1c] sm:$0xf] %vm987, %v5250
      %5267 = vst.msk [vmem:[#allocation6 + $0x30] sm:$0xf] %vm987, %v5251
      %5268 = vst.msk [vmem:[#allocation6 + $0x44] sm:$0xf] %vm987, %v5252
      %5269 = vst.msk [vmem:[#allocation6 + $0x58] sm:$0xf] %vm987, %v5253
      %5270 = vst.msk [vmem:[#allocation6 + $0x6c] sm:$0xf] %vm987, %v5254
      %5271 = vst.msk [vmem:[#allocation6 + $0x80] sm:$0xf] %vm987, %v5255
      %5272 = vst.msk [vmem:[#allocation6 + $0x94] sm:$0xf] %vm987, %v5256
      %5273 = vst.msk [vmem:[#allocation6 + $0xa8] sm:$0xf] %vm987, %v5257
      %5274 = vst.msk [vmem:[#allocation6 + $0xbc] sm:$0xf] %vm987, %v5258
      %5275 = vst.msk [vmem:[#allocation6 + $0xd0] sm:$0xf] %vm987, %v5259
      %5276 = vst.msk [vmem:[#allocation6 + $0xe4] sm:$0xf] %vm987, %v5260
      %5277 = vst.msk [vmem:[#allocation6 + $0xf8] sm:$0xf] %vm987, %v5261
      %5278 = vst.msk [vmem:[#allocation6 + $0x10c] sm:$0xf] %vm987, %v5262
      %5279 = vst.msk [vmem:[#allocation6 + $0x120] sm:$0xf] %vm987, %v5263
      %5280 = vst.msk [vmem:[#allocation6 + $0x134] sm:$0xf] %vm987, %v5264
      %v5281 = vld [vmem:[%s4271 + $0x8] sm:$0xf]
      %v5282 = vld [vmem:[%s4271 + $0xc] sm:$0x1]
      %v5283 = vld [vmem:[%s4271 + $0x18] sm:$0xf]
      %v5284 = vld [vmem:[%s4271 + $0x1c] sm:$0x1]
      %v5285 = vld [vmem:[%s4271 + $0x28] sm:$0xf]
      %v5286 = vld [vmem:[%s4271 + $0x2c] sm:$0x1]
      %v5287 = vld [vmem:[%s4271 + $0x38] sm:$0xf]
      %v5288 = vld [vmem:[%s4271 + $0x3c] sm:$0x1]
      %v5289 = vld [vmem:[%s4271 + $0x48] sm:$0xf]
      %v5290 = vld [vmem:[%s4271 + $0x4c] sm:$0x1]
      %v5291 = vld [vmem:[%s4271 + $0x58] sm:$0xf]
      %v5292 = vld [vmem:[%s4271 + $0x5c] sm:$0x1]
      %v5293 = vld [vmem:[%s4271 + $0x68] sm:$0xf]
      %v5294 = vld [vmem:[%s4271 + $0x6c] sm:$0x1]
      %v5295 = vld [vmem:[%s4271 + $0x78] sm:$0xf]
      %v5296 = vld [vmem:[%s4271 + $0x7c] sm:$0x1]
      %v5297 = vld [vmem:[%s4271 + $0xa8] sm:$0xf]
      %v5298 = vld [vmem:[%s4271 + $0xac] sm:$0x1]
      %v5299 = vld [vmem:[%s4271 + $0xb8] sm:$0xf]
      %v5300 = vld [vmem:[%s4271 + $0xbc] sm:$0x1]
      %v5301 = vld [vmem:[%s4271 + $0xc8] sm:$0xf]
      %v5302 = vld [vmem:[%s4271 + $0xcc] sm:$0x1]
      %v5303 = vld [vmem:[%s4271 + $0xd8] sm:$0xf]
      %v5304 = vld [vmem:[%s4271 + $0xdc] sm:$0x1]
      %v5305 = vld [vmem:[%s4271 + $0xe8] sm:$0xf]
      %v5306 = vld [vmem:[%s4271 + $0xec] sm:$0x1]
      %v5307 = vld [vmem:[%s4271 + $0xf8] sm:$0xf]
      %v5308 = vld [vmem:[%s4271 + $0xfc] sm:$0x1]
      %v5309 = vld [vmem:[%s4271 + $0x108] sm:$0xf]
      %v5310 = vld [vmem:[%s4271 + $0x10c] sm:$0x1]
      %v5311 = vld [vmem:[%s4271 + $0x118] sm:$0xf]
      %v5312 = vld [vmem:[%s4271 + $0x11c] sm:$0x1]
      %v5314 = vshrl.u32 %v5281, 16
      %v5316 = vrot.slane %v5314, 4
      %v5317 = vshll.u32 %v5281, 16
      %v5319 = vrot.slane %v5317, 5
      %v5320 = vor.u32 %v5316, %v5319
      %v5321 = vrot.slane %v5320, 4
      %v5323 = vshll.u32 %v5282, 16
      %v5325 = vrot.slane %v5323, 5
      %v5326 = vsel %vm1135, %v5321, %v5325
      %v5328 = vshrl.u32 %v5283, 16
      %v5330 = vrot.slane %v5328, 4
      %v5331 = vshll.u32 %v5283, 16
      %v5333 = vrot.slane %v5331, 5
      %v5334 = vor.u32 %v5330, %v5333
      %v5335 = vrot.slane %v5334, 4
      %v5337 = vshll.u32 %v5284, 16
      %v5339 = vrot.slane %v5337, 5
      %v5340 = vsel %vm1135, %v5335, %v5339
      %v5342 = vshrl.u32 %v5285, 16
      %v5344 = vrot.slane %v5342, 4
      %v5345 = vshll.u32 %v5285, 16
      %v5347 = vrot.slane %v5345, 5
      %v5348 = vor.u32 %v5344, %v5347
      %v5349 = vrot.slane %v5348, 4
      %v5351 = vshll.u32 %v5286, 16
      %v5353 = vrot.slane %v5351, 5
      %v5354 = vsel %vm1135, %v5349, %v5353
      %v5356 = vshrl.u32 %v5287, 16
      %v5358 = vrot.slane %v5356, 4
      %v5359 = vshll.u32 %v5287, 16
      %v5361 = vrot.slane %v5359, 5
      %v5362 = vor.u32 %v5358, %v5361
      %v5363 = vrot.slane %v5362, 4
      %v5365 = vshll.u32 %v5288, 16
      %v5367 = vrot.slane %v5365, 5
      %v5368 = vsel %vm1135, %v5363, %v5367
      %v5370 = vshrl.u32 %v5289, 16
      %v5372 = vrot.slane %v5370, 4
      %v5373 = vshll.u32 %v5289, 16
      %v5375 = vrot.slane %v5373, 5
      %v5376 = vor.u32 %v5372, %v5375
      %v5377 = vrot.slane %v5376, 4
      %v5379 = vshll.u32 %v5290, 16
      %v5381 = vrot.slane %v5379, 5
      %v5382 = vsel %vm1135, %v5377, %v5381
      %v5384 = vshrl.u32 %v5291, 16
      %v5386 = vrot.slane %v5384, 4
      %v5387 = vshll.u32 %v5291, 16
      %v5389 = vrot.slane %v5387, 5
      %v5390 = vor.u32 %v5386, %v5389
      %v5391 = vrot.slane %v5390, 4
      %v5393 = vshll.u32 %v5292, 16
      %v5395 = vrot.slane %v5393, 5
      %v5396 = vsel %vm1135, %v5391, %v5395
      %v5398 = vshrl.u32 %v5293, 16
      %v5400 = vrot.slane %v5398, 4
      %v5401 = vshll.u32 %v5293, 16
      %v5403 = vrot.slane %v5401, 5
      %v5404 = vor.u32 %v5400, %v5403
      %v5405 = vrot.slane %v5404, 4
      %v5407 = vshll.u32 %v5294, 16
      %v5409 = vrot.slane %v5407, 5
      %v5410 = vsel %vm1135, %v5405, %v5409
      %v5412 = vshrl.u32 %v5295, 16
      %v5414 = vrot.slane %v5412, 4
      %v5415 = vshll.u32 %v5295, 16
      %v5417 = vrot.slane %v5415, 5
      %v5418 = vor.u32 %v5414, %v5417
      %v5419 = vrot.slane %v5418, 4
      %v5421 = vshll.u32 %v5296, 16
      %v5423 = vrot.slane %v5421, 5
      %v5424 = vsel %vm1135, %v5419, %v5423
      %v5426 = vshrl.u32 %v5297, 16
      %v5428 = vrot.slane %v5426, 4
      %v5429 = vshll.u32 %v5297, 16
      %v5431 = vrot.slane %v5429, 5
      %v5432 = vor.u32 %v5428, %v5431
      %v5433 = vrot.slane %v5432, 4
      %v5435 = vshll.u32 %v5298, 16
      %v5437 = vrot.slane %v5435, 5
      %v5438 = vsel %vm1135, %v5433, %v5437
      %v5440 = vshrl.u32 %v5299, 16
      %v5442 = vrot.slane %v5440, 4
      %v5443 = vshll.u32 %v5299, 16
      %v5445 = vrot.slane %v5443, 5
      %v5446 = vor.u32 %v5442, %v5445
      %v5447 = vrot.slane %v5446, 4
      %v5449 = vshll.u32 %v5300, 16
      %v5451 = vrot.slane %v5449, 5
      %v5452 = vsel %vm1135, %v5447, %v5451
      %v5454 = vshrl.u32 %v5301, 16
      %v5456 = vrot.slane %v5454, 4
      %v5457 = vshll.u32 %v5301, 16
      %v5459 = vrot.slane %v5457, 5
      %v5460 = vor.u32 %v5456, %v5459
      %v5461 = vrot.slane %v5460, 4
      %v5463 = vshll.u32 %v5302, 16
      %v5465 = vrot.slane %v5463, 5
      %v5466 = vsel %vm1135, %v5461, %v5465
      %v5468 = vshrl.u32 %v5303, 16
      %v5470 = vrot.slane %v5468, 4
      %v5471 = vshll.u32 %v5303, 16
      %v5473 = vrot.slane %v5471, 5
      %v5474 = vor.u32 %v5470, %v5473
      %v5475 = vrot.slane %v5474, 4
      %v5477 = vshll.u32 %v5304, 16
      %v5479 = vrot.slane %v5477, 5
      %v5480 = vsel %vm1135, %v5475, %v5479
      %v5482 = vshrl.u32 %v5305, 16
      %v5484 = vrot.slane %v5482, 4
      %v5485 = vshll.u32 %v5305, 16
      %v5487 = vrot.slane %v5485, 5
      %v5488 = vor.u32 %v5484, %v5487
      %v5489 = vrot.slane %v5488, 4
      %v5491 = vshll.u32 %v5306, 16
      %v5493 = vrot.slane %v5491, 5
      %v5494 = vsel %vm1135, %v5489, %v5493
      %v5496 = vshrl.u32 %v5307, 16
      %v5498 = vrot.slane %v5496, 4
      %v5499 = vshll.u32 %v5307, 16
      %v5501 = vrot.slane %v5499, 5
      %v5502 = vor.u32 %v5498, %v5501
      %v5503 = vrot.slane %v5502, 4
      %v5505 = vshll.u32 %v5308, 16
      %v5507 = vrot.slane %v5505, 5
      %v5508 = vsel %vm1135, %v5503, %v5507
      %v5510 = vshrl.u32 %v5309, 16
      %v5512 = vrot.slane %v5510, 4
      %v5513 = vshll.u32 %v5309, 16
      %v5515 = vrot.slane %v5513, 5
      %v5516 = vor.u32 %v5512, %v5515
      %v5517 = vrot.slane %v5516, 4
      %v5519 = vshll.u32 %v5310, 16
      %v5521 = vrot.slane %v5519, 5
      %v5522 = vsel %vm1135, %v5517, %v5521
      %v5524 = vshrl.u32 %v5311, 16
      %v5526 = vrot.slane %v5524, 4
      %v5527 = vshll.u32 %v5311, 16
      %v5529 = vrot.slane %v5527, 5
      %v5530 = vor.u32 %v5526, %v5529
      %v5531 = vrot.slane %v5530, 4
      %v5533 = vshll.u32 %v5312, 16
      %v5535 = vrot.slane %v5533, 5
      %v5536 = vsel %vm1135, %v5531, %v5535
      %5537 = vrot.lane.b32.xlu0 %v5326, 64
      %v5538 = vpop.permute.xlu0 %5537
      %5539 = vrot.lane.b32.xlu0 %v5340, 64
      %v5540 = vpop.permute.xlu0 %5539
      %5541 = vrot.lane.b32.xlu0 %v5354, 64
      %v5542 = vpop.permute.xlu0 %5541
      %5543 = vrot.lane.b32.xlu0 %v5368, 64
      %v5544 = vpop.permute.xlu0 %5543
      %5545 = vrot.lane.b32.xlu0 %v5382, 64
      %v5546 = vpop.permute.xlu0 %5545
      %5547 = vrot.lane.b32.xlu0 %v5396, 64
      %v5548 = vpop.permute.xlu0 %5547
      %5549 = vrot.lane.b32.xlu0 %v5410, 64
      %v5550 = vpop.permute.xlu0 %5549
      %5551 = vrot.lane.b32.xlu0 %v5424, 64
      %v5552 = vpop.permute.xlu0 %5551
      %5553 = vrot.lane.b32.xlu0 %v5438, 64
      %v5554 = vpop.permute.xlu0 %5553
      %5555 = vrot.lane.b32.xlu0 %v5452, 64
      %v5556 = vpop.permute.xlu0 %5555
      %5557 = vrot.lane.b32.xlu0 %v5466, 64
      %v5558 = vpop.permute.xlu0 %5557
      %5559 = vrot.lane.b32.xlu0 %v5480, 64
      %v5560 = vpop.permute.xlu0 %5559
      %5561 = vrot.lane.b32.xlu0 %v5494, 64
      %v5562 = vpop.permute.xlu0 %5561
      %5563 = vrot.lane.b32.xlu0 %v5508, 64
      %v5564 = vpop.permute.xlu0 %5563
      %5565 = vrot.lane.b32.xlu0 %v5522, 64
      %v5566 = vpop.permute.xlu0 %5565
      %5567 = vrot.lane.b32.xlu0 %v5536, 64
      %v5568 = vpop.permute.xlu0 %5567
      %5585 = vst.msk [vmem:[#allocation6 + $0x8] sm:$0xf] %vm1084, %v5538
      %5586 = vst.msk [vmem:[#allocation6 + $0x1c] sm:$0xf] %vm1084, %v5540
      %5587 = vst.msk [vmem:[#allocation6 + $0x30] sm:$0xf] %vm1084, %v5542
      %5588 = vst.msk [vmem:[#allocation6 + $0x44] sm:$0xf] %vm1084, %v5544
      %5589 = vst.msk [vmem:[#allocation6 + $0x58] sm:$0xf] %vm1084, %v5546
      %5590 = vst.msk [vmem:[#allocation6 + $0x6c] sm:$0xf] %vm1084, %v5548
      %5591 = vst.msk [vmem:[#allocation6 + $0x80] sm:$0xf] %vm1084, %v5550
      %5592 = vst.msk [vmem:[#allocation6 + $0x94] sm:$0xf] %vm1084, %v5552
      %5593 = vst.msk [vmem:[#allocation6 + $0xa8] sm:$0xf] %vm1084, %v5554
      %5594 = vst.msk [vmem:[#allocation6 + $0xbc] sm:$0xf] %vm1084, %v5556
      %5595 = vst.msk [vmem:[#allocation6 + $0xd0] sm:$0xf] %vm1084, %v5558
      %5596 = vst.msk [vmem:[#allocation6 + $0xe4] sm:$0xf] %vm1084, %v5560
      %5597 = vst.msk [vmem:[#allocation6 + $0xf8] sm:$0xf] %vm1084, %v5562
      %5598 = vst.msk [vmem:[#allocation6 + $0x10c] sm:$0xf] %vm1084, %v5564
      %5599 = vst.msk [vmem:[#allocation6 + $0x120] sm:$0xf] %vm1084, %v5566
      %5600 = vst.msk [vmem:[#allocation6 + $0x134] sm:$0xf] %vm1084, %v5568
      %s5601 = scalar_lea.vmem [#allocation5], 32
      %v5602 = vld [vmem:[%s5601 + $0x4] sm:$0x8]
      %v5603 = vld [vmem:[%s5601 + $0x8] sm:$0xf]
      %v5604 = vld [vmem:[%s5601 + $0x14] sm:$0x8]
      %v5605 = vld [vmem:[%s5601 + $0x18] sm:$0xf]
      %v5606 = vld [vmem:[%s5601 + $0x24] sm:$0x8]
      %v5607 = vld [vmem:[%s5601 + $0x28] sm:$0xf]
      %v5608 = vld [vmem:[%s5601 + $0x34] sm:$0x8]
      %v5609 = vld [vmem:[%s5601 + $0x38] sm:$0xf]
      %v5610 = vld [vmem:[%s5601 + $0x44] sm:$0x8]
      %v5611 = vld [vmem:[%s5601 + $0x48] sm:$0xf]
      %v5612 = vld [vmem:[%s5601 + $0x54] sm:$0x8]
      %v5613 = vld [vmem:[%s5601 + $0x58] sm:$0xf]
      %v5614 = vld [vmem:[%s5601 + $0x64] sm:$0x8]
      %v5615 = vld [vmem:[%s5601 + $0x68] sm:$0xf]
      %v5616 = vld [vmem:[%s5601 + $0x74] sm:$0x8]
      %v5617 = vld [vmem:[%s5601 + $0x78] sm:$0xf]
      %v5618 = vld [vmem:[%s5601 + $0xa4] sm:$0x8]
      %v5619 = vld [vmem:[%s5601 + $0xa8] sm:$0xf]
      %v5620 = vld [vmem:[%s5601 + $0xb4] sm:$0x8]
      %v5621 = vld [vmem:[%s5601 + $0xb8] sm:$0xf]
      %v5622 = vld [vmem:[%s5601 + $0xc4] sm:$0x8]
      %v5623 = vld [vmem:[%s5601 + $0xc8] sm:$0xf]
      %v5624 = vld [vmem:[%s5601 + $0xd4] sm:$0x8]
      %v5625 = vld [vmem:[%s5601 + $0xd8] sm:$0xf]
      %v5626 = vld [vmem:[%s5601 + $0xe4] sm:$0x8]
      %v5627 = vld [vmem:[%s5601 + $0xe8] sm:$0xf]
      %v5628 = vld [vmem:[%s5601 + $0xf4] sm:$0x8]
      %v5629 = vld [vmem:[%s5601 + $0xf8] sm:$0xf]
      %v5630 = vld [vmem:[%s5601 + $0x104] sm:$0x8]
      %v5631 = vld [vmem:[%s5601 + $0x108] sm:$0xf]
      %v5632 = vld [vmem:[%s5601 + $0x114] sm:$0x8]
      %v5633 = vld [vmem:[%s5601 + $0x118] sm:$0xf]
      %v5635 = vshrl.u32 %v5602, 16
      %v5637 = vrot.slane %v5635, 7
      %v5638 = vrot.slane %v5637, 4
      %v5640 = vshrl.u32 %v5603, 16
      %v5642 = vrot.slane %v5640, 7
      %v5643 = vshll.u32 %v5603, 16
      %v5645 = vor.u32 %v5642, %v5643
      %v5646 = vsel %vm762, %v5638, %v5645
      %v5648 = vshrl.u32 %v5604, 16
      %v5650 = vrot.slane %v5648, 7
      %v5651 = vrot.slane %v5650, 4
      %v5653 = vshrl.u32 %v5605, 16
      %v5655 = vrot.slane %v5653, 7
      %v5656 = vshll.u32 %v5605, 16
      %v5658 = vor.u32 %v5655, %v5656
      %v5659 = vsel %vm762, %v5651, %v5658
      %v5661 = vshrl.u32 %v5606, 16
      %v5663 = vrot.slane %v5661, 7
      %v5664 = vrot.slane %v5663, 4
      %v5666 = vshrl.u32 %v5607, 16
      %v5668 = vrot.slane %v5666, 7
      %v5669 = vshll.u32 %v5607, 16
      %v5671 = vor.u32 %v5668, %v5669
      %v5672 = vsel %vm762, %v5664, %v5671
      %v5674 = vshrl.u32 %v5608, 16
      %v5676 = vrot.slane %v5674, 7
      %v5677 = vrot.slane %v5676, 4
      %v5679 = vshrl.u32 %v5609, 16
      %v5681 = vrot.slane %v5679, 7
      %v5682 = vshll.u32 %v5609, 16
      %v5684 = vor.u32 %v5681, %v5682
      %v5685 = vsel %vm762, %v5677, %v5684
      %v5687 = vshrl.u32 %v5610, 16
      %v5689 = vrot.slane %v5687, 7
      %v5690 = vrot.slane %v5689, 4
      %v5692 = vshrl.u32 %v5611, 16
      %v5694 = vrot.slane %v5692, 7
      %v5695 = vshll.u32 %v5611, 16
      %v5697 = vor.u32 %v5694, %v5695
      %v5698 = vsel %vm762, %v5690, %v5697
      %v5700 = vshrl.u32 %v5612, 16
      %v5702 = vrot.slane %v5700, 7
      %v5703 = vrot.slane %v5702, 4
      %v5705 = vshrl.u32 %v5613, 16
      %v5707 = vrot.slane %v5705, 7
      %v5708 = vshll.u32 %v5613, 16
      %v5710 = vor.u32 %v5707, %v5708
      %v5711 = vsel %vm762, %v5703, %v5710
      %v5713 = vshrl.u32 %v5614, 16
      %v5715 = vrot.slane %v5713, 7
      %v5716 = vrot.slane %v5715, 4
      %v5718 = vshrl.u32 %v5615, 16
      %v5720 = vrot.slane %v5718, 7
      %v5721 = vshll.u32 %v5615, 16
      %v5723 = vor.u32 %v5720, %v5721
      %v5724 = vsel %vm762, %v5716, %v5723
      %v5726 = vshrl.u32 %v5616, 16
      %v5728 = vrot.slane %v5726, 7
      %v5729 = vrot.slane %v5728, 4
      %v5731 = vshrl.u32 %v5617, 16
      %v5733 = vrot.slane %v5731, 7
      %v5734 = vshll.u32 %v5617, 16
      %v5736 = vor.u32 %v5733, %v5734
      %v5737 = vsel %vm762, %v5729, %v5736
      %v5739 = vshrl.u32 %v5618, 16
      %v5741 = vrot.slane %v5739, 7
      %v5742 = vrot.slane %v5741, 4
      %v5744 = vshrl.u32 %v5619, 16
      %v5746 = vrot.slane %v5744, 7
      %v5747 = vshll.u32 %v5619, 16
      %v5749 = vor.u32 %v5746, %v5747
      %v5750 = vsel %vm762, %v5742, %v5749
      %v5752 = vshrl.u32 %v5620, 16
      %v5754 = vrot.slane %v5752, 7
      %v5755 = vrot.slane %v5754, 4
      %v5757 = vshrl.u32 %v5621, 16
      %v5759 = vrot.slane %v5757, 7
      %v5760 = vshll.u32 %v5621, 16
      %v5762 = vor.u32 %v5759, %v5760
      %v5763 = vsel %vm762, %v5755, %v5762
      %v5765 = vshrl.u32 %v5622, 16
      %v5767 = vrot.slane %v5765, 7
      %v5768 = vrot.slane %v5767, 4
      %v5770 = vshrl.u32 %v5623, 16
      %v5772 = vrot.slane %v5770, 7
      %v5773 = vshll.u32 %v5623, 16
      %v5775 = vor.u32 %v5772, %v5773
      %v5776 = vsel %vm762, %v5768, %v5775
      %v5778 = vshrl.u32 %v5624, 16
      %v5780 = vrot.slane %v5778, 7
      %v5781 = vrot.slane %v5780, 4
      %v5783 = vshrl.u32 %v5625, 16
      %v5785 = vrot.slane %v5783, 7
      %v5786 = vshll.u32 %v5625, 16
      %v5788 = vor.u32 %v5785, %v5786
      %v5789 = vsel %vm762, %v5781, %v5788
      %v5791 = vshrl.u32 %v5626, 16
      %v5793 = vrot.slane %v5791, 7
      %v5794 = vrot.slane %v5793, 4
      %v5796 = vshrl.u32 %v5627, 16
      %v5798 = vrot.slane %v5796, 7
      %v5799 = vshll.u32 %v5627, 16
      %v5801 = vor.u32 %v5798, %v5799
      %v5802 = vsel %vm762, %v5794, %v5801
      %v5804 = vshrl.u32 %v5628, 16
      %v5806 = vrot.slane %v5804, 7
      %v5807 = vrot.slane %v5806, 4
      %v5809 = vshrl.u32 %v5629, 16
      %v5811 = vrot.slane %v5809, 7
      %v5812 = vshll.u32 %v5629, 16
      %v5814 = vor.u32 %v5811, %v5812
      %v5815 = vsel %vm762, %v5807, %v5814
      %v5817 = vshrl.u32 %v5630, 16
      %v5819 = vrot.slane %v5817, 7
      %v5820 = vrot.slane %v5819, 4
      %v5822 = vshrl.u32 %v5631, 16
      %v5824 = vrot.slane %v5822, 7
      %v5825 = vshll.u32 %v5631, 16
      %v5827 = vor.u32 %v5824, %v5825
      %v5828 = vsel %vm762, %v5820, %v5827
      %v5830 = vshrl.u32 %v5632, 16
      %v5832 = vrot.slane %v5830, 7
      %v5833 = vrot.slane %v5832, 4
      %v5835 = vshrl.u32 %v5633, 16
      %v5837 = vrot.slane %v5835, 7
      %v5838 = vshll.u32 %v5633, 16
      %v5840 = vor.u32 %v5837, %v5838
      %v5841 = vsel %vm762, %v5833, %v5840
      %5858 = vst.msk [vmem:[#allocation6 + $0xc] sm:$0xf] %vm987, %v5646
      %5859 = vst.msk [vmem:[#allocation6 + $0x20] sm:$0xf] %vm987, %v5659
      %5860 = vst.msk [vmem:[#allocation6 + $0x34] sm:$0xf] %vm987, %v5672
      %5861 = vst.msk [vmem:[#allocation6 + $0x48] sm:$0xf] %vm987, %v5685
      %5862 = vst.msk [vmem:[#allocation6 + $0x5c] sm:$0xf] %vm987, %v5698
      %5863 = vst.msk [vmem:[#allocation6 + $0x70] sm:$0xf] %vm987, %v5711
      %5864 = vst.msk [vmem:[#allocation6 + $0x84] sm:$0xf] %vm987, %v5724
      %5865 = vst.msk [vmem:[#allocation6 + $0x98] sm:$0xf] %vm987, %v5737
      %5866 = vst.msk [vmem:[#allocation6 + $0xac] sm:$0xf] %vm987, %v5750
      %5867 = vst.msk [vmem:[#allocation6 + $0xc0] sm:$0xf] %vm987, %v5763
      %5868 = vst.msk [vmem:[#allocation6 + $0xd4] sm:$0xf] %vm987, %v5776
      %5869 = vst.msk [vmem:[#allocation6 + $0xe8] sm:$0xf] %vm987, %v5789
      %5870 = vst.msk [vmem:[#allocation6 + $0xfc] sm:$0xf] %vm987, %v5802
      %5871 = vst.msk [vmem:[#allocation6 + $0x110] sm:$0xf] %vm987, %v5815
      %5872 = vst.msk [vmem:[#allocation6 + $0x124] sm:$0xf] %vm987, %v5828
      %5873 = vst.msk [vmem:[#allocation6 + $0x138] sm:$0xf] %vm987, %v5841
      %v5874 = vld [vmem:[%s5601 + $0x8] sm:$0xf]
      %v5875 = vld [vmem:[%s5601 + $0x18] sm:$0xf]
      %v5876 = vld [vmem:[%s5601 + $0x28] sm:$0xf]
      %v5877 = vld [vmem:[%s5601 + $0x38] sm:$0xf]
      %v5878 = vld [vmem:[%s5601 + $0x48] sm:$0xf]
      %v5879 = vld [vmem:[%s5601 + $0x58] sm:$0xf]
      %v5880 = vld [vmem:[%s5601 + $0x68] sm:$0xf]
      %v5881 = vld [vmem:[%s5601 + $0x78] sm:$0xf]
      %v5882 = vld [vmem:[%s5601 + $0xa8] sm:$0xf]
      %v5883 = vld [vmem:[%s5601 + $0xb8] sm:$0xf]
      %v5884 = vld [vmem:[%s5601 + $0xc8] sm:$0xf]
      %v5885 = vld [vmem:[%s5601 + $0xd8] sm:$0xf]
      %v5886 = vld [vmem:[%s5601 + $0xe8] sm:$0xf]
      %v5887 = vld [vmem:[%s5601 + $0xf8] sm:$0xf]
      %v5888 = vld [vmem:[%s5601 + $0x108] sm:$0xf]
      %v5889 = vld [vmem:[%s5601 + $0x118] sm:$0xf]
      %5906 = vrot.lane.b32.xlu0 %v5874, 64
      %v5907 = vpop.permute.xlu0 %5906
      %5908 = vrot.lane.b32.xlu0 %v5875, 64
      %v5909 = vpop.permute.xlu0 %5908
      %5910 = vrot.lane.b32.xlu0 %v5876, 64
      %v5911 = vpop.permute.xlu0 %5910
      %5912 = vrot.lane.b32.xlu0 %v5877, 64
      %v5913 = vpop.permute.xlu0 %5912
      %5914 = vrot.lane.b32.xlu0 %v5878, 64
      %v5915 = vpop.permute.xlu0 %5914
      %5916 = vrot.lane.b32.xlu0 %v5879, 64
      %v5917 = vpop.permute.xlu0 %5916
      %5918 = vrot.lane.b32.xlu0 %v5880, 64
      %v5919 = vpop.permute.xlu0 %5918
      %5920 = vrot.lane.b32.xlu0 %v5881, 64
      %v5921 = vpop.permute.xlu0 %5920
      %5922 = vrot.lane.b32.xlu0 %v5882, 64
      %v5923 = vpop.permute.xlu0 %5922
      %5924 = vrot.lane.b32.xlu0 %v5883, 64
      %v5925 = vpop.permute.xlu0 %5924
      %5926 = vrot.lane.b32.xlu0 %v5884, 64
      %v5927 = vpop.permute.xlu0 %5926
      %5928 = vrot.lane.b32.xlu0 %v5885, 64
      %v5929 = vpop.permute.xlu0 %5928
      %5930 = vrot.lane.b32.xlu0 %v5886, 64
      %v5931 = vpop.permute.xlu0 %5930
      %5932 = vrot.lane.b32.xlu0 %v5887, 64
      %v5933 = vpop.permute.xlu0 %5932
      %5934 = vrot.lane.b32.xlu0 %v5888, 64
      %v5935 = vpop.permute.xlu0 %5934
      %5936 = vrot.lane.b32.xlu0 %v5889, 64
      %v5937 = vpop.permute.xlu0 %5936
      %5954 = vst.msk [vmem:[#allocation6 + $0xc] sm:$0xf] %vm1084, %v5907
      %5955 = vst.msk [vmem:[#allocation6 + $0x20] sm:$0xf] %vm1084, %v5909
      %5956 = vst.msk [vmem:[#allocation6 + $0x34] sm:$0xf] %vm1084, %v5911
      %5957 = vst.msk [vmem:[#allocation6 + $0x48] sm:$0xf] %vm1084, %v5913
      %5958 = vst.msk [vmem:[#allocation6 + $0x5c] sm:$0xf] %vm1084, %v5915
      %5959 = vst.msk [vmem:[#allocation6 + $0x70] sm:$0xf] %vm1084, %v5917
      %5960 = vst.msk [vmem:[#allocation6 + $0x84] sm:$0xf] %vm1084, %v5919
      %5961 = vst.msk [vmem:[#allocation6 + $0x98] sm:$0xf] %vm1084, %v5921
      %5962 = vst.msk [vmem:[#allocation6 + $0xac] sm:$0xf] %vm1084, %v5923
      %5963 = vst.msk [vmem:[#allocation6 + $0xc0] sm:$0xf] %vm1084, %v5925
      %5964 = vst.msk [vmem:[#allocation6 + $0xd4] sm:$0xf] %vm1084, %v5927
      %5965 = vst.msk [vmem:[#allocation6 + $0xe8] sm:$0xf] %vm1084, %v5929
      %5966 = vst.msk [vmem:[#allocation6 + $0xfc] sm:$0xf] %vm1084, %v5931
      %5967 = vst.msk [vmem:[#allocation6 + $0x110] sm:$0xf] %vm1084, %v5933
      %5968 = vst.msk [vmem:[#allocation6 + $0x124] sm:$0xf] %vm1084, %v5935
      %5969 = vst.msk [vmem:[#allocation6 + $0x138] sm:$0xf] %vm1084, %v5937
      %v5970 = vld [vmem:[%s5601 + $0x8] sm:$0xf]
      %v5971 = vld [vmem:[%s5601 + $0xc] sm:$0x1]
      %v5972 = vld [vmem:[%s5601 + $0x18] sm:$0xf]
      %v5973 = vld [vmem:[%s5601 + $0x1c] sm:$0x1]
      %v5974 = vld [vmem:[%s5601 + $0x28] sm:$0xf]
      %v5975 = vld [vmem:[%s5601 + $0x2c] sm:$0x1]
      %v5976 = vld [vmem:[%s5601 + $0x38] sm:$0xf]
      %v5977 = vld [vmem:[%s5601 + $0x3c] sm:$0x1]
      %v5978 = vld [vmem:[%s5601 + $0x48] sm:$0xf]
      %v5979 = vld [vmem:[%s5601 + $0x4c] sm:$0x1]
      %v5980 = vld [vmem:[%s5601 + $0x58] sm:$0xf]
      %v5981 = vld [vmem:[%s5601 + $0x5c] sm:$0x1]
      %v5982 = vld [vmem:[%s5601 + $0x68] sm:$0xf]
      %v5983 = vld [vmem:[%s5601 + $0x6c] sm:$0x1]
      %v5984 = vld [vmem:[%s5601 + $0x78] sm:$0xf]
      %v5985 = vld [vmem:[%s5601 + $0x7c] sm:$0x1]
      %v5986 = vld [vmem:[%s5601 + $0xa8] sm:$0xf]
      %v5987 = vld [vmem:[%s5601 + $0xac] sm:$0x1]
      %v5988 = vld [vmem:[%s5601 + $0xb8] sm:$0xf]
      %v5989 = vld [vmem:[%s5601 + $0xbc] sm:$0x1]
      %v5990 = vld [vmem:[%s5601 + $0xc8] sm:$0xf]
      %v5991 = vld [vmem:[%s5601 + $0xcc] sm:$0x1]
      %v5992 = vld [vmem:[%s5601 + $0xd8] sm:$0xf]
      %v5993 = vld [vmem:[%s5601 + $0xdc] sm:$0x1]
      %v5994 = vld [vmem:[%s5601 + $0xe8] sm:$0xf]
      %v5995 = vld [vmem:[%s5601 + $0xec] sm:$0x1]
      %v5996 = vld [vmem:[%s5601 + $0xf8] sm:$0xf]
      %v5997 = vld [vmem:[%s5601 + $0xfc] sm:$0x1]
      %v5998 = vld [vmem:[%s5601 + $0x108] sm:$0xf]
      %v5999 = vld [vmem:[%s5601 + $0x10c] sm:$0x1]
      %v6000 = vld [vmem:[%s5601 + $0x118] sm:$0xf]
      %v6001 = vld [vmem:[%s5601 + $0x11c] sm:$0x1]
      %v6003 = vshrl.u32 %v5970, 16
      %v6005 = vrot.slane %v6003, 4
      %v6006 = vshll.u32 %v5970, 16
      %v6008 = vrot.slane %v6006, 5
      %v6009 = vor.u32 %v6005, %v6008
      %v6010 = vrot.slane %v6009, 4
      %v6012 = vshll.u32 %v5971, 16
      %v6014 = vrot.slane %v6012, 5
      %v6015 = vsel %vm1135, %v6010, %v6014
      %v6017 = vshrl.u32 %v5972, 16
      %v6019 = vrot.slane %v6017, 4
      %v6020 = vshll.u32 %v5972, 16
      %v6022 = vrot.slane %v6020, 5
      %v6023 = vor.u32 %v6019, %v6022
      %v6024 = vrot.slane %v6023, 4
      %v6026 = vshll.u32 %v5973, 16
      %v6028 = vrot.slane %v6026, 5
      %v6029 = vsel %vm1135, %v6024, %v6028
      %v6031 = vshrl.u32 %v5974, 16
      %v6033 = vrot.slane %v6031, 4
      %v6034 = vshll.u32 %v5974, 16
      %v6036 = vrot.slane %v6034, 5
      %v6037 = vor.u32 %v6033, %v6036
      %v6038 = vrot.slane %v6037, 4
      %v6040 = vshll.u32 %v5975, 16
      %v6042 = vrot.slane %v6040, 5
      %v6043 = vsel %vm1135, %v6038, %v6042
      %v6045 = vshrl.u32 %v5976, 16
      %v6047 = vrot.slane %v6045, 4
      %v6048 = vshll.u32 %v5976, 16
      %v6050 = vrot.slane %v6048, 5
      %v6051 = vor.u32 %v6047, %v6050
      %v6052 = vrot.slane %v6051, 4
      %v6054 = vshll.u32 %v5977, 16
      %v6056 = vrot.slane %v6054, 5
      %v6057 = vsel %vm1135, %v6052, %v6056
      %v6059 = vshrl.u32 %v5978, 16
      %v6061 = vrot.slane %v6059, 4
      %v6062 = vshll.u32 %v5978, 16
      %v6064 = vrot.slane %v6062, 5
      %v6065 = vor.u32 %v6061, %v6064
      %v6066 = vrot.slane %v6065, 4
      %v6068 = vshll.u32 %v5979, 16
      %v6070 = vrot.slane %v6068, 5
      %v6071 = vsel %vm1135, %v6066, %v6070
      %v6073 = vshrl.u32 %v5980, 16
      %v6075 = vrot.slane %v6073, 4
      %v6076 = vshll.u32 %v5980, 16
      %v6078 = vrot.slane %v6076, 5
      %v6079 = vor.u32 %v6075, %v6078
      %v6080 = vrot.slane %v6079, 4
      %v6082 = vshll.u32 %v5981, 16
      %v6084 = vrot.slane %v6082, 5
      %v6085 = vsel %vm1135, %v6080, %v6084
      %v6087 = vshrl.u32 %v5982, 16
      %v6089 = vrot.slane %v6087, 4
      %v6090 = vshll.u32 %v5982, 16
      %v6092 = vrot.slane %v6090, 5
      %v6093 = vor.u32 %v6089, %v6092
      %v6094 = vrot.slane %v6093, 4
      %v6096 = vshll.u32 %v5983, 16
      %v6098 = vrot.slane %v6096, 5
      %v6099 = vsel %vm1135, %v6094, %v6098
      %v6101 = vshrl.u32 %v5984, 16
      %v6103 = vrot.slane %v6101, 4
      %v6104 = vshll.u32 %v5984, 16
      %v6106 = vrot.slane %v6104, 5
      %v6107 = vor.u32 %v6103, %v6106
      %v6108 = vrot.slane %v6107, 4
      %v6110 = vshll.u32 %v5985, 16
      %v6112 = vrot.slane %v6110, 5
      %v6113 = vsel %vm1135, %v6108, %v6112
      %v6115 = vshrl.u32 %v5986, 16
      %v6117 = vrot.slane %v6115, 4
      %v6118 = vshll.u32 %v5986, 16
      %v6120 = vrot.slane %v6118, 5
      %v6121 = vor.u32 %v6117, %v6120
      %v6122 = vrot.slane %v6121, 4
      %v6124 = vshll.u32 %v5987, 16
      %v6126 = vrot.slane %v6124, 5
      %v6127 = vsel %vm1135, %v6122, %v6126
      %v6129 = vshrl.u32 %v5988, 16
      %v6131 = vrot.slane %v6129, 4
      %v6132 = vshll.u32 %v5988, 16
      %v6134 = vrot.slane %v6132, 5
      %v6135 = vor.u32 %v6131, %v6134
      %v6136 = vrot.slane %v6135, 4
      %v6138 = vshll.u32 %v5989, 16
      %v6140 = vrot.slane %v6138, 5
      %v6141 = vsel %vm1135, %v6136, %v6140
      %v6143 = vshrl.u32 %v5990, 16
      %v6145 = vrot.slane %v6143, 4
      %v6146 = vshll.u32 %v5990, 16
      %v6148 = vrot.slane %v6146, 5
      %v6149 = vor.u32 %v6145, %v6148
      %v6150 = vrot.slane %v6149, 4
      %v6152 = vshll.u32 %v5991, 16
      %v6154 = vrot.slane %v6152, 5
      %v6155 = vsel %vm1135, %v6150, %v6154
      %v6157 = vshrl.u32 %v5992, 16
      %v6159 = vrot.slane %v6157, 4
      %v6160 = vshll.u32 %v5992, 16
      %v6162 = vrot.slane %v6160, 5
      %v6163 = vor.u32 %v6159, %v6162
      %v6164 = vrot.slane %v6163, 4
      %v6166 = vshll.u32 %v5993, 16
      %v6168 = vrot.slane %v6166, 5
      %v6169 = vsel %vm1135, %v6164, %v6168
      %v6171 = vshrl.u32 %v5994, 16
      %v6173 = vrot.slane %v6171, 4
      %v6174 = vshll.u32 %v5994, 16
      %v6176 = vrot.slane %v6174, 5
      %v6177 = vor.u32 %v6173, %v6176
      %v6178 = vrot.slane %v6177, 4
      %v6180 = vshll.u32 %v5995, 16
      %v6182 = vrot.slane %v6180, 5
      %v6183 = vsel %vm1135, %v6178, %v6182
      %v6185 = vshrl.u32 %v5996, 16
      %v6187 = vrot.slane %v6185, 4
      %v6188 = vshll.u32 %v5996, 16
      %v6190 = vrot.slane %v6188, 5
      %v6191 = vor.u32 %v6187, %v6190
      %v6192 = vrot.slane %v6191, 4
      %v6194 = vshll.u32 %v5997, 16
      %v6196 = vrot.slane %v6194, 5
      %v6197 = vsel %vm1135, %v6192, %v6196
      %v6199 = vshrl.u32 %v5998, 16
      %v6201 = vrot.slane %v6199, 4
      %v6202 = vshll.u32 %v5998, 16
      %v6204 = vrot.slane %v6202, 5
      %v6205 = vor.u32 %v6201, %v6204
      %v6206 = vrot.slane %v6205, 4
      %v6208 = vshll.u32 %v5999, 16
      %v6210 = vrot.slane %v6208, 5
      %v6211 = vsel %vm1135, %v6206, %v6210
      %v6213 = vshrl.u32 %v6000, 16
      %v6215 = vrot.slane %v6213, 4
      %v6216 = vshll.u32 %v6000, 16
      %v6218 = vrot.slane %v6216, 5
      %v6219 = vor.u32 %v6215, %v6218
      %v6220 = vrot.slane %v6219, 4
      %v6222 = vshll.u32 %v6001, 16
      %v6224 = vrot.slane %v6222, 5
      %v6225 = vsel %vm1135, %v6220, %v6224
      %6242 = vst.msk [vmem:[#allocation6 + $0x10] sm:$0xf] %vm987, %v6015
      %6243 = vst.msk [vmem:[#allocation6 + $0x24] sm:$0xf] %vm987, %v6029
      %6244 = vst.msk [vmem:[#allocation6 + $0x38] sm:$0xf] %vm987, %v6043
      %6245 = vst.msk [vmem:[#allocation6 + $0x4c] sm:$0xf] %vm987, %v6057
      %6246 = vst.msk [vmem:[#allocation6 + $0x60] sm:$0xf] %vm987, %v6071
      %6247 = vst.msk [vmem:[#allocation6 + $0x74] sm:$0xf] %vm987, %v6085
      %6248 = vst.msk [vmem:[#allocation6 + $0x88] sm:$0xf] %vm987, %v6099
      %6249 = vst.msk [vmem:[#allocation6 + $0x9c] sm:$0xf] %vm987, %v6113
      %6250 = vst.msk [vmem:[#allocation6 + $0xb0] sm:$0xf] %vm987, %v6127
      %6251 = vst.msk [vmem:[#allocation6 + $0xc4] sm:$0xf] %vm987, %v6141
      %6252 = vst.msk [vmem:[#allocation6 + $0xd8] sm:$0xf] %vm987, %v6155
      %6253 = vst.msk [vmem:[#allocation6 + $0xec] sm:$0xf] %vm987, %v6169
      %6254 = vst.msk [vmem:[#allocation6 + $0x100] sm:$0xf] %vm987, %v6183
      %6255 = vst.msk [vmem:[#allocation6 + $0x114] sm:$0xf] %vm987, %v6197
      %6256 = vst.msk [vmem:[#allocation6 + $0x128] sm:$0xf] %vm987, %v6211
      %6257 = vst.msk [vmem:[#allocation6 + $0x13c] sm:$0xf] %vm987, %v6225
      %v6258 = vld [vmem:[#allocation6] sm:$0xff]
      %v6259 = vld [vmem:[#allocation6 + $0x8] sm:$0xff]
      %v6260 = vld [vmem:[#allocation6 + $0x10] sm:$0xf]
      %v6261 = vld [vmem:[#allocation6 + $0x14] sm:$0xff]
      %v6262 = vld [vmem:[#allocation6 + $0x1c] sm:$0xff]
      %v6263 = vld [vmem:[#allocation6 + $0x24] sm:$0xf]
      %v6264 = vld [vmem:[#allocation6 + $0x28] sm:$0xff]
      %v6265 = vld [vmem:[#allocation6 + $0x30] sm:$0xff]
      %v6266 = vld [vmem:[#allocation6 + $0x38] sm:$0xf]
      %v6267 = vld [vmem:[#allocation6 + $0x3c] sm:$0xff]
      %v6268 = vld [vmem:[#allocation6 + $0x44] sm:$0xff]
      %v6269 = vld [vmem:[#allocation6 + $0x4c] sm:$0xf]
      %v6270 = vld [vmem:[#allocation6 + $0x50] sm:$0xff]
      %v6271 = vld [vmem:[#allocation6 + $0x58] sm:$0xff]
      %v6272 = vld [vmem:[#allocation6 + $0x60] sm:$0xf]
      %v6273 = vld [vmem:[#allocation6 + $0x64] sm:$0xff]
      %v6274 = vld [vmem:[#allocation6 + $0x6c] sm:$0xff]
      %v6275 = vld [vmem:[#allocation6 + $0x74] sm:$0xf]
      %v6276 = vld [vmem:[#allocation6 + $0x78] sm:$0xff]
      %v6277 = vld [vmem:[#allocation6 + $0x80] sm:$0xff]
      %v6278 = vld [vmem:[#allocation6 + $0x88] sm:$0xf]
      %v6279 = vld [vmem:[#allocation6 + $0x8c] sm:$0xff]
      %v6280 = vld [vmem:[#allocation6 + $0x94] sm:$0xff]
      %v6281 = vld [vmem:[#allocation6 + $0x9c] sm:$0xf]
      %v6282 = vld [vmem:[#allocation6 + $0xa0] sm:$0xff]
      %v6283 = vld [vmem:[#allocation6 + $0xa8] sm:$0xff]
      %v6284 = vld [vmem:[#allocation6 + $0xb0] sm:$0xf]
      %v6285 = vld [vmem:[#allocation6 + $0xb4] sm:$0xff]
      %v6286 = vld [vmem:[#allocation6 + $0xbc] sm:$0xff]
      %v6287 = vld [vmem:[#allocation6 + $0xc4] sm:$0xf]
      %v6288 = vld [vmem:[#allocation6 + $0xc8] sm:$0xff]
      %v6289 = vld [vmem:[#allocation6 + $0xd0] sm:$0xff]
      %v6290 = vld [vmem:[#allocation6 + $0xd8] sm:$0xf]
      %v6291 = vld [vmem:[#allocation6 + $0xdc] sm:$0xff]
      %v6292 = vld [vmem:[#allocation6 + $0xe4] sm:$0xff]
      %v6293 = vld [vmem:[#allocation6 + $0xec] sm:$0xf]
      %v6294 = vld [vmem:[#allocation6 + $0xf0] sm:$0xff]
      %v6295 = vld [vmem:[#allocation6 + $0xf8] sm:$0xff]
      %v6296 = vld [vmem:[#allocation6 + $0x100] sm:$0xf]
      %v6297 = vld [vmem:[#allocation6 + $0x104] sm:$0xff]
      %v6298 = vld [vmem:[#allocation6 + $0x10c] sm:$0xff]
      %v6299 = vld [vmem:[#allocation6 + $0x114] sm:$0xf]
      %v6300 = vld [vmem:[#allocation6 + $0x118] sm:$0xff]
      %v6301 = vld [vmem:[#allocation6 + $0x120] sm:$0xff]
      %v6302 = vld [vmem:[#allocation6 + $0x128] sm:$0xf]
      %v6303 = vld [vmem:[#allocation6 + $0x12c] sm:$0xff]
      %v6304 = vld [vmem:[#allocation6 + $0x134] sm:$0xff]
      %v6305 = vld [vmem:[#allocation6 + $0x13c] sm:$0xf]
      %v6306 = vld [vmem:[%s3] sm:$0xf]
      %v6307 = vld [vmem:[%s3 + $0x4] sm:$0xf]
      %v6308 = vld [vmem:[%s3 + $0x8] sm:$0xf]
      %v6309 = vld [vmem:[%s3 + $0xc] sm:$0xf]
      %v6310 = vld [vmem:[%s3 + $0x10] sm:$0xf]
      %v6311 = vld [vmem:[%s3 + $0x14] sm:$0xf]
      %v6312 = vld [vmem:[%s3 + $0x18] sm:$0xf]
      %v6313 = vld [vmem:[%s3 + $0x1c] sm:$0xf]
      %v6314 = vld [vmem:[%s3 + $0x20] sm:$0xf]
      %v6315 = vld [vmem:[%s3 + $0x24] sm:$0xf]
      %v6316 = vld [vmem:[%s3 + $0x28] sm:$0xf]
      %v6317 = vld [vmem:[%s3 + $0x2c] sm:$0xf]
      %v6318 = vld [vmem:[%s3 + $0x30] sm:$0xf]
      %v6319 = vld [vmem:[%s3 + $0x34] sm:$0xf]
      %v6320 = vld [vmem:[%s3 + $0x38] sm:$0xf]
      %v6321 = vld [vmem:[%s3 + $0x3c] sm:$0xf]
      %v6322 = vld [vmem:[%s3 + $0x40] sm:$0xf]
      %v6323 = vld [vmem:[%s3 + $0x44] sm:$0xf]
      %v6324 = vld [vmem:[%s3 + $0x48] sm:$0xf]
      %v6325 = vld [vmem:[%s3 + $0x4c] sm:$0xf]
      %v6326 = vld [vmem:[%s3 + $0x50] sm:$0xf]
      %v6327 = vld [vmem:[%s3 + $0x54] sm:$0xf]
      %v6328 = vld [vmem:[%s3 + $0x58] sm:$0xf]
      %v6329 = vld [vmem:[%s3 + $0x5c] sm:$0xf]
      %v6330 = vld [vmem:[%s3 + $0x60] sm:$0xf]
      %v6331 = vld [vmem:[%s3 + $0x64] sm:$0xf]
      %v6332 = vld [vmem:[%s3 + $0x68] sm:$0xf]
      %v6333 = vld [vmem:[%s3 + $0x6c] sm:$0xf]
      %v6334 = vld [vmem:[%s3 + $0x70] sm:$0xf]
      %v6335 = vld [vmem:[%s3 + $0x74] sm:$0xf]
      %v6336 = vld [vmem:[%s3 + $0x78] sm:$0xf]
      %v6337 = vld [vmem:[%s3 + $0x7c] sm:$0xf]
      %v6338 = vld [vmem:[%s3 + $0x80] sm:$0xf]
      %v6339 = vld [vmem:[%s3 + $0x84] sm:$0xf]
      %v6340 = vld [vmem:[%s3 + $0x88] sm:$0xf]
      %v6341 = vld [vmem:[%s3 + $0x8c] sm:$0xf]
      %v6342 = vld [vmem:[%s3 + $0x90] sm:$0xf]
      %v6343 = vld [vmem:[%s3 + $0x94] sm:$0xf]
      %v6344 = vld [vmem:[%s3 + $0x98] sm:$0xf]
      %v6345 = vld [vmem:[%s3 + $0x9c] sm:$0xf]
      %v6346 = vld [vmem:[%s3 + $0xa0] sm:$0xf]
      %v6347 = vld [vmem:[%s3 + $0xa4] sm:$0xf]
      %v6348 = vld [vmem:[%s3 + $0xa8] sm:$0xf]
      %v6349 = vld [vmem:[%s3 + $0xac] sm:$0xf]
      %v6350 = vld [vmem:[%s3 + $0xb0] sm:$0xf]
      %v6351 = vld [vmem:[%s3 + $0xb4] sm:$0xf]
      %v6352 = vld [vmem:[%s3 + $0xb8] sm:$0xf]
      %v6353 = vld [vmem:[%s3 + $0xbc] sm:$0xf]
      %v6354 = vld [vmem:[%s3 + $0xc0] sm:$0xf]
      %v6355 = vld [vmem:[%s3 + $0xc4] sm:$0xf]
      %v6356 = vld [vmem:[%s3 + $0xc8] sm:$0xf]
      %v6357 = vld [vmem:[%s3 + $0xcc] sm:$0xf]
      %v6358 = vld [vmem:[%s3 + $0xd0] sm:$0xf]
      %v6359 = vld [vmem:[%s3 + $0xd4] sm:$0xf]
      %v6360 = vld [vmem:[%s3 + $0xd8] sm:$0xf]
      %v6361 = vld [vmem:[%s3 + $0xdc] sm:$0xf]
      %v6362 = vld [vmem:[%s3 + $0xe0] sm:$0xf]
      %v6363 = vld [vmem:[%s3 + $0xe4] sm:$0xf]
      %v6364 = vld [vmem:[%s3 + $0xe8] sm:$0xf]
      %v6365 = vld [vmem:[%s3 + $0xec] sm:$0xf]
      %v6366 = vld [vmem:[%s3 + $0xf0] sm:$0xf]
      %v6367 = vld [vmem:[%s3 + $0xf4] sm:$0xf]
      %v6368 = vld [vmem:[%s3 + $0xf8] sm:$0xf]
      %v6369 = vld [vmem:[%s3 + $0xfc] sm:$0xf]
      %v6370 = vld [vmem:[%s3 + $0x100] sm:$0xf]
      %v6371 = vld [vmem:[%s3 + $0x104] sm:$0xf]
      %v6372 = vld [vmem:[%s3 + $0x108] sm:$0xf]
      %v6373 = vld [vmem:[%s3 + $0x10c] sm:$0xf]
      %v6374 = vld [vmem:[%s3 + $0x110] sm:$0xf]
      %v6375 = vld [vmem:[%s3 + $0x114] sm:$0xf]
      %v6376 = vld [vmem:[%s3 + $0x118] sm:$0xf]
      %v6377 = vld [vmem:[%s3 + $0x11c] sm:$0xf]
      %v6378 = vld [vmem:[%s4] sm:$0x1]
      %v6380 = vlaneseq
      %v6381 = vshrl.u32 %v6380, 7
      %v6382 = vsub.s32 0, %v6381
      %v6383 = vrot.slane %v6378, %v6382
      %v6433 = vunpack.c.l.b16 %v6258
      %v6434 = vunpack.c.h.b16 %v6258
      %v6435 = vunpack.c.l.b16 %v6259
      %v6436 = vunpack.c.h.b16 %v6259
      %v6437 = vunpack.c.l.b16 %v6260
      %v6438 = vunpack.c.l.b16 %v6261
      %v6439 = vunpack.c.h.b16 %v6261
      %v6440 = vunpack.c.l.b16 %v6262
      %v6441 = vunpack.c.h.b16 %v6262
      %v6442 = vunpack.c.l.b16 %v6263
      %v6443 = vunpack.c.l.b16 %v6264
      %v6444 = vunpack.c.h.b16 %v6264
      %v6445 = vunpack.c.l.b16 %v6265
      %v6446 = vunpack.c.h.b16 %v6265
      %v6447 = vunpack.c.l.b16 %v6266
      %v6448 = vunpack.c.l.b16 %v6267
      %v6449 = vunpack.c.h.b16 %v6267
      %v6450 = vunpack.c.l.b16 %v6268
      %v6451 = vunpack.c.h.b16 %v6268
      %v6452 = vunpack.c.l.b16 %v6269
      %v6453 = vunpack.c.l.b16 %v6270
      %v6454 = vunpack.c.h.b16 %v6270
      %v6455 = vunpack.c.l.b16 %v6271
      %v6456 = vunpack.c.h.b16 %v6271
      %v6457 = vunpack.c.l.b16 %v6272
      %v6458 = vunpack.c.l.b16 %v6273
      %v6459 = vunpack.c.h.b16 %v6273
      %v6460 = vunpack.c.l.b16 %v6274
      %v6461 = vunpack.c.h.b16 %v6274
      %v6462 = vunpack.c.l.b16 %v6275
      %v6463 = vunpack.c.l.b16 %v6276
      %v6464 = vunpack.c.h.b16 %v6276
      %v6465 = vunpack.c.l.b16 %v6277
      %v6466 = vunpack.c.h.b16 %v6277
      %v6467 = vunpack.c.l.b16 %v6278
      %v6468 = vunpack.c.l.b16 %v6279
      %v6469 = vunpack.c.h.b16 %v6279
      %v6470 = vunpack.c.l.b16 %v6280
      %v6471 = vunpack.c.h.b16 %v6280
      %v6472 = vunpack.c.l.b16 %v6281
      %v6473 = vunpack.c.l.b16 %v6282
      %v6474 = vunpack.c.h.b16 %v6282
      %v6475 = vunpack.c.l.b16 %v6283
      %v6476 = vunpack.c.h.b16 %v6283
      %v6477 = vunpack.c.l.b16 %v6284
      %v6478 = vunpack.c.l.b16 %v6285
      %v6479 = vunpack.c.h.b16 %v6285
      %v6480 = vunpack.c.l.b16 %v6286
      %v6481 = vunpack.c.h.b16 %v6286
      %v6482 = vunpack.c.l.b16 %v6287
      %v6483 = vunpack.c.l.b16 %v6288
      %v6484 = vunpack.c.h.b16 %v6288
      %v6485 = vunpack.c.l.b16 %v6289
      %v6486 = vunpack.c.h.b16 %v6289
      %v6487 = vunpack.c.l.b16 %v6290
      %v6488 = vunpack.c.l.b16 %v6291
      %v6489 = vunpack.c.h.b16 %v6291
      %v6490 = vunpack.c.l.b16 %v6292
      %v6491 = vunpack.c.h.b16 %v6292
      %v6492 = vunpack.c.l.b16 %v6293
      %v6493 = vunpack.c.l.b16 %v6294
      %v6494 = vunpack.c.h.b16 %v6294
      %v6495 = vunpack.c.l.b16 %v6295
      %v6496 = vunpack.c.h.b16 %v6295
      %v6497 = vunpack.c.l.b16 %v6296
      %v6498 = vunpack.c.l.b16 %v6297
      %v6499 = vunpack.c.h.b16 %v6297
      %v6500 = vunpack.c.l.b16 %v6298
      %v6501 = vunpack.c.h.b16 %v6298
      %v6502 = vunpack.c.l.b16 %v6299
      %v6503 = vunpack.c.l.b16 %v6300
      %v6504 = vunpack.c.h.b16 %v6300
      %v6505 = vunpack.c.l.b16 %v6301
      %v6506 = vunpack.c.h.b16 %v6301
      %v6507 = vunpack.c.l.b16 %v6302
      %v6508 = vunpack.c.l.b16 %v6303
      %v6509 = vunpack.c.h.b16 %v6303
      %v6510 = vunpack.c.l.b16 %v6304
      %v6511 = vunpack.c.h.b16 %v6304
      %v6512 = vunpack.c.l.b16 %v6305
      %v6513 = vpack.c.b16 %v6438, %v6433
      %v6514 = vpack.c.b16 %v6439, %v6434
      %v6515 = vpack.c.b16 %v6440, %v6435
      %v6516 = vpack.c.b16 %v6441, %v6436
      %v6517 = vpack.c.b16 %v6442, %v6437
      %v6518 = vpack.c.b16 %v6448, %v6443
      %v6519 = vpack.c.b16 %v6449, %v6444
      %v6520 = vpack.c.b16 %v6450, %v6445
      %v6521 = vpack.c.b16 %v6451, %v6446
      %v6522 = vpack.c.b16 %v6452, %v6447
      %v6523 = vpack.c.b16 %v6458, %v6453
      %v6524 = vpack.c.b16 %v6459, %v6454
      %v6525 = vpack.c.b16 %v6460, %v6455
      %v6526 = vpack.c.b16 %v6461, %v6456
      %v6527 = vpack.c.b16 %v6462, %v6457
      %v6528 = vpack.c.b16 %v6468, %v6463
      %v6529 = vpack.c.b16 %v6469, %v6464
      %v6530 = vpack.c.b16 %v6470, %v6465
      %v6531 = vpack.c.b16 %v6471, %v6466
      %v6532 = vpack.c.b16 %v6472, %v6467
      %v6533 = vpack.c.b16 %v6478, %v6473
      %v6534 = vpack.c.b16 %v6479, %v6474
      %v6535 = vpack.c.b16 %v6480, %v6475
      %v6536 = vpack.c.b16 %v6481, %v6476
      %v6537 = vpack.c.b16 %v6482, %v6477
      %v6538 = vpack.c.b16 %v6488, %v6483
      %v6539 = vpack.c.b16 %v6489, %v6484
      %v6540 = vpack.c.b16 %v6490, %v6485
      %v6541 = vpack.c.b16 %v6491, %v6486
      %v6542 = vpack.c.b16 %v6492, %v6487
      %v6543 = vpack.c.b16 %v6498, %v6493
      %v6544 = vpack.c.b16 %v6499, %v6494
      %v6545 = vpack.c.b16 %v6500, %v6495
      %v6546 = vpack.c.b16 %v6501, %v6496
      %v6547 = vpack.c.b16 %v6502, %v6497
      %v6548 = vpack.c.b16 %v6508, %v6503
      %v6549 = vpack.c.b16 %v6509, %v6504
      %v6550 = vpack.c.b16 %v6510, %v6505
      %v6551 = vpack.c.b16 %v6511, %v6506
      %v6552 = vpack.c.b16 %v6512, %v6507
      %v6657 = vunpack.c.l.b16 %v6306
      %v6658 = vunpack.c.l.b16 %v6307
      %v6659 = vunpack.c.l.b16 %v6308
      %v6660 = vunpack.c.l.b16 %v6309
      %v6661 = vunpack.c.l.b16 %v6310
      %v6662 = vunpack.c.l.b16 %v6311
      %v6663 = vunpack.c.l.b16 %v6312
      %v6664 = vunpack.c.l.b16 %v6313
      %v6665 = vunpack.c.l.b16 %v6314
      %v6666 = vunpack.c.l.b16 %v6315
      %v6667 = vunpack.c.l.b16 %v6316
      %v6668 = vunpack.c.l.b16 %v6317
      %v6669 = vunpack.c.l.b16 %v6318
      %v6670 = vunpack.c.l.b16 %v6319
      %v6671 = vunpack.c.l.b16 %v6320
      %v6672 = vunpack.c.l.b16 %v6321
      %v6673 = vunpack.c.l.b16 %v6322
      %v6674 = vunpack.c.l.b16 %v6323
      %v6675 = vunpack.c.l.b16 %v6324
      %v6676 = vunpack.c.l.b16 %v6325
      %v6677 = vunpack.c.l.b16 %v6326
      %v6678 = vunpack.c.l.b16 %v6327
      %v6679 = vunpack.c.l.b16 %v6328
      %v6680 = vunpack.c.l.b16 %v6329
      %v6681 = vunpack.c.l.b16 %v6330
      %v6682 = vunpack.c.l.b16 %v6331
      %v6683 = vunpack.c.l.b16 %v6332
      %v6684 = vunpack.c.l.b16 %v6333
      %v6685 = vunpack.c.l.b16 %v6334
      %v6686 = vunpack.c.l.b16 %v6335
      %v6687 = vunpack.c.l.b16 %v6336
      %v6688 = vunpack.c.l.b16 %v6337
      %v6689 = vunpack.c.l.b16 %v6338
      %v6690 = vunpack.c.l.b16 %v6339
      %v6691 = vunpack.c.l.b16 %v6340
      %v6692 = vunpack.c.l.b16 %v6341
      %v6693 = vunpack.c.l.b16 %v6342
      %v6694 = vunpack.c.l.b16 %v6343
      %v6695 = vunpack.c.l.b16 %v6344
      %v6696 = vunpack.c.l.b16 %v6345
      %v6697 = vunpack.c.l.b16 %v6346
      %v6698 = vunpack.c.l.b16 %v6347
      %v6699 = vunpack.c.l.b16 %v6348
      %v6700 = vunpack.c.l.b16 %v6349
      %v6701 = vunpack.c.l.b16 %v6350
      %v6702 = vunpack.c.l.b16 %v6351
      %v6703 = vunpack.c.l.b16 %v6352
      %v6704 = vunpack.c.l.b16 %v6353
      %v6705 = vunpack.c.l.b16 %v6354
      %v6706 = vunpack.c.l.b16 %v6355
      %v6707 = vunpack.c.l.b16 %v6356
      %v6708 = vunpack.c.l.b16 %v6357
      %v6709 = vunpack.c.l.b16 %v6358
      %v6710 = vunpack.c.l.b16 %v6359
      %v6711 = vunpack.c.l.b16 %v6360
      %v6712 = vunpack.c.l.b16 %v6361
      %v6713 = vunpack.c.l.b16 %v6362
      %v6714 = vunpack.c.l.b16 %v6363
      %v6715 = vunpack.c.l.b16 %v6364
      %v6716 = vunpack.c.l.b16 %v6365
      %v6717 = vunpack.c.l.b16 %v6366
      %v6718 = vunpack.c.l.b16 %v6367
      %v6719 = vunpack.c.l.b16 %v6368
      %v6720 = vunpack.c.l.b16 %v6369
      %v6721 = vunpack.c.l.b16 %v6370
      %v6722 = vunpack.c.l.b16 %v6371
      %v6723 = vunpack.c.l.b16 %v6372
      %v6724 = vunpack.c.l.b16 %v6373
      %v6725 = vunpack.c.l.b16 %v6374
      %v6726 = vunpack.c.l.b16 %v6375
      %v6727 = vunpack.c.l.b16 %v6376
      %v6728 = vunpack.c.l.b16 %v6377
      %v6729 = vpack.c.b16 %v6658, %v6657
      %v6730 = vpack.c.b16 %v6660, %v6659
      %v6731 = vpack.c.b16 %v6662, %v6661
      %v6732 = vpack.c.b16 %v6664, %v6663
      %v6733 = vpack.c.b16 %v6666, %v6665
      %v6734 = vpack.c.b16 %v6668, %v6667
      %v6735 = vpack.c.b16 %v6670, %v6669
      %v6736 = vpack.c.b16 %v6672, %v6671
      %v6737 = vpack.c.b16 %v6674, %v6673
      %v6738 = vpack.c.b16 %v6676, %v6675
      %v6739 = vpack.c.b16 %v6678, %v6677
      %v6740 = vpack.c.b16 %v6680, %v6679
      %v6741 = vpack.c.b16 %v6682, %v6681
      %v6742 = vpack.c.b16 %v6684, %v6683
      %v6743 = vpack.c.b16 %v6686, %v6685
      %v6744 = vpack.c.b16 %v6688, %v6687
      %v6745 = vpack.c.b16 %v6690, %v6689
      %v6746 = vpack.c.b16 %v6692, %v6691
      %v6747 = vpack.c.b16 %v6694, %v6693
      %v6748 = vpack.c.b16 %v6696, %v6695
      %v6749 = vpack.c.b16 %v6698, %v6697
      %v6750 = vpack.c.b16 %v6700, %v6699
      %v6751 = vpack.c.b16 %v6702, %v6701
      %v6752 = vpack.c.b16 %v6704, %v6703
      %v6753 = vpack.c.b16 %v6706, %v6705
      %v6754 = vpack.c.b16 %v6708, %v6707
      %v6755 = vpack.c.b16 %v6710, %v6709
      %v6756 = vpack.c.b16 %v6712, %v6711
      %v6757 = vpack.c.b16 %v6714, %v6713
      %v6758 = vpack.c.b16 %v6716, %v6715
      %v6759 = vpack.c.b16 %v6718, %v6717
      %v6760 = vpack.c.b16 %v6720, %v6719
      %v6761 = vpack.c.b16 %v6722, %v6721
      %v6762 = vpack.c.b16 %v6724, %v6723
      %v6763 = vpack.c.b16 %v6726, %v6725
      %v6764 = vpack.c.b16 %v6728, %v6727
      %v6802 = vsel %vm3249, %v6517, 0
      %v6805 = vsel %vm3249, %v6522, 0
      %v6808 = vsel %vm3249, %v6527, 0
      %v6811 = vsel %vm3249, %v6532, 0
      %v6814 = vsel %vm3249, %v6537, 0
      %v6817 = vsel %vm3249, %v6542, 0
      %v6820 = vsel %vm3249, %v6547, 0
      %v6823 = vsel %vm3249, %v6552, 0
      %6825 = vmatprep.subr.bf16.mxu0 0
      %6826 = vmatpush1.bf16.msra.mxu0 %v6736
      %6827 = vmatprep.subr.bf16.mxu0 0
      %6828 = vmatpush1.bf16.msra.mxu0 %v6735
      %6829 = vmatprep.subr.bf16.mxu0 0
      %6830 = vmatpush1.bf16.msra.mxu0 %v6734
      %6831 = vmatprep.subr.bf16.mxu0 0
      %6832 = vmatpush1.bf16.msra.mxu0 %v6733
      %6833 = vmatprep.subr.bf16.mxu0 0
      %6834 = vmatpush1.bf16.msra.mxu0 %v6732
      %6835 = vmatprep.subr.bf16.mxu0 0
      %6836 = vmatpush1.bf16.msra.mxu0 %v6731
      %6837 = vmatprep.subr.bf16.mxu0 0
      %6838 = vmatpush1.bf16.msra.mxu0 %v6730
      %6839 = vmatprep.subr.bf16.mxu0 0
      %6840 = vmatpush1.bf16.msra.mxu0 %v6729
      %6841 = vmatprep.subr.bf16.mxu0 0
      %6842 = vmatpush2.bf16.msra.mxu0 %v6744
      %6843 = vmatprep.subr.bf16.mxu0 0
      %6844 = vmatpush2.bf16.msra.mxu0 %v6743
      %6845 = vmatprep.subr.bf16.mxu0 0
      %6846 = vmatpush2.bf16.msra.mxu0 %v6742
      %6847 = vmatprep.subr.bf16.mxu0 0
      %6848 = vmatpush2.bf16.msra.mxu0 %v6741
      %6849 = vmatprep.subr.bf16.mxu0 0
      %6850 = vmatpush2.bf16.msra.mxu0 %v6740
      %6851 = vmatprep.subr.bf16.mxu0 0
      %6852 = vmatpush2.bf16.msra.mxu0 %v6739
      %6853 = vmatprep.subr.bf16.mxu0 0
      %6854 = vmatpush2.bf16.msra.mxu0 %v6738
      %6855 = vmatprep.subr.bf16.mxu0 0
      %6856 = vmatpush2.bf16.msra.mxu0 %v6737
      %6857 = vmatprep.mubr.bf16.mxu0 %v6514
      %6858 = vmatmul.mubr.bf16.gmra.mxu0 %v6513
      %v6859 = vpop.f32.mrf.mxu0
      %v6860 = vadd.f32 %v6383, %v6859
      %v6861 = vpop.f32.mrf.mxu0
      %v6862 = vpop.f32.mrf.mxu0
      %v6863 = vadd.f32 %v6383, %v6862
      %v6864 = vpop.f32.mrf.mxu0
      %6865 = vmatprep.mubr.bf16.mxu0 %v6519
      %6866 = vmatmul.mubr.bf16.gmra.mxu0 %v6518
      %v6867 = vpop.f32.mrf.mxu0
      %v6868 = vadd.f32 %v6383, %v6867
      %v6869 = vpop.f32.mrf.mxu0
      %v6870 = vpop.f32.mrf.mxu0
      %v6871 = vadd.f32 %v6383, %v6870
      %v6872 = vpop.f32.mrf.mxu0
      %6873 = vmatprep.mubr.bf16.mxu0 %v6524
      %6874 = vmatmul.mubr.bf16.gmra.mxu0 %v6523
      %v6875 = vpop.f32.mrf.mxu0
      %v6876 = vadd.f32 %v6383, %v6875
      %v6877 = vpop.f32.mrf.mxu0
      %v6878 = vpop.f32.mrf.mxu0
      %v6879 = vadd.f32 %v6383, %v6878
      %v6880 = vpop.f32.mrf.mxu0
      %6881 = vmatprep.mubr.bf16.mxu0 %v6529
      %6882 = vmatmul.mubr.bf16.gmra.mxu0 %v6528
      %v6883 = vpop.f32.mrf.mxu0
      %v6884 = vadd.f32 %v6383, %v6883
      %v6885 = vpop.f32.mrf.mxu0
      %v6886 = vpop.f32.mrf.mxu0
      %v6887 = vadd.f32 %v6383, %v6886
      %v6888 = vpop.f32.mrf.mxu0
      %6889 = vmatprep.mubr.bf16.mxu0 %v6534
      %6890 = vmatmul.mubr.bf16.gmra.mxu0 %v6533
      %v6891 = vpop.f32.mrf.mxu0
      %v6892 = vadd.f32 %v6383, %v6891
      %v6893 = vpop.f32.mrf.mxu0
      %v6894 = vpop.f32.mrf.mxu0
      %v6895 = vadd.f32 %v6383, %v6894
      %v6896 = vpop.f32.mrf.mxu0
      %6897 = vmatprep.mubr.bf16.mxu0 %v6539
      %6898 = vmatmul.mubr.bf16.gmra.mxu0 %v6538
      %v6899 = vpop.f32.mrf.mxu0
      %v6900 = vadd.f32 %v6383, %v6899
      %v6901 = vpop.f32.mrf.mxu0
      %v6902 = vpop.f32.mrf.mxu0
      %v6903 = vadd.f32 %v6383, %v6902
      %v6904 = vpop.f32.mrf.mxu0
      %6905 = vmatprep.mubr.bf16.mxu0 %v6544
      %6906 = vmatmul.mubr.bf16.gmra.mxu0 %v6543
      %v6907 = vpop.f32.mrf.mxu0
      %v6908 = vadd.f32 %v6383, %v6907
      %v6909 = vpop.f32.mrf.mxu0
      %v6910 = vpop.f32.mrf.mxu0
      %v6911 = vadd.f32 %v6383, %v6910
      %v6912 = vpop.f32.mrf.mxu0
      %6913 = vmatprep.mubr.bf16.mxu0 %v6549
      %6914 = vmatmul.mubr.bf16.gmra.mxu0 %v6548
      %v6915 = vpop.f32.mrf.mxu0
      %v6916 = vadd.f32 %v6383, %v6915
      %v6917 = vpop.f32.mrf.mxu0
      %v6918 = vpop.f32.mrf.mxu0
      %v6919 = vadd.f32 %v6383, %v6918
      %v6920 = vpop.f32.mrf.mxu0
      %6921 = vdwg.mxu0
      %6922 = vmatprep.subr.bf16.mxu0 0
      %6923 = vmatpush1.bf16.msra.mxu0 %v6752
      %6924 = vmatprep.subr.bf16.mxu0 0
      %6925 = vmatpush1.bf16.msra.mxu0 %v6751
      %6926 = vmatprep.subr.bf16.mxu0 0
      %6927 = vmatpush1.bf16.msra.mxu0 %v6750
      %6928 = vmatprep.subr.bf16.mxu0 0
      %6929 = vmatpush1.bf16.msra.mxu0 %v6749
      %6930 = vmatprep.subr.bf16.mxu0 0
      %6931 = vmatpush1.bf16.msra.mxu0 %v6748
      %6932 = vmatprep.subr.bf16.mxu0 0
      %6933 = vmatpush1.bf16.msra.mxu0 %v6747
      %6934 = vmatprep.subr.bf16.mxu0 0
      %6935 = vmatpush1.bf16.msra.mxu0 %v6746
      %6936 = vmatprep.subr.bf16.mxu0 0
      %6937 = vmatpush1.bf16.msra.mxu0 %v6745
      %6938 = vmatprep.subr.bf16.mxu0 0
      %6939 = vmatpush2.bf16.msra.mxu0 %v6760
      %6940 = vmatprep.subr.bf16.mxu0 0
      %6941 = vmatpush2.bf16.msra.mxu0 %v6759
      %6942 = vmatprep.subr.bf16.mxu0 0
      %6943 = vmatpush2.bf16.msra.mxu0 %v6758
      %6944 = vmatprep.subr.bf16.mxu0 0
      %6945 = vmatpush2.bf16.msra.mxu0 %v6757
      %6946 = vmatprep.subr.bf16.mxu0 0
      %6947 = vmatpush2.bf16.msra.mxu0 %v6756
      %6948 = vmatprep.subr.bf16.mxu0 0
      %6949 = vmatpush2.bf16.msra.mxu0 %v6755
      %6950 = vmatprep.subr.bf16.mxu0 0
      %6951 = vmatpush2.bf16.msra.mxu0 %v6754
      %6952 = vmatprep.subr.bf16.mxu0 0
      %6953 = vmatpush2.bf16.msra.mxu0 %v6753
      %6954 = vmatprep.mubr.bf16.mxu0 %v6516
      %6955 = vmatmul.mubr.bf16.gmra.mxu0 %v6515
      %v6956 = vpop.f32.mrf.mxu0
      %v6957 = vadd.f32 %v6860, %v6956
      %v6958 = vpop.f32.mrf.mxu0
      %v6959 = vpop.f32.mrf.mxu0
      %v6960 = vadd.f32 %v6863, %v6959
      %v6961 = vpop.f32.mrf.mxu0
      %6962 = vmatprep.mubr.bf16.mxu0 %v6521
      %6963 = vmatmul.mubr.bf16.gmra.mxu0 %v6520
      %v6964 = vpop.f32.mrf.mxu0
      %v6965 = vadd.f32 %v6868, %v6964
      %v6966 = vpop.f32.mrf.mxu0
      %v6967 = vpop.f32.mrf.mxu0
      %v6968 = vadd.f32 %v6871, %v6967
      %v6969 = vpop.f32.mrf.mxu0
      %6970 = vmatprep.mubr.bf16.mxu0 %v6526
      %6971 = vmatmul.mubr.bf16.gmra.mxu0 %v6525
      %v6972 = vpop.f32.mrf.mxu0
      %v6973 = vadd.f32 %v6876, %v6972
      %v6974 = vpop.f32.mrf.mxu0
      %v6975 = vpop.f32.mrf.mxu0
      %v6976 = vadd.f32 %v6879, %v6975
      %v6977 = vpop.f32.mrf.mxu0
      %6978 = vmatprep.mubr.bf16.mxu0 %v6531
      %6979 = vmatmul.mubr.bf16.gmra.mxu0 %v6530
      %v6980 = vpop.f32.mrf.mxu0
      %v6981 = vadd.f32 %v6884, %v6980
      %v6982 = vpop.f32.mrf.mxu0
      %v6983 = vpop.f32.mrf.mxu0
      %v6984 = vadd.f32 %v6887, %v6983
      %v6985 = vpop.f32.mrf.mxu0
      %6986 = vmatprep.mubr.bf16.mxu0 %v6536
      %6987 = vmatmul.mubr.bf16.gmra.mxu0 %v6535
      %v6988 = vpop.f32.mrf.mxu0
      %v6989 = vadd.f32 %v6892, %v6988
      %v6990 = vpop.f32.mrf.mxu0
      %v6991 = vpop.f32.mrf.mxu0
      %v6992 = vadd.f32 %v6895, %v6991
      %v6993 = vpop.f32.mrf.mxu0
      %6994 = vmatprep.mubr.bf16.mxu0 %v6541
      %6995 = vmatmul.mubr.bf16.gmra.mxu0 %v6540
      %v6996 = vpop.f32.mrf.mxu0
      %v6997 = vadd.f32 %v6900, %v6996
      %v6998 = vpop.f32.mrf.mxu0
      %v6999 = vpop.f32.mrf.mxu0
      %v7000 = vadd.f32 %v6903, %v6999
      %v7001 = vpop.f32.mrf.mxu0
      %7002 = vmatprep.mubr.bf16.mxu0 %v6546
      %7003 = vmatmul.mubr.bf16.gmra.mxu0 %v6545
      %v7004 = vpop.f32.mrf.mxu0
      %v7005 = vadd.f32 %v6908, %v7004
      %v7006 = vpop.f32.mrf.mxu0
      %v7007 = vpop.f32.mrf.mxu0
      %v7008 = vadd.f32 %v6911, %v7007
      %v7009 = vpop.f32.mrf.mxu0
      %7010 = vmatprep.mubr.bf16.mxu0 %v6551
      %7011 = vmatmul.mubr.bf16.gmra.mxu0 %v6550
      %v7012 = vpop.f32.mrf.mxu0
      %v7013 = vadd.f32 %v6916, %v7012
      %v7014 = vpop.f32.mrf.mxu0
      %v7015 = vpop.f32.mrf.mxu0
      %v7016 = vadd.f32 %v6919, %v7015
      %v7017 = vpop.f32.mrf.mxu0
      %7018 = vdwg.mxu0
      %7019 = vmatprep.subr.bf16.mxu0 0
      %7020 = vmatpush1.bf16.msra.mxu0 0
      %7021 = vmatprep.subr.bf16.mxu0 0
      %7022 = vmatpush1.bf16.msra.mxu0 0
      %7023 = vmatprep.subr.bf16.mxu0 0
      %7024 = vmatpush1.bf16.msra.mxu0 0
      %7025 = vmatprep.subr.bf16.mxu0 0
      %7026 = vmatpush1.bf16.msra.mxu0 0
      %7027 = vmatprep.subr.bf16.mxu0 0
      %7028 = vmatpush1.bf16.msra.mxu0 %v6764
      %7029 = vmatprep.subr.bf16.mxu0 0
      %7030 = vmatpush1.bf16.msra.mxu0 %v6763
      %7031 = vmatprep.subr.bf16.mxu0 0
      %7032 = vmatpush1.bf16.msra.mxu0 %v6762
      %7033 = vmatprep.subr.bf16.mxu0 0
      %7034 = vmatpush1.bf16.msra.mxu0 %v6761
      %7035 = vmatprep.subr.bf16.mxu0 0
      %7036 = vmatpush2.bf16.msra.mxu0 0
      %7037 = vmatprep.subr.bf16.mxu0 0
      %7038 = vmatpush2.bf16.msra.mxu0 0
      %7039 = vmatprep.subr.bf16.mxu0 0
      %7040 = vmatpush2.bf16.msra.mxu0 0
      %7041 = vmatprep.subr.bf16.mxu0 0
      %7042 = vmatpush2.bf16.msra.mxu0 0
      %7043 = vmatprep.subr.bf16.mxu0 0
      %7044 = vmatpush2.bf16.msra.mxu0 0
      %7045 = vmatprep.subr.bf16.mxu0 0
      %7046 = vmatpush2.bf16.msra.mxu0 0
      %7047 = vmatprep.subr.bf16.mxu0 0
      %7048 = vmatpush2.bf16.msra.mxu0 0
      %7049 = vmatprep.subr.bf16.mxu0 0
      %7050 = vmatpush2.bf16.msra.mxu0 0
      %7051 = vmatprep.mubr.bf16.mxu0 0
      %7052 = vmatmul.mubr.bf16.gmra.mxu0 %v6802
      %v7053 = vpop.f32.mrf.mxu0
      %v7054 = vadd.f32 %v6957, %v7053
      %v7055 = vpop.f32.mrf.mxu0
      %v7056 = vpop.f32.mrf.mxu0
      %v7057 = vadd.f32 %v6960, %v7056
      %v7058 = vpop.f32.mrf.mxu0
      %7059 = vmatprep.mubr.bf16.mxu0 0
      %7060 = vmatmul.mubr.bf16.gmra.mxu0 %v6805
      %v7061 = vpop.f32.mrf.mxu0
      %v7062 = vadd.f32 %v6965, %v7061
      %v7063 = vpop.f32.mrf.mxu0
      %v7064 = vpop.f32.mrf.mxu0
      %v7065 = vadd.f32 %v6968, %v7064
      %v7066 = vpop.f32.mrf.mxu0
      %7067 = vmatprep.mubr.bf16.mxu0 0
      %7068 = vmatmul.mubr.bf16.gmra.mxu0 %v6808
      %v7069 = vpop.f32.mrf.mxu0
      %v7070 = vadd.f32 %v6973, %v7069
      %v7071 = vpop.f32.mrf.mxu0
      %v7072 = vpop.f32.mrf.mxu0
      %v7073 = vadd.f32 %v6976, %v7072
      %v7074 = vpop.f32.mrf.mxu0
      %7075 = vmatprep.mubr.bf16.mxu0 0
      %7076 = vmatmul.mubr.bf16.gmra.mxu0 %v6811
      %v7077 = vpop.f32.mrf.mxu0
      %v7078 = vadd.f32 %v6981, %v7077
      %v7079 = vpop.f32.mrf.mxu0
      %v7080 = vpop.f32.mrf.mxu0
      %v7081 = vadd.f32 %v6984, %v7080
      %v7082 = vpop.f32.mrf.mxu0
      %7083 = vmatprep.mubr.bf16.mxu0 0
      %7084 = vmatmul.mubr.bf16.gmra.mxu0 %v6814
      %v7085 = vpop.f32.mrf.mxu0
      %v7086 = vadd.f32 %v6989, %v7085
      %v7087 = vpop.f32.mrf.mxu0
      %v7088 = vpop.f32.mrf.mxu0
      %v7089 = vadd.f32 %v6992, %v7088
      %v7090 = vpop.f32.mrf.mxu0
      %7091 = vmatprep.mubr.bf16.mxu0 0
      %7092 = vmatmul.mubr.bf16.gmra.mxu0 %v6817
      %v7093 = vpop.f32.mrf.mxu0
      %v7094 = vadd.f32 %v6997, %v7093
      %v7095 = vpop.f32.mrf.mxu0
      %v7096 = vpop.f32.mrf.mxu0
      %v7097 = vadd.f32 %v7000, %v7096
      %v7098 = vpop.f32.mrf.mxu0
      %7099 = vmatprep.mubr.bf16.mxu0 0
      %7100 = vmatmul.mubr.bf16.gmra.mxu0 %v6820
      %v7101 = vpop.f32.mrf.mxu0
      %v7102 = vadd.f32 %v7005, %v7101
      %v7103 = vpop.f32.mrf.mxu0
      %v7104 = vpop.f32.mrf.mxu0
      %v7105 = vadd.f32 %v7008, %v7104
      %v7106 = vpop.f32.mrf.mxu0
      %7107 = vmatprep.mubr.bf16.mxu0 0
      %7108 = vmatmul.mubr.bf16.gmra.mxu0 %v6823
      %v7109 = vpop.f32.mrf.mxu0
      %v7110 = vadd.f32 %v7013, %v7109
      %v7111 = vpop.f32.mrf.mxu0
      %v7112 = vpop.f32.mrf.mxu0
      %v7113 = vadd.f32 %v7016, %v7112
      %v7114 = vpop.f32.mrf.mxu0
      %7115 = vdwg.mxu0
      %v7116 = vxor.u32 %v7054, 2147483648
      %v7117 = vxor.u32 %v7057, 2147483648
      %v7118 = vxor.u32 %v7062, 2147483648
      %v7119 = vxor.u32 %v7065, 2147483648
      %v7120 = vxor.u32 %v7070, 2147483648
      %v7121 = vxor.u32 %v7073, 2147483648
      %v7122 = vxor.u32 %v7078, 2147483648
      %v7123 = vxor.u32 %v7081, 2147483648
      %v7124 = vxor.u32 %v7086, 2147483648
      %v7125 = vxor.u32 %v7089, 2147483648
      %v7126 = vxor.u32 %v7094, 2147483648
      %v7127 = vxor.u32 %v7097, 2147483648
      %v7128 = vxor.u32 %v7102, 2147483648
      %v7129 = vxor.u32 %v7105, 2147483648
      %v7130 = vxor.u32 %v7110, 2147483648
      %v7131 = vxor.u32 %v7113, 2147483648
      %v7132 = vmul.f32 %v7116, 1.442695
      %v7133 = vpow.pop %v7132
      %v7134 = vmul.f32 %v7117, 1.442695
      %v7135 = vpow.pop %v7134
      %v7136 = vmul.f32 %v7118, 1.442695
      %v7137 = vpow.pop %v7136
      %v7138 = vmul.f32 %v7119, 1.442695
      %v7139 = vpow.pop %v7138
      %v7140 = vmul.f32 %v7120, 1.442695
      %v7141 = vpow.pop %v7140
      %v7142 = vmul.f32 %v7121, 1.442695
      %v7143 = vpow.pop %v7142
      %v7144 = vmul.f32 %v7122, 1.442695
      %v7145 = vpow.pop %v7144
      %v7146 = vmul.f32 %v7123, 1.442695
      %v7147 = vpow.pop %v7146
      %v7148 = vmul.f32 %v7124, 1.442695
      %v7149 = vpow.pop %v7148
      %v7150 = vmul.f32 %v7125, 1.442695
      %v7151 = vpow.pop %v7150
      %v7152 = vmul.f32 %v7126, 1.442695
      %v7153 = vpow.pop %v7152
      %v7154 = vmul.f32 %v7127, 1.442695
      %v7155 = vpow.pop %v7154
      %v7156 = vmul.f32 %v7128, 1.442695
      %v7157 = vpow.pop %v7156
      %v7158 = vmul.f32 %v7129, 1.442695
      %v7159 = vpow.pop %v7158
      %v7160 = vmul.f32 %v7130, 1.442695
      %v7161 = vpow.pop %v7160
      %v7162 = vmul.f32 %v7131, 1.442695
      %v7163 = vpow.pop %v7162
      %v7164 = vadd.f32 %v7133, 1.0
      %v7165 = vadd.f32 %v7135, 1.0
      %v7166 = vadd.f32 %v7137, 1.0
      %v7167 = vadd.f32 %v7139, 1.0
      %v7168 = vadd.f32 %v7141, 1.0
      %v7169 = vadd.f32 %v7143, 1.0
      %v7170 = vadd.f32 %v7145, 1.0
      %v7171 = vadd.f32 %v7147, 1.0
      %v7172 = vadd.f32 %v7149, 1.0
      %v7173 = vadd.f32 %v7151, 1.0
      %v7174 = vadd.f32 %v7153, 1.0
      %v7175 = vadd.f32 %v7155, 1.0
      %v7176 = vadd.f32 %v7157, 1.0
      %v7177 = vadd.f32 %v7159, 1.0
      %v7178 = vadd.f32 %v7161, 1.0
      %v7179 = vadd.f32 %v7163, 1.0
      %v7180 = vrcp.pop %v7164
      %v7181 = vmul.f32 1.0, %v7180
      %v7182 = vrcp.pop %v7165
      %v7183 = vmul.f32 1.0, %v7182
      %v7184 = vrcp.pop %v7166
      %v7185 = vmul.f32 1.0, %v7184
      %v7186 = vrcp.pop %v7167
      %v7187 = vmul.f32 1.0, %v7186
      %v7188 = vrcp.pop %v7168
      %v7189 = vmul.f32 1.0, %v7188
      %v7190 = vrcp.pop %v7169
      %v7191 = vmul.f32 1.0, %v7190
      %v7192 = vrcp.pop %v7170
      %v7193 = vmul.f32 1.0, %v7192
      %v7194 = vrcp.pop %v7171
      %v7195 = vmul.f32 1.0, %v7194
      %v7196 = vrcp.pop %v7172
      %v7197 = vmul.f32 1.0, %v7196
      %v7198 = vrcp.pop %v7173
      %v7199 = vmul.f32 1.0, %v7198
      %v7200 = vrcp.pop %v7174
      %v7201 = vmul.f32 1.0, %v7200
      %v7202 = vrcp.pop %v7175
      %v7203 = vmul.f32 1.0, %v7202
      %v7204 = vrcp.pop %v7176
      %v7205 = vmul.f32 1.0, %v7204
      %v7206 = vrcp.pop %v7177
      %v7207 = vmul.f32 1.0, %v7206
      %v7208 = vrcp.pop %v7178
      %v7209 = vmul.f32 1.0, %v7208
      %v7210 = vrcp.pop %v7179
      %v7211 = vmul.f32 1.0, %v7210
      %v7212 = vtanh.pop %v7054
      %v7213 = vtanh.pop %v7057
      %v7214 = vtanh.pop %v7062
      %v7215 = vtanh.pop %v7065
      %v7216 = vtanh.pop %v7070
      %v7217 = vtanh.pop %v7073
      %v7218 = vtanh.pop %v7078
      %v7219 = vtanh.pop %v7081
      %v7220 = vtanh.pop %v7086
      %v7221 = vtanh.pop %v7089
      %v7222 = vtanh.pop %v7094
      %v7223 = vtanh.pop %v7097
      %v7224 = vtanh.pop %v7102
      %v7225 = vtanh.pop %v7105
      %v7226 = vtanh.pop %v7110
      %v7227 = vtanh.pop %v7113
      %v7228 = vld [vmem:[#allocation7] sm:$0xff]
      %v7229 = vld [vmem:[#allocation7 + $0x8] sm:$0xff]
      %v7230 = vld [vmem:[#allocation7 + $0x10] sm:$0xff]
      %v7231 = vld [vmem:[#allocation7 + $0x18] sm:$0xff]
      %v7232 = vld [vmem:[#allocation7 + $0x20] sm:$0xff]
      %v7233 = vld [vmem:[#allocation7 + $0x28] sm:$0xff]
      %v7234 = vld [vmem:[#allocation7 + $0x30] sm:$0xff]
      %v7235 = vld [vmem:[#allocation7 + $0x38] sm:$0xff]
      %v7236 = vld [vmem:[#allocation7 + $0x40] sm:$0xff]
      %v7237 = vld [vmem:[#allocation7 + $0x48] sm:$0xff]
      %v7238 = vld [vmem:[#allocation7 + $0x50] sm:$0xff]
      %v7239 = vld [vmem:[#allocation7 + $0x58] sm:$0xff]
      %v7240 = vld [vmem:[#allocation7 + $0x60] sm:$0xff]
      %v7241 = vld [vmem:[#allocation7 + $0x68] sm:$0xff]
      %v7242 = vld [vmem:[#allocation7 + $0x70] sm:$0xff]
      %v7243 = vld [vmem:[#allocation7 + $0x78] sm:$0xff]
      %7260 = vrot.lane.b32.xlu0 %v7228, 32
      %v7261 = vpop.permute.xlu0 %7260
      %7262 = vrot.lane.b32.xlu0 %v7229, 32
      %v7263 = vpop.permute.xlu0 %7262
      %7264 = vrot.lane.b32.xlu0 %v7230, 32
      %v7265 = vpop.permute.xlu0 %7264
      %7266 = vrot.lane.b32.xlu0 %v7231, 32
      %v7267 = vpop.permute.xlu0 %7266
      %7268 = vrot.lane.b32.xlu0 %v7232, 32
      %v7269 = vpop.permute.xlu0 %7268
      %7270 = vrot.lane.b32.xlu0 %v7233, 32
      %v7271 = vpop.permute.xlu0 %7270
      %7272 = vrot.lane.b32.xlu0 %v7234, 32
      %v7273 = vpop.permute.xlu0 %7272
      %7274 = vrot.lane.b32.xlu0 %v7235, 32
      %v7275 = vpop.permute.xlu0 %7274
      %7276 = vrot.lane.b32.xlu0 %v7236, 32
      %v7277 = vpop.permute.xlu0 %7276
      %7278 = vrot.lane.b32.xlu0 %v7237, 32
      %v7279 = vpop.permute.xlu0 %7278
      %7280 = vrot.lane.b32.xlu0 %v7238, 32
      %v7281 = vpop.permute.xlu0 %7280
      %7282 = vrot.lane.b32.xlu0 %v7239, 32
      %v7283 = vpop.permute.xlu0 %7282
      %7284 = vrot.lane.b32.xlu0 %v7240, 32
      %v7285 = vpop.permute.xlu0 %7284
      %7286 = vrot.lane.b32.xlu0 %v7241, 32
      %v7287 = vpop.permute.xlu0 %7286
      %7288 = vrot.lane.b32.xlu0 %v7242, 32
      %v7289 = vpop.permute.xlu0 %7288
      %7290 = vrot.lane.b32.xlu0 %v7243, 32
      %v7291 = vpop.permute.xlu0 %7290
      %v7308 = vmul.f32 %v7181, %v7261
      %v7309 = vmul.f32 %v7183, %v7263
      %v7310 = vmul.f32 %v7185, %v7265
      %v7311 = vmul.f32 %v7187, %v7267
      %v7312 = vmul.f32 %v7189, %v7269
      %v7313 = vmul.f32 %v7191, %v7271
      %v7314 = vmul.f32 %v7193, %v7273
      %v7315 = vmul.f32 %v7195, %v7275
      %v7316 = vmul.f32 %v7197, %v7277
      %v7317 = vmul.f32 %v7199, %v7279
      %v7318 = vmul.f32 %v7201, %v7281
      %v7319 = vmul.f32 %v7203, %v7283
      %v7320 = vmul.f32 %v7205, %v7285
      %v7321 = vmul.f32 %v7207, %v7287
      %v7322 = vmul.f32 %v7209, %v7289
      %v7323 = vmul.f32 %v7211, %v7291
      %7340 = vrot.lane.b32.xlu0 %v7212, 32
      %v7341 = vpop.permute.xlu0 %7340
      %7342 = vrot.lane.b32.xlu0 %v7213, 32
      %v7343 = vpop.permute.xlu0 %7342
      %7344 = vrot.lane.b32.xlu0 %v7214, 32
      %v7345 = vpop.permute.xlu0 %7344
      %7346 = vrot.lane.b32.xlu0 %v7215, 32
      %v7347 = vpop.permute.xlu0 %7346
      %7348 = vrot.lane.b32.xlu0 %v7216, 32
      %v7349 = vpop.permute.xlu0 %7348
      %7350 = vrot.lane.b32.xlu0 %v7217, 32
      %v7351 = vpop.permute.xlu0 %7350
      %7352 = vrot.lane.b32.xlu0 %v7218, 32
      %v7353 = vpop.permute.xlu0 %7352
      %7354 = vrot.lane.b32.xlu0 %v7219, 32
      %v7355 = vpop.permute.xlu0 %7354
      %7356 = vrot.lane.b32.xlu0 %v7220, 32
      %v7357 = vpop.permute.xlu0 %7356
      %7358 = vrot.lane.b32.xlu0 %v7221, 32
      %v7359 = vpop.permute.xlu0 %7358
      %7360 = vrot.lane.b32.xlu0 %v7222, 32
      %v7361 = vpop.permute.xlu0 %7360
      %7362 = vrot.lane.b32.xlu0 %v7223, 32
      %v7363 = vpop.permute.xlu0 %7362
      %7364 = vrot.lane.b32.xlu0 %v7224, 32
      %v7365 = vpop.permute.xlu0 %7364
      %7366 = vrot.lane.b32.xlu0 %v7225, 32
      %v7367 = vpop.permute.xlu0 %7366
      %7368 = vrot.lane.b32.xlu0 %v7226, 32
      %v7369 = vpop.permute.xlu0 %7368
      %7370 = vrot.lane.b32.xlu0 %v7227, 32
      %v7371 = vpop.permute.xlu0 %7370
      %v7388 = vmul.f32 %v7181, %v7341
      %v7389 = vmul.f32 %v7183, %v7343
      %v7390 = vmul.f32 %v7185, %v7345
      %v7391 = vmul.f32 %v7187, %v7347
      %v7392 = vmul.f32 %v7189, %v7349
      %v7393 = vmul.f32 %v7191, %v7351
      %v7394 = vmul.f32 %v7193, %v7353
      %v7395 = vmul.f32 %v7195, %v7355
      %v7396 = vmul.f32 %v7197, %v7357
      %v7397 = vmul.f32 %v7199, %v7359
      %v7398 = vmul.f32 %v7201, %v7361
      %v7399 = vmul.f32 %v7203, %v7363
      %v7400 = vmul.f32 %v7205, %v7365
      %v7401 = vmul.f32 %v7207, %v7367
      %v7402 = vmul.f32 %v7209, %v7369
      %v7403 = vmul.f32 %v7211, %v7371
      %7420 = vrot.lane.b32.xlu0 %v7388, 32
      %v7421 = vpop.permute.xlu0 %7420
      %7422 = vrot.lane.b32.xlu0 %v7389, 32
      %v7423 = vpop.permute.xlu0 %7422
      %7424 = vrot.lane.b32.xlu0 %v7390, 32
      %v7425 = vpop.permute.xlu0 %7424
      %7426 = vrot.lane.b32.xlu0 %v7391, 32
      %v7427 = vpop.permute.xlu0 %7426
      %7428 = vrot.lane.b32.xlu0 %v7392, 32
      %v7429 = vpop.permute.xlu0 %7428
      %7430 = vrot.lane.b32.xlu0 %v7393, 32
      %v7431 = vpop.permute.xlu0 %7430
      %7432 = vrot.lane.b32.xlu0 %v7394, 32
      %v7433 = vpop.permute.xlu0 %7432
      %7434 = vrot.lane.b32.xlu0 %v7395, 32
      %v7435 = vpop.permute.xlu0 %7434
      %7436 = vrot.lane.b32.xlu0 %v7396, 32
      %v7437 = vpop.permute.xlu0 %7436
      %7438 = vrot.lane.b32.xlu0 %v7397, 32
      %v7439 = vpop.permute.xlu0 %7438
      %7440 = vrot.lane.b32.xlu0 %v7398, 32
      %v7441 = vpop.permute.xlu0 %7440
      %7442 = vrot.lane.b32.xlu0 %v7399, 32
      %v7443 = vpop.permute.xlu0 %7442
      %7444 = vrot.lane.b32.xlu0 %v7400, 32
      %v7445 = vpop.permute.xlu0 %7444
      %7446 = vrot.lane.b32.xlu0 %v7401, 32
      %v7447 = vpop.permute.xlu0 %7446
      %7448 = vrot.lane.b32.xlu0 %v7402, 32
      %v7449 = vpop.permute.xlu0 %7448
      %7450 = vrot.lane.b32.xlu0 %v7403, 32
      %v7451 = vpop.permute.xlu0 %7450
      %v7468 = vadd.f32 %v7308, %v7421
      %v7469 = vadd.f32 %v7309, %v7423
      %v7470 = vadd.f32 %v7310, %v7425
      %v7471 = vadd.f32 %v7311, %v7427
      %v7472 = vadd.f32 %v7312, %v7429
      %v7473 = vadd.f32 %v7313, %v7431
      %v7474 = vadd.f32 %v7314, %v7433
      %v7475 = vadd.f32 %v7315, %v7435
      %v7476 = vadd.f32 %v7316, %v7437
      %v7477 = vadd.f32 %v7317, %v7439
      %v7478 = vadd.f32 %v7318, %v7441
      %v7479 = vadd.f32 %v7319, %v7443
      %v7480 = vadd.f32 %v7320, %v7445
      %v7481 = vadd.f32 %v7321, %v7447
      %v7482 = vadd.f32 %v7322, %v7449
      %v7483 = vadd.f32 %v7323, %v7451
      %v7484 = vtanh.pop %v7468
      %v7485 = vtanh.pop %v7469
      %v7486 = vtanh.pop %v7470
      %v7487 = vtanh.pop %v7471
      %v7488 = vtanh.pop %v7472
      %v7489 = vtanh.pop %v7473
      %v7490 = vtanh.pop %v7474
      %v7491 = vtanh.pop %v7475
      %v7492 = vtanh.pop %v7476
      %v7493 = vtanh.pop %v7477
      %v7494 = vtanh.pop %v7478
      %v7495 = vtanh.pop %v7479
      %v7496 = vtanh.pop %v7480
      %v7497 = vtanh.pop %v7481
      %v7498 = vtanh.pop %v7482
      %v7499 = vtanh.pop %v7483
      %7516 = vrot.lane.b32.xlu0 %v7484, 32
      %v7517 = vpop.permute.xlu0 %7516
      %7518 = vrot.lane.b32.xlu0 %v7485, 32
      %v7519 = vpop.permute.xlu0 %7518
      %7520 = vrot.lane.b32.xlu0 %v7486, 32
      %v7521 = vpop.permute.xlu0 %7520
      %7522 = vrot.lane.b32.xlu0 %v7487, 32
      %v7523 = vpop.permute.xlu0 %7522
      %7524 = vrot.lane.b32.xlu0 %v7488, 32
      %v7525 = vpop.permute.xlu0 %7524
      %7526 = vrot.lane.b32.xlu0 %v7489, 32
      %v7527 = vpop.permute.xlu0 %7526
      %7528 = vrot.lane.b32.xlu0 %v7490, 32
      %v7529 = vpop.permute.xlu0 %7528
      %7530 = vrot.lane.b32.xlu0 %v7491, 32
      %v7531 = vpop.permute.xlu0 %7530
      %7532 = vrot.lane.b32.xlu0 %v7492, 32
      %v7533 = vpop.permute.xlu0 %7532
      %7534 = vrot.lane.b32.xlu0 %v7493, 32
      %v7535 = vpop.permute.xlu0 %7534
      %7536 = vrot.lane.b32.xlu0 %v7494, 32
      %v7537 = vpop.permute.xlu0 %7536
      %7538 = vrot.lane.b32.xlu0 %v7495, 32
      %v7539 = vpop.permute.xlu0 %7538
      %7540 = vrot.lane.b32.xlu0 %v7496, 32
      %v7541 = vpop.permute.xlu0 %7540
      %7542 = vrot.lane.b32.xlu0 %v7497, 32
      %v7543 = vpop.permute.xlu0 %7542
      %7544 = vrot.lane.b32.xlu0 %v7498, 32
      %v7545 = vpop.permute.xlu0 %7544
      %7546 = vrot.lane.b32.xlu0 %v7499, 32
      %v7547 = vpop.permute.xlu0 %7546
      %v7564 = vmul.f32 %v7181, %v7517
      %v7565 = vmul.f32 %v7183, %v7519
      %v7566 = vmul.f32 %v7185, %v7521
      %v7567 = vmul.f32 %v7187, %v7523
      %v7568 = vmul.f32 %v7189, %v7525
      %v7569 = vmul.f32 %v7191, %v7527
      %v7570 = vmul.f32 %v7193, %v7529
      %v7571 = vmul.f32 %v7195, %v7531
      %v7572 = vmul.f32 %v7197, %v7533
      %v7573 = vmul.f32 %v7199, %v7535
      %v7574 = vmul.f32 %v7201, %v7537
      %v7575 = vmul.f32 %v7203, %v7539
      %v7576 = vmul.f32 %v7205, %v7541
      %v7577 = vmul.f32 %v7207, %v7543
      %v7578 = vmul.f32 %v7209, %v7545
      %v7579 = vmul.f32 %v7211, %v7547
      %7596 = vrot.lane.b32.xlu0 %v7468, 96
      %v7597 = vpop.permute.xlu0 %7596
      %7598 = vrot.lane.b32.xlu0 %v7469, 96
      %v7599 = vpop.permute.xlu0 %7598
      %7600 = vrot.lane.b32.xlu0 %v7470, 96
      %v7601 = vpop.permute.xlu0 %7600
      %7602 = vrot.lane.b32.xlu0 %v7471, 96
      %v7603 = vpop.permute.xlu0 %7602
      %7604 = vrot.lane.b32.xlu0 %v7472, 96
      %v7605 = vpop.permute.xlu0 %7604
      %7606 = vrot.lane.b32.xlu0 %v7473, 96
      %v7607 = vpop.permute.xlu0 %7606
      %7608 = vrot.lane.b32.xlu0 %v7474, 96
      %v7609 = vpop.permute.xlu0 %7608
      %7610 = vrot.lane.b32.xlu0 %v7475, 96
      %v7611 = vpop.permute.xlu0 %7610
      %7612 = vrot.lane.b32.xlu0 %v7476, 96
      %v7613 = vpop.permute.xlu0 %7612
      %7614 = vrot.lane.b32.xlu0 %v7477, 96
      %v7615 = vpop.permute.xlu0 %7614
      %7616 = vrot.lane.b32.xlu0 %v7478, 96
      %v7617 = vpop.permute.xlu0 %7616
      %7618 = vrot.lane.b32.xlu0 %v7479, 96
      %v7619 = vpop.permute.xlu0 %7618
      %7620 = vrot.lane.b32.xlu0 %v7480, 96
      %v7621 = vpop.permute.xlu0 %7620
      %7622 = vrot.lane.b32.xlu0 %v7481, 96
      %v7623 = vpop.permute.xlu0 %7622
      %7624 = vrot.lane.b32.xlu0 %v7482, 96
      %v7625 = vpop.permute.xlu0 %7624
      %7626 = vrot.lane.b32.xlu0 %v7483, 96
      %v7627 = vpop.permute.xlu0 %7626
      %7644 = vst.msk [vmem:[#allocation7] sm:$0xff] %vm4093, %v7597
      %7645 = vst.msk [vmem:[#allocation7 + $0x8] sm:$0xff] %vm4093, %v7599
      %7646 = vst.msk [vmem:[#allocation7 + $0x10] sm:$0xff] %vm4093, %v7601
      %7647 = vst.msk [vmem:[#allocation7 + $0x18] sm:$0xff] %vm4093, %v7603
      %7648 = vst.msk [vmem:[#allocation7 + $0x20] sm:$0xff] %vm4093, %v7605
      %7649 = vst.msk [vmem:[#allocation7 + $0x28] sm:$0xff] %vm4093, %v7607
      %7650 = vst.msk [vmem:[#allocation7 + $0x30] sm:$0xff] %vm4093, %v7609
      %7651 = vst.msk [vmem:[#allocation7 + $0x38] sm:$0xff] %vm4093, %v7611
      %7652 = vst.msk [vmem:[#allocation7 + $0x40] sm:$0xff] %vm4093, %v7613
      %7653 = vst.msk [vmem:[#allocation7 + $0x48] sm:$0xff] %vm4093, %v7615
      %7654 = vst.msk [vmem:[#allocation7 + $0x50] sm:$0xff] %vm4093, %v7617
      %7655 = vst.msk [vmem:[#allocation7 + $0x58] sm:$0xff] %vm4093, %v7619
      %7656 = vst.msk [vmem:[#allocation7 + $0x60] sm:$0xff] %vm4093, %v7621
      %7657 = vst.msk [vmem:[#allocation7 + $0x68] sm:$0xff] %vm4093, %v7623
      %7658 = vst.msk [vmem:[#allocation7 + $0x70] sm:$0xff] %vm4093, %v7625
      %7659 = vst.msk [vmem:[#allocation7 + $0x78] sm:$0xff] %vm4093, %v7627
      %v7660 = vpack.c.bf16 %v7565, %v7564
      %v7661 = vpack.c.bf16 %v7567, %v7566
      %v7662 = vpack.c.bf16 %v7569, %v7568
      %v7663 = vpack.c.bf16 %v7571, %v7570
      %v7664 = vpack.c.bf16 %v7573, %v7572
      %v7665 = vpack.c.bf16 %v7575, %v7574
      %v7666 = vpack.c.bf16 %v7577, %v7576
      %v7667 = vpack.c.bf16 %v7579, %v7578
      %v7676 = vunpack.c.l.b16 %v7660
      %v7677 = vunpack.c.h.b16 %v7660
      %v7678 = vunpack.c.l.b16 %v7661
      %v7679 = vunpack.c.h.b16 %v7661
      %v7680 = vunpack.c.l.b16 %v7662
      %v7681 = vunpack.c.h.b16 %v7662
      %v7682 = vunpack.c.l.b16 %v7663
      %v7683 = vunpack.c.h.b16 %v7663
      %v7684 = vunpack.c.l.b16 %v7664
      %v7685 = vunpack.c.h.b16 %v7664
      %v7686 = vunpack.c.l.b16 %v7665
      %v7687 = vunpack.c.h.b16 %v7665
      %v7688 = vunpack.c.l.b16 %v7666
      %v7689 = vunpack.c.h.b16 %v7666
      %v7690 = vunpack.c.l.b16 %v7667
      %v7691 = vunpack.c.h.b16 %v7667
      %v7692 = vpack.c.b16 %v7676, %v7676
      %v7693 = vpack.c.b16 %v7677, %v7677
      %v7694 = vpack.c.b16 %v7678, %v7678
      %v7695 = vpack.c.b16 %v7679, %v7679
      %v7696 = vpack.c.b16 %v7680, %v7680
      %v7697 = vpack.c.b16 %v7681, %v7681
      %v7698 = vpack.c.b16 %v7682, %v7682
      %v7699 = vpack.c.b16 %v7683, %v7683
      %v7700 = vpack.c.b16 %v7684, %v7684
      %v7701 = vpack.c.b16 %v7685, %v7685
      %v7702 = vpack.c.b16 %v7686, %v7686
      %v7703 = vpack.c.b16 %v7687, %v7687
      %v7704 = vpack.c.b16 %v7688, %v7688
      %v7705 = vpack.c.b16 %v7689, %v7689
      %v7706 = vpack.c.b16 %v7690, %v7690
      %v7707 = vpack.c.b16 %v7691, %v7691
      %7708 = vrot.lane.b32.xlu0 %v7692, 64
      %v7709 = vpop.permute.xlu0 %7708
      %7710 = vrot.lane.b32.xlu0 %v7693, 64
      %v7711 = vpop.permute.xlu0 %7710
      %7712 = vrot.lane.b32.xlu0 %v7694, 64
      %v7713 = vpop.permute.xlu0 %7712
      %7714 = vrot.lane.b32.xlu0 %v7695, 64
      %v7715 = vpop.permute.xlu0 %7714
      %7716 = vrot.lane.b32.xlu0 %v7696, 64
      %v7717 = vpop.permute.xlu0 %7716
      %7718 = vrot.lane.b32.xlu0 %v7697, 64
      %v7719 = vpop.permute.xlu0 %7718
      %7720 = vrot.lane.b32.xlu0 %v7698, 64
      %v7721 = vpop.permute.xlu0 %7720
      %7722 = vrot.lane.b32.xlu0 %v7699, 64
      %v7723 = vpop.permute.xlu0 %7722
      %7724 = vrot.lane.b32.xlu0 %v7700, 64
      %v7725 = vpop.permute.xlu0 %7724
      %7726 = vrot.lane.b32.xlu0 %v7701, 64
      %v7727 = vpop.permute.xlu0 %7726
      %7728 = vrot.lane.b32.xlu0 %v7702, 64
      %v7729 = vpop.permute.xlu0 %7728
      %7730 = vrot.lane.b32.xlu0 %v7703, 64
      %v7731 = vpop.permute.xlu0 %7730
      %7732 = vrot.lane.b32.xlu0 %v7704, 64
      %v7733 = vpop.permute.xlu0 %7732
      %7734 = vrot.lane.b32.xlu0 %v7705, 64
      %v7735 = vpop.permute.xlu0 %7734
      %7736 = vrot.lane.b32.xlu0 %v7706, 64
      %v7737 = vpop.permute.xlu0 %7736
      %7738 = vrot.lane.b32.xlu0 %v7707, 64
      %v7739 = vpop.permute.xlu0 %7738
      %7756 = vst.msk [vmem:[%s4271 + $0x8] sm:$0xf] %vm4206, %v7709
      %7757 = vst.msk [vmem:[%s4271 + $0x18] sm:$0xf] %vm4206, %v7711
      %7758 = vst.msk [vmem:[%s4271 + $0x28] sm:$0xf] %vm4206, %v7713
      %7759 = vst.msk [vmem:[%s4271 + $0x38] sm:$0xf] %vm4206, %v7715
      %7760 = vst.msk [vmem:[%s4271 + $0x48] sm:$0xf] %vm4206, %v7717
      %7761 = vst.msk [vmem:[%s4271 + $0x58] sm:$0xf] %vm4206, %v7719
      %7762 = vst.msk [vmem:[%s4271 + $0x68] sm:$0xf] %vm4206, %v7721
      %7763 = vst.msk [vmem:[%s4271 + $0x78] sm:$0xf] %vm4206, %v7723
      %7764 = vst.msk [vmem:[%s4271 + $0xa8] sm:$0xf] %vm4206, %v7725
      %7765 = vst.msk [vmem:[%s4271 + $0xb8] sm:$0xf] %vm4206, %v7727
      %7766 = vst.msk [vmem:[%s4271 + $0xc8] sm:$0xf] %vm4206, %v7729
      %7767 = vst.msk [vmem:[%s4271 + $0xd8] sm:$0xf] %vm4206, %v7731
      %7768 = vst.msk [vmem:[%s4271 + $0xe8] sm:$0xf] %vm4206, %v7733
      %7769 = vst.msk [vmem:[%s4271 + $0xf8] sm:$0xf] %vm4206, %v7735
      %7770 = vst.msk [vmem:[%s4271 + $0x108] sm:$0xf] %vm4206, %v7737
      %7771 = vst.msk [vmem:[%s4271 + $0x118] sm:$0xf] %vm4206, %v7739
      %p7772 = scmp.ge.s32.totalorder %s23, 5
      // Predicated region
      $region57: #{rnn_convlstm_forward.1} parent=47 // pred_check
        %p7773 = pneg %p7772
      $region58: #{rnn_convlstm_forward.1} parent=47 // pred_check_branch
        %7775 = sbr.rel (%p7773) target = $region60
      $region59: #{rnn_convlstm_forward.1} parent=47 // pred_region
        %v7776 = vld [vmem:[%s5] sm:$0xf]
        %v7777 = vld [vmem:[%s5 + $0x4] sm:$0xf]
        %v7778 = vld [vmem:[%s5 + $0x8] sm:$0xf]
        %v7779 = vld [vmem:[%s5 + $0xc] sm:$0xf]
        %v7780 = vld [vmem:[%s6] sm:$0x1]
        %v7782 = vlaneseq
        %v7783 = vshrl.u32 %v7782, 7
        %v7784 = vsub.s32 0, %v7783
        %v7785 = vrot.slane %v7780, %v7784
        %7787 = vrot.lane.b32.xlu0 %v7660, 64
        %v7788 = vpop.permute.xlu0 %7787
        %7789 = vrot.lane.b32.xlu0 %v7661, 64
        %v7790 = vpop.permute.xlu0 %7789
        %7791 = vrot.lane.b32.xlu0 %v7662, 64
        %v7792 = vpop.permute.xlu0 %7791
        %7793 = vrot.lane.b32.xlu0 %v7663, 64
        %v7794 = vpop.permute.xlu0 %7793
        %7795 = vrot.lane.b32.xlu0 %v7664, 64
        %v7796 = vpop.permute.xlu0 %7795
        %7797 = vrot.lane.b32.xlu0 %v7665, 64
        %v7798 = vpop.permute.xlu0 %7797
        %7799 = vrot.lane.b32.xlu0 %v7666, 64
        %v7800 = vpop.permute.xlu0 %7799
        %7801 = vrot.lane.b32.xlu0 %v7667, 64
        %v7802 = vpop.permute.xlu0 %7801
        %v7807 = vunpack.c.l.b16 %v7776
        %v7808 = vunpack.c.l.b16 %v7777
        %v7809 = vunpack.c.l.b16 %v7778
        %v7810 = vunpack.c.l.b16 %v7779
        %v7811 = vpack.c.b16 %v7808, %v7807
        %v7812 = vpack.c.b16 %v7810, %v7809
        %v7816 = vsel %vm4093, %v7788, 0
        %v7819 = vsel %vm4093, %v7790, 0
        %v7822 = vsel %vm4093, %v7792, 0
        %v7825 = vsel %vm4093, %v7794, 0
        %v7828 = vsel %vm4093, %v7796, 0
        %v7831 = vsel %vm4093, %v7798, 0
        %v7834 = vsel %vm4093, %v7800, 0
        %v7837 = vsel %vm4093, %v7802, 0
        %7839 = vmatprep.subr.bf16.mxu0 0
        %7840 = vmatpush1.bf16.msra.mxu0 0
        %7841 = vmatprep.subr.bf16.mxu0 0
        %7842 = vmatpush1.bf16.msra.mxu0 0
        %7843 = vmatprep.subr.bf16.mxu0 0
        %7844 = vmatpush1.bf16.msra.mxu0 0
        %7845 = vmatprep.subr.bf16.mxu0 0
        %7846 = vmatpush1.bf16.msra.mxu0 0
        %7847 = vmatprep.subr.bf16.mxu0 0
        %7848 = vmatpush1.bf16.msra.mxu0 0
        %7849 = vmatprep.subr.bf16.mxu0 0
        %7850 = vmatpush1.bf16.msra.mxu0 0
        %7851 = vmatprep.subr.bf16.mxu0 0
        %7852 = vmatpush1.bf16.msra.mxu0 %v7812
        %7853 = vmatprep.subr.bf16.mxu0 0
        %7854 = vmatpush1.bf16.msra.mxu0 %v7811
        %7855 = vmatprep.subr.bf16.mxu0 0
        %7856 = vmatpush2.bf16.msra.mxu0 0
        %7857 = vmatprep.subr.bf16.mxu0 0
        %7858 = vmatpush2.bf16.msra.mxu0 0
        %7859 = vmatprep.subr.bf16.mxu0 0
        %7860 = vmatpush2.bf16.msra.mxu0 0
        %7861 = vmatprep.subr.bf16.mxu0 0
        %7862 = vmatpush2.bf16.msra.mxu0 0
        %7863 = vmatprep.subr.bf16.mxu0 0
        %7864 = vmatpush2.bf16.msra.mxu0 0
        %7865 = vmatprep.subr.bf16.mxu0 0
        %7866 = vmatpush2.bf16.msra.mxu0 0
        %7867 = vmatprep.subr.bf16.mxu0 0
        %7868 = vmatpush2.bf16.msra.mxu0 0
        %7869 = vmatprep.subr.bf16.mxu0 0
        %7870 = vmatpush2.bf16.msra.mxu0 0
        %7871 = vmatprep.mubr.bf16.mxu0 0
        %7872 = vmatmul.mubr.bf16.gmra.mxu0 %v7816
        %v7873 = vpop.f32.mrf.mxu0
        %v7874 = vadd.f32 %v7785, %v7873
        %v7875 = vpop.f32.mrf.mxu0
        %v7876 = vpop.f32.mrf.mxu0
        %v7877 = vadd.f32 %v7785, %v7876
        %v7878 = vpop.f32.mrf.mxu0
        %7879 = vmatprep.mubr.bf16.mxu0 0
        %7880 = vmatmul.mubr.bf16.gmra.mxu0 %v7819
        %v7881 = vpop.f32.mrf.mxu0
        %v7882 = vadd.f32 %v7785, %v7881
        %v7883 = vpop.f32.mrf.mxu0
        %v7884 = vpop.f32.mrf.mxu0
        %v7885 = vadd.f32 %v7785, %v7884
        %v7886 = vpop.f32.mrf.mxu0
        %7887 = vmatprep.mubr.bf16.mxu0 0
        %7888 = vmatmul.mubr.bf16.gmra.mxu0 %v7822
        %v7889 = vpop.f32.mrf.mxu0
        %v7890 = vadd.f32 %v7785, %v7889
        %v7891 = vpop.f32.mrf.mxu0
        %v7892 = vpop.f32.mrf.mxu0
        %v7893 = vadd.f32 %v7785, %v7892
        %v7894 = vpop.f32.mrf.mxu0
        %7895 = vmatprep.mubr.bf16.mxu0 0
        %7896 = vmatmul.mubr.bf16.gmra.mxu0 %v7825
        %v7897 = vpop.f32.mrf.mxu0
        %v7898 = vadd.f32 %v7785, %v7897
        %v7899 = vpop.f32.mrf.mxu0
        %v7900 = vpop.f32.mrf.mxu0
        %v7901 = vadd.f32 %v7785, %v7900
        %v7902 = vpop.f32.mrf.mxu0
        %7903 = vmatprep.mubr.bf16.mxu0 0
        %7904 = vmatmul.mubr.bf16.gmra.mxu0 %v7828
        %v7905 = vpop.f32.mrf.mxu0
        %v7906 = vadd.f32 %v7785, %v7905
        %v7907 = vpop.f32.mrf.mxu0
        %v7908 = vpop.f32.mrf.mxu0
        %v7909 = vadd.f32 %v7785, %v7908
        %v7910 = vpop.f32.mrf.mxu0
        %7911 = vmatprep.mubr.bf16.mxu0 0
        %7912 = vmatmul.mubr.bf16.gmra.mxu0 %v7831
        %v7913 = vpop.f32.mrf.mxu0
        %v7914 = vadd.f32 %v7785, %v7913
        %v7915 = vpop.f32.mrf.mxu0
        %v7916 = vpop.f32.mrf.mxu0
        %v7917 = vadd.f32 %v7785, %v7916
        %v7918 = vpop.f32.mrf.mxu0
        %7919 = vmatprep.mubr.bf16.mxu0 0
        %7920 = vmatmul.mubr.bf16.gmra.mxu0 %v7834
        %v7921 = vpop.f32.mrf.mxu0
        %v7922 = vadd.f32 %v7785, %v7921
        %v7923 = vpop.f32.mrf.mxu0
        %v7924 = vpop.f32.mrf.mxu0
        %v7925 = vadd.f32 %v7785, %v7924
        %v7926 = vpop.f32.mrf.mxu0
        %7927 = vmatprep.mubr.bf16.mxu0 0
        %7928 = vmatmul.mubr.bf16.gmra.mxu0 %v7837
        %v7929 = vpop.f32.mrf.mxu0
        %v7930 = vadd.f32 %v7785, %v7929
        %v7931 = vpop.f32.mrf.mxu0
        %v7932 = vpop.f32.mrf.mxu0
        %v7933 = vadd.f32 %v7785, %v7932
        %v7934 = vpop.f32.mrf.mxu0
        %7935 = vdwg.mxu0
        %v7936 = vpack.c.bf16 %v7877, %v7874
        %v7937 = vpack.c.bf16 %v7885, %v7882
        %v7938 = vpack.c.bf16 %v7893, %v7890
        %v7939 = vpack.c.bf16 %v7901, %v7898
        %v7940 = vpack.c.bf16 %v7909, %v7906
        %v7941 = vpack.c.bf16 %v7917, %v7914
        %v7942 = vpack.c.bf16 %v7925, %v7922
        %v7943 = vpack.c.bf16 %v7933, %v7930
        %v7952 = vunpack.c.l.b16 %v7936
        %v7953 = vunpack.c.h.b16 %v7936
        %v7954 = vunpack.c.l.b16 %v7937
        %v7955 = vunpack.c.h.b16 %v7937
        %v7956 = vunpack.c.l.b16 %v7938
        %v7957 = vunpack.c.h.b16 %v7938
        %v7958 = vunpack.c.l.b16 %v7939
        %v7959 = vunpack.c.h.b16 %v7939
        %v7960 = vunpack.c.l.b16 %v7940
        %v7961 = vunpack.c.h.b16 %v7940
        %v7962 = vunpack.c.l.b16 %v7941
        %v7963 = vunpack.c.h.b16 %v7941
        %v7964 = vunpack.c.l.b16 %v7942
        %v7965 = vunpack.c.h.b16 %v7942
        %v7966 = vunpack.c.l.b16 %v7943
        %v7967 = vunpack.c.h.b16 %v7943
        %v7968 = vpack.c.b16 %v7952, %v7952
        %v7969 = vpack.c.b16 %v7953, %v7953
        %v7970 = vpack.c.b16 %v7954, %v7954
        %v7971 = vpack.c.b16 %v7955, %v7955
        %v7972 = vpack.c.b16 %v7956, %v7956
        %v7973 = vpack.c.b16 %v7957, %v7957
        %v7974 = vpack.c.b16 %v7958, %v7958
        %v7975 = vpack.c.b16 %v7959, %v7959
        %v7976 = vpack.c.b16 %v7960, %v7960
        %v7977 = vpack.c.b16 %v7961, %v7961
        %v7978 = vpack.c.b16 %v7962, %v7962
        %v7979 = vpack.c.b16 %v7963, %v7963
        %v7980 = vpack.c.b16 %v7964, %v7964
        %v7981 = vpack.c.b16 %v7965, %v7965
        %v7982 = vpack.c.b16 %v7966, %v7966
        %v7983 = vpack.c.b16 %v7967, %v7967
        %8000 = vst [vmem:[%s340] sm:$0xf] %v7968
        %8001 = vst [vmem:[%s340 + $0x4] sm:$0xf] %v7969
        %8002 = vst [vmem:[%s340 + $0x8] sm:$0xf] %v7970
        %8003 = vst [vmem:[%s340 + $0xc] sm:$0xf] %v7971
        %8004 = vst [vmem:[%s340 + $0x10] sm:$0xf] %v7972
        %8005 = vst [vmem:[%s340 + $0x14] sm:$0xf] %v7973
        %8006 = vst [vmem:[%s340 + $0x18] sm:$0xf] %v7974
        %8007 = vst [vmem:[%s340 + $0x1c] sm:$0xf] %v7975
        %8008 = vst [vmem:[%s340 + $0x20] sm:$0xf] %v7976
        %8009 = vst [vmem:[%s340 + $0x24] sm:$0xf] %v7977
        %8010 = vst [vmem:[%s340 + $0x28] sm:$0xf] %v7978
        %8011 = vst [vmem:[%s340 + $0x2c] sm:$0xf] %v7979
        %8012 = vst [vmem:[%s340 + $0x30] sm:$0xf] %v7980
        %8013 = vst [vmem:[%s340 + $0x34] sm:$0xf] %v7981
        %8014 = vst [vmem:[%s340 + $0x38] sm:$0xf] %v7982
        %8015 = vst [vmem:[%s340 + $0x3c] sm:$0xf] %v7983
        %8016 = vrot.lane.b32.xlu0 %v7968, 32
        %v8017 = vpop.permute.xlu0 %8016
        %8018 = vrot.lane.b32.xlu0 %v7969, 32
        %v8019 = vpop.permute.xlu0 %8018
        %8020 = vrot.lane.b32.xlu0 %v7970, 32
        %v8021 = vpop.permute.xlu0 %8020
        %8022 = vrot.lane.b32.xlu0 %v7971, 32
        %v8023 = vpop.permute.xlu0 %8022
        %8024 = vrot.lane.b32.xlu0 %v7972, 32
        %v8025 = vpop.permute.xlu0 %8024
        %8026 = vrot.lane.b32.xlu0 %v7973, 32
        %v8027 = vpop.permute.xlu0 %8026
        %8028 = vrot.lane.b32.xlu0 %v7974, 32
        %v8029 = vpop.permute.xlu0 %8028
        %8030 = vrot.lane.b32.xlu0 %v7975, 32
        %v8031 = vpop.permute.xlu0 %8030
        %8032 = vrot.lane.b32.xlu0 %v7976, 32
        %v8033 = vpop.permute.xlu0 %8032
        %8034 = vrot.lane.b32.xlu0 %v7977, 32
        %v8035 = vpop.permute.xlu0 %8034
        %8036 = vrot.lane.b32.xlu0 %v7978, 32
        %v8037 = vpop.permute.xlu0 %8036
        %8038 = vrot.lane.b32.xlu0 %v7979, 32
        %v8039 = vpop.permute.xlu0 %8038
        %8040 = vrot.lane.b32.xlu0 %v7980, 32
        %v8041 = vpop.permute.xlu0 %8040
        %8042 = vrot.lane.b32.xlu0 %v7981, 32
        %v8043 = vpop.permute.xlu0 %8042
        %8044 = vrot.lane.b32.xlu0 %v7982, 32
        %v8045 = vpop.permute.xlu0 %8044
        %8046 = vrot.lane.b32.xlu0 %v7983, 32
        %v8047 = vpop.permute.xlu0 %8046
        %vm8064 = vcmask 388352
        %8065 = vst.msk [vmem:[%s1392 + $0x8] sm:$0xf] %vm8064, %v8017
        %8066 = vst.msk [vmem:[%s1392 + $0x18] sm:$0xf] %vm8064, %v8019
        %8067 = vst.msk [vmem:[%s1392 + $0x28] sm:$0xf] %vm8064, %v8021
        %8068 = vst.msk [vmem:[%s1392 + $0x38] sm:$0xf] %vm8064, %v8023
        %8069 = vst.msk [vmem:[%s1392 + $0x48] sm:$0xf] %vm8064, %v8025
        %8070 = vst.msk [vmem:[%s1392 + $0x58] sm:$0xf] %vm8064, %v8027
        %8071 = vst.msk [vmem:[%s1392 + $0x68] sm:$0xf] %vm8064, %v8029
        %8072 = vst.msk [vmem:[%s1392 + $0x78] sm:$0xf] %vm8064, %v8031
        %8073 = vst.msk [vmem:[%s1392 + $0xa8] sm:$0xf] %vm8064, %v8033
        %8074 = vst.msk [vmem:[%s1392 + $0xb8] sm:$0xf] %vm8064, %v8035
        %8075 = vst.msk [vmem:[%s1392 + $0xc8] sm:$0xf] %vm8064, %v8037
        %8076 = vst.msk [vmem:[%s1392 + $0xd8] sm:$0xf] %vm8064, %v8039
        %8077 = vst.msk [vmem:[%s1392 + $0xe8] sm:$0xf] %vm8064, %v8041
        %8078 = vst.msk [vmem:[%s1392 + $0xf8] sm:$0xf] %vm8064, %v8043
        %8079 = vst.msk [vmem:[%s1392 + $0x108] sm:$0xf] %vm8064, %v8045
        %8080 = vst.msk [vmem:[%s1392 + $0x118] sm:$0xf] %vm8064, %v8047
      $region60: #{rnn_convlstm_forward.1} parent=47 // pred_fallthru
        _
      %s8081 = ssub.s32 %s23, 5
      %p8082 = scmp.gt.s32.totalorder %s8081, 0
      %s8083 = scalar_select %p8082, %s8081, 0
      %p8084 = scmp.lt.s32.totalorder %s22, 0
      %s8085 = scalar_select %p8084, %s22, 0
      %p8086 = scmp.lt.s32.totalorder %s8083, 3
      %s8087 = scalar_select %p8086, %s8083, 3
      %s8088 = smul.addr %s8087, 16
      %s8089 = smul.addr %s8085, 64
      %s8090 = sadd.s32 %s8088, %s8089
      %s8091 = smul.addr %s8090, 4
      %s8092 = scalar_lea.vmem %s7, %s8091
      // Predicated region
      $region61: #{rnn_convlstm_forward.1} parent=47 // pred_check
        %p8093 = pneg %p216
      $region62: #{rnn_convlstm_forward.1} parent=47 // pred_check_branch
        %8095 = sbr.rel (%p8093) target = $region64
      $region63: #{rnn_convlstm_forward.1} parent=47 // pred_region
        %s8096 = ssub.s32 %s23, 5
        %p8097 = scmp.gt.s32.totalorder %s8096, 0
        %s8098 = scalar_select %p8097, %s8096, 0
      $region64: #{rnn_convlstm_forward.1} parent=47 // pred_fallthru
        _
    $region48: #{rnn_convlstm_forward.1} parent=5 // pred_fallthru
      _
    %p8099 = scmp.le.s32.totalorder 2, %s13
    // Predicated region
    $region65: #{rnn_convlstm_forward.1} parent=5 // pred_check
      %p8100 = pneg %p8099
    $region66: #{rnn_convlstm_forward.1} parent=5 // pred_check_branch
      %8102 = sbr.rel (%p8100) target = $region68
    $region67: #{rnn_convlstm_forward.1} parent=5 // pred_region
      %s8103 = ssub.s32 %s13, 2
      // Predicated region
      $region69: #{rnn_convlstm_forward.1} parent=67 // pred_check
        %p8104 = pneg %p222
      $region70: #{rnn_convlstm_forward.1} parent=67 // pred_check_branch
        %8106 = sbr.rel (%p8104) target = $region72
      $region71: #{rnn_convlstm_forward.1} parent=67 // pred_region
        %s8107 = ssub.s32 %s25, 5
        %p8108 = scmp.gt.s32.totalorder %s8107, 0
        %s8109 = scalar_select %p8108, %s8107, 0
        %p8110 = scmp.lt.s32.totalorder %s24, 0
        %s8111 = scalar_select %p8110, %s24, 0
        %p8112 = scmp.lt.s32.totalorder %s8109, 3
        %s8113 = scalar_select %p8112, %s8109, 3
        %s8114 = smul.addr %s8113, 16
        %s8115 = smul.addr %s8111, 64
        %s8116 = sadd.s32 %s8114, %s8115
        %s8117 = smul.addr %s8116, 4
        %s8118 = scalar_lea.vmem %s7, %s8117
      $region72: #{rnn_convlstm_forward.1} parent=67 // pred_fallthru
        _
    $region68: #{rnn_convlstm_forward.1} parent=5 // pred_fallthru
      _
  $region6: #{rnn_convlstm_forward.1} parent=0 // loop_footer
    %s17 = sadd.s32 1, %s13
  $region7: #{rnn_convlstm_forward.1} parent=0 // loop_footer_branch
    %12 = sbr.rel target = $region3
  $region8: #{rnn_convlstm_forward.1} parent=0 // loop_exit
    _

</llo_original>
